<compile_context>
chip_gen: v6e
topology: v6e:2x2x1
jax: 0.10.0
libtpu: 0.0.40
codegen_flags: <defaults>
</compile_context>

<pallas_src>
import functools

import numpy as np
import jax
import jax.numpy as jnp
from jax import lax
from jax.experimental import pallas as pl
from jax.experimental.pallas import tpu as pltpu

_TAPS = tuple((dy, dx) for dy in (-1, 0, 1) for dx in (-1, 0, 1))


def _ceil_to(x, m):
    return ((x + m - 1) // m) * m


# ----------------------------------------------------------------------------
# Host-side constants (tiny 0/1 matrices & masks, built once per shape)
# ----------------------------------------------------------------------------
def _tap_masks(H, W, HWp):
    """(9, 1, HWp) f32 validity mask per 3x3 tap on a flattened (padded) image."""
    p = np.arange(HWp)
    row, col = p // W, p % W
    masks = []
    for dy, dx in _TAPS:
        valid = ((p < H * W)
                 & (row + dy >= 0) & (row + dy < H)
                 & (col + dx >= 0) & (col + dx < W))
        masks.append(valid.astype(np.float32))
    return np.stack(masks)[:, None, :]


def _pool_select_matrix(H, W, HWp_in, HWp_out):
    """(HWp_in, HWp_out) 0/1 matrix: gathers the 2x2-max values at even (y,x)."""
    H2, W2 = H // 2, W // 2
    S = np.zeros((HWp_in, HWp_out), np.float32)
    q = np.arange(H2 * W2)
    sel = (q // W2) * 2 * W + (q % W2) * 2
    S[sel, q] = 1.0
    return S


def _upsample_matrix(H, W, HWp_in, HWp_out):
    """(HWp_in, HWp_out) 0/1 matrix: nearest-neighbour x2 upsample as a matmul."""
    H2, W2 = H // 2, W // 2
    U = np.zeros((HWp_in, HWp_out), np.float32)
    p = np.arange(H * W)
    src = (p // W // 2) * W2 + (p % W) // 2
    U[src, p] = 1.0
    return U


# ----------------------------------------------------------------------------
# Fused UNet kernel: one (model, batch-tile) grid point per invocation
# ----------------------------------------------------------------------------
def _fused_unet_kernel(p1_ref, S_ref, U_ref, mf_ref, mb_ref,
                       e1w, e1b, e2w, e2b, b1w, b1b, b2w, b2b,
                       d1wu, d1ws, d1b, d2w, d2b, hw, hb,
                       o_ref, *, W, Bt, HWp, HWq, ones_f, ones_b):
    W2 = W // 2
    Lf = Bt * HWp                      # full-resolution lane width (Bt images)

    def tap_acc(x, w_ref, m_ref, Ww, acc, ones_mask, roll_output):
        """acc += sum_k W_k @ neighbor_k(x) with zero 'same' padding via masks.

        roll_output=False: roll+mask the input  (Cin <= Cout).
        roll_output=True : matmul first, then roll+mask the (smaller) output
                           (Cout < Cin) -> ~Cin/Cout less XLU/VPU work.
        Circular-roll wrap (across image sub-tiles / padding) only ever lands
        on masked-out destination lanes, so it never reaches valid outputs.
        """
        L = x.shape[1]
        for k, (dy, dx) in enumerate(_TAPS):
            sh = (-(dy * Ww + dx)) % L
            if roll_output:
                z = jnp.dot(w_ref[0, k], x, preferred_element_type=jnp.float32)
                if sh:
                    z = pltpu.roll(z, shift=sh, axis=1)
                if not ones_mask[k]:
                    z = z * m_ref[k]
                acc = acc + z
            else:
                t = pltpu.roll(x, shift=sh, axis=1) if sh else x
                if not ones_mask[k]:
                    t = t * m_ref[k]
                acc = acc + jnp.dot(w_ref[0, k], t,
                                    preferred_element_type=jnp.float32)
        return acc

    def conv3x3_relu(x, w_ref, b_ref, m_ref, Ww, ones_mask):
        cout = w_ref.shape[2]
        acc = tap_acc(x, w_ref, m_ref, Ww,
                      jnp.zeros((cout, x.shape[1]), jnp.float32),
                      ones_mask, roll_output=False)
        return jnp.maximum(acc + b_ref[0], 0.0)

    # ---- encoder: layer-1 im2col is shared across models (hoisted to the
    # wrapper), so the first conv is a single matmul here. ----
    patches = p1_ref[0]                                         # (9*Cp, Lf)
    e = jnp.maximum(jnp.dot(e1w[0], patches,
                            preferred_element_type=jnp.float32) + e1b[0], 0.0)
    e = conv3x3_relu(e, e2w, e2b, mf_ref, W, ones_f)            # (F, Lf) skip

    # ---- 2x2 max-pool: lane-rolled pairwise maxima + per-image 0/1 select ----
    a = jnp.maximum(e, pltpu.roll(e, shift=Lf - 1, axis=1))
    a = jnp.maximum(a, pltpu.roll(a, shift=Lf - W, axis=1))
    pool = jnp.concatenate(
        [jnp.dot(a[:, i * HWp:(i + 1) * HWp], S_ref[...],
                 preferred_element_type=jnp.float32) for i in range(Bt)],
        axis=1)                                                 # (F, Bt*HWq)

    # ---- bottleneck at (H/2, W/2) ----
    b = conv3x3_relu(pool, b1w, b1b, mb_ref, W2, ones_b)        # (2F, Bt*HWq)
    b = conv3x3_relu(b, b2w, b2b, mb_ref, W2, ones_b)           # (2F, Bt*HWq)

    # ---- nearest x2 upsample: per-image 0/1 matmul ----
    up = jnp.concatenate(
        [jnp.dot(b[:, i * HWq:(i + 1) * HWq], U_ref[...],
                 preferred_element_type=jnp.float32) for i in range(Bt)],
        axis=1)                                                 # (2F, Lf)

    # ---- decoder conv1: skip concat never materialized; the wide `up`
    # branch (Cin=2F > Cout=F) uses roll-after-matmul. ----
    cout = d1wu.shape[2]
    acc = jnp.zeros((cout, Lf), jnp.float32)
    acc = tap_acc(up, d1wu, mf_ref, W, acc, ones_f, roll_output=True)
    acc = tap_acc(e, d1ws, mf_ref, W, acc, ones_f, roll_output=False)
    d = jnp.maximum(acc + d1b[0], 0.0)
    d = conv3x3_relu(d, d2w, d2b, mf_ref, W, ones_f)

    # ---- 1x1 classification head (fused, lane-dense output slab) ----
    o_ref[0, 0] = (jnp.dot(hw[0], d, preferred_element_type=jnp.float32)
                   + hb[0]).astype(o_ref.dtype)


# ----------------------------------------------------------------------------
# Wrapper: one pallas_call for the whole ensemble forward
# ----------------------------------------------------------------------------
def ensemble_forward(packed, x_nchw):
    """packed: stacked per-model params (leading model axis); x: (N, C, H, W).
    Returns (M, N, num_classes, H, W) logits."""
    N, C, H, W = x_nchw.shape
    if H % 2 or W % 2:
        raise ValueError("H and W must be even (2x2 max-pool).")
    M = packed[0].shape[0]
    Cp = packed[0].shape[-1] // 9          # padded input channels
    F = packed[0].shape[1]
    K = packed[-2].shape[1]                # num_classes
    HW, HW2 = H * W, (H // 2) * (W // 2)
    HWp, HWq = _ceil_to(HW, 128), _ceil_to(HW2, 128)

    # Batch tile: amortize per-grid-step overhead over Bt images on the lanes.
    Bt = max(d for d in (8, 4, 2, 1) if N % d == 0)
    NB = N // Bt
    Lf, Lb = Bt * HWp, Bt * HWq

    # Host-side constants (built at trace time).
    mf_np = _tap_masks(H, W, HWp)
    mb_np = _tap_masks(H // 2, W // 2, HWq)
    ones_f = tuple(bool(np.all(mf_np[k] == 1.0)) for k in range(9))
    ones_b = tuple(bool(np.all(mb_np[k] == 1.0)) for k in range(9))
    mf = jnp.asarray(np.tile(mf_np, (1, 1, Bt)))       # (9, 1, Lf)
    mb = jnp.asarray(np.tile(mb_np, (1, 1, Bt)))       # (9, 1, Lb)
    S = jnp.asarray(_pool_select_matrix(H, W, HWp, HWq))
    U = jnp.asarray(_upsample_matrix(H, W, HWq, HWp))

    # Layer-1 im2col of the shared input, hoisted out of the model loop
    # (computed once per image instead of once per (model, image)).
    x = x_nchw.reshape(N, C, HW).astype(jnp.float32)
    x = jnp.pad(x, ((0, 0), (0, Cp - C), (0, HWp - HW)))
    taps = []
    for k, (dy, dx) in enumerate(_TAPS):
        taps.append(jnp.roll(x, shift=-(dy * W + dx), axis=-1)
                    * jnp.asarray(mf_np[k]))
    patches = jnp.concatenate(taps, axis=1)            # (N, 9*Cp, HWp)
    patches = (patches.reshape(NB, Bt, 9 * Cp, HWp)
               .transpose(0, 2, 1, 3).reshape(NB, 9 * Cp, Lf))

    kernel = functools.partial(_fused_unet_kernel, W=W, Bt=Bt, HWp=HWp,
                               HWq=HWq, ones_f=ones_f, ones_b=ones_b)

    def _model_spec(arr):
        zeros = (0,) * (arr.ndim - 1)
        return pl.BlockSpec((1,) + tuple(arr.shape[1:]),
                            lambda m, n, _z=zeros: (m,) + _z)

    in_specs = [
        pl.BlockSpec((1, 9 * Cp, Lf), lambda m, n: (n, 0, 0)),   # shared patches
        pl.BlockSpec((HWp, HWq), lambda m, n: (0, 0)),           # pool select
        pl.BlockSpec((HWq, HWp), lambda m, n: (0, 0)),           # upsample
        pl.BlockSpec((9, 1, Lf), lambda m, n: (0, 0, 0)),        # masks full res
        pl.BlockSpec((9, 1, Lb), lambda m, n: (0, 0, 0)),        # masks bottleneck
    ] + [_model_spec(p) for p in packed]                         # per-model weights

    flops_img = (2 * F * 9 * Cp * HWp                 # e1
                 + 2 * F * 9 * F * HWp                # e2
                 + 2 * F * HWp * HWq                  # pool select
                 + 2 * (2 * F) * 9 * F * HWq          # b1
                 + 2 * (2 * F) * 9 * (2 * F) * HWq    # b2
                 + 2 * (2 * F) * HWq * HWp            # upsample
                 + 2 * F * 9 * (2 * F) * HWp          # d1 (up)
                 + 2 * F * 9 * F * HWp                # d1 (skip)
                 + 2 * F * 9 * F * HWp                # d2
                 + 2 * K * F * HWp)                   # head
    bytes_accessed = int(sum(int(np.prod(a.shape)) * a.dtype.itemsize
                             for a in (patches, S, U, mf, mb, *packed))
                         + M * NB * K * Lf * 4)
    cost = pl.CostEstimate(flops=int(flops_img) * M * N,
                           transcendentals=0,
                           bytes_accessed=bytes_accessed)

    out = pl.pallas_call(
        kernel,
        out_shape=jax.ShapeDtypeStruct((M, NB, K, Lf), jnp.float32),
        grid=(M, NB),            # batch-tile innermost: weights stay resident
        in_specs=in_specs,
        out_specs=pl.BlockSpec((1, 1, K, Lf), lambda m, n: (m, n, 0, 0)),
        compiler_params=pltpu.CompilerParams(
            dimension_semantics=("parallel", "arbitrary")),
        cost_estimate=cost,
    )(patches, S, U, mf, mb, *packed)

    out = (out.reshape(M, NB, K, Bt, HWp).transpose(0, 1, 3, 2, 4)
           .reshape(M, N, K, HWp)[..., :HW].reshape(M, N, K, H, W))
    return out


# ----------------------------------------------------------------------------
# Parameter init (same architecture / init as before) and packing
# ----------------------------------------------------------------------------
def init_unet_params(key, in_channel, num_classes, num_filters):
    F = num_filters

    def he(k, shape, fan_in):
        return jax.random.normal(k, shape, jnp.float32) * jnp.sqrt(2.0 / fan_in)

    ks = jax.random.split(key, 7)
    return {
        "e1w1": he(ks[0], (3, 3, in_channel, F), 9 * in_channel),
        "e1b1": jnp.zeros((F,), jnp.float32),
        "e1w2": he(ks[1], (3, 3, F, F), 9 * F),
        "e1b2": jnp.zeros((F,), jnp.float32),
        "bw1": he(ks[2], (3, 3, F, 2 * F), 9 * F),
        "bb1": jnp.zeros((2 * F,), jnp.float32),
        "bw2": he(ks[3], (3, 3, 2 * F, 2 * F), 9 * 2 * F),
        "bb2": jnp.zeros((2 * F,), jnp.float32),
        "dw1": he(ks[4], (3, 3, 3 * F, F), 9 * 3 * F),
        "db1": jnp.zeros((F,), jnp.float32),
        "dw2": he(ks[5], (3, 3, F, F), 9 * F),
        "db2": jnp.zeros((F,), jnp.float32),
        "ow": he(ks[6], (F, num_classes), F),
        "ob": jnp.zeros((num_classes,), jnp.float32),
    }


def _pack_ensemble_params(params_list, in_channel):
    """Stack per-model params with a leading model axis, in kernel layout."""
    Cp = _ceil_to(in_channel, 8)
    F = params_list[0]["e1b1"].shape[0]

    def flat_l1(w):
        # layer-1 weight for the hoisted im2col: (Cout, 9*Cp) tap-major.
        _, _, cin, _ = w.shape
        if Cp > cin:
            w = jnp.pad(w, ((0, 0), (0, 0), (0, Cp - cin), (0, 0)))
        return jnp.transpose(w, (3, 0, 1, 2)).reshape(w.shape[3], 9 * Cp)

    def taps4d(w):
        # per-tap weights: (3,3,Cin,Cout) -> (9, Cout, Cin), tap = ky*3+kx.
        _, _, cin, cout = w.shape
        return jnp.transpose(w, (0, 1, 3, 2)).reshape(9, cout, cin)

    def bias(b):
        return b.reshape(-1, 1)

    packed = [
        jnp.stack([flat_l1(p["e1w1"]) for p in params_list]),           # e1w
        jnp.stack([bias(p["e1b1"]) for p in params_list]),              # e1b
        jnp.stack([taps4d(p["e1w2"]) for p in params_list]),            # e2w
        jnp.stack([bias(p["e1b2"]) for p in params_list]),              # e2b
        jnp.stack([taps4d(p["bw1"]) for p in params_list]),             # b1w
        jnp.stack([bias(p["bb1"]) for p in params_list]),               # b1b
        jnp.stack([taps4d(p["bw2"]) for p in params_list]),             # b2w
        jnp.stack([bias(p["bb2"]) for p in params_list]),               # b2b
        jnp.stack([taps4d(p["dw1"][:, :, :2 * F, :]) for p in params_list]),  # d1wu
        jnp.stack([taps4d(p["dw1"][:, :, 2 * F:, :]) for p in params_list]),  # d1ws
        jnp.stack([bias(p["db1"]) for p in params_list]),               # d1b
        jnp.stack([taps4d(p["dw2"]) for p in params_list]),             # d2w
        jnp.stack([bias(p["db2"]) for p in params_list]),               # d2b
        jnp.stack([p["ow"].T for p in params_list]),                    # hw
        jnp.stack([bias(p["ob"]) for p in params_list]),                # hb
    ]
    return packed


# ----------------------------------------------------------------------------
# Ensemble
# ----------------------------------------------------------------------------
class EnsemblePallas:
    def __init__(self, name, number_of_models, in_channel=4, num_classes=1,
                 num_filters=8, seed=0):
        if num_filters % 8 != 0:
            # TODO(synk): support widths that are not a multiple of 8 (would need
            # zero-padding every intermediate channel dim to the f32 sublane tile).
            raise ValueError("num_filters must be a multiple of 8")
        self.name = name
        self.number_of_models = number_of_models
        self.in_channel = in_channel
        self.num_classes = num_classes
        self.num_filters = num_filters
        keys = jax.random.split(jax.random.PRNGKey(seed), number_of_models)
        self.params = [init_unet_params(k, in_channel, num_classes, num_filters)
                       for k in keys]
        self.packed = _pack_ensemble_params(self.params, in_channel)
        self._fwd = jax.jit(ensemble_forward)

    def forward(self, image_nchw):
        out = self._fwd(self.packed, image_nchw)     # (M, N, K, H, W)
        return [out[i] for i in range(self.number_of_models)]


# ----------------------------------------------------------------------------
# Pure-JAX reference of the same UNet (for in-script validation)
# ----------------------------------------------------------------------------
def unet_reference(p, x_nchw):
    hp = lax.Precision.HIGHEST

    def conv(x, w, b):
        y = lax.conv_general_dilated(
            x, w, window_strides=(1, 1), padding="SAME",
            dimension_numbers=("NCHW", "HWIO", "NCHW"), precision=hp)
        return y + b[None, :, None, None]

    relu = lambda t: jnp.maximum(t, 0.0)
    e = relu(conv(x_nchw, p["e1w1"], p["e1b1"]))
    e = relu(conv(e, p["e1w2"], p["e1b2"]))
    N, C, H, W = e.shape
    pool = e.reshape(N, C, H // 2, 2, W // 2, 2).max(axis=(3, 5))
    b = relu(conv(pool, p["bw1"], p["bb1"]))
    b = relu(conv(b, p["bw2"], p["bb2"]))
    up = jnp.repeat(jnp.repeat(b, 2, axis=2), 2, axis=3)
    d = jnp.concatenate([up, e], axis=1)
    d = relu(conv(d, p["dw1"], p["db1"]))
    d = relu(conv(d, p["dw2"], p["db2"]))
    return (jnp.einsum("nchw,ck->nkhw", d, p["ow"], precision=hp)
            + p["ob"][None, :, None, None])


# ----------------------------------------------------------------------------
if __name__ == "__main__":
    N, C, H, W = 2, 4, 16, 16
    image = jax.random.normal(jax.random.PRNGKey(0), (N, C, H, W), jnp.float32)

    ens = EnsemblePallas(name="unet", number_of_models=2, in_channel=C,
                         num_classes=1, num_filters=8, seed=0)
    logits = ens.forward(image)
    logits = [jax.block_until_ready(l) for l in logits]

    assert len(logits) == ens.number_of_models
    for l in logits:
        assert l.shape == (N, 1, H, W), l.shape
        assert bool(jnp.all(jnp.isfinite(l)))

    # Validate the fused Pallas kernel against a pure-JAX lax.conv reference.
    for l, p in zip(logits, ens.params):
        ref = unet_reference(p, image)
        err = float(jnp.max(jnp.abs(l - ref)))
        assert jnp.allclose(l, ref, rtol=2e-2, atol=2e-2), err

    print("KERNEL_OK")
</pallas_src>

<mosaic_0001>
module attributes {stable_mosaic.version = 11 : i64} {
  func.func @_fused_unet_kernel(%arg0: i32, %arg1: i32, %arg2: memref<1x72x512xf32, #tpu.memory_space<vmem>>, %arg3: memref<256x128xf32, #tpu.memory_space<vmem>>, %arg4: memref<128x256xf32, #tpu.memory_space<vmem>>, %arg5: memref<9x1x512xf32, #tpu.memory_space<vmem>>, %arg6: memref<9x1x256xf32, #tpu.memory_space<vmem>>, %arg7: memref<1x8x72xf32, #tpu.memory_space<vmem>>, %arg8: memref<1x8x1xf32, #tpu.memory_space<vmem>>, %arg9: memref<1x9x8x8xf32, #tpu.memory_space<vmem>>, %arg10: memref<1x8x1xf32, #tpu.memory_space<vmem>>, %arg11: memref<1x9x16x8xf32, #tpu.memory_space<vmem>>, %arg12: memref<1x16x1xf32, #tpu.memory_space<vmem>>, %arg13: memref<1x9x16x16xf32, #tpu.memory_space<vmem>>, %arg14: memref<1x16x1xf32, #tpu.memory_space<vmem>>, %arg15: memref<1x9x8x16xf32, #tpu.memory_space<vmem>>, %arg16: memref<1x9x8x8xf32, #tpu.memory_space<vmem>>, %arg17: memref<1x8x1xf32, #tpu.memory_space<vmem>>, %arg18: memref<1x9x8x8xf32, #tpu.memory_space<vmem>>, %arg19: memref<1x8x1xf32, #tpu.memory_space<vmem>>, %arg20: memref<1x1x8xf32, #tpu.memory_space<vmem>>, %arg21: memref<1x1x1xf32, #tpu.memory_space<vmem>>, %arg22: memref<1x1x1x512xf32, #tpu.memory_space<vmem>>) attributes {dimension_semantics = [#tpu.dimension_semantics<parallel>, #tpu.dimension_semantics<arbitrary>], iteration_bounds = array<i64: 2, 1>, scalar_prefetch = 0 : i64, scratch_operands = 0 : i64, tpu.core_type = #tpu.core_type<tc>, window_params = [{transform_indices = @transform_0, window_bounds = array<i64: 1, 72, 512>}, {pipeline_mode = #tpu.pipeline_mode<synchronous>, transform_indices = @transform_1, window_bounds = array<i64: 256, 128>}, {pipeline_mode = #tpu.pipeline_mode<synchronous>, transform_indices = @transform_2, window_bounds = array<i64: 128, 256>}, {pipeline_mode = #tpu.pipeline_mode<synchronous>, transform_indices = @transform_3, window_bounds = array<i64: 9, 1, 512>}, {pipeline_mode = #tpu.pipeline_mode<synchronous>, transform_indices = @transform_4, window_bounds = array<i64: 9, 1, 256>}, {transform_indices = @transform_5, window_bounds = array<i64: 1, 8, 72>}, {transform_indices = @transform_6, window_bounds = array<i64: 1, 8, 1>}, {transform_indices = @transform_7, window_bounds = array<i64: 1, 9, 8, 8>}, {transform_indices = @transform_8, window_bounds = array<i64: 1, 8, 1>}, {transform_indices = @transform_9, window_bounds = array<i64: 1, 9, 16, 8>}, {transform_indices = @transform_10, window_bounds = array<i64: 1, 16, 1>}, {transform_indices = @transform_11, window_bounds = array<i64: 1, 9, 16, 16>}, {transform_indices = @transform_12, window_bounds = array<i64: 1, 16, 1>}, {transform_indices = @transform_13, window_bounds = array<i64: 1, 9, 8, 16>}, {transform_indices = @transform_14, window_bounds = array<i64: 1, 9, 8, 8>}, {transform_indices = @transform_15, window_bounds = array<i64: 1, 8, 1>}, {transform_indices = @transform_16, window_bounds = array<i64: 1, 9, 8, 8>}, {transform_indices = @transform_17, window_bounds = array<i64: 1, 8, 1>}, {transform_indices = @transform_18, window_bounds = array<i64: 1, 1, 8>}, {transform_indices = @transform_19, window_bounds = array<i64: 1, 1, 1>}, {transform_indices = @transform_20, window_bounds = array<i64: 1, 1, 1, 512>}]} {
    %c0 = arith.constant 0 : index
    %c0_0 = arith.constant 0 : index
    %c0_1 = arith.constant 0 : index
    %0 = vector.load %arg2[%c0, %c0_0, %c0_1] : memref<1x72x512xf32, #tpu.memory_space<vmem>>, vector<1x72x512xf32>
    %1 = vector.shape_cast %0 : vector<1x72x512xf32> to vector<72x512xf32>
    %c0_2 = arith.constant 0 : index
    %c0_3 = arith.constant 0 : index
    %c0_4 = arith.constant 0 : index
    %2 = vector.load %arg7[%c0_2, %c0_3, %c0_4] : memref<1x8x72xf32, #tpu.memory_space<vmem>>, vector<1x8x72xf32>
    %3 = vector.shape_cast %2 : vector<1x8x72xf32> to vector<8x72xf32>
    %cst = arith.constant dense<0.000000e+00> : vector<8x512xf32>
    %4 = tpu.matmul %3, %1, %cst {dimension_numbers = #tpu.dot_dimension_numbers<[1], [0], [0], [1], [0, 0, 1, 1], [], []>} : vector<8x72xf32>, vector<72x512xf32>, vector<8x512xf32> -> vector<8x512xf32>
    %c0_5 = arith.constant 0 : index
    %c0_6 = arith.constant 0 : index
    %c0_7 = arith.constant 0 : index
    %5 = vector.load %arg8[%c0_5, %c0_6, %c0_7] : memref<1x8x1xf32, #tpu.memory_space<vmem>>, vector<1x8x1xf32>
    %6 = vector.shape_cast %5 : vector<1x8x1xf32> to vector<8x1xf32>
    %7 = vector.broadcast %6 : vector<8x1xf32> to vector<8x512xf32>
    %8 = arith.addf %4, %7 : vector<8x512xf32>
    %cst_8 = arith.constant 0.000000e+00 : f32
    %9 = vector.broadcast %cst_8 : f32 to vector<8x512xf32>
    %10 = arith.maximumf %8, %9 : vector<8x512xf32>
    %cst_9 = arith.constant 0.000000e+00 : f32
    %11 = vector.broadcast %cst_9 : f32 to vector<8x512xf32>
    %c17_i32 = arith.constant 17 : i32
    %12 = tpu.dynamic_rotate %10 by %c17_i32 dim 1 : vector<8x512xf32>, i32 -> vector<8x512xf32>
    %c0_10 = arith.constant 0 : index
    %c0_11 = arith.constant 0 : index
    %c0_12 = arith.constant 0 : index
    %13 = vector.load %arg5[%c0_10, %c0_11, %c0_12] : memref<9x1x512xf32, #tpu.memory_space<vmem>>, vector<1x1x512xf32>
    %14 = vector.shape_cast %13 : vector<1x1x512xf32> to vector<1x512xf32>
    %15 = vector.broadcast %14 : vector<1x512xf32> to vector<8x512xf32>
    %16 = arith.mulf %12, %15 : vector<8x512xf32>
    %c0_13 = arith.constant 0 : index
    %c0_14 = arith.constant 0 : index
    %c0_15 = arith.constant 0 : index
    %c0_16 = arith.constant 0 : index
    %17 = vector.load %arg9[%c0_13, %c0_14, %c0_15, %c0_16] : memref<1x9x8x8xf32, #tpu.memory_space<vmem>>, vector<1x1x8x8xf32>
    %18 = vector.shape_cast %17 : vector<1x1x8x8xf32> to vector<8x8xf32>
    %cst_17 = arith.constant dense<0.000000e+00> : vector<8x512xf32>
    %19 = tpu.matmul %18, %16, %cst_17 {dimension_numbers = #tpu.dot_dimension_numbers<[1], [0], [0], [1], [0, 0, 1, 1], [], []>} : vector<8x8xf32>, vector<8x512xf32>, vector<8x512xf32> -> vector<8x512xf32>
    %20 = arith.addf %11, %19 : vector<8x512xf32>
    %c16_i32 = arith.constant 16 : i32
    %21 = tpu.dynamic_rotate %10 by %c16_i32 dim 1 : vector<8x512xf32>, i32 -> vector<8x512xf32>
    %c1 = arith.constant 1 : index
    %c0_18 = arith.constant 0 : index
    %c0_19 = arith.constant 0 : index
    %22 = vector.load %arg5[%c1, %c0_18, %c0_19] : memref<9x1x512xf32, #tpu.memory_space<vmem>>, vector<1x1x512xf32>
    %23 = vector.shape_cast %22 : vector<1x1x512xf32> to vector<1x512xf32>
    %24 = vector.broadcast %23 : vector<1x512xf32> to vector<8x512xf32>
    %25 = arith.mulf %21, %24 : vector<8x512xf32>
    %c0_20 = arith.constant 0 : index
    %c1_21 = arith.constant 1 : index
    %c0_22 = arith.constant 0 : index
    %c0_23 = arith.constant 0 : index
    %26 = vector.load %arg9[%c0_20, %c1_21, %c0_22, %c0_23] : memref<1x9x8x8xf32, #tpu.memory_space<vmem>>, vector<1x1x8x8xf32>
    %27 = vector.shape_cast %26 : vector<1x1x8x8xf32> to vector<8x8xf32>
    %cst_24 = arith.constant dense<0.000000e+00> : vector<8x512xf32>
    %28 = tpu.matmul %27, %25, %cst_24 {dimension_numbers = #tpu.dot_dimension_numbers<[1], [0], [0], [1], [0, 0, 1, 1], [], []>} : vector<8x8xf32>, vector<8x512xf32>, vector<8x512xf32> -> vector<8x512xf32>
    %29 = arith.addf %20, %28 : vector<8x512xf32>
    %c15_i32 = arith.constant 15 : i32
    %30 = tpu.dynamic_rotate %10 by %c15_i32 dim 1 : vector<8x512xf32>, i32 -> vector<8x512xf32>
    %c2 = arith.constant 2 : index
    %c0_25 = arith.constant 0 : index
    %c0_26 = arith.constant 0 : index
    %31 = vector.load %arg5[%c2, %c0_25, %c0_26] : memref<9x1x512xf32, #tpu.memory_space<vmem>>, vector<1x1x512xf32>
    %32 = vector.shape_cast %31 : vector<1x1x512xf32> to vector<1x512xf32>
    %33 = vector.broadcast %32 : vector<1x512xf32> to vector<8x512xf32>
    %34 = arith.mulf %30, %33 : vector<8x512xf32>
    %c0_27 = arith.constant 0 : index
    %c2_28 = arith.constant 2 : index
    %c0_29 = arith.constant 0 : index
    %c0_30 = arith.constant 0 : index
    %35 = vector.load %arg9[%c0_27, %c2_28, %c0_29, %c0_30] : memref<1x9x8x8xf32, #tpu.memory_space<vmem>>, vector<1x1x8x8xf32>
    %36 = vector.shape_cast %35 : vector<1x1x8x8xf32> to vector<8x8xf32>
    %cst_31 = arith.constant dense<0.000000e+00> : vector<8x512xf32>
    %37 = tpu.matmul %36, %34, %cst_31 {dimension_numbers = #tpu.dot_dimension_numbers<[1], [0], [0], [1], [0, 0, 1, 1], [], []>} : vector<8x8xf32>, vector<8x512xf32>, vector<8x512xf32> -> vector<8x512xf32>
    %38 = arith.addf %29, %37 : vector<8x512xf32>
    %c1_i32 = arith.constant 1 : i32
    %39 = tpu.dynamic_rotate %10 by %c1_i32 dim 1 : vector<8x512xf32>, i32 -> vector<8x512xf32>
    %c3 = arith.constant 3 : index
    %c0_32 = arith.constant 0 : index
    %c0_33 = arith.constant 0 : index
    %40 = vector.load %arg5[%c3, %c0_32, %c0_33] : memref<9x1x512xf32, #tpu.memory_space<vmem>>, vector<1x1x512xf32>
    %41 = vector.shape_cast %40 : vector<1x1x512xf32> to vector<1x512xf32>
    %42 = vector.broadcast %41 : vector<1x512xf32> to vector<8x512xf32>
    %43 = arith.mulf %39, %42 : vector<8x512xf32>
    %c0_34 = arith.constant 0 : index
    %c3_35 = arith.constant 3 : index
    %c0_36 = arith.constant 0 : index
    %c0_37 = arith.constant 0 : index
    %44 = vector.load %arg9[%c0_34, %c3_35, %c0_36, %c0_37] : memref<1x9x8x8xf32, #tpu.memory_space<vmem>>, vector<1x1x8x8xf32>
    %45 = vector.shape_cast %44 : vector<1x1x8x8xf32> to vector<8x8xf32>
    %cst_38 = arith.constant dense<0.000000e+00> : vector<8x512xf32>
    %46 = tpu.matmul %45, %43, %cst_38 {dimension_numbers = #tpu.dot_dimension_numbers<[1], [0], [0], [1], [0, 0, 1, 1], [], []>} : vector<8x8xf32>, vector<8x512xf32>, vector<8x512xf32> -> vector<8x512xf32>
    %47 = arith.addf %38, %46 : vector<8x512xf32>
    %c0_39 = arith.constant 0 : index
    %c4 = arith.constant 4 : index
    %c0_40 = arith.constant 0 : index
    %c0_41 = arith.constant 0 : index
    %48 = vector.load %arg9[%c0_39, %c4, %c0_40, %c0_41] : memref<1x9x8x8xf32, #tpu.memory_space<vmem>>, vector<1x1x8x8xf32>
    %49 = vector.shape_cast %48 : vector<1x1x8x8xf32> to vector<8x8xf32>
    %cst_42 = arith.constant dense<0.000000e+00> : vector<8x512xf32>
    %50 = tpu.matmul %49, %10, %cst_42 {dimension_numbers = #tpu.dot_dimension_numbers<[1], [0], [0], [1], [0, 0, 1, 1], [], []>} : vector<8x8xf32>, vector<8x512xf32>, vector<8x512xf32> -> vector<8x512xf32>
    %51 = arith.addf %47, %50 : vector<8x512xf32>
    %c511_i32 = arith.constant 511 : i32
    %52 = tpu.dynamic_rotate %10 by %c511_i32 dim 1 : vector<8x512xf32>, i32 -> vector<8x512xf32>
    %c5 = arith.constant 5 : index
    %c0_43 = arith.constant 0 : index
    %c0_44 = arith.constant 0 : index
    %53 = vector.load %arg5[%c5, %c0_43, %c0_44] : memref<9x1x512xf32, #tpu.memory_space<vmem>>, vector<1x1x512xf32>
    %54 = vector.shape_cast %53 : vector<1x1x512xf32> to vector<1x512xf32>
    %55 = vector.broadcast %54 : vector<1x512xf32> to vector<8x512xf32>
    %56 = arith.mulf %52, %55 : vector<8x512xf32>
    %c0_45 = arith.constant 0 : index
    %c5_46 = arith.constant 5 : index
    %c0_47 = arith.constant 0 : index
    %c0_48 = arith.constant 0 : index
    %57 = vector.load %arg9[%c0_45, %c5_46, %c0_47, %c0_48] : memref<1x9x8x8xf32, #tpu.memory_space<vmem>>, vector<1x1x8x8xf32>
    %58 = vector.shape_cast %57 : vector<1x1x8x8xf32> to vector<8x8xf32>
    %cst_49 = arith.constant dense<0.000000e+00> : vector<8x512xf32>
    %59 = tpu.matmul %58, %56, %cst_49 {dimension_numbers = #tpu.dot_dimension_numbers<[1], [0], [0], [1], [0, 0, 1, 1], [], []>} : vector<8x8xf32>, vector<8x512xf32>, vector<8x512xf32> -> vector<8x512xf32>
    %60 = arith.addf %51, %59 : vector<8x512xf32>
    %c497_i32 = arith.constant 497 : i32
    %61 = tpu.dynamic_rotate %10 by %c497_i32 dim 1 : vector<8x512xf32>, i32 -> vector<8x512xf32>
    %c6 = arith.constant 6 : index
    %c0_50 = arith.constant 0 : index
    %c0_51 = arith.constant 0 : index
    %62 = vector.load %arg5[%c6, %c0_50, %c0_51] : memref<9x1x512xf32, #tpu.memory_space<vmem>>, vector<1x1x512xf32>
    %63 = vector.shape_cast %62 : vector<1x1x512xf32> to vector<1x512xf32>
    %64 = vector.broadcast %63 : vector<1x512xf32> to vector<8x512xf32>
    %65 = arith.mulf %61, %64 : vector<8x512xf32>
    %c0_52 = arith.constant 0 : index
    %c6_53 = arith.constant 6 : index
    %c0_54 = arith.constant 0 : index
    %c0_55 = arith.constant 0 : index
    %66 = vector.load %arg9[%c0_52, %c6_53, %c0_54, %c0_55] : memref<1x9x8x8xf32, #tpu.memory_space<vmem>>, vector<1x1x8x8xf32>
    %67 = vector.shape_cast %66 : vector<1x1x8x8xf32> to vector<8x8xf32>
    %cst_56 = arith.constant dense<0.000000e+00> : vector<8x512xf32>
    %68 = tpu.matmul %67, %65, %cst_56 {dimension_numbers = #tpu.dot_dimension_numbers<[1], [0], [0], [1], [0, 0, 1, 1], [], []>} : vector<8x8xf32>, vector<8x512xf32>, vector<8x512xf32> -> vector<8x512xf32>
    %69 = arith.addf %60, %68 : vector<8x512xf32>
    %c496_i32 = arith.constant 496 : i32
    %70 = tpu.dynamic_rotate %10 by %c496_i32 dim 1 : vector<8x512xf32>, i32 -> vector<8x512xf32>
    %c7 = arith.constant 7 : index
    %c0_57 = arith.constant 0 : index
    %c0_58 = arith.constant 0 : index
    %71 = vector.load %arg5[%c7, %c0_57, %c0_58] : memref<9x1x512xf32, #tpu.memory_space<vmem>>, vector<1x1x512xf32>
    %72 = vector.shape_cast %71 : vector<1x1x512xf32> to vector<1x512xf32>
    %73 = vector.broadcast %72 : vector<1x512xf32> to vector<8x512xf32>
    %74 = arith.mulf %70, %73 : vector<8x512xf32>
    %c0_59 = arith.constant 0 : index
    %c7_60 = arith.constant 7 : index
    %c0_61 = arith.constant 0 : index
    %c0_62 = arith.constant 0 : index
    %75 = vector.load %arg9[%c0_59, %c7_60, %c0_61, %c0_62] : memref<1x9x8x8xf32, #tpu.memory_space<vmem>>, vector<1x1x8x8xf32>
    %76 = vector.shape_cast %75 : vector<1x1x8x8xf32> to vector<8x8xf32>
    %cst_63 = arith.constant dense<0.000000e+00> : vector<8x512xf32>
    %77 = tpu.matmul %76, %74, %cst_63 {dimension_numbers = #tpu.dot_dimension_numbers<[1], [0], [0], [1], [0, 0, 1, 1], [], []>} : vector<8x8xf32>, vector<8x512xf32>, vector<8x512xf32> -> vector<8x512xf32>
    %78 = arith.addf %69, %77 : vector<8x512xf32>
    %c495_i32 = arith.constant 495 : i32
    %79 = tpu.dynamic_rotate %10 by %c495_i32 dim 1 : vector<8x512xf32>, i32 -> vector<8x512xf32>
    %c8 = arith.constant 8 : index
    %c0_64 = arith.constant 0 : index
    %c0_65 = arith.constant 0 : index
    %80 = vector.load %arg5[%c8, %c0_64, %c0_65] : memref<9x1x512xf32, #tpu.memory_space<vmem>>, vector<1x1x512xf32>
    %81 = vector.shape_cast %80 : vector<1x1x512xf32> to vector<1x512xf32>
    %82 = vector.broadcast %81 : vector<1x512xf32> to vector<8x512xf32>
    %83 = arith.mulf %79, %82 : vector<8x512xf32>
    %c0_66 = arith.constant 0 : index
    %c8_67 = arith.constant 8 : index
    %c0_68 = arith.constant 0 : index
    %c0_69 = arith.constant 0 : index
    %84 = vector.load %arg9[%c0_66, %c8_67, %c0_68, %c0_69] : memref<1x9x8x8xf32, #tpu.memory_space<vmem>>, vector<1x1x8x8xf32>
    %85 = vector.shape_cast %84 : vector<1x1x8x8xf32> to vector<8x8xf32>
    %cst_70 = arith.constant dense<0.000000e+00> : vector<8x512xf32>
    %86 = tpu.matmul %85, %83, %cst_70 {dimension_numbers = #tpu.dot_dimension_numbers<[1], [0], [0], [1], [0, 0, 1, 1], [], []>} : vector<8x8xf32>, vector<8x512xf32>, vector<8x512xf32> -> vector<8x512xf32>
    %87 = arith.addf %78, %86 : vector<8x512xf32>
    %c0_71 = arith.constant 0 : index
    %c0_72 = arith.constant 0 : index
    %c0_73 = arith.constant 0 : index
    %88 = vector.load %arg10[%c0_71, %c0_72, %c0_73] : memref<1x8x1xf32, #tpu.memory_space<vmem>>, vector<1x8x1xf32>
    %89 = vector.shape_cast %88 : vector<1x8x1xf32> to vector<8x1xf32>
    %90 = vector.broadcast %89 : vector<8x1xf32> to vector<8x512xf32>
    %91 = arith.addf %87, %90 : vector<8x512xf32>
    %cst_74 = arith.constant 0.000000e+00 : f32
    %92 = vector.broadcast %cst_74 : f32 to vector<8x512xf32>
    %93 = arith.maximumf %91, %92 : vector<8x512xf32>
    %c511_i32_75 = arith.constant 511 : i32
    %94 = tpu.dynamic_rotate %93 by %c511_i32_75 dim 1 : vector<8x512xf32>, i32 -> vector<8x512xf32>
    %95 = arith.maximumf %93, %94 : vector<8x512xf32>
    %c496_i32_76 = arith.constant 496 : i32
    %96 = tpu.dynamic_rotate %95 by %c496_i32_76 dim 1 : vector<8x512xf32>, i32 -> vector<8x512xf32>
    %97 = arith.maximumf %95, %96 : vector<8x512xf32>
    %98 = vector.extract_strided_slice %97 {offsets = [0, 0], sizes = [8, 256], strides = [1, 1]} : vector<8x512xf32> to vector<8x256xf32>
    %c0_77 = arith.constant 0 : index
    %c0_78 = arith.constant 0 : index
    %99 = vector.load %arg3[%c0_77, %c0_78] : memref<256x128xf32, #tpu.memory_space<vmem>>, vector<256x128xf32>
    %cst_79 = arith.constant dense<0.000000e+00> : vector<8x128xf32>
    %100 = tpu.matmul %98, %99, %cst_79 {dimension_numbers = #tpu.dot_dimension_numbers<[1], [0], [0], [1], [0, 0, 1, 1], [], []>} : vector<8x256xf32>, vector<256x128xf32>, vector<8x128xf32> -> vector<8x128xf32>
    %101 = vector.extract_strided_slice %97 {offsets = [0, 256], sizes = [8, 256], strides = [1, 1]} : vector<8x512xf32> to vector<8x256xf32>
    %c0_80 = arith.constant 0 : index
    %c0_81 = arith.constant 0 : index
    %102 = vector.load %arg3[%c0_80, %c0_81] : memref<256x128xf32, #tpu.memory_space<vmem>>, vector<256x128xf32>
    %cst_82 = arith.constant dense<0.000000e+00> : vector<8x128xf32>
    %103 = tpu.matmul %101, %102, %cst_82 {dimension_numbers = #tpu.dot_dimension_numbers<[1], [0], [0], [1], [0, 0, 1, 1], [], []>} : vector<8x256xf32>, vector<256x128xf32>, vector<8x128xf32> -> vector<8x128xf32>
    %104 = tpu.concatenate %100, %103 in 1 : vector<8x128xf32>, vector<8x128xf32> -> vector<8x256xf32>
    %cst_83 = arith.constant 0.000000e+00 : f32
    %105 = vector.broadcast %cst_83 : f32 to vector<16x256xf32>
    %c9_i32 = arith.constant 9 : i32
    %106 = tpu.dynamic_rotate %104 by %c9_i32 dim 1 : vector<8x256xf32>, i32 -> vector<8x256xf32>
    %c0_84 = arith.constant 0 : index
    %c0_85 = arith.constant 0 : index
    %c0_86 = arith.constant 0 : index
    %107 = vector.load %arg6[%c0_84, %c0_85, %c0_86] : memref<9x1x256xf32, #tpu.memory_space<vmem>>, vector<1x1x256xf32>
    %108 = vector.shape_cast %107 : vector<1x1x256xf32> to vector<1x256xf32>
    %109 = vector.broadcast %108 : vector<1x256xf32> to vector<8x256xf32>
    %110 = arith.mulf %106, %109 : vector<8x256xf32>
    %c0_87 = arith.constant 0 : index
    %c0_88 = arith.constant 0 : index
    %c0_89 = arith.constant 0 : index
    %c0_90 = arith.constant 0 : index
    %111 = vector.load %arg11[%c0_87, %c0_88, %c0_89, %c0_90] : memref<1x9x16x8xf32, #tpu.memory_space<vmem>>, vector<1x1x16x8xf32>
    %112 = vector.shape_cast %111 : vector<1x1x16x8xf32> to vector<16x8xf32>
    %cst_91 = arith.constant dense<0.000000e+00> : vector<16x256xf32>
    %113 = tpu.matmul %112, %110, %cst_91 {dimension_numbers = #tpu.dot_dimension_numbers<[1], [0], [0], [1], [0, 0, 1, 1], [], []>} : vector<16x8xf32>, vector<8x256xf32>, vector<16x256xf32> -> vector<16x256xf32>
    %114 = arith.addf %105, %113 : vector<16x256xf32>
    %c8_i32 = arith.constant 8 : i32
    %115 = tpu.dynamic_rotate %104 by %c8_i32 dim 1 : vector<8x256xf32>, i32 -> vector<8x256xf32>
    %c1_92 = arith.constant 1 : index
    %c0_93 = arith.constant 0 : index
    %c0_94 = arith.constant 0 : index
    %116 = vector.load %arg6[%c1_92, %c0_93, %c0_94] : memref<9x1x256xf32, #tpu.memory_space<vmem>>, vector<1x1x256xf32>
    %117 = vector.shape_cast %116 : vector<1x1x256xf32> to vector<1x256xf32>
    %118 = vector.broadcast %117 : vector<1x256xf32> to vector<8x256xf32>
    %119 = arith.mulf %115, %118 : vector<8x256xf32>
    %c0_95 = arith.constant 0 : index
    %c1_96 = arith.constant 1 : index
    %c0_97 = arith.constant 0 : index
    %c0_98 = arith.constant 0 : index
    %120 = vector.load %arg11[%c0_95, %c1_96, %c0_97, %c0_98] : memref<1x9x16x8xf32, #tpu.memory_space<vmem>>, vector<1x1x16x8xf32>
    %121 = vector.shape_cast %120 : vector<1x1x16x8xf32> to vector<16x8xf32>
    %cst_99 = arith.constant dense<0.000000e+00> : vector<16x256xf32>
    %122 = tpu.matmul %121, %119, %cst_99 {dimension_numbers = #tpu.dot_dimension_numbers<[1], [0], [0], [1], [0, 0, 1, 1], [], []>} : vector<16x8xf32>, vector<8x256xf32>, vector<16x256xf32> -> vector<16x256xf32>
    %123 = arith.addf %114, %122 : vector<16x256xf32>
    %c7_i32 = arith.constant 7 : i32
    %124 = tpu.dynamic_rotate %104 by %c7_i32 dim 1 : vector<8x256xf32>, i32 -> vector<8x256xf32>
    %c2_100 = arith.constant 2 : index
    %c0_101 = arith.constant 0 : index
    %c0_102 = arith.constant 0 : index
    %125 = vector.load %arg6[%c2_100, %c0_101, %c0_102] : memref<9x1x256xf32, #tpu.memory_space<vmem>>, vector<1x1x256xf32>
    %126 = vector.shape_cast %125 : vector<1x1x256xf32> to vector<1x256xf32>
    %127 = vector.broadcast %126 : vector<1x256xf32> to vector<8x256xf32>
    %128 = arith.mulf %124, %127 : vector<8x256xf32>
    %c0_103 = arith.constant 0 : index
    %c2_104 = arith.constant 2 : index
    %c0_105 = arith.constant 0 : index
    %c0_106 = arith.constant 0 : index
    %129 = vector.load %arg11[%c0_103, %c2_104, %c0_105, %c0_106] : memref<1x9x16x8xf32, #tpu.memory_space<vmem>>, vector<1x1x16x8xf32>
    %130 = vector.shape_cast %129 : vector<1x1x16x8xf32> to vector<16x8xf32>
    %cst_107 = arith.constant dense<0.000000e+00> : vector<16x256xf32>
    %131 = tpu.matmul %130, %128, %cst_107 {dimension_numbers = #tpu.dot_dimension_numbers<[1], [0], [0], [1], [0, 0, 1, 1], [], []>} : vector<16x8xf32>, vector<8x256xf32>, vector<16x256xf32> -> vector<16x256xf32>
    %132 = arith.addf %123, %131 : vector<16x256xf32>
    %c1_i32_108 = arith.constant 1 : i32
    %133 = tpu.dynamic_rotate %104 by %c1_i32_108 dim 1 : vector<8x256xf32>, i32 -> vector<8x256xf32>
    %c3_109 = arith.constant 3 : index
    %c0_110 = arith.constant 0 : index
    %c0_111 = arith.constant 0 : index
    %134 = vector.load %arg6[%c3_109, %c0_110, %c0_111] : memref<9x1x256xf32, #tpu.memory_space<vmem>>, vector<1x1x256xf32>
    %135 = vector.shape_cast %134 : vector<1x1x256xf32> to vector<1x256xf32>
    %136 = vector.broadcast %135 : vector<1x256xf32> to vector<8x256xf32>
    %137 = arith.mulf %133, %136 : vector<8x256xf32>
    %c0_112 = arith.constant 0 : index
    %c3_113 = arith.constant 3 : index
    %c0_114 = arith.constant 0 : index
    %c0_115 = arith.constant 0 : index
    %138 = vector.load %arg11[%c0_112, %c3_113, %c0_114, %c0_115] : memref<1x9x16x8xf32, #tpu.memory_space<vmem>>, vector<1x1x16x8xf32>
    %139 = vector.shape_cast %138 : vector<1x1x16x8xf32> to vector<16x8xf32>
    %cst_116 = arith.constant dense<0.000000e+00> : vector<16x256xf32>
    %140 = tpu.matmul %139, %137, %cst_116 {dimension_numbers = #tpu.dot_dimension_numbers<[1], [0], [0], [1], [0, 0, 1, 1], [], []>} : vector<16x8xf32>, vector<8x256xf32>, vector<16x256xf32> -> vector<16x256xf32>
    %141 = arith.addf %132, %140 : vector<16x256xf32>
    %c4_117 = arith.constant 4 : index
    %c0_118 = arith.constant 0 : index
    %c0_119 = arith.constant 0 : index
    %142 = vector.load %arg6[%c4_117, %c0_118, %c0_119] : memref<9x1x256xf32, #tpu.memory_space<vmem>>, vector<1x1x256xf32>
    %143 = vector.shape_cast %142 : vector<1x1x256xf32> to vector<1x256xf32>
    %144 = vector.broadcast %143 : vector<1x256xf32> to vector<8x256xf32>
    %145 = arith.mulf %104, %144 : vector<8x256xf32>
    %c0_120 = arith.constant 0 : index
    %c4_121 = arith.constant 4 : index
    %c0_122 = arith.constant 0 : index
    %c0_123 = arith.constant 0 : index
    %146 = vector.load %arg11[%c0_120, %c4_121, %c0_122, %c0_123] : memref<1x9x16x8xf32, #tpu.memory_space<vmem>>, vector<1x1x16x8xf32>
    %147 = vector.shape_cast %146 : vector<1x1x16x8xf32> to vector<16x8xf32>
    %cst_124 = arith.constant dense<0.000000e+00> : vector<16x256xf32>
    %148 = tpu.matmul %147, %145, %cst_124 {dimension_numbers = #tpu.dot_dimension_numbers<[1], [0], [0], [1], [0, 0, 1, 1], [], []>} : vector<16x8xf32>, vector<8x256xf32>, vector<16x256xf32> -> vector<16x256xf32>
    %149 = arith.addf %141, %148 : vector<16x256xf32>
    %c255_i32 = arith.constant 255 : i32
    %150 = tpu.dynamic_rotate %104 by %c255_i32 dim 1 : vector<8x256xf32>, i32 -> vector<8x256xf32>
    %c5_125 = arith.constant 5 : index
    %c0_126 = arith.constant 0 : index
    %c0_127 = arith.constant 0 : index
    %151 = vector.load %arg6[%c5_125, %c0_126, %c0_127] : memref<9x1x256xf32, #tpu.memory_space<vmem>>, vector<1x1x256xf32>
    %152 = vector.shape_cast %151 : vector<1x1x256xf32> to vector<1x256xf32>
    %153 = vector.broadcast %152 : vector<1x256xf32> to vector<8x256xf32>
    %154 = arith.mulf %150, %153 : vector<8x256xf32>
    %c0_128 = arith.constant 0 : index
    %c5_129 = arith.constant 5 : index
    %c0_130 = arith.constant 0 : index
    %c0_131 = arith.constant 0 : index
    %155 = vector.load %arg11[%c0_128, %c5_129, %c0_130, %c0_131] : memref<1x9x16x8xf32, #tpu.memory_space<vmem>>, vector<1x1x16x8xf32>
    %156 = vector.shape_cast %155 : vector<1x1x16x8xf32> to vector<16x8xf32>
    %cst_132 = arith.constant dense<0.000000e+00> : vector<16x256xf32>
    %157 = tpu.matmul %156, %154, %cst_132 {dimension_numbers = #tpu.dot_dimension_numbers<[1], [0], [0], [1], [0, 0, 1, 1], [], []>} : vector<16x8xf32>, vector<8x256xf32>, vector<16x256xf32> -> vector<16x256xf32>
    %158 = arith.addf %149, %157 : vector<16x256xf32>
    %c249_i32 = arith.constant 249 : i32
    %159 = tpu.dynamic_rotate %104 by %c249_i32 dim 1 : vector<8x256xf32>, i32 -> vector<8x256xf32>
    %c6_133 = arith.constant 6 : index
    %c0_134 = arith.constant 0 : index
    %c0_135 = arith.constant 0 : index
    %160 = vector.load %arg6[%c6_133, %c0_134, %c0_135] : memref<9x1x256xf32, #tpu.memory_space<vmem>>, vector<1x1x256xf32>
    %161 = vector.shape_cast %160 : vector<1x1x256xf32> to vector<1x256xf32>
    %162 = vector.broadcast %161 : vector<1x256xf32> to vector<8x256xf32>
    %163 = arith.mulf %159, %162 : vector<8x256xf32>
    %c0_136 = arith.constant 0 : index
    %c6_137 = arith.constant 6 : index
    %c0_138 = arith.constant 0 : index
    %c0_139 = arith.constant 0 : index
    %164 = vector.load %arg11[%c0_136, %c6_137, %c0_138, %c0_139] : memref<1x9x16x8xf32, #tpu.memory_space<vmem>>, vector<1x1x16x8xf32>
    %165 = vector.shape_cast %164 : vector<1x1x16x8xf32> to vector<16x8xf32>
    %cst_140 = arith.constant dense<0.000000e+00> : vector<16x256xf32>
    %166 = tpu.matmul %165, %163, %cst_140 {dimension_numbers = #tpu.dot_dimension_numbers<[1], [0], [0], [1], [0, 0, 1, 1], [], []>} : vector<16x8xf32>, vector<8x256xf32>, vector<16x256xf32> -> vector<16x256xf32>
    %167 = arith.addf %158, %166 : vector<16x256xf32>
    %c248_i32 = arith.constant 248 : i32
    %168 = tpu.dynamic_rotate %104 by %c248_i32 dim 1 : vector<8x256xf32>, i32 -> vector<8x256xf32>
    %c7_141 = arith.constant 7 : index
    %c0_142 = arith.constant 0 : index
    %c0_143 = arith.constant 0 : index
    %169 = vector.load %arg6[%c7_141, %c0_142, %c0_143] : memref<9x1x256xf32, #tpu.memory_space<vmem>>, vector<1x1x256xf32>
    %170 = vector.shape_cast %169 : vector<1x1x256xf32> to vector<1x256xf32>
    %171 = vector.broadcast %170 : vector<1x256xf32> to vector<8x256xf32>
    %172 = arith.mulf %168, %171 : vector<8x256xf32>
    %c0_144 = arith.constant 0 : index
    %c7_145 = arith.constant 7 : index
    %c0_146 = arith.constant 0 : index
    %c0_147 = arith.constant 0 : index
    %173 = vector.load %arg11[%c0_144, %c7_145, %c0_146, %c0_147] : memref<1x9x16x8xf32, #tpu.memory_space<vmem>>, vector<1x1x16x8xf32>
    %174 = vector.shape_cast %173 : vector<1x1x16x8xf32> to vector<16x8xf32>
    %cst_148 = arith.constant dense<0.000000e+00> : vector<16x256xf32>
    %175 = tpu.matmul %174, %172, %cst_148 {dimension_numbers = #tpu.dot_dimension_numbers<[1], [0], [0], [1], [0, 0, 1, 1], [], []>} : vector<16x8xf32>, vector<8x256xf32>, vector<16x256xf32> -> vector<16x256xf32>
    %176 = arith.addf %167, %175 : vector<16x256xf32>
    %c247_i32 = arith.constant 247 : i32
    %177 = tpu.dynamic_rotate %104 by %c247_i32 dim 1 : vector<8x256xf32>, i32 -> vector<8x256xf32>
    %c8_149 = arith.constant 8 : index
    %c0_150 = arith.constant 0 : index
    %c0_151 = arith.constant 0 : index
    %178 = vector.load %arg6[%c8_149, %c0_150, %c0_151] : memref<9x1x256xf32, #tpu.memory_space<vmem>>, vector<1x1x256xf32>
    %179 = vector.shape_cast %178 : vector<1x1x256xf32> to vector<1x256xf32>
    %180 = vector.broadcast %179 : vector<1x256xf32> to vector<8x256xf32>
    %181 = arith.mulf %177, %180 : vector<8x256xf32>
    %c0_152 = arith.constant 0 : index
    %c8_153 = arith.constant 8 : index
    %c0_154 = arith.constant 0 : index
    %c0_155 = arith.constant 0 : index
    %182 = vector.load %arg11[%c0_152, %c8_153, %c0_154, %c0_155] : memref<1x9x16x8xf32, #tpu.memory_space<vmem>>, vector<1x1x16x8xf32>
    %183 = vector.shape_cast %182 : vector<1x1x16x8xf32> to vector<16x8xf32>
    %cst_156 = arith.constant dense<0.000000e+00> : vector<16x256xf32>
    %184 = tpu.matmul %183, %181, %cst_156 {dimension_numbers = #tpu.dot_dimension_numbers<[1], [0], [0], [1], [0, 0, 1, 1], [], []>} : vector<16x8xf32>, vector<8x256xf32>, vector<16x256xf32> -> vector<16x256xf32>
    %185 = arith.addf %176, %184 : vector<16x256xf32>
    %c0_157 = arith.constant 0 : index
    %c0_158 = arith.constant 0 : index
    %c0_159 = arith.constant 0 : index
    %186 = vector.load %arg12[%c0_157, %c0_158, %c0_159] : memref<1x16x1xf32, #tpu.memory_space<vmem>>, vector<1x16x1xf32>
    %187 = vector.shape_cast %186 : vector<1x16x1xf32> to vector<16x1xf32>
    %188 = vector.broadcast %187 : vector<16x1xf32> to vector<16x256xf32>
    %189 = arith.addf %185, %188 : vector<16x256xf32>
    %cst_160 = arith.constant 0.000000e+00 : f32
    %190 = vector.broadcast %cst_160 : f32 to vector<16x256xf32>
    %191 = arith.maximumf %189, %190 : vector<16x256xf32>
    %cst_161 = arith.constant 0.000000e+00 : f32
    %192 = vector.broadcast %cst_161 : f32 to vector<16x256xf32>
    %c9_i32_162 = arith.constant 9 : i32
    %193 = tpu.dynamic_rotate %191 by %c9_i32_162 dim 1 : vector<16x256xf32>, i32 -> vector<16x256xf32>
    %c0_163 = arith.constant 0 : index
    %c0_164 = arith.constant 0 : index
    %c0_165 = arith.constant 0 : index
    %194 = vector.load %arg6[%c0_163, %c0_164, %c0_165] : memref<9x1x256xf32, #tpu.memory_space<vmem>>, vector<1x1x256xf32>
    %195 = vector.shape_cast %194 : vector<1x1x256xf32> to vector<1x256xf32>
    %196 = vector.broadcast %195 : vector<1x256xf32> to vector<16x256xf32>
    %197 = arith.mulf %193, %196 : vector<16x256xf32>
    %c0_166 = arith.constant 0 : index
    %c0_167 = arith.constant 0 : index
    %c0_168 = arith.constant 0 : index
    %c0_169 = arith.constant 0 : index
    %198 = vector.load %arg13[%c0_166, %c0_167, %c0_168, %c0_169] : memref<1x9x16x16xf32, #tpu.memory_space<vmem>>, vector<1x1x16x16xf32>
    %199 = vector.shape_cast %198 : vector<1x1x16x16xf32> to vector<16x16xf32>
    %cst_170 = arith.constant dense<0.000000e+00> : vector<16x256xf32>
    %200 = tpu.matmul %199, %197, %cst_170 {dimension_numbers = #tpu.dot_dimension_numbers<[1], [0], [0], [1], [0, 0, 1, 1], [], []>} : vector<16x16xf32>, vector<16x256xf32>, vector<16x256xf32> -> vector<16x256xf32>
    %201 = arith.addf %192, %200 : vector<16x256xf32>
    %c8_i32_171 = arith.constant 8 : i32
    %202 = tpu.dynamic_rotate %191 by %c8_i32_171 dim 1 : vector<16x256xf32>, i32 -> vector<16x256xf32>
    %c1_172 = arith.constant 1 : index
    %c0_173 = arith.constant 0 : index
    %c0_174 = arith.constant 0 : index
    %203 = vector.load %arg6[%c1_172, %c0_173, %c0_174] : memref<9x1x256xf32, #tpu.memory_space<vmem>>, vector<1x1x256xf32>
    %204 = vector.shape_cast %203 : vector<1x1x256xf32> to vector<1x256xf32>
    %205 = vector.broadcast %204 : vector<1x256xf32> to vector<16x256xf32>
    %206 = arith.mulf %202, %205 : vector<16x256xf32>
    %c0_175 = arith.constant 0 : index
    %c1_176 = arith.constant 1 : index
    %c0_177 = arith.constant 0 : index
    %c0_178 = arith.constant 0 : index
    %207 = vector.load %arg13[%c0_175, %c1_176, %c0_177, %c0_178] : memref<1x9x16x16xf32, #tpu.memory_space<vmem>>, vector<1x1x16x16xf32>
    %208 = vector.shape_cast %207 : vector<1x1x16x16xf32> to vector<16x16xf32>
    %cst_179 = arith.constant dense<0.000000e+00> : vector<16x256xf32>
    %209 = tpu.matmul %208, %206, %cst_179 {dimension_numbers = #tpu.dot_dimension_numbers<[1], [0], [0], [1], [0, 0, 1, 1], [], []>} : vector<16x16xf32>, vector<16x256xf32>, vector<16x256xf32> -> vector<16x256xf32>
    %210 = arith.addf %201, %209 : vector<16x256xf32>
    %c7_i32_180 = arith.constant 7 : i32
    %211 = tpu.dynamic_rotate %191 by %c7_i32_180 dim 1 : vector<16x256xf32>, i32 -> vector<16x256xf32>
    %c2_181 = arith.constant 2 : index
    %c0_182 = arith.constant 0 : index
    %c0_183 = arith.constant 0 : index
    %212 = vector.load %arg6[%c2_181, %c0_182, %c0_183] : memref<9x1x256xf32, #tpu.memory_space<vmem>>, vector<1x1x256xf32>
    %213 = vector.shape_cast %212 : vector<1x1x256xf32> to vector<1x256xf32>
    %214 = vector.broadcast %213 : vector<1x256xf32> to vector<16x256xf32>
    %215 = arith.mulf %211, %214 : vector<16x256xf32>
    %c0_184 = arith.constant 0 : index
    %c2_185 = arith.constant 2 : index
    %c0_186 = arith.constant 0 : index
    %c0_187 = arith.constant 0 : index
    %216 = vector.load %arg13[%c0_184, %c2_185, %c0_186, %c0_187] : memref<1x9x16x16xf32, #tpu.memory_space<vmem>>, vector<1x1x16x16xf32>
    %217 = vector.shape_cast %216 : vector<1x1x16x16xf32> to vector<16x16xf32>
    %cst_188 = arith.constant dense<0.000000e+00> : vector<16x256xf32>
    %218 = tpu.matmul %217, %215, %cst_188 {dimension_numbers = #tpu.dot_dimension_numbers<[1], [0], [0], [1], [0, 0, 1, 1], [], []>} : vector<16x16xf32>, vector<16x256xf32>, vector<16x256xf32> -> vector<16x256xf32>
    %219 = arith.addf %210, %218 : vector<16x256xf32>
    %c1_i32_189 = arith.constant 1 : i32
    %220 = tpu.dynamic_rotate %191 by %c1_i32_189 dim 1 : vector<16x256xf32>, i32 -> vector<16x256xf32>
    %c3_190 = arith.constant 3 : index
    %c0_191 = arith.constant 0 : index
    %c0_192 = arith.constant 0 : index
    %221 = vector.load %arg6[%c3_190, %c0_191, %c0_192] : memref<9x1x256xf32, #tpu.memory_space<vmem>>, vector<1x1x256xf32>
    %222 = vector.shape_cast %221 : vector<1x1x256xf32> to vector<1x256xf32>
    %223 = vector.broadcast %222 : vector<1x256xf32> to vector<16x256xf32>
    %224 = arith.mulf %220, %223 : vector<16x256xf32>
    %c0_193 = arith.constant 0 : index
    %c3_194 = arith.constant 3 : index
    %c0_195 = arith.constant 0 : index
    %c0_196 = arith.constant 0 : index
    %225 = vector.load %arg13[%c0_193, %c3_194, %c0_195, %c0_196] : memref<1x9x16x16xf32, #tpu.memory_space<vmem>>, vector<1x1x16x16xf32>
    %226 = vector.shape_cast %225 : vector<1x1x16x16xf32> to vector<16x16xf32>
    %cst_197 = arith.constant dense<0.000000e+00> : vector<16x256xf32>
    %227 = tpu.matmul %226, %224, %cst_197 {dimension_numbers = #tpu.dot_dimension_numbers<[1], [0], [0], [1], [0, 0, 1, 1], [], []>} : vector<16x16xf32>, vector<16x256xf32>, vector<16x256xf32> -> vector<16x256xf32>
    %228 = arith.addf %219, %227 : vector<16x256xf32>
    %c4_198 = arith.constant 4 : index
    %c0_199 = arith.constant 0 : index
    %c0_200 = arith.constant 0 : index
    %229 = vector.load %arg6[%c4_198, %c0_199, %c0_200] : memref<9x1x256xf32, #tpu.memory_space<vmem>>, vector<1x1x256xf32>
    %230 = vector.shape_cast %229 : vector<1x1x256xf32> to vector<1x256xf32>
    %231 = vector.broadcast %230 : vector<1x256xf32> to vector<16x256xf32>
    %232 = arith.mulf %191, %231 : vector<16x256xf32>
    %c0_201 = arith.constant 0 : index
    %c4_202 = arith.constant 4 : index
    %c0_203 = arith.constant 0 : index
    %c0_204 = arith.constant 0 : index
    %233 = vector.load %arg13[%c0_201, %c4_202, %c0_203, %c0_204] : memref<1x9x16x16xf32, #tpu.memory_space<vmem>>, vector<1x1x16x16xf32>
    %234 = vector.shape_cast %233 : vector<1x1x16x16xf32> to vector<16x16xf32>
    %cst_205 = arith.constant dense<0.000000e+00> : vector<16x256xf32>
    %235 = tpu.matmul %234, %232, %cst_205 {dimension_numbers = #tpu.dot_dimension_numbers<[1], [0], [0], [1], [0, 0, 1, 1], [], []>} : vector<16x16xf32>, vector<16x256xf32>, vector<16x256xf32> -> vector<16x256xf32>
    %236 = arith.addf %228, %235 : vector<16x256xf32>
    %c255_i32_206 = arith.constant 255 : i32
    %237 = tpu.dynamic_rotate %191 by %c255_i32_206 dim 1 : vector<16x256xf32>, i32 -> vector<16x256xf32>
    %c5_207 = arith.constant 5 : index
    %c0_208 = arith.constant 0 : index
    %c0_209 = arith.constant 0 : index
    %238 = vector.load %arg6[%c5_207, %c0_208, %c0_209] : memref<9x1x256xf32, #tpu.memory_space<vmem>>, vector<1x1x256xf32>
    %239 = vector.shape_cast %238 : vector<1x1x256xf32> to vector<1x256xf32>
    %240 = vector.broadcast %239 : vector<1x256xf32> to vector<16x256xf32>
    %241 = arith.mulf %237, %240 : vector<16x256xf32>
    %c0_210 = arith.constant 0 : index
    %c5_211 = arith.constant 5 : index
    %c0_212 = arith.constant 0 : index
    %c0_213 = arith.constant 0 : index
    %242 = vector.load %arg13[%c0_210, %c5_211, %c0_212, %c0_213] : memref<1x9x16x16xf32, #tpu.memory_space<vmem>>, vector<1x1x16x16xf32>
    %243 = vector.shape_cast %242 : vector<1x1x16x16xf32> to vector<16x16xf32>
    %cst_214 = arith.constant dense<0.000000e+00> : vector<16x256xf32>
    %244 = tpu.matmul %243, %241, %cst_214 {dimension_numbers = #tpu.dot_dimension_numbers<[1], [0], [0], [1], [0, 0, 1, 1], [], []>} : vector<16x16xf32>, vector<16x256xf32>, vector<16x256xf32> -> vector<16x256xf32>
    %245 = arith.addf %236, %244 : vector<16x256xf32>
    %c249_i32_215 = arith.constant 249 : i32
    %246 = tpu.dynamic_rotate %191 by %c249_i32_215 dim 1 : vector<16x256xf32>, i32 -> vector<16x256xf32>
    %c6_216 = arith.constant 6 : index
    %c0_217 = arith.constant 0 : index
    %c0_218 = arith.constant 0 : index
    %247 = vector.load %arg6[%c6_216, %c0_217, %c0_218] : memref<9x1x256xf32, #tpu.memory_space<vmem>>, vector<1x1x256xf32>
    %248 = vector.shape_cast %247 : vector<1x1x256xf32> to vector<1x256xf32>
    %249 = vector.broadcast %248 : vector<1x256xf32> to vector<16x256xf32>
    %250 = arith.mulf %246, %249 : vector<16x256xf32>
    %c0_219 = arith.constant 0 : index
    %c6_220 = arith.constant 6 : index
    %c0_221 = arith.constant 0 : index
    %c0_222 = arith.constant 0 : index
    %251 = vector.load %arg13[%c0_219, %c6_220, %c0_221, %c0_222] : memref<1x9x16x16xf32, #tpu.memory_space<vmem>>, vector<1x1x16x16xf32>
    %252 = vector.shape_cast %251 : vector<1x1x16x16xf32> to vector<16x16xf32>
    %cst_223 = arith.constant dense<0.000000e+00> : vector<16x256xf32>
    %253 = tpu.matmul %252, %250, %cst_223 {dimension_numbers = #tpu.dot_dimension_numbers<[1], [0], [0], [1], [0, 0, 1, 1], [], []>} : vector<16x16xf32>, vector<16x256xf32>, vector<16x256xf32> -> vector<16x256xf32>
    %254 = arith.addf %245, %253 : vector<16x256xf32>
    %c248_i32_224 = arith.constant 248 : i32
    %255 = tpu.dynamic_rotate %191 by %c248_i32_224 dim 1 : vector<16x256xf32>, i32 -> vector<16x256xf32>
    %c7_225 = arith.constant 7 : index
    %c0_226 = arith.constant 0 : index
    %c0_227 = arith.constant 0 : index
    %256 = vector.load %arg6[%c7_225, %c0_226, %c0_227] : memref<9x1x256xf32, #tpu.memory_space<vmem>>, vector<1x1x256xf32>
    %257 = vector.shape_cast %256 : vector<1x1x256xf32> to vector<1x256xf32>
    %258 = vector.broadcast %257 : vector<1x256xf32> to vector<16x256xf32>
    %259 = arith.mulf %255, %258 : vector<16x256xf32>
    %c0_228 = arith.constant 0 : index
    %c7_229 = arith.constant 7 : index
    %c0_230 = arith.constant 0 : index
    %c0_231 = arith.constant 0 : index
    %260 = vector.load %arg13[%c0_228, %c7_229, %c0_230, %c0_231] : memref<1x9x16x16xf32, #tpu.memory_space<vmem>>, vector<1x1x16x16xf32>
    %261 = vector.shape_cast %260 : vector<1x1x16x16xf32> to vector<16x16xf32>
    %cst_232 = arith.constant dense<0.000000e+00> : vector<16x256xf32>
    %262 = tpu.matmul %261, %259, %cst_232 {dimension_numbers = #tpu.dot_dimension_numbers<[1], [0], [0], [1], [0, 0, 1, 1], [], []>} : vector<16x16xf32>, vector<16x256xf32>, vector<16x256xf32> -> vector<16x256xf32>
    %263 = arith.addf %254, %262 : vector<16x256xf32>
    %c247_i32_233 = arith.constant 247 : i32
    %264 = tpu.dynamic_rotate %191 by %c247_i32_233 dim 1 : vector<16x256xf32>, i32 -> vector<16x256xf32>
    %c8_234 = arith.constant 8 : index
    %c0_235 = arith.constant 0 : index
    %c0_236 = arith.constant 0 : index
    %265 = vector.load %arg6[%c8_234, %c0_235, %c0_236] : memref<9x1x256xf32, #tpu.memory_space<vmem>>, vector<1x1x256xf32>
    %266 = vector.shape_cast %265 : vector<1x1x256xf32> to vector<1x256xf32>
    %267 = vector.broadcast %266 : vector<1x256xf32> to vector<16x256xf32>
    %268 = arith.mulf %264, %267 : vector<16x256xf32>
    %c0_237 = arith.constant 0 : index
    %c8_238 = arith.constant 8 : index
    %c0_239 = arith.constant 0 : index
    %c0_240 = arith.constant 0 : index
    %269 = vector.load %arg13[%c0_237, %c8_238, %c0_239, %c0_240] : memref<1x9x16x16xf32, #tpu.memory_space<vmem>>, vector<1x1x16x16xf32>
    %270 = vector.shape_cast %269 : vector<1x1x16x16xf32> to vector<16x16xf32>
    %cst_241 = arith.constant dense<0.000000e+00> : vector<16x256xf32>
    %271 = tpu.matmul %270, %268, %cst_241 {dimension_numbers = #tpu.dot_dimension_numbers<[1], [0], [0], [1], [0, 0, 1, 1], [], []>} : vector<16x16xf32>, vector<16x256xf32>, vector<16x256xf32> -> vector<16x256xf32>
    %272 = arith.addf %263, %271 : vector<16x256xf32>
    %c0_242 = arith.constant 0 : index
    %c0_243 = arith.constant 0 : index
    %c0_244 = arith.constant 0 : index
    %273 = vector.load %arg14[%c0_242, %c0_243, %c0_244] : memref<1x16x1xf32, #tpu.memory_space<vmem>>, vector<1x16x1xf32>
    %274 = vector.shape_cast %273 : vector<1x16x1xf32> to vector<16x1xf32>
    %275 = vector.broadcast %274 : vector<16x1xf32> to vector<16x256xf32>
    %276 = arith.addf %272, %275 : vector<16x256xf32>
    %cst_245 = arith.constant 0.000000e+00 : f32
    %277 = vector.broadcast %cst_245 : f32 to vector<16x256xf32>
    %278 = arith.maximumf %276, %277 : vector<16x256xf32>
    %279 = vector.extract_strided_slice %278 {offsets = [0, 0], sizes = [16, 128], strides = [1, 1]} : vector<16x256xf32> to vector<16x128xf32>
    %c0_246 = arith.constant 0 : index
    %c0_247 = arith.constant 0 : index
    %280 = vector.load %arg4[%c0_246, %c0_247] : memref<128x256xf32, #tpu.memory_space<vmem>>, vector<128x256xf32>
    %cst_248 = arith.constant dense<0.000000e+00> : vector<16x256xf32>
    %281 = tpu.matmul %279, %280, %cst_248 {dimension_numbers = #tpu.dot_dimension_numbers<[1], [0], [0], [1], [0, 0, 1, 1], [], []>} : vector<16x128xf32>, vector<128x256xf32>, vector<16x256xf32> -> vector<16x256xf32>
    %282 = vector.extract_strided_slice %278 {offsets = [0, 128], sizes = [16, 128], strides = [1, 1]} : vector<16x256xf32> to vector<16x128xf32>
    %c0_249 = arith.constant 0 : index
    %c0_250 = arith.constant 0 : index
    %283 = vector.load %arg4[%c0_249, %c0_250] : memref<128x256xf32, #tpu.memory_space<vmem>>, vector<128x256xf32>
    %cst_251 = arith.constant dense<0.000000e+00> : vector<16x256xf32>
    %284 = tpu.matmul %282, %283, %cst_251 {dimension_numbers = #tpu.dot_dimension_numbers<[1], [0], [0], [1], [0, 0, 1, 1], [], []>} : vector<16x128xf32>, vector<128x256xf32>, vector<16x256xf32> -> vector<16x256xf32>
    %285 = tpu.concatenate %281, %284 in 1 : vector<16x256xf32>, vector<16x256xf32> -> vector<16x512xf32>
    %cst_252 = arith.constant 0.000000e+00 : f32
    %286 = vector.broadcast %cst_252 : f32 to vector<8x512xf32>
    %c0_253 = arith.constant 0 : index
    %c0_254 = arith.constant 0 : index
    %c0_255 = arith.constant 0 : index
    %c0_256 = arith.constant 0 : index
    %287 = vector.load %arg15[%c0_253, %c0_254, %c0_255, %c0_256] : memref<1x9x8x16xf32, #tpu.memory_space<vmem>>, vector<1x1x8x16xf32>
    %288 = vector.shape_cast %287 : vector<1x1x8x16xf32> to vector<8x16xf32>
    %cst_257 = arith.constant dense<0.000000e+00> : vector<8x512xf32>
    %289 = tpu.matmul %288, %285, %cst_257 {dimension_numbers = #tpu.dot_dimension_numbers<[1], [0], [0], [1], [0, 0, 1, 1], [], []>} : vector<8x16xf32>, vector<16x512xf32>, vector<8x512xf32> -> vector<8x512xf32>
    %c17_i32_258 = arith.constant 17 : i32
    %290 = tpu.dynamic_rotate %289 by %c17_i32_258 dim 1 : vector<8x512xf32>, i32 -> vector<8x512xf32>
    %c0_259 = arith.constant 0 : index
    %c0_260 = arith.constant 0 : index
    %c0_261 = arith.constant 0 : index
    %291 = vector.load %arg5[%c0_259, %c0_260, %c0_261] : memref<9x1x512xf32, #tpu.memory_space<vmem>>, vector<1x1x512xf32>
    %292 = vector.shape_cast %291 : vector<1x1x512xf32> to vector<1x512xf32>
    %293 = vector.broadcast %292 : vector<1x512xf32> to vector<8x512xf32>
    %294 = arith.mulf %290, %293 : vector<8x512xf32>
    %295 = arith.addf %286, %294 : vector<8x512xf32>
    %c0_262 = arith.constant 0 : index
    %c1_263 = arith.constant 1 : index
    %c0_264 = arith.constant 0 : index
    %c0_265 = arith.constant 0 : index
    %296 = vector.load %arg15[%c0_262, %c1_263, %c0_264, %c0_265] : memref<1x9x8x16xf32, #tpu.memory_space<vmem>>, vector<1x1x8x16xf32>
    %297 = vector.shape_cast %296 : vector<1x1x8x16xf32> to vector<8x16xf32>
    %cst_266 = arith.constant dense<0.000000e+00> : vector<8x512xf32>
    %298 = tpu.matmul %297, %285, %cst_266 {dimension_numbers = #tpu.dot_dimension_numbers<[1], [0], [0], [1], [0, 0, 1, 1], [], []>} : vector<8x16xf32>, vector<16x512xf32>, vector<8x512xf32> -> vector<8x512xf32>
    %c16_i32_267 = arith.constant 16 : i32
    %299 = tpu.dynamic_rotate %298 by %c16_i32_267 dim 1 : vector<8x512xf32>, i32 -> vector<8x512xf32>
    %c1_268 = arith.constant 1 : index
    %c0_269 = arith.constant 0 : index
    %c0_270 = arith.constant 0 : index
    %300 = vector.load %arg5[%c1_268, %c0_269, %c0_270] : memref<9x1x512xf32, #tpu.memory_space<vmem>>, vector<1x1x512xf32>
    %301 = vector.shape_cast %300 : vector<1x1x512xf32> to vector<1x512xf32>
    %302 = vector.broadcast %301 : vector<1x512xf32> to vector<8x512xf32>
    %303 = arith.mulf %299, %302 : vector<8x512xf32>
    %304 = arith.addf %295, %303 : vector<8x512xf32>
    %c0_271 = arith.constant 0 : index
    %c2_272 = arith.constant 2 : index
    %c0_273 = arith.constant 0 : index
    %c0_274 = arith.constant 0 : index
    %305 = vector.load %arg15[%c0_271, %c2_272, %c0_273, %c0_274] : memref<1x9x8x16xf32, #tpu.memory_space<vmem>>, vector<1x1x8x16xf32>
    %306 = vector.shape_cast %305 : vector<1x1x8x16xf32> to vector<8x16xf32>
    %cst_275 = arith.constant dense<0.000000e+00> : vector<8x512xf32>
    %307 = tpu.matmul %306, %285, %cst_275 {dimension_numbers = #tpu.dot_dimension_numbers<[1], [0], [0], [1], [0, 0, 1, 1], [], []>} : vector<8x16xf32>, vector<16x512xf32>, vector<8x512xf32> -> vector<8x512xf32>
    %c15_i32_276 = arith.constant 15 : i32
    %308 = tpu.dynamic_rotate %307 by %c15_i32_276 dim 1 : vector<8x512xf32>, i32 -> vector<8x512xf32>
    %c2_277 = arith.constant 2 : index
    %c0_278 = arith.constant 0 : index
    %c0_279 = arith.constant 0 : index
    %309 = vector.load %arg5[%c2_277, %c0_278, %c0_279] : memref<9x1x512xf32, #tpu.memory_space<vmem>>, vector<1x1x512xf32>
    %310 = vector.shape_cast %309 : vector<1x1x512xf32> to vector<1x512xf32>
    %311 = vector.broadcast %310 : vector<1x512xf32> to vector<8x512xf32>
    %312 = arith.mulf %308, %311 : vector<8x512xf32>
    %313 = arith.addf %304, %312 : vector<8x512xf32>
    %c0_280 = arith.constant 0 : index
    %c3_281 = arith.constant 3 : index
    %c0_282 = arith.constant 0 : index
    %c0_283 = arith.constant 0 : index
    %314 = vector.load %arg15[%c0_280, %c3_281, %c0_282, %c0_283] : memref<1x9x8x16xf32, #tpu.memory_space<vmem>>, vector<1x1x8x16xf32>
    %315 = vector.shape_cast %314 : vector<1x1x8x16xf32> to vector<8x16xf32>
    %cst_284 = arith.constant dense<0.000000e+00> : vector<8x512xf32>
    %316 = tpu.matmul %315, %285, %cst_284 {dimension_numbers = #tpu.dot_dimension_numbers<[1], [0], [0], [1], [0, 0, 1, 1], [], []>} : vector<8x16xf32>, vector<16x512xf32>, vector<8x512xf32> -> vector<8x512xf32>
    %c1_i32_285 = arith.constant 1 : i32
    %317 = tpu.dynamic_rotate %316 by %c1_i32_285 dim 1 : vector<8x512xf32>, i32 -> vector<8x512xf32>
    %c3_286 = arith.constant 3 : index
    %c0_287 = arith.constant 0 : index
    %c0_288 = arith.constant 0 : index
    %318 = vector.load %arg5[%c3_286, %c0_287, %c0_288] : memref<9x1x512xf32, #tpu.memory_space<vmem>>, vector<1x1x512xf32>
    %319 = vector.shape_cast %318 : vector<1x1x512xf32> to vector<1x512xf32>
    %320 = vector.broadcast %319 : vector<1x512xf32> to vector<8x512xf32>
    %321 = arith.mulf %317, %320 : vector<8x512xf32>
    %322 = arith.addf %313, %321 : vector<8x512xf32>
    %c0_289 = arith.constant 0 : index
    %c4_290 = arith.constant 4 : index
    %c0_291 = arith.constant 0 : index
    %c0_292 = arith.constant 0 : index
    %323 = vector.load %arg15[%c0_289, %c4_290, %c0_291, %c0_292] : memref<1x9x8x16xf32, #tpu.memory_space<vmem>>, vector<1x1x8x16xf32>
    %324 = vector.shape_cast %323 : vector<1x1x8x16xf32> to vector<8x16xf32>
    %cst_293 = arith.constant dense<0.000000e+00> : vector<8x512xf32>
    %325 = tpu.matmul %324, %285, %cst_293 {dimension_numbers = #tpu.dot_dimension_numbers<[1], [0], [0], [1], [0, 0, 1, 1], [], []>} : vector<8x16xf32>, vector<16x512xf32>, vector<8x512xf32> -> vector<8x512xf32>
    %326 = arith.addf %322, %325 : vector<8x512xf32>
    %c0_294 = arith.constant 0 : index
    %c5_295 = arith.constant 5 : index
    %c0_296 = arith.constant 0 : index
    %c0_297 = arith.constant 0 : index
    %327 = vector.load %arg15[%c0_294, %c5_295, %c0_296, %c0_297] : memref<1x9x8x16xf32, #tpu.memory_space<vmem>>, vector<1x1x8x16xf32>
    %328 = vector.shape_cast %327 : vector<1x1x8x16xf32> to vector<8x16xf32>
    %cst_298 = arith.constant dense<0.000000e+00> : vector<8x512xf32>
    %329 = tpu.matmul %328, %285, %cst_298 {dimension_numbers = #tpu.dot_dimension_numbers<[1], [0], [0], [1], [0, 0, 1, 1], [], []>} : vector<8x16xf32>, vector<16x512xf32>, vector<8x512xf32> -> vector<8x512xf32>
    %c511_i32_299 = arith.constant 511 : i32
    %330 = tpu.dynamic_rotate %329 by %c511_i32_299 dim 1 : vector<8x512xf32>, i32 -> vector<8x512xf32>
    %c5_300 = arith.constant 5 : index
    %c0_301 = arith.constant 0 : index
    %c0_302 = arith.constant 0 : index
    %331 = vector.load %arg5[%c5_300, %c0_301, %c0_302] : memref<9x1x512xf32, #tpu.memory_space<vmem>>, vector<1x1x512xf32>
    %332 = vector.shape_cast %331 : vector<1x1x512xf32> to vector<1x512xf32>
    %333 = vector.broadcast %332 : vector<1x512xf32> to vector<8x512xf32>
    %334 = arith.mulf %330, %333 : vector<8x512xf32>
    %335 = arith.addf %326, %334 : vector<8x512xf32>
    %c0_303 = arith.constant 0 : index
    %c6_304 = arith.constant 6 : index
    %c0_305 = arith.constant 0 : index
    %c0_306 = arith.constant 0 : index
    %336 = vector.load %arg15[%c0_303, %c6_304, %c0_305, %c0_306] : memref<1x9x8x16xf32, #tpu.memory_space<vmem>>, vector<1x1x8x16xf32>
    %337 = vector.shape_cast %336 : vector<1x1x8x16xf32> to vector<8x16xf32>
    %cst_307 = arith.constant dense<0.000000e+00> : vector<8x512xf32>
    %338 = tpu.matmul %337, %285, %cst_307 {dimension_numbers = #tpu.dot_dimension_numbers<[1], [0], [0], [1], [0, 0, 1, 1], [], []>} : vector<8x16xf32>, vector<16x512xf32>, vector<8x512xf32> -> vector<8x512xf32>
    %c497_i32_308 = arith.constant 497 : i32
    %339 = tpu.dynamic_rotate %338 by %c497_i32_308 dim 1 : vector<8x512xf32>, i32 -> vector<8x512xf32>
    %c6_309 = arith.constant 6 : index
    %c0_310 = arith.constant 0 : index
    %c0_311 = arith.constant 0 : index
    %340 = vector.load %arg5[%c6_309, %c0_310, %c0_311] : memref<9x1x512xf32, #tpu.memory_space<vmem>>, vector<1x1x512xf32>
    %341 = vector.shape_cast %340 : vector<1x1x512xf32> to vector<1x512xf32>
    %342 = vector.broadcast %341 : vector<1x512xf32> to vector<8x512xf32>
    %343 = arith.mulf %339, %342 : vector<8x512xf32>
    %344 = arith.addf %335, %343 : vector<8x512xf32>
    %c0_312 = arith.constant 0 : index
    %c7_313 = arith.constant 7 : index
    %c0_314 = arith.constant 0 : index
    %c0_315 = arith.constant 0 : index
    %345 = vector.load %arg15[%c0_312, %c7_313, %c0_314, %c0_315] : memref<1x9x8x16xf32, #tpu.memory_space<vmem>>, vector<1x1x8x16xf32>
    %346 = vector.shape_cast %345 : vector<1x1x8x16xf32> to vector<8x16xf32>
    %cst_316 = arith.constant dense<0.000000e+00> : vector<8x512xf32>
    %347 = tpu.matmul %346, %285, %cst_316 {dimension_numbers = #tpu.dot_dimension_numbers<[1], [0], [0], [1], [0, 0, 1, 1], [], []>} : vector<8x16xf32>, vector<16x512xf32>, vector<8x512xf32> -> vector<8x512xf32>
    %c496_i32_317 = arith.constant 496 : i32
    %348 = tpu.dynamic_rotate %347 by %c496_i32_317 dim 1 : vector<8x512xf32>, i32 -> vector<8x512xf32>
    %c7_318 = arith.constant 7 : index
    %c0_319 = arith.constant 0 : index
    %c0_320 = arith.constant 0 : index
    %349 = vector.load %arg5[%c7_318, %c0_319, %c0_320] : memref<9x1x512xf32, #tpu.memory_space<vmem>>, vector<1x1x512xf32>
    %350 = vector.shape_cast %349 : vector<1x1x512xf32> to vector<1x512xf32>
    %351 = vector.broadcast %350 : vector<1x512xf32> to vector<8x512xf32>
    %352 = arith.mulf %348, %351 : vector<8x512xf32>
    %353 = arith.addf %344, %352 : vector<8x512xf32>
    %c0_321 = arith.constant 0 : index
    %c8_322 = arith.constant 8 : index
    %c0_323 = arith.constant 0 : index
    %c0_324 = arith.constant 0 : index
    %354 = vector.load %arg15[%c0_321, %c8_322, %c0_323, %c0_324] : memref<1x9x8x16xf32, #tpu.memory_space<vmem>>, vector<1x1x8x16xf32>
    %355 = vector.shape_cast %354 : vector<1x1x8x16xf32> to vector<8x16xf32>
    %cst_325 = arith.constant dense<0.000000e+00> : vector<8x512xf32>
    %356 = tpu.matmul %355, %285, %cst_325 {dimension_numbers = #tpu.dot_dimension_numbers<[1], [0], [0], [1], [0, 0, 1, 1], [], []>} : vector<8x16xf32>, vector<16x512xf32>, vector<8x512xf32> -> vector<8x512xf32>
    %c495_i32_326 = arith.constant 495 : i32
    %357 = tpu.dynamic_rotate %356 by %c495_i32_326 dim 1 : vector<8x512xf32>, i32 -> vector<8x512xf32>
    %c8_327 = arith.constant 8 : index
    %c0_328 = arith.constant 0 : index
    %c0_329 = arith.constant 0 : index
    %358 = vector.load %arg5[%c8_327, %c0_328, %c0_329] : memref<9x1x512xf32, #tpu.memory_space<vmem>>, vector<1x1x512xf32>
    %359 = vector.shape_cast %358 : vector<1x1x512xf32> to vector<1x512xf32>
    %360 = vector.broadcast %359 : vector<1x512xf32> to vector<8x512xf32>
    %361 = arith.mulf %357, %360 : vector<8x512xf32>
    %362 = arith.addf %353, %361 : vector<8x512xf32>
    %c17_i32_330 = arith.constant 17 : i32
    %363 = tpu.dynamic_rotate %93 by %c17_i32_330 dim 1 : vector<8x512xf32>, i32 -> vector<8x512xf32>
    %c0_331 = arith.constant 0 : index
    %c0_332 = arith.constant 0 : index
    %c0_333 = arith.constant 0 : index
    %364 = vector.load %arg5[%c0_331, %c0_332, %c0_333] : memref<9x1x512xf32, #tpu.memory_space<vmem>>, vector<1x1x512xf32>
    %365 = vector.shape_cast %364 : vector<1x1x512xf32> to vector<1x512xf32>
    %366 = vector.broadcast %365 : vector<1x512xf32> to vector<8x512xf32>
    %367 = arith.mulf %363, %366 : vector<8x512xf32>
    %c0_334 = arith.constant 0 : index
    %c0_335 = arith.constant 0 : index
    %c0_336 = arith.constant 0 : index
    %c0_337 = arith.constant 0 : index
    %368 = vector.load %arg16[%c0_334, %c0_335, %c0_336, %c0_337] : memref<1x9x8x8xf32, #tpu.memory_space<vmem>>, vector<1x1x8x8xf32>
    %369 = vector.shape_cast %368 : vector<1x1x8x8xf32> to vector<8x8xf32>
    %cst_338 = arith.constant dense<0.000000e+00> : vector<8x512xf32>
    %370 = tpu.matmul %369, %367, %cst_338 {dimension_numbers = #tpu.dot_dimension_numbers<[1], [0], [0], [1], [0, 0, 1, 1], [], []>} : vector<8x8xf32>, vector<8x512xf32>, vector<8x512xf32> -> vector<8x512xf32>
    %371 = arith.addf %362, %370 : vector<8x512xf32>
    %c16_i32_339 = arith.constant 16 : i32
    %372 = tpu.dynamic_rotate %93 by %c16_i32_339 dim 1 : vector<8x512xf32>, i32 -> vector<8x512xf32>
    %c1_340 = arith.constant 1 : index
    %c0_341 = arith.constant 0 : index
    %c0_342 = arith.constant 0 : index
    %373 = vector.load %arg5[%c1_340, %c0_341, %c0_342] : memref<9x1x512xf32, #tpu.memory_space<vmem>>, vector<1x1x512xf32>
    %374 = vector.shape_cast %373 : vector<1x1x512xf32> to vector<1x512xf32>
    %375 = vector.broadcast %374 : vector<1x512xf32> to vector<8x512xf32>
    %376 = arith.mulf %372, %375 : vector<8x512xf32>
    %c0_343 = arith.constant 0 : index
    %c1_344 = arith.constant 1 : index
    %c0_345 = arith.constant 0 : index
    %c0_346 = arith.constant 0 : index
    %377 = vector.load %arg16[%c0_343, %c1_344, %c0_345, %c0_346] : memref<1x9x8x8xf32, #tpu.memory_space<vmem>>, vector<1x1x8x8xf32>
    %378 = vector.shape_cast %377 : vector<1x1x8x8xf32> to vector<8x8xf32>
    %cst_347 = arith.constant dense<0.000000e+00> : vector<8x512xf32>
    %379 = tpu.matmul %378, %376, %cst_347 {dimension_numbers = #tpu.dot_dimension_numbers<[1], [0], [0], [1], [0, 0, 1, 1], [], []>} : vector<8x8xf32>, vector<8x512xf32>, vector<8x512xf32> -> vector<8x512xf32>
    %380 = arith.addf %371, %379 : vector<8x512xf32>
    %c15_i32_348 = arith.constant 15 : i32
    %381 = tpu.dynamic_rotate %93 by %c15_i32_348 dim 1 : vector<8x512xf32>, i32 -> vector<8x512xf32>
    %c2_349 = arith.constant 2 : index
    %c0_350 = arith.constant 0 : index
    %c0_351 = arith.constant 0 : index
    %382 = vector.load %arg5[%c2_349, %c0_350, %c0_351] : memref<9x1x512xf32, #tpu.memory_space<vmem>>, vector<1x1x512xf32>
    %383 = vector.shape_cast %382 : vector<1x1x512xf32> to vector<1x512xf32>
    %384 = vector.broadcast %383 : vector<1x512xf32> to vector<8x512xf32>
    %385 = arith.mulf %381, %384 : vector<8x512xf32>
    %c0_352 = arith.constant 0 : index
    %c2_353 = arith.constant 2 : index
    %c0_354 = arith.constant 0 : index
    %c0_355 = arith.constant 0 : index
    %386 = vector.load %arg16[%c0_352, %c2_353, %c0_354, %c0_355] : memref<1x9x8x8xf32, #tpu.memory_space<vmem>>, vector<1x1x8x8xf32>
    %387 = vector.shape_cast %386 : vector<1x1x8x8xf32> to vector<8x8xf32>
    %cst_356 = arith.constant dense<0.000000e+00> : vector<8x512xf32>
    %388 = tpu.matmul %387, %385, %cst_356 {dimension_numbers = #tpu.dot_dimension_numbers<[1], [0], [0], [1], [0, 0, 1, 1], [], []>} : vector<8x8xf32>, vector<8x512xf32>, vector<8x512xf32> -> vector<8x512xf32>
    %389 = arith.addf %380, %388 : vector<8x512xf32>
    %c1_i32_357 = arith.constant 1 : i32
    %390 = tpu.dynamic_rotate %93 by %c1_i32_357 dim 1 : vector<8x512xf32>, i32 -> vector<8x512xf32>
    %c3_358 = arith.constant 3 : index
    %c0_359 = arith.constant 0 : index
    %c0_360 = arith.constant 0 : index
    %391 = vector.load %arg5[%c3_358, %c0_359, %c0_360] : memref<9x1x512xf32, #tpu.memory_space<vmem>>, vector<1x1x512xf32>
    %392 = vector.shape_cast %391 : vector<1x1x512xf32> to vector<1x512xf32>
    %393 = vector.broadcast %392 : vector<1x512xf32> to vector<8x512xf32>
    %394 = arith.mulf %390, %393 : vector<8x512xf32>
    %c0_361 = arith.constant 0 : index
    %c3_362 = arith.constant 3 : index
    %c0_363 = arith.constant 0 : index
    %c0_364 = arith.constant 0 : index
    %395 = vector.load %arg16[%c0_361, %c3_362, %c0_363, %c0_364] : memref<1x9x8x8xf32, #tpu.memory_space<vmem>>, vector<1x1x8x8xf32>
    %396 = vector.shape_cast %395 : vector<1x1x8x8xf32> to vector<8x8xf32>
    %cst_365 = arith.constant dense<0.000000e+00> : vector<8x512xf32>
    %397 = tpu.matmul %396, %394, %cst_365 {dimension_numbers = #tpu.dot_dimension_numbers<[1], [0], [0], [1], [0, 0, 1, 1], [], []>} : vector<8x8xf32>, vector<8x512xf32>, vector<8x512xf32> -> vector<8x512xf32>
    %398 = arith.addf %389, %397 : vector<8x512xf32>
    %c0_366 = arith.constant 0 : index
    %c4_367 = arith.constant 4 : index
    %c0_368 = arith.constant 0 : index
    %c0_369 = arith.constant 0 : index
    %399 = vector.load %arg16[%c0_366, %c4_367, %c0_368, %c0_369] : memref<1x9x8x8xf32, #tpu.memory_space<vmem>>, vector<1x1x8x8xf32>
    %400 = vector.shape_cast %399 : vector<1x1x8x8xf32> to vector<8x8xf32>
    %cst_370 = arith.constant dense<0.000000e+00> : vector<8x512xf32>
    %401 = tpu.matmul %400, %93, %cst_370 {dimension_numbers = #tpu.dot_dimension_numbers<[1], [0], [0], [1], [0, 0, 1, 1], [], []>} : vector<8x8xf32>, vector<8x512xf32>, vector<8x512xf32> -> vector<8x512xf32>
    %402 = arith.addf %398, %401 : vector<8x512xf32>
    %c511_i32_371 = arith.constant 511 : i32
    %403 = tpu.dynamic_rotate %93 by %c511_i32_371 dim 1 : vector<8x512xf32>, i32 -> vector<8x512xf32>
    %c5_372 = arith.constant 5 : index
    %c0_373 = arith.constant 0 : index
    %c0_374 = arith.constant 0 : index
    %404 = vector.load %arg5[%c5_372, %c0_373, %c0_374] : memref<9x1x512xf32, #tpu.memory_space<vmem>>, vector<1x1x512xf32>
    %405 = vector.shape_cast %404 : vector<1x1x512xf32> to vector<1x512xf32>
    %406 = vector.broadcast %405 : vector<1x512xf32> to vector<8x512xf32>
    %407 = arith.mulf %403, %406 : vector<8x512xf32>
    %c0_375 = arith.constant 0 : index
    %c5_376 = arith.constant 5 : index
    %c0_377 = arith.constant 0 : index
    %c0_378 = arith.constant 0 : index
    %408 = vector.load %arg16[%c0_375, %c5_376, %c0_377, %c0_378] : memref<1x9x8x8xf32, #tpu.memory_space<vmem>>, vector<1x1x8x8xf32>
    %409 = vector.shape_cast %408 : vector<1x1x8x8xf32> to vector<8x8xf32>
    %cst_379 = arith.constant dense<0.000000e+00> : vector<8x512xf32>
    %410 = tpu.matmul %409, %407, %cst_379 {dimension_numbers = #tpu.dot_dimension_numbers<[1], [0], [0], [1], [0, 0, 1, 1], [], []>} : vector<8x8xf32>, vector<8x512xf32>, vector<8x512xf32> -> vector<8x512xf32>
    %411 = arith.addf %402, %410 : vector<8x512xf32>
    %c497_i32_380 = arith.constant 497 : i32
    %412 = tpu.dynamic_rotate %93 by %c497_i32_380 dim 1 : vector<8x512xf32>, i32 -> vector<8x512xf32>
    %c6_381 = arith.constant 6 : index
    %c0_382 = arith.constant 0 : index
    %c0_383 = arith.constant 0 : index
    %413 = vector.load %arg5[%c6_381, %c0_382, %c0_383] : memref<9x1x512xf32, #tpu.memory_space<vmem>>, vector<1x1x512xf32>
    %414 = vector.shape_cast %413 : vector<1x1x512xf32> to vector<1x512xf32>
    %415 = vector.broadcast %414 : vector<1x512xf32> to vector<8x512xf32>
    %416 = arith.mulf %412, %415 : vector<8x512xf32>
    %c0_384 = arith.constant 0 : index
    %c6_385 = arith.constant 6 : index
    %c0_386 = arith.constant 0 : index
    %c0_387 = arith.constant 0 : index
    %417 = vector.load %arg16[%c0_384, %c6_385, %c0_386, %c0_387] : memref<1x9x8x8xf32, #tpu.memory_space<vmem>>, vector<1x1x8x8xf32>
    %418 = vector.shape_cast %417 : vector<1x1x8x8xf32> to vector<8x8xf32>
    %cst_388 = arith.constant dense<0.000000e+00> : vector<8x512xf32>
    %419 = tpu.matmul %418, %416, %cst_388 {dimension_numbers = #tpu.dot_dimension_numbers<[1], [0], [0], [1], [0, 0, 1, 1], [], []>} : vector<8x8xf32>, vector<8x512xf32>, vector<8x512xf32> -> vector<8x512xf32>
    %420 = arith.addf %411, %419 : vector<8x512xf32>
    %c496_i32_389 = arith.constant 496 : i32
    %421 = tpu.dynamic_rotate %93 by %c496_i32_389 dim 1 : vector<8x512xf32>, i32 -> vector<8x512xf32>
    %c7_390 = arith.constant 7 : index
    %c0_391 = arith.constant 0 : index
    %c0_392 = arith.constant 0 : index
    %422 = vector.load %arg5[%c7_390, %c0_391, %c0_392] : memref<9x1x512xf32, #tpu.memory_space<vmem>>, vector<1x1x512xf32>
    %423 = vector.shape_cast %422 : vector<1x1x512xf32> to vector<1x512xf32>
    %424 = vector.broadcast %423 : vector<1x512xf32> to vector<8x512xf32>
    %425 = arith.mulf %421, %424 : vector<8x512xf32>
    %c0_393 = arith.constant 0 : index
    %c7_394 = arith.constant 7 : index
    %c0_395 = arith.constant 0 : index
    %c0_396 = arith.constant 0 : index
    %426 = vector.load %arg16[%c0_393, %c7_394, %c0_395, %c0_396] : memref<1x9x8x8xf32, #tpu.memory_space<vmem>>, vector<1x1x8x8xf32>
    %427 = vector.shape_cast %426 : vector<1x1x8x8xf32> to vector<8x8xf32>
    %cst_397 = arith.constant dense<0.000000e+00> : vector<8x512xf32>
    %428 = tpu.matmul %427, %425, %cst_397 {dimension_numbers = #tpu.dot_dimension_numbers<[1], [0], [0], [1], [0, 0, 1, 1], [], []>} : vector<8x8xf32>, vector<8x512xf32>, vector<8x512xf32> -> vector<8x512xf32>
    %429 = arith.addf %420, %428 : vector<8x512xf32>
    %c495_i32_398 = arith.constant 495 : i32
    %430 = tpu.dynamic_rotate %93 by %c495_i32_398 dim 1 : vector<8x512xf32>, i32 -> vector<8x512xf32>
    %c8_399 = arith.constant 8 : index
    %c0_400 = arith.constant 0 : index
    %c0_401 = arith.constant 0 : index
    %431 = vector.load %arg5[%c8_399, %c0_400, %c0_401] : memref<9x1x512xf32, #tpu.memory_space<vmem>>, vector<1x1x512xf32>
    %432 = vector.shape_cast %431 : vector<1x1x512xf32> to vector<1x512xf32>
    %433 = vector.broadcast %432 : vector<1x512xf32> to vector<8x512xf32>
    %434 = arith.mulf %430, %433 : vector<8x512xf32>
    %c0_402 = arith.constant 0 : index
    %c8_403 = arith.constant 8 : index
    %c0_404 = arith.constant 0 : index
    %c0_405 = arith.constant 0 : index
    %435 = vector.load %arg16[%c0_402, %c8_403, %c0_404, %c0_405] : memref<1x9x8x8xf32, #tpu.memory_space<vmem>>, vector<1x1x8x8xf32>
    %436 = vector.shape_cast %435 : vector<1x1x8x8xf32> to vector<8x8xf32>
    %cst_406 = arith.constant dense<0.000000e+00> : vector<8x512xf32>
    %437 = tpu.matmul %436, %434, %cst_406 {dimension_numbers = #tpu.dot_dimension_numbers<[1], [0], [0], [1], [0, 0, 1, 1], [], []>} : vector<8x8xf32>, vector<8x512xf32>, vector<8x512xf32> -> vector<8x512xf32>
    %438 = arith.addf %429, %437 : vector<8x512xf32>
    %c0_407 = arith.constant 0 : index
    %c0_408 = arith.constant 0 : index
    %c0_409 = arith.constant 0 : index
    %439 = vector.load %arg17[%c0_407, %c0_408, %c0_409] : memref<1x8x1xf32, #tpu.memory_space<vmem>>, vector<1x8x1xf32>
    %440 = vector.shape_cast %439 : vector<1x8x1xf32> to vector<8x1xf32>
    %441 = vector.broadcast %440 : vector<8x1xf32> to vector<8x512xf32>
    %442 = arith.addf %438, %441 : vector<8x512xf32>
    %cst_410 = arith.constant 0.000000e+00 : f32
    %443 = vector.broadcast %cst_410 : f32 to vector<8x512xf32>
    %444 = arith.maximumf %442, %443 : vector<8x512xf32>
    %cst_411 = arith.constant 0.000000e+00 : f32
    %445 = vector.broadcast %cst_411 : f32 to vector<8x512xf32>
    %c17_i32_412 = arith.constant 17 : i32
    %446 = tpu.dynamic_rotate %444 by %c17_i32_412 dim 1 : vector<8x512xf32>, i32 -> vector<8x512xf32>
    %c0_413 = arith.constant 0 : index
    %c0_414 = arith.constant 0 : index
    %c0_415 = arith.constant 0 : index
    %447 = vector.load %arg5[%c0_413, %c0_414, %c0_415] : memref<9x1x512xf32, #tpu.memory_space<vmem>>, vector<1x1x512xf32>
    %448 = vector.shape_cast %447 : vector<1x1x512xf32> to vector<1x512xf32>
    %449 = vector.broadcast %448 : vector<1x512xf32> to vector<8x512xf32>
    %450 = arith.mulf %446, %449 : vector<8x512xf32>
    %c0_416 = arith.constant 0 : index
    %c0_417 = arith.constant 0 : index
    %c0_418 = arith.constant 0 : index
    %c0_419 = arith.constant 0 : index
    %451 = vector.load %arg18[%c0_416, %c0_417, %c0_418, %c0_419] : memref<1x9x8x8xf32, #tpu.memory_space<vmem>>, vector<1x1x8x8xf32>
    %452 = vector.shape_cast %451 : vector<1x1x8x8xf32> to vector<8x8xf32>
    %cst_420 = arith.constant dense<0.000000e+00> : vector<8x512xf32>
    %453 = tpu.matmul %452, %450, %cst_420 {dimension_numbers = #tpu.dot_dimension_numbers<[1], [0], [0], [1], [0, 0, 1, 1], [], []>} : vector<8x8xf32>, vector<8x512xf32>, vector<8x512xf32> -> vector<8x512xf32>
    %454 = arith.addf %445, %453 : vector<8x512xf32>
    %c16_i32_421 = arith.constant 16 : i32
    %455 = tpu.dynamic_rotate %444 by %c16_i32_421 dim 1 : vector<8x512xf32>, i32 -> vector<8x512xf32>
    %c1_422 = arith.constant 1 : index
    %c0_423 = arith.constant 0 : index
    %c0_424 = arith.constant 0 : index
    %456 = vector.load %arg5[%c1_422, %c0_423, %c0_424] : memref<9x1x512xf32, #tpu.memory_space<vmem>>, vector<1x1x512xf32>
    %457 = vector.shape_cast %456 : vector<1x1x512xf32> to vector<1x512xf32>
    %458 = vector.broadcast %457 : vector<1x512xf32> to vector<8x512xf32>
    %459 = arith.mulf %455, %458 : vector<8x512xf32>
    %c0_425 = arith.constant 0 : index
    %c1_426 = arith.constant 1 : index
    %c0_427 = arith.constant 0 : index
    %c0_428 = arith.constant 0 : index
    %460 = vector.load %arg18[%c0_425, %c1_426, %c0_427, %c0_428] : memref<1x9x8x8xf32, #tpu.memory_space<vmem>>, vector<1x1x8x8xf32>
    %461 = vector.shape_cast %460 : vector<1x1x8x8xf32> to vector<8x8xf32>
    %cst_429 = arith.constant dense<0.000000e+00> : vector<8x512xf32>
    %462 = tpu.matmul %461, %459, %cst_429 {dimension_numbers = #tpu.dot_dimension_numbers<[1], [0], [0], [1], [0, 0, 1, 1], [], []>} : vector<8x8xf32>, vector<8x512xf32>, vector<8x512xf32> -> vector<8x512xf32>
    %463 = arith.addf %454, %462 : vector<8x512xf32>
    %c15_i32_430 = arith.constant 15 : i32
    %464 = tpu.dynamic_rotate %444 by %c15_i32_430 dim 1 : vector<8x512xf32>, i32 -> vector<8x512xf32>
    %c2_431 = arith.constant 2 : index
    %c0_432 = arith.constant 0 : index
    %c0_433 = arith.constant 0 : index
    %465 = vector.load %arg5[%c2_431, %c0_432, %c0_433] : memref<9x1x512xf32, #tpu.memory_space<vmem>>, vector<1x1x512xf32>
    %466 = vector.shape_cast %465 : vector<1x1x512xf32> to vector<1x512xf32>
    %467 = vector.broadcast %466 : vector<1x512xf32> to vector<8x512xf32>
    %468 = arith.mulf %464, %467 : vector<8x512xf32>
    %c0_434 = arith.constant 0 : index
    %c2_435 = arith.constant 2 : index
    %c0_436 = arith.constant 0 : index
    %c0_437 = arith.constant 0 : index
    %469 = vector.load %arg18[%c0_434, %c2_435, %c0_436, %c0_437] : memref<1x9x8x8xf32, #tpu.memory_space<vmem>>, vector<1x1x8x8xf32>
    %470 = vector.shape_cast %469 : vector<1x1x8x8xf32> to vector<8x8xf32>
    %cst_438 = arith.constant dense<0.000000e+00> : vector<8x512xf32>
    %471 = tpu.matmul %470, %468, %cst_438 {dimension_numbers = #tpu.dot_dimension_numbers<[1], [0], [0], [1], [0, 0, 1, 1], [], []>} : vector<8x8xf32>, vector<8x512xf32>, vector<8x512xf32> -> vector<8x512xf32>
    %472 = arith.addf %463, %471 : vector<8x512xf32>
    %c1_i32_439 = arith.constant 1 : i32
    %473 = tpu.dynamic_rotate %444 by %c1_i32_439 dim 1 : vector<8x512xf32>, i32 -> vector<8x512xf32>
    %c3_440 = arith.constant 3 : index
    %c0_441 = arith.constant 0 : index
    %c0_442 = arith.constant 0 : index
    %474 = vector.load %arg5[%c3_440, %c0_441, %c0_442] : memref<9x1x512xf32, #tpu.memory_space<vmem>>, vector<1x1x512xf32>
    %475 = vector.shape_cast %474 : vector<1x1x512xf32> to vector<1x512xf32>
    %476 = vector.broadcast %475 : vector<1x512xf32> to vector<8x512xf32>
    %477 = arith.mulf %473, %476 : vector<8x512xf32>
    %c0_443 = arith.constant 0 : index
    %c3_444 = arith.constant 3 : index
    %c0_445 = arith.constant 0 : index
    %c0_446 = arith.constant 0 : index
    %478 = vector.load %arg18[%c0_443, %c3_444, %c0_445, %c0_446] : memref<1x9x8x8xf32, #tpu.memory_space<vmem>>, vector<1x1x8x8xf32>
    %479 = vector.shape_cast %478 : vector<1x1x8x8xf32> to vector<8x8xf32>
    %cst_447 = arith.constant dense<0.000000e+00> : vector<8x512xf32>
    %480 = tpu.matmul %479, %477, %cst_447 {dimension_numbers = #tpu.dot_dimension_numbers<[1], [0], [0], [1], [0, 0, 1, 1], [], []>} : vector<8x8xf32>, vector<8x512xf32>, vector<8x512xf32> -> vector<8x512xf32>
    %481 = arith.addf %472, %480 : vector<8x512xf32>
    %c0_448 = arith.constant 0 : index
    %c4_449 = arith.constant 4 : index
    %c0_450 = arith.constant 0 : index
    %c0_451 = arith.constant 0 : index
    %482 = vector.load %arg18[%c0_448, %c4_449, %c0_450, %c0_451] : memref<1x9x8x8xf32, #tpu.memory_space<vmem>>, vector<1x1x8x8xf32>
    %483 = vector.shape_cast %482 : vector<1x1x8x8xf32> to vector<8x8xf32>
    %cst_452 = arith.constant dense<0.000000e+00> : vector<8x512xf32>
    %484 = tpu.matmul %483, %444, %cst_452 {dimension_numbers = #tpu.dot_dimension_numbers<[1], [0], [0], [1], [0, 0, 1, 1], [], []>} : vector<8x8xf32>, vector<8x512xf32>, vector<8x512xf32> -> vector<8x512xf32>
    %485 = arith.addf %481, %484 : vector<8x512xf32>
    %c511_i32_453 = arith.constant 511 : i32
    %486 = tpu.dynamic_rotate %444 by %c511_i32_453 dim 1 : vector<8x512xf32>, i32 -> vector<8x512xf32>
    %c5_454 = arith.constant 5 : index
    %c0_455 = arith.constant 0 : index
    %c0_456 = arith.constant 0 : index
    %487 = vector.load %arg5[%c5_454, %c0_455, %c0_456] : memref<9x1x512xf32, #tpu.memory_space<vmem>>, vector<1x1x512xf32>
    %488 = vector.shape_cast %487 : vector<1x1x512xf32> to vector<1x512xf32>
    %489 = vector.broadcast %488 : vector<1x512xf32> to vector<8x512xf32>
    %490 = arith.mulf %486, %489 : vector<8x512xf32>
    %c0_457 = arith.constant 0 : index
    %c5_458 = arith.constant 5 : index
    %c0_459 = arith.constant 0 : index
    %c0_460 = arith.constant 0 : index
    %491 = vector.load %arg18[%c0_457, %c5_458, %c0_459, %c0_460] : memref<1x9x8x8xf32, #tpu.memory_space<vmem>>, vector<1x1x8x8xf32>
    %492 = vector.shape_cast %491 : vector<1x1x8x8xf32> to vector<8x8xf32>
    %cst_461 = arith.constant dense<0.000000e+00> : vector<8x512xf32>
    %493 = tpu.matmul %492, %490, %cst_461 {dimension_numbers = #tpu.dot_dimension_numbers<[1], [0], [0], [1], [0, 0, 1, 1], [], []>} : vector<8x8xf32>, vector<8x512xf32>, vector<8x512xf32> -> vector<8x512xf32>
    %494 = arith.addf %485, %493 : vector<8x512xf32>
    %c497_i32_462 = arith.constant 497 : i32
    %495 = tpu.dynamic_rotate %444 by %c497_i32_462 dim 1 : vector<8x512xf32>, i32 -> vector<8x512xf32>
    %c6_463 = arith.constant 6 : index
    %c0_464 = arith.constant 0 : index
    %c0_465 = arith.constant 0 : index
    %496 = vector.load %arg5[%c6_463, %c0_464, %c0_465] : memref<9x1x512xf32, #tpu.memory_space<vmem>>, vector<1x1x512xf32>
    %497 = vector.shape_cast %496 : vector<1x1x512xf32> to vector<1x512xf32>
    %498 = vector.broadcast %497 : vector<1x512xf32> to vector<8x512xf32>
    %499 = arith.mulf %495, %498 : vector<8x512xf32>
    %c0_466 = arith.constant 0 : index
    %c6_467 = arith.constant 6 : index
    %c0_468 = arith.constant 0 : index
    %c0_469 = arith.constant 0 : index
    %500 = vector.load %arg18[%c0_466, %c6_467, %c0_468, %c0_469] : memref<1x9x8x8xf32, #tpu.memory_space<vmem>>, vector<1x1x8x8xf32>
    %501 = vector.shape_cast %500 : vector<1x1x8x8xf32> to vector<8x8xf32>
    %cst_470 = arith.constant dense<0.000000e+00> : vector<8x512xf32>
    %502 = tpu.matmul %501, %499, %cst_470 {dimension_numbers = #tpu.dot_dimension_numbers<[1], [0], [0], [1], [0, 0, 1, 1], [], []>} : vector<8x8xf32>, vector<8x512xf32>, vector<8x512xf32> -> vector<8x512xf32>
    %503 = arith.addf %494, %502 : vector<8x512xf32>
    %c496_i32_471 = arith.constant 496 : i32
    %504 = tpu.dynamic_rotate %444 by %c496_i32_471 dim 1 : vector<8x512xf32>, i32 -> vector<8x512xf32>
    %c7_472 = arith.constant 7 : index
    %c0_473 = arith.constant 0 : index
    %c0_474 = arith.constant 0 : index
    %505 = vector.load %arg5[%c7_472, %c0_473, %c0_474] : memref<9x1x512xf32, #tpu.memory_space<vmem>>, vector<1x1x512xf32>
    %506 = vector.shape_cast %505 : vector<1x1x512xf32> to vector<1x512xf32>
    %507 = vector.broadcast %506 : vector<1x512xf32> to vector<8x512xf32>
    %508 = arith.mulf %504, %507 : vector<8x512xf32>
    %c0_475 = arith.constant 0 : index
    %c7_476 = arith.constant 7 : index
    %c0_477 = arith.constant 0 : index
    %c0_478 = arith.constant 0 : index
    %509 = vector.load %arg18[%c0_475, %c7_476, %c0_477, %c0_478] : memref<1x9x8x8xf32, #tpu.memory_space<vmem>>, vector<1x1x8x8xf32>
    %510 = vector.shape_cast %509 : vector<1x1x8x8xf32> to vector<8x8xf32>
    %cst_479 = arith.constant dense<0.000000e+00> : vector<8x512xf32>
    %511 = tpu.matmul %510, %508, %cst_479 {dimension_numbers = #tpu.dot_dimension_numbers<[1], [0], [0], [1], [0, 0, 1, 1], [], []>} : vector<8x8xf32>, vector<8x512xf32>, vector<8x512xf32> -> vector<8x512xf32>
    %512 = arith.addf %503, %511 : vector<8x512xf32>
    %c495_i32_480 = arith.constant 495 : i32
    %513 = tpu.dynamic_rotate %444 by %c495_i32_480 dim 1 : vector<8x512xf32>, i32 -> vector<8x512xf32>
    %c8_481 = arith.constant 8 : index
    %c0_482 = arith.constant 0 : index
    %c0_483 = arith.constant 0 : index
    %514 = vector.load %arg5[%c8_481, %c0_482, %c0_483] : memref<9x1x512xf32, #tpu.memory_space<vmem>>, vector<1x1x512xf32>
    %515 = vector.shape_cast %514 : vector<1x1x512xf32> to vector<1x512xf32>
    %516 = vector.broadcast %515 : vector<1x512xf32> to vector<8x512xf32>
    %517 = arith.mulf %513, %516 : vector<8x512xf32>
    %c0_484 = arith.constant 0 : index
    %c8_485 = arith.constant 8 : index
    %c0_486 = arith.constant 0 : index
    %c0_487 = arith.constant 0 : index
    %518 = vector.load %arg18[%c0_484, %c8_485, %c0_486, %c0_487] : memref<1x9x8x8xf32, #tpu.memory_space<vmem>>, vector<1x1x8x8xf32>
    %519 = vector.shape_cast %518 : vector<1x1x8x8xf32> to vector<8x8xf32>
    %cst_488 = arith.constant dense<0.000000e+00> : vector<8x512xf32>
    %520 = tpu.matmul %519, %517, %cst_488 {dimension_numbers = #tpu.dot_dimension_numbers<[1], [0], [0], [1], [0, 0, 1, 1], [], []>} : vector<8x8xf32>, vector<8x512xf32>, vector<8x512xf32> -> vector<8x512xf32>
    %521 = arith.addf %512, %520 : vector<8x512xf32>
    %c0_489 = arith.constant 0 : index
    %c0_490 = arith.constant 0 : index
    %c0_491 = arith.constant 0 : index
    %522 = vector.load %arg19[%c0_489, %c0_490, %c0_491] : memref<1x8x1xf32, #tpu.memory_space<vmem>>, vector<1x8x1xf32>
    %523 = vector.shape_cast %522 : vector<1x8x1xf32> to vector<8x1xf32>
    %524 = vector.broadcast %523 : vector<8x1xf32> to vector<8x512xf32>
    %525 = arith.addf %521, %524 : vector<8x512xf32>
    %cst_492 = arith.constant 0.000000e+00 : f32
    %526 = vector.broadcast %cst_492 : f32 to vector<8x512xf32>
    %527 = arith.maximumf %525, %526 : vector<8x512xf32>
    %c0_493 = arith.constant 0 : index
    %c0_494 = arith.constant 0 : index
    %c0_495 = arith.constant 0 : index
    %528 = vector.load %arg20[%c0_493, %c0_494, %c0_495] : memref<1x1x8xf32, #tpu.memory_space<vmem>>, vector<1x1x8xf32>
    %529 = vector.shape_cast %528 : vector<1x1x8xf32> to vector<1x8xf32>
    %cst_496 = arith.constant dense<0.000000e+00> : vector<1x512xf32>
    %530 = tpu.matmul %529, %527, %cst_496 {dimension_numbers = #tpu.dot_dimension_numbers<[1], [0], [0], [1], [0, 0, 1, 1], [], []>} : vector<1x8xf32>, vector<8x512xf32>, vector<1x512xf32> -> vector<1x512xf32>
    %c0_497 = arith.constant 0 : index
    %c0_498 = arith.constant 0 : index
    %c0_499 = arith.constant 0 : index
    %531 = vector.load %arg21[%c0_497, %c0_498, %c0_499] : memref<1x1x1xf32, #tpu.memory_space<vmem>>, vector<1x1x1xf32>
    %532 = vector.shape_cast %531 : vector<1x1x1xf32> to vector<1x1xf32>
    %533 = vector.broadcast %532 : vector<1x1xf32> to vector<1x512xf32>
    %534 = arith.addf %530, %533 : vector<1x512xf32>
    %c0_500 = arith.constant 0 : index
    %c0_501 = arith.constant 0 : index
    %c0_502 = arith.constant 0 : index
    %c0_503 = arith.constant 0 : index
    %535 = vector.load %arg22[%c0_500, %c0_501, %c0_502, %c0_503] : memref<1x1x1x512xf32, #tpu.memory_space<vmem>>, vector<1x1x1x512xf32>
    %536 = vector.shape_cast %535 : vector<1x1x1x512xf32> to vector<1x512xf32>
    %537 = vector.shape_cast %534 : vector<1x512xf32> to vector<1x1x1x512xf32>
    tpu.vector_store %arg22[%c0_500, %c0_501, %c0_502, %c0_503], %537 {strides = array<i32>} : memref<1x1x1x512xf32, #tpu.memory_space<vmem>>, vector<1x1x1x512xf32>,
    return
  }
  func.func @transform_0(%arg0: i32, %arg1: i32) -> (i32, i32, i32) {
    %c0_i32 = arith.constant 0 : i32
    %c0_i32_0 = arith.constant 0 : i32
    %c0_i32_1 = arith.constant 0 : i32
    return %arg1, %c0_i32, %c0_i32_0 : i32, i32, i32
  }
  func.func @transform_1(%arg0: i32, %arg1: i32) -> (i32, i32) {
    %c0_i32 = arith.constant 0 : i32
    %c0_i32_0 = arith.constant 0 : i32
    %c0_i32_1 = arith.constant 0 : i32
    return %c0_i32, %c0_i32_0 : i32, i32
  }
  func.func @transform_2(%arg0: i32, %arg1: i32) -> (i32, i32) {
    %c0_i32 = arith.constant 0 : i32
    %c0_i32_0 = arith.constant 0 : i32
    %c0_i32_1 = arith.constant 0 : i32
    return %c0_i32, %c0_i32_0 : i32, i32
  }
  func.func @transform_3(%arg0: i32, %arg1: i32) -> (i32, i32, i32) {
    %c0_i32 = arith.constant 0 : i32
    %c0_i32_0 = arith.constant 0 : i32
    %c0_i32_1 = arith.constant 0 : i32
    %c0_i32_2 = arith.constant 0 : i32
    return %c0_i32, %c0_i32_0, %c0_i32_1 : i32, i32, i32
  }
  func.func @transform_4(%arg0: i32, %arg1: i32) -> (i32, i32, i32) {
    %c0_i32 = arith.constant 0 : i32
    %c0_i32_0 = arith.constant 0 : i32
    %c0_i32_1 = arith.constant 0 : i32
    %c0_i32_2 = arith.constant 0 : i32
    return %c0_i32, %c0_i32_0, %c0_i32_1 : i32, i32, i32
  }
  func.func @transform_5(%arg0: i32, %arg1: i32) -> (i32, i32, i32) {
    %c0_i32 = arith.constant 0 : i32
    %c0_i32_0 = arith.constant 0 : i32
    %c0_i32_1 = arith.constant 0 : i32
    return %arg0, %c0_i32, %c0_i32_0 : i32, i32, i32
  }
  func.func @transform_6(%arg0: i32, %arg1: i32) -> (i32, i32, i32) {
    %c0_i32 = arith.constant 0 : i32
    %c0_i32_0 = arith.constant 0 : i32
    %c0_i32_1 = arith.constant 0 : i32
    return %arg0, %c0_i32, %c0_i32_0 : i32, i32, i32
  }
  func.func @transform_7(%arg0: i32, %arg1: i32) -> (i32, i32, i32, i32) {
    %c0_i32 = arith.constant 0 : i32
    %c0_i32_0 = arith.constant 0 : i32
    %c0_i32_1 = arith.constant 0 : i32
    %c0_i32_2 = arith.constant 0 : i32
    return %arg0, %c0_i32, %c0_i32_0, %c0_i32_1 : i32, i32, i32, i32
  }
  func.func @transform_8(%arg0: i32, %arg1: i32) -> (i32, i32, i32) {
    %c0_i32 = arith.constant 0 : i32
    %c0_i32_0 = arith.constant 0 : i32
    %c0_i32_1 = arith.constant 0 : i32
    return %arg0, %c0_i32, %c0_i32_0 : i32, i32, i32
  }
  func.func @transform_9(%arg0: i32, %arg1: i32) -> (i32, i32, i32, i32) {
    %c0_i32 = arith.constant 0 : i32
    %c0_i32_0 = arith.constant 0 : i32
    %c0_i32_1 = arith.constant 0 : i32
    %c0_i32_2 = arith.constant 0 : i32
    return %arg0, %c0_i32, %c0_i32_0, %c0_i32_1 : i32, i32, i32, i32
  }
  func.func @transform_10(%arg0: i32, %arg1: i32) -> (i32, i32, i32) {
    %c0_i32 = arith.constant 0 : i32
    %c0_i32_0 = arith.constant 0 : i32
    %c0_i32_1 = arith.constant 0 : i32
    return %arg0, %c0_i32, %c0_i32_0 : i32, i32, i32
  }
  func.func @transform_11(%arg0: i32, %arg1: i32) -> (i32, i32, i32, i32) {
    %c0_i32 = arith.constant 0 : i32
    %c0_i32_0 = arith.constant 0 : i32
    %c0_i32_1 = arith.constant 0 : i32
    %c0_i32_2 = arith.constant 0 : i32
    return %arg0, %c0_i32, %c0_i32_0, %c0_i32_1 : i32, i32, i32, i32
  }
  func.func @transform_12(%arg0: i32, %arg1: i32) -> (i32, i32, i32) {
    %c0_i32 = arith.constant 0 : i32
    %c0_i32_0 = arith.constant 0 : i32
    %c0_i32_1 = arith.constant 0 : i32
    return %arg0, %c0_i32, %c0_i32_0 : i32, i32, i32
  }
  func.func @transform_13(%arg0: i32, %arg1: i32) -> (i32, i32, i32, i32) {
    %c0_i32 = arith.constant 0 : i32
    %c0_i32_0 = arith.constant 0 : i32
    %c0_i32_1 = arith.constant 0 : i32
    %c0_i32_2 = arith.constant 0 : i32
    return %arg0, %c0_i32, %c0_i32_0, %c0_i32_1 : i32, i32, i32, i32
  }
  func.func @transform_14(%arg0: i32, %arg1: i32) -> (i32, i32, i32, i32) {
    %c0_i32 = arith.constant 0 : i32
    %c0_i32_0 = arith.constant 0 : i32
    %c0_i32_1 = arith.constant 0 : i32
    %c0_i32_2 = arith.constant 0 : i32
    return %arg0, %c0_i32, %c0_i32_0, %c0_i32_1 : i32, i32, i32, i32
  }
  func.func @transform_15(%arg0: i32, %arg1: i32) -> (i32, i32, i32) {
    %c0_i32 = arith.constant 0 : i32
    %c0_i32_0 = arith.constant 0 : i32
    %c0_i32_1 = arith.constant 0 : i32
    return %arg0, %c0_i32, %c0_i32_0 : i32, i32, i32
  }
  func.func @transform_16(%arg0: i32, %arg1: i32) -> (i32, i32, i32, i32) {
    %c0_i32 = arith.constant 0 : i32
    %c0_i32_0 = arith.constant 0 : i32
    %c0_i32_1 = arith.constant 0 : i32
    %c0_i32_2 = arith.constant 0 : i32
    return %arg0, %c0_i32, %c0_i32_0, %c0_i32_1 : i32, i32, i32, i32
  }
  func.func @transform_17(%arg0: i32, %arg1: i32) -> (i32, i32, i32) {
    %c0_i32 = arith.constant 0 : i32
    %c0_i32_0 = arith.constant 0 : i32
    %c0_i32_1 = arith.constant 0 : i32
    return %arg0, %c0_i32, %c0_i32_0 : i32, i32, i32
  }
  func.func @transform_18(%arg0: i32, %arg1: i32) -> (i32, i32, i32) {
    %c0_i32 = arith.constant 0 : i32
    %c0_i32_0 = arith.constant 0 : i32
    %c0_i32_1 = arith.constant 0 : i32
    return %arg0, %c0_i32, %c0_i32_0 : i32, i32, i32
  }
  func.func @transform_19(%arg0: i32, %arg1: i32) -> (i32, i32, i32) {
    %c0_i32 = arith.constant 0 : i32
    %c0_i32_0 = arith.constant 0 : i32
    %c0_i32_1 = arith.constant 0 : i32
    return %arg0, %c0_i32, %c0_i32_0 : i32, i32, i32
  }
  func.func @transform_20(%arg0: i32, %arg1: i32) -> (i32, i32, i32, i32) {
    %c0_i32 = arith.constant 0 : i32
    %c0_i32_0 = arith.constant 0 : i32
    %c0_i32_1 = arith.constant 0 : i32
    return %arg0, %arg1, %c0_i32, %c0_i32_0 : i32, i32, i32, i32
  }
}

</mosaic_0001>

<llo_original>
// kernel: ensemble_forward.1
$region0: #{ensemble_forward.1}
  #allocation0 [shape = 'u32[]', space=smem, size = 0x4, offset = 0x4, fixed_abs, tag = 'smem constant byte address 0x4 - core index']
  #allocation1 [shape = 'u32[144,128]{1,0:T(1,128)}', space=vmem, size = 0x12000, scoped, tag = 'internal scratch']
  %s0 = inlined_call_operand.vmem [shape: f32[1,72,512], index: 0, kind: input, shape index: {}]
  %s1 = inlined_call_operand.vmem [shape: f32[256,128], index: 1, kind: input, shape index: {}]
  %s2 = inlined_call_operand.vmem [shape: f32[128,256], index: 2, kind: input, shape index: {}]
  %s3 = inlined_call_operand.vmem [shape: f32[9,1,512], index: 3, kind: input, shape index: {}]
  %s4 = inlined_call_operand.vmem [shape: f32[9,1,256], index: 4, kind: input, shape index: {}]
  %s5 = inlined_call_operand.vmem [shape: f32[2,8,72], index: 5, kind: input, shape index: {}]
  %s6 = inlined_call_operand.vmem [shape: f32[2,8,1], index: 6, kind: input, shape index: {}]
  %s7 = inlined_call_operand.vmem [shape: f32[2,9,8,8], index: 7, kind: input, shape index: {}]
  %s8 = inlined_call_operand.vmem [shape: f32[2,8,1], index: 8, kind: input, shape index: {}]
  %s9 = inlined_call_operand.vmem [shape: f32[2,9,16,8], index: 9, kind: input, shape index: {}]
  %s10 = inlined_call_operand.vmem [shape: f32[2,16,1], index: 10, kind: input, shape index: {}]
  %s11 = inlined_call_operand.vmem [shape: f32[2,9,16,16], index: 11, kind: input, shape index: {}]
  %s12 = inlined_call_operand.vmem [shape: f32[2,16,1], index: 12, kind: input, shape index: {}]
  %s13 = inlined_call_operand.vmem [shape: f32[2,9,8,16], index: 13, kind: input, shape index: {}]
  %s14 = inlined_call_operand.vmem [shape: f32[2,9,8,8], index: 14, kind: input, shape index: {}]
  %s15 = inlined_call_operand.vmem [shape: f32[2,8,1], index: 15, kind: input, shape index: {}]
  %s16 = inlined_call_operand.vmem [shape: f32[2,9,8,8], index: 16, kind: input, shape index: {}]
  %s17 = inlined_call_operand.vmem [shape: f32[2,8,1], index: 17, kind: input, shape index: {}]
  %s18 = inlined_call_operand.vmem [shape: f32[2,1,8], index: 18, kind: input, shape index: {}]
  %s19 = inlined_call_operand.vmem [shape: f32[2,1,1], index: 19, kind: input, shape index: {}]
  %s20 = inlined_call_operand.vmem [shape: f32[2,1,1,512], index: 20, kind: output, shape index: {}]
  %s21 = sld [smem:[#allocation0]]
  $region113: #{ensemble_forward.1} parent=0
    _
  %s23 = ssub.s32 1, %s21
  %s24 = scalar_select 0, %s23, %s21
  loop: start=0, step=1, limit=4
  $region2: #{ensemble_forward.1} parent=0 // loop_pre_header
    _
  $region3: #{ensemble_forward.1} parent=0 // loop_header
    %s26 = sphi 0, %s30
    %p27 = scmp.ge.s32.totalorder %s26, 4
    %s33 = sphi 0, %s45
    %s34 = sphi 0, %s41
    %s35 = sphi 0, %s33
    %s36 = sphi 0, %s34
    %s37 = sphi 0, %s35
    %s38 = sphi 0, %s36
    %s48 = sphi 0, %s50
    %s51 = sphi 0, %s48
    %s52 = sphi 0, %s51
    %s68 = sphi 0, %s52
    %s72 = sphi 0, %s72
    %s74 = sphi 0, %s72
    %s75 = sphi 0, %s74
    %s89 = sphi 0, %s75
    %s93 = sphi 0, %s93
    %s95 = sphi 0, %s93
    %s96 = sphi 0, %s95
    %s110 = sphi 0, %s96
    %s114 = sphi 0, %s114
    %s116 = sphi 0, %s114
    %s117 = sphi 0, %s116
    %s131 = sphi 0, %s117
    %s135 = sphi 0, %s135
    %s137 = sphi 0, %s135
    %s138 = sphi 0, %s137
    %s152 = sphi 0, %s138
    %s158 = sphi 0, %s160
    %s161 = sphi 0, %s158
    %s162 = sphi 0, %s161
    %s178 = sphi 0, %s162
    %s184 = sphi 0, %s186
    %s187 = sphi 0, %s184
    %s188 = sphi 0, %s187
    %s204 = sphi 0, %s188
    %s210 = sphi 0, %s212
    %s213 = sphi 0, %s210
    %s214 = sphi 0, %s213
    %s230 = sphi 0, %s214
    %s236 = sphi 0, %s238
    %s239 = sphi 0, %s236
    %s240 = sphi 0, %s239
    %s256 = sphi 0, %s240
    %s262 = sphi 0, %s264
    %s265 = sphi 0, %s262
    %s266 = sphi 0, %s265
    %s282 = sphi 0, %s266
    %s288 = sphi 0, %s290
    %s291 = sphi 0, %s288
    %s292 = sphi 0, %s291
    %s308 = sphi 0, %s292
    %s314 = sphi 0, %s316
    %s317 = sphi 0, %s314
    %s318 = sphi 0, %s317
    %s334 = sphi 0, %s318
    %s340 = sphi 0, %s342
    %s343 = sphi 0, %s340
    %s344 = sphi 0, %s343
    %s360 = sphi 0, %s344
    %s366 = sphi 0, %s368
    %s369 = sphi 0, %s366
    %s370 = sphi 0, %s369
    %s386 = sphi 0, %s370
    %s392 = sphi 0, %s394
    %s395 = sphi 0, %s392
    %s396 = sphi 0, %s395
    %s412 = sphi 0, %s396
    %s418 = sphi 0, %s420
    %s421 = sphi 0, %s418
    %s422 = sphi 0, %s421
    %s438 = sphi 0, %s422
    %s444 = sphi 0, %s446
    %s447 = sphi 0, %s444
    %s448 = sphi 0, %s447
    %s464 = sphi 0, %s448
    %s470 = sphi 0, %s472
    %s473 = sphi 0, %s470
    %s474 = sphi 0, %s473
    %s490 = sphi 0, %s474
    %s496 = sphi 0, %s498
    %s499 = sphi 0, %s496
    %s500 = sphi 0, %s499
    %s516 = sphi 0, %s500
    %s522 = sphi 0, %s524
    %s525 = sphi 0, %s522
    %s526 = sphi 0, %s525
    %s542 = sphi 0, %s526
    %s550 = sphi 0, %s552
    %s553 = sphi 0, %s550
    %s554 = sphi 0, %s553
    %s570 = sphi 0, %s554
  $region4: #{ensemble_forward.1} parent=0 // loop_header_branch
    %29 = sbr.rel (%p27) target = $region8
  $region5: #{ensemble_forward.1} parent=0 // loop_body
    %s31 = ssub.s32 %s26, 1
    %s32 = ssub.s32 %s26, 2
    %s39 = sadd.s32 1, %s34
    %p40 = scmp.ge.s32.totalorder %s39, 1
    %s41 = scalar_select %p40, 0, %s39
    %s42 = sadd.s32 1, %s33
    %s43 = scalar_select %p40, %s42, %s33
    %p44 = scmp.ge.s32.totalorder %s43, 2
    %s45 = scalar_select %p44, 0, %s43
    %s46 = ssub.s32 %s34, %s41
    %p47 = scmp.eq.s32.totalorder %s46, 0
    %s49 = sadd.s32 %s48, 1
    %s50 = scalar_select %p47, %s48, %s49
    %p53 = pneg %p47
    %p54 = scmp.eq.s32.totalorder %s26, 1
    %p55 = por %p53, %p54
    %p56 = scmp.ne.s32.totalorder %s48, %s51
    %p57 = scmp.eq.s32.totalorder %s26, 0
    %p58 = por %p56, %p57
    %p59 = scmp.ne.s32.totalorder %s48, %s51
    %p60 = scmp.eq.s32.totalorder %s31, 1
    %p61 = por %p59, %p60
    %p62 = scmp.ne.s32.totalorder %s51, %s52
    %p63 = scmp.eq.s32.totalorder %s31, 0
    %p64 = por %p62, %p63
    %p65 = scmp.ne.s32.totalorder %s51, %s52
    %p66 = scmp.eq.s32.totalorder %s32, 1
    %p67 = por %p65, %p66
    %p69 = scmp.ne.s32.totalorder %s52, %s68
    %p70 = scmp.eq.s32.totalorder %s32, 0
    %p71 = por %p69, %p70
    %s73 = sadd.s32 %s72, 1
    %p76 = scmp.eq.s32.totalorder %s26, 1
    %p77 = scmp.ne.s32.totalorder %s72, %s74
    %p78 = scmp.eq.s32.totalorder %s26, 0
    %p79 = por %p77, %p78
    %p80 = scmp.ne.s32.totalorder %s72, %s74
    %p81 = scmp.eq.s32.totalorder %s31, 1
    %p82 = por %p80, %p81
    %p83 = scmp.ne.s32.totalorder %s74, %s75
    %p84 = scmp.eq.s32.totalorder %s31, 0
    %p85 = por %p83, %p84
    %p86 = scmp.ne.s32.totalorder %s74, %s75
    %p87 = scmp.eq.s32.totalorder %s32, 1
    %p88 = por %p86, %p87
    %p90 = scmp.ne.s32.totalorder %s75, %s89
    %p91 = scmp.eq.s32.totalorder %s32, 0
    %p92 = por %p90, %p91
    %s94 = sadd.s32 %s93, 1
    %p97 = scmp.eq.s32.totalorder %s26, 1
    %p98 = scmp.ne.s32.totalorder %s93, %s95
    %p99 = scmp.eq.s32.totalorder %s26, 0
    %p100 = por %p98, %p99
    %p101 = scmp.ne.s32.totalorder %s93, %s95
    %p102 = scmp.eq.s32.totalorder %s31, 1
    %p103 = por %p101, %p102
    %p104 = scmp.ne.s32.totalorder %s95, %s96
    %p105 = scmp.eq.s32.totalorder %s31, 0
    %p106 = por %p104, %p105
    %p107 = scmp.ne.s32.totalorder %s95, %s96
    %p108 = scmp.eq.s32.totalorder %s32, 1
    %p109 = por %p107, %p108
    %p111 = scmp.ne.s32.totalorder %s96, %s110
    %p112 = scmp.eq.s32.totalorder %s32, 0
    %p113 = por %p111, %p112
    %s115 = sadd.s32 %s114, 1
    %p118 = scmp.eq.s32.totalorder %s26, 1
    %p119 = scmp.ne.s32.totalorder %s114, %s116
    %p120 = scmp.eq.s32.totalorder %s26, 0
    %p121 = por %p119, %p120
    %p122 = scmp.ne.s32.totalorder %s114, %s116
    %p123 = scmp.eq.s32.totalorder %s31, 1
    %p124 = por %p122, %p123
    %p125 = scmp.ne.s32.totalorder %s116, %s117
    %p126 = scmp.eq.s32.totalorder %s31, 0
    %p127 = por %p125, %p126
    %p128 = scmp.ne.s32.totalorder %s116, %s117
    %p129 = scmp.eq.s32.totalorder %s32, 1
    %p130 = por %p128, %p129
    %p132 = scmp.ne.s32.totalorder %s117, %s131
    %p133 = scmp.eq.s32.totalorder %s32, 0
    %p134 = por %p132, %p133
    %s136 = sadd.s32 %s135, 1
    %p139 = scmp.eq.s32.totalorder %s26, 1
    %p140 = scmp.ne.s32.totalorder %s135, %s137
    %p141 = scmp.eq.s32.totalorder %s26, 0
    %p142 = por %p140, %p141
    %p143 = scmp.ne.s32.totalorder %s135, %s137
    %p144 = scmp.eq.s32.totalorder %s31, 1
    %p145 = por %p143, %p144
    %p146 = scmp.ne.s32.totalorder %s137, %s138
    %p147 = scmp.eq.s32.totalorder %s31, 0
    %p148 = por %p146, %p147
    %p149 = scmp.ne.s32.totalorder %s137, %s138
    %p150 = scmp.eq.s32.totalorder %s32, 1
    %p151 = por %p149, %p150
    %p153 = scmp.ne.s32.totalorder %s138, %s152
    %p154 = scmp.eq.s32.totalorder %s32, 0
    %p155 = por %p153, %p154
    %s156 = ssub.s32 %s33, %s45
    %p157 = scmp.eq.s32.totalorder %s156, 0
    %s159 = sadd.s32 %s158, 1
    %s160 = scalar_select %p157, %s158, %s159
    %p163 = pneg %p157
    %p164 = scmp.eq.s32.totalorder %s26, 1
    %p165 = por %p163, %p164
    %p166 = scmp.ne.s32.totalorder %s158, %s161
    %p167 = scmp.eq.s32.totalorder %s26, 0
    %p168 = por %p166, %p167
    %p169 = scmp.ne.s32.totalorder %s158, %s161
    %p170 = scmp.eq.s32.totalorder %s31, 1
    %p171 = por %p169, %p170
    %p172 = scmp.ne.s32.totalorder %s161, %s162
    %p173 = scmp.eq.s32.totalorder %s31, 0
    %p174 = por %p172, %p173
    %p175 = scmp.ne.s32.totalorder %s161, %s162
    %p176 = scmp.eq.s32.totalorder %s32, 1
    %p177 = por %p175, %p176
    %p179 = scmp.ne.s32.totalorder %s162, %s178
    %p180 = scmp.eq.s32.totalorder %s32, 0
    %p181 = por %p179, %p180
    %s182 = ssub.s32 %s33, %s45
    %p183 = scmp.eq.s32.totalorder %s182, 0
    %s185 = sadd.s32 %s184, 1
    %s186 = scalar_select %p183, %s184, %s185
    %p189 = pneg %p183
    %p190 = scmp.eq.s32.totalorder %s26, 1
    %p191 = por %p189, %p190
    %p192 = scmp.ne.s32.totalorder %s184, %s187
    %p193 = scmp.eq.s32.totalorder %s26, 0
    %p194 = por %p192, %p193
    %p195 = scmp.ne.s32.totalorder %s184, %s187
    %p196 = scmp.eq.s32.totalorder %s31, 1
    %p197 = por %p195, %p196
    %p198 = scmp.ne.s32.totalorder %s187, %s188
    %p199 = scmp.eq.s32.totalorder %s31, 0
    %p200 = por %p198, %p199
    %p201 = scmp.ne.s32.totalorder %s187, %s188
    %p202 = scmp.eq.s32.totalorder %s32, 1
    %p203 = por %p201, %p202
    %p205 = scmp.ne.s32.totalorder %s188, %s204
    %p206 = scmp.eq.s32.totalorder %s32, 0
    %p207 = por %p205, %p206
    %s208 = ssub.s32 %s33, %s45
    %p209 = scmp.eq.s32.totalorder %s208, 0
    %s211 = sadd.s32 %s210, 1
    %s212 = scalar_select %p209, %s210, %s211
    %p215 = pneg %p209
    %p216 = scmp.eq.s32.totalorder %s26, 1
    %p217 = por %p215, %p216
    %p218 = scmp.ne.s32.totalorder %s210, %s213
    %p219 = scmp.eq.s32.totalorder %s26, 0
    %p220 = por %p218, %p219
    %p221 = scmp.ne.s32.totalorder %s210, %s213
    %p222 = scmp.eq.s32.totalorder %s31, 1
    %p223 = por %p221, %p222
    %p224 = scmp.ne.s32.totalorder %s213, %s214
    %p225 = scmp.eq.s32.totalorder %s31, 0
    %p226 = por %p224, %p225
    %p227 = scmp.ne.s32.totalorder %s213, %s214
    %p228 = scmp.eq.s32.totalorder %s32, 1
    %p229 = por %p227, %p228
    %p231 = scmp.ne.s32.totalorder %s214, %s230
    %p232 = scmp.eq.s32.totalorder %s32, 0
    %p233 = por %p231, %p232
    %s234 = ssub.s32 %s33, %s45
    %p235 = scmp.eq.s32.totalorder %s234, 0
    %s237 = sadd.s32 %s236, 1
    %s238 = scalar_select %p235, %s236, %s237
    %p241 = pneg %p235
    %p242 = scmp.eq.s32.totalorder %s26, 1
    %p243 = por %p241, %p242
    %p244 = scmp.ne.s32.totalorder %s236, %s239
    %p245 = scmp.eq.s32.totalorder %s26, 0
    %p246 = por %p244, %p245
    %p247 = scmp.ne.s32.totalorder %s236, %s239
    %p248 = scmp.eq.s32.totalorder %s31, 1
    %p249 = por %p247, %p248
    %p250 = scmp.ne.s32.totalorder %s239, %s240
    %p251 = scmp.eq.s32.totalorder %s31, 0
    %p252 = por %p250, %p251
    %p253 = scmp.ne.s32.totalorder %s239, %s240
    %p254 = scmp.eq.s32.totalorder %s32, 1
    %p255 = por %p253, %p254
    %p257 = scmp.ne.s32.totalorder %s240, %s256
    %p258 = scmp.eq.s32.totalorder %s32, 0
    %p259 = por %p257, %p258
    %s260 = ssub.s32 %s33, %s45
    %p261 = scmp.eq.s32.totalorder %s260, 0
    %s263 = sadd.s32 %s262, 1
    %s264 = scalar_select %p261, %s262, %s263
    %p267 = pneg %p261
    %p268 = scmp.eq.s32.totalorder %s26, 1
    %p269 = por %p267, %p268
    %p270 = scmp.ne.s32.totalorder %s262, %s265
    %p271 = scmp.eq.s32.totalorder %s26, 0
    %p272 = por %p270, %p271
    %p273 = scmp.ne.s32.totalorder %s262, %s265
    %p274 = scmp.eq.s32.totalorder %s31, 1
    %p275 = por %p273, %p274
    %p276 = scmp.ne.s32.totalorder %s265, %s266
    %p277 = scmp.eq.s32.totalorder %s31, 0
    %p278 = por %p276, %p277
    %p279 = scmp.ne.s32.totalorder %s265, %s266
    %p280 = scmp.eq.s32.totalorder %s32, 1
    %p281 = por %p279, %p280
    %p283 = scmp.ne.s32.totalorder %s266, %s282
    %p284 = scmp.eq.s32.totalorder %s32, 0
    %p285 = por %p283, %p284
    %s286 = ssub.s32 %s33, %s45
    %p287 = scmp.eq.s32.totalorder %s286, 0
    %s289 = sadd.s32 %s288, 1
    %s290 = scalar_select %p287, %s288, %s289
    %p293 = pneg %p287
    %p294 = scmp.eq.s32.totalorder %s26, 1
    %p295 = por %p293, %p294
    %p296 = scmp.ne.s32.totalorder %s288, %s291
    %p297 = scmp.eq.s32.totalorder %s26, 0
    %p298 = por %p296, %p297
    %p299 = scmp.ne.s32.totalorder %s288, %s291
    %p300 = scmp.eq.s32.totalorder %s31, 1
    %p301 = por %p299, %p300
    %p302 = scmp.ne.s32.totalorder %s291, %s292
    %p303 = scmp.eq.s32.totalorder %s31, 0
    %p304 = por %p302, %p303
    %p305 = scmp.ne.s32.totalorder %s291, %s292
    %p306 = scmp.eq.s32.totalorder %s32, 1
    %p307 = por %p305, %p306
    %p309 = scmp.ne.s32.totalorder %s292, %s308
    %p310 = scmp.eq.s32.totalorder %s32, 0
    %p311 = por %p309, %p310
    %s312 = ssub.s32 %s33, %s45
    %p313 = scmp.eq.s32.totalorder %s312, 0
    %s315 = sadd.s32 %s314, 1
    %s316 = scalar_select %p313, %s314, %s315
    %p319 = pneg %p313
    %p320 = scmp.eq.s32.totalorder %s26, 1
    %p321 = por %p319, %p320
    %p322 = scmp.ne.s32.totalorder %s314, %s317
    %p323 = scmp.eq.s32.totalorder %s26, 0
    %p324 = por %p322, %p323
    %p325 = scmp.ne.s32.totalorder %s314, %s317
    %p326 = scmp.eq.s32.totalorder %s31, 1
    %p327 = por %p325, %p326
    %p328 = scmp.ne.s32.totalorder %s317, %s318
    %p329 = scmp.eq.s32.totalorder %s31, 0
    %p330 = por %p328, %p329
    %p331 = scmp.ne.s32.totalorder %s317, %s318
    %p332 = scmp.eq.s32.totalorder %s32, 1
    %p333 = por %p331, %p332
    %p335 = scmp.ne.s32.totalorder %s318, %s334
    %p336 = scmp.eq.s32.totalorder %s32, 0
    %p337 = por %p335, %p336
    %s338 = ssub.s32 %s33, %s45
    %p339 = scmp.eq.s32.totalorder %s338, 0
    %s341 = sadd.s32 %s340, 1
    %s342 = scalar_select %p339, %s340, %s341
    %p345 = pneg %p339
    %p346 = scmp.eq.s32.totalorder %s26, 1
    %p347 = por %p345, %p346
    %p348 = scmp.ne.s32.totalorder %s340, %s343
    %p349 = scmp.eq.s32.totalorder %s26, 0
    %p350 = por %p348, %p349
    %p351 = scmp.ne.s32.totalorder %s340, %s343
    %p352 = scmp.eq.s32.totalorder %s31, 1
    %p353 = por %p351, %p352
    %p354 = scmp.ne.s32.totalorder %s343, %s344
    %p355 = scmp.eq.s32.totalorder %s31, 0
    %p356 = por %p354, %p355
    %p357 = scmp.ne.s32.totalorder %s343, %s344
    %p358 = scmp.eq.s32.totalorder %s32, 1
    %p359 = por %p357, %p358
    %p361 = scmp.ne.s32.totalorder %s344, %s360
    %p362 = scmp.eq.s32.totalorder %s32, 0
    %p363 = por %p361, %p362
    %s364 = ssub.s32 %s33, %s45
    %p365 = scmp.eq.s32.totalorder %s364, 0
    %s367 = sadd.s32 %s366, 1
    %s368 = scalar_select %p365, %s366, %s367
    %p371 = pneg %p365
    %p372 = scmp.eq.s32.totalorder %s26, 1
    %p373 = por %p371, %p372
    %p374 = scmp.ne.s32.totalorder %s366, %s369
    %p375 = scmp.eq.s32.totalorder %s26, 0
    %p376 = por %p374, %p375
    %p377 = scmp.ne.s32.totalorder %s366, %s369
    %p378 = scmp.eq.s32.totalorder %s31, 1
    %p379 = por %p377, %p378
    %p380 = scmp.ne.s32.totalorder %s369, %s370
    %p381 = scmp.eq.s32.totalorder %s31, 0
    %p382 = por %p380, %p381
    %p383 = scmp.ne.s32.totalorder %s369, %s370
    %p384 = scmp.eq.s32.totalorder %s32, 1
    %p385 = por %p383, %p384
    %p387 = scmp.ne.s32.totalorder %s370, %s386
    %p388 = scmp.eq.s32.totalorder %s32, 0
    %p389 = por %p387, %p388
    %s390 = ssub.s32 %s33, %s45
    %p391 = scmp.eq.s32.totalorder %s390, 0
    %s393 = sadd.s32 %s392, 1
    %s394 = scalar_select %p391, %s392, %s393
    %p397 = pneg %p391
    %p398 = scmp.eq.s32.totalorder %s26, 1
    %p399 = por %p397, %p398
    %p400 = scmp.ne.s32.totalorder %s392, %s395
    %p401 = scmp.eq.s32.totalorder %s26, 0
    %p402 = por %p400, %p401
    %p403 = scmp.ne.s32.totalorder %s392, %s395
    %p404 = scmp.eq.s32.totalorder %s31, 1
    %p405 = por %p403, %p404
    %p406 = scmp.ne.s32.totalorder %s395, %s396
    %p407 = scmp.eq.s32.totalorder %s31, 0
    %p408 = por %p406, %p407
    %p409 = scmp.ne.s32.totalorder %s395, %s396
    %p410 = scmp.eq.s32.totalorder %s32, 1
    %p411 = por %p409, %p410
    %p413 = scmp.ne.s32.totalorder %s396, %s412
    %p414 = scmp.eq.s32.totalorder %s32, 0
    %p415 = por %p413, %p414
    %s416 = ssub.s32 %s33, %s45
    %p417 = scmp.eq.s32.totalorder %s416, 0
    %s419 = sadd.s32 %s418, 1
    %s420 = scalar_select %p417, %s418, %s419
    %p423 = pneg %p417
    %p424 = scmp.eq.s32.totalorder %s26, 1
    %p425 = por %p423, %p424
    %p426 = scmp.ne.s32.totalorder %s418, %s421
    %p427 = scmp.eq.s32.totalorder %s26, 0
    %p428 = por %p426, %p427
    %p429 = scmp.ne.s32.totalorder %s418, %s421
    %p430 = scmp.eq.s32.totalorder %s31, 1
    %p431 = por %p429, %p430
    %p432 = scmp.ne.s32.totalorder %s421, %s422
    %p433 = scmp.eq.s32.totalorder %s31, 0
    %p434 = por %p432, %p433
    %p435 = scmp.ne.s32.totalorder %s421, %s422
    %p436 = scmp.eq.s32.totalorder %s32, 1
    %p437 = por %p435, %p436
    %p439 = scmp.ne.s32.totalorder %s422, %s438
    %p440 = scmp.eq.s32.totalorder %s32, 0
    %p441 = por %p439, %p440
    %s442 = ssub.s32 %s33, %s45
    %p443 = scmp.eq.s32.totalorder %s442, 0
    %s445 = sadd.s32 %s444, 1
    %s446 = scalar_select %p443, %s444, %s445
    %p449 = pneg %p443
    %p450 = scmp.eq.s32.totalorder %s26, 1
    %p451 = por %p449, %p450
    %p452 = scmp.ne.s32.totalorder %s444, %s447
    %p453 = scmp.eq.s32.totalorder %s26, 0
    %p454 = por %p452, %p453
    %p455 = scmp.ne.s32.totalorder %s444, %s447
    %p456 = scmp.eq.s32.totalorder %s31, 1
    %p457 = por %p455, %p456
    %p458 = scmp.ne.s32.totalorder %s447, %s448
    %p459 = scmp.eq.s32.totalorder %s31, 0
    %p460 = por %p458, %p459
    %p461 = scmp.ne.s32.totalorder %s447, %s448
    %p462 = scmp.eq.s32.totalorder %s32, 1
    %p463 = por %p461, %p462
    %p465 = scmp.ne.s32.totalorder %s448, %s464
    %p466 = scmp.eq.s32.totalorder %s32, 0
    %p467 = por %p465, %p466
    %s468 = ssub.s32 %s33, %s45
    %p469 = scmp.eq.s32.totalorder %s468, 0
    %s471 = sadd.s32 %s470, 1
    %s472 = scalar_select %p469, %s470, %s471
    %p475 = pneg %p469
    %p476 = scmp.eq.s32.totalorder %s26, 1
    %p477 = por %p475, %p476
    %p478 = scmp.ne.s32.totalorder %s470, %s473
    %p479 = scmp.eq.s32.totalorder %s26, 0
    %p480 = por %p478, %p479
    %p481 = scmp.ne.s32.totalorder %s470, %s473
    %p482 = scmp.eq.s32.totalorder %s31, 1
    %p483 = por %p481, %p482
    %p484 = scmp.ne.s32.totalorder %s473, %s474
    %p485 = scmp.eq.s32.totalorder %s31, 0
    %p486 = por %p484, %p485
    %p487 = scmp.ne.s32.totalorder %s473, %s474
    %p488 = scmp.eq.s32.totalorder %s32, 1
    %p489 = por %p487, %p488
    %p491 = scmp.ne.s32.totalorder %s474, %s490
    %p492 = scmp.eq.s32.totalorder %s32, 0
    %p493 = por %p491, %p492
    %s494 = ssub.s32 %s33, %s45
    %p495 = scmp.eq.s32.totalorder %s494, 0
    %s497 = sadd.s32 %s496, 1
    %s498 = scalar_select %p495, %s496, %s497
    %p501 = pneg %p495
    %p502 = scmp.eq.s32.totalorder %s26, 1
    %p503 = por %p501, %p502
    %p504 = scmp.ne.s32.totalorder %s496, %s499
    %p505 = scmp.eq.s32.totalorder %s26, 0
    %p506 = por %p504, %p505
    %p507 = scmp.ne.s32.totalorder %s496, %s499
    %p508 = scmp.eq.s32.totalorder %s31, 1
    %p509 = por %p507, %p508
    %p510 = scmp.ne.s32.totalorder %s499, %s500
    %p511 = scmp.eq.s32.totalorder %s31, 0
    %p512 = por %p510, %p511
    %p513 = scmp.ne.s32.totalorder %s499, %s500
    %p514 = scmp.eq.s32.totalorder %s32, 1
    %p515 = por %p513, %p514
    %p517 = scmp.ne.s32.totalorder %s500, %s516
    %p518 = scmp.eq.s32.totalorder %s32, 0
    %p519 = por %p517, %p518
    %s520 = ssub.s32 %s33, %s45
    %p521 = scmp.eq.s32.totalorder %s520, 0
    %s523 = sadd.s32 %s522, 1
    %s524 = scalar_select %p521, %s522, %s523
    %p527 = pneg %p521
    %p528 = scmp.eq.s32.totalorder %s26, 1
    %p529 = por %p527, %p528
    %p530 = scmp.ne.s32.totalorder %s522, %s525
    %p531 = scmp.eq.s32.totalorder %s26, 0
    %p532 = por %p530, %p531
    %p533 = scmp.ne.s32.totalorder %s522, %s525
    %p534 = scmp.eq.s32.totalorder %s31, 1
    %p535 = por %p533, %p534
    %p536 = scmp.ne.s32.totalorder %s525, %s526
    %p537 = scmp.eq.s32.totalorder %s31, 0
    %p538 = por %p536, %p537
    %p539 = scmp.ne.s32.totalorder %s525, %s526
    %p540 = scmp.eq.s32.totalorder %s32, 1
    %p541 = por %p539, %p540
    %p543 = scmp.ne.s32.totalorder %s526, %s542
    %p544 = scmp.eq.s32.totalorder %s32, 0
    %p545 = por %p543, %p544
    %s546 = ssub.s32 %s33, %s45
    %s547 = ssub.s32 %s34, %s41
    %s548 = sor.u32 %s546, %s547
    %p549 = scmp.eq.s32.totalorder %s548, 0
    %s551 = sadd.s32 %s550, 1
    %s552 = scalar_select %p549, %s550, %s551
    %p555 = pneg %p549
    %p556 = scmp.eq.s32.totalorder %s26, 1
    %p557 = por %p555, %p556
    %p558 = scmp.ne.s32.totalorder %s550, %s553
    %p559 = scmp.eq.s32.totalorder %s26, 0
    %p560 = por %p558, %p559
    %p561 = scmp.ne.s32.totalorder %s550, %s553
    %p562 = scmp.eq.s32.totalorder %s31, 1
    %p563 = por %p561, %p562
    %p564 = scmp.ne.s32.totalorder %s553, %s554
    %p565 = scmp.eq.s32.totalorder %s31, 0
    %p566 = por %p564, %p565
    %p567 = scmp.ne.s32.totalorder %s553, %s554
    %p568 = scmp.eq.s32.totalorder %s32, 1
    %p569 = por %p567, %p568
    %p571 = scmp.ne.s32.totalorder %s554, %s570
    %p572 = scmp.eq.s32.totalorder %s32, 0
    %p573 = por %p571, %p572
    %p574 = scmp.le.s32.totalorder 1, %s26
    %p575 = scmp.lt.s32.totalorder %s26, 3
    %p576 = pnand %p574, %p575
    %p577 = pneg %p576
    // Predicated region
    $region9: #{ensemble_forward.1} parent=5 // pred_check
      _
    $region10: #{ensemble_forward.1} parent=5 // pred_check_branch
      %579 = sbr.rel (%p576) target = $region12
    $region11: #{ensemble_forward.1} parent=5 // pred_region
      %s580 = ssub.s32 %s26, 1
      // Predicated region
      $region13: #{ensemble_forward.1} parent=11 // pred_check
        %p581 = pneg %p64
      $region14: #{ensemble_forward.1} parent=11 // pred_check_branch
        %583 = sbr.rel (%p581) target = $region16
      $region15: #{ensemble_forward.1} parent=11 // pred_region
        %p584 = scmp.lt.s32.totalorder %s36, 0
        %s585 = scalar_select %p584, %s36, 0
        %s586 = smul.addr %s585, 36
        %s587 = smul.addr %s586, 8
        %s588 = scalar_lea.vmem %s0, %s587
      $region16: #{ensemble_forward.1} parent=11 // pred_fallthru
        _
      // Predicated region
      $region17: #{ensemble_forward.1} parent=11 // pred_check
        %p589 = pneg %p85
      $region18: #{ensemble_forward.1} parent=11 // pred_check_branch
        %591 = sbr.rel (%p589) target = $region20
      $region19: #{ensemble_forward.1} parent=11 // pred_region
        _
      $region20: #{ensemble_forward.1} parent=11 // pred_fallthru
        _
      // Predicated region
      $region21: #{ensemble_forward.1} parent=11 // pred_check
        %p592 = pneg %p106
      $region22: #{ensemble_forward.1} parent=11 // pred_check_branch
        %594 = sbr.rel (%p592) target = $region24
      $region23: #{ensemble_forward.1} parent=11 // pred_region
        _
      $region24: #{ensemble_forward.1} parent=11 // pred_fallthru
        _
      // Predicated region
      $region25: #{ensemble_forward.1} parent=11 // pred_check
        %p595 = pneg %p127
      $region26: #{ensemble_forward.1} parent=11 // pred_check_branch
        %597 = sbr.rel (%p595) target = $region28
      $region27: #{ensemble_forward.1} parent=11 // pred_region
        _
      $region28: #{ensemble_forward.1} parent=11 // pred_fallthru
        _
      // Predicated region
      $region29: #{ensemble_forward.1} parent=11 // pred_check
        %p598 = pneg %p148
      $region30: #{ensemble_forward.1} parent=11 // pred_check_branch
        %600 = sbr.rel (%p598) target = $region32
      $region31: #{ensemble_forward.1} parent=11 // pred_region
        _
      $region32: #{ensemble_forward.1} parent=11 // pred_fallthru
        _
    $region12: #{ensemble_forward.1} parent=5 // pred_fallthru
      _
    %p601 = scmp.lt.s32.totalorder %s26, 2
    // Predicated region
    $region33: #{ensemble_forward.1} parent=5 // pred_check
      %p602 = pneg %p601
    $region34: #{ensemble_forward.1} parent=5 // pred_check_branch
      %604 = sbr.rel (%p602) target = $region36
    $region35: #{ensemble_forward.1} parent=5 // pred_region
      // Predicated region
      $region37: #{ensemble_forward.1} parent=35 // pred_check
        %p605 = pneg %p168
      $region38: #{ensemble_forward.1} parent=35 // pred_check_branch
        %607 = sbr.rel (%p605) target = $region40
      $region39: #{ensemble_forward.1} parent=35 // pred_region
        %p608 = scmp.lt.s32.totalorder %s33, 1
        %s609 = scalar_select %p608, %s33, 1
        %s610 = smul.addr %s609, 8
        %s611 = scalar_lea.vmem %s5, %s610
      $region40: #{ensemble_forward.1} parent=35 // pred_fallthru
        _
      // Predicated region
      $region41: #{ensemble_forward.1} parent=35 // pred_check
        %p612 = pneg %p194
      $region42: #{ensemble_forward.1} parent=35 // pred_check_branch
        %614 = sbr.rel (%p612) target = $region44
      $region43: #{ensemble_forward.1} parent=35 // pred_region
        %p615 = scmp.lt.s32.totalorder %s33, 1
        %s616 = scalar_select %p615, %s33, 1
        %s617 = smul.addr %s616, 8
        %s618 = scalar_lea.vmem %s6, %s617
      $region44: #{ensemble_forward.1} parent=35 // pred_fallthru
        _
      // Predicated region
      $region45: #{ensemble_forward.1} parent=35 // pred_check
        %p619 = pneg %p220
      $region46: #{ensemble_forward.1} parent=35 // pred_check_branch
        %621 = sbr.rel (%p619) target = $region48
      $region47: #{ensemble_forward.1} parent=35 // pred_region
        %p622 = scmp.lt.s32.totalorder %s33, 1
        %s623 = scalar_select %p622, %s33, 1
        %s624 = smul.addr %s623, 9
        %s625 = smul.addr %s624, 8
        %s626 = scalar_lea.vmem %s7, %s625
      $region48: #{ensemble_forward.1} parent=35 // pred_fallthru
        _
      // Predicated region
      $region49: #{ensemble_forward.1} parent=35 // pred_check
        %p627 = pneg %p246
      $region50: #{ensemble_forward.1} parent=35 // pred_check_branch
        %629 = sbr.rel (%p627) target = $region52
      $region51: #{ensemble_forward.1} parent=35 // pred_region
        %p630 = scmp.lt.s32.totalorder %s33, 1
        %s631 = scalar_select %p630, %s33, 1
        %s632 = smul.addr %s631, 8
        %s633 = scalar_lea.vmem %s8, %s632
      $region52: #{ensemble_forward.1} parent=35 // pred_fallthru
        _
      // Predicated region
      $region53: #{ensemble_forward.1} parent=35 // pred_check
        %p634 = pneg %p272
      $region54: #{ensemble_forward.1} parent=35 // pred_check_branch
        %636 = sbr.rel (%p634) target = $region56
      $region55: #{ensemble_forward.1} parent=35 // pred_region
        %p637 = scmp.lt.s32.totalorder %s33, 1
        %s638 = scalar_select %p637, %s33, 1
        %s639 = smul.addr %s638, 18
        %s640 = smul.addr %s639, 8
        %s641 = scalar_lea.vmem %s9, %s640
      $region56: #{ensemble_forward.1} parent=35 // pred_fallthru
        _
      // Predicated region
      $region57: #{ensemble_forward.1} parent=35 // pred_check
        %p642 = pneg %p298
      $region58: #{ensemble_forward.1} parent=35 // pred_check_branch
        %644 = sbr.rel (%p642) target = $region60
      $region59: #{ensemble_forward.1} parent=35 // pred_region
        %p645 = scmp.lt.s32.totalorder %s33, 1
        %s646 = scalar_select %p645, %s33, 1
        %s647 = smul.addr %s646, 2
        %s648 = smul.addr %s647, 8
        %s649 = scalar_lea.vmem %s10, %s648
      $region60: #{ensemble_forward.1} parent=35 // pred_fallthru
        _
      // Predicated region
      $region61: #{ensemble_forward.1} parent=35 // pred_check
        %p650 = pneg %p324
      $region62: #{ensemble_forward.1} parent=35 // pred_check_branch
        %652 = sbr.rel (%p650) target = $region64
      $region63: #{ensemble_forward.1} parent=35 // pred_region
        %p653 = scmp.lt.s32.totalorder %s33, 1
        %s654 = scalar_select %p653, %s33, 1
        %s655 = smul.addr %s654, 18
        %s656 = smul.addr %s655, 8
        %s657 = scalar_lea.vmem %s11, %s656
      $region64: #{ensemble_forward.1} parent=35 // pred_fallthru
        _
      // Predicated region
      $region65: #{ensemble_forward.1} parent=35 // pred_check
        %p658 = pneg %p350
      $region66: #{ensemble_forward.1} parent=35 // pred_check_branch
        %660 = sbr.rel (%p658) target = $region68
      $region67: #{ensemble_forward.1} parent=35 // pred_region
        %p661 = scmp.lt.s32.totalorder %s33, 1
        %s662 = scalar_select %p661, %s33, 1
        %s663 = smul.addr %s662, 2
        %s664 = smul.addr %s663, 8
        %s665 = scalar_lea.vmem %s12, %s664
      $region68: #{ensemble_forward.1} parent=35 // pred_fallthru
        _
      // Predicated region
      $region69: #{ensemble_forward.1} parent=35 // pred_check
        %p666 = pneg %p376
      $region70: #{ensemble_forward.1} parent=35 // pred_check_branch
        %668 = sbr.rel (%p666) target = $region72
      $region71: #{ensemble_forward.1} parent=35 // pred_region
        %p669 = scmp.lt.s32.totalorder %s33, 1
        %s670 = scalar_select %p669, %s33, 1
        %s671 = smul.addr %s670, 9
        %s672 = smul.addr %s671, 8
        %s673 = scalar_lea.vmem %s13, %s672
      $region72: #{ensemble_forward.1} parent=35 // pred_fallthru
        _
      // Predicated region
      $region73: #{ensemble_forward.1} parent=35 // pred_check
        %p674 = pneg %p402
      $region74: #{ensemble_forward.1} parent=35 // pred_check_branch
        %676 = sbr.rel (%p674) target = $region76
      $region75: #{ensemble_forward.1} parent=35 // pred_region
        %p677 = scmp.lt.s32.totalorder %s33, 1
        %s678 = scalar_select %p677, %s33, 1
        %s679 = smul.addr %s678, 9
        %s680 = smul.addr %s679, 8
        %s681 = scalar_lea.vmem %s14, %s680
      $region76: #{ensemble_forward.1} parent=35 // pred_fallthru
        _
      // Predicated region
      $region77: #{ensemble_forward.1} parent=35 // pred_check
        %p682 = pneg %p428
      $region78: #{ensemble_forward.1} parent=35 // pred_check_branch
        %684 = sbr.rel (%p682) target = $region80
      $region79: #{ensemble_forward.1} parent=35 // pred_region
        %p685 = scmp.lt.s32.totalorder %s33, 1
        %s686 = scalar_select %p685, %s33, 1
        %s687 = smul.addr %s686, 8
        %s688 = scalar_lea.vmem %s15, %s687
      $region80: #{ensemble_forward.1} parent=35 // pred_fallthru
        _
      // Predicated region
      $region81: #{ensemble_forward.1} parent=35 // pred_check
        %p689 = pneg %p454
      $region82: #{ensemble_forward.1} parent=35 // pred_check_branch
        %691 = sbr.rel (%p689) target = $region84
      $region83: #{ensemble_forward.1} parent=35 // pred_region
        %p692 = scmp.lt.s32.totalorder %s33, 1
        %s693 = scalar_select %p692, %s33, 1
        %s694 = smul.addr %s693, 9
        %s695 = smul.addr %s694, 8
        %s696 = scalar_lea.vmem %s16, %s695
      $region84: #{ensemble_forward.1} parent=35 // pred_fallthru
        _
      // Predicated region
      $region85: #{ensemble_forward.1} parent=35 // pred_check
        %p697 = pneg %p480
      $region86: #{ensemble_forward.1} parent=35 // pred_check_branch
        %699 = sbr.rel (%p697) target = $region88
      $region87: #{ensemble_forward.1} parent=35 // pred_region
        %p700 = scmp.lt.s32.totalorder %s33, 1
        %s701 = scalar_select %p700, %s33, 1
        %s702 = smul.addr %s701, 8
        %s703 = scalar_lea.vmem %s17, %s702
      $region88: #{ensemble_forward.1} parent=35 // pred_fallthru
        _
      // Predicated region
      $region89: #{ensemble_forward.1} parent=35 // pred_check
        %p704 = pneg %p506
      $region90: #{ensemble_forward.1} parent=35 // pred_check_branch
        %706 = sbr.rel (%p704) target = $region92
      $region91: #{ensemble_forward.1} parent=35 // pred_region
        %p707 = scmp.lt.s32.totalorder %s33, 1
        %s708 = scalar_select %p707, %s33, 1
        %s709 = scalar_lea.vmem %s18, %s708
      $region92: #{ensemble_forward.1} parent=35 // pred_fallthru
        _
      // Predicated region
      $region93: #{ensemble_forward.1} parent=35 // pred_check
        %p710 = pneg %p532
      $region94: #{ensemble_forward.1} parent=35 // pred_check_branch
        %712 = sbr.rel (%p710) target = $region96
      $region95: #{ensemble_forward.1} parent=35 // pred_region
        %p713 = scmp.lt.s32.totalorder %s33, 1
        %s714 = scalar_select %p713, %s33, 1
        %s715 = scalar_lea.vmem %s19, %s714
      $region96: #{ensemble_forward.1} parent=35 // pred_fallthru
        _
    $region36: #{ensemble_forward.1} parent=5 // pred_fallthru
      _
    %p716 = scmp.le.s32.totalorder 1, %s26
    %p717 = scmp.lt.s32.totalorder %s26, 3
    %p718 = pnand %p716, %p717
    %p719 = pneg %p718
    // Predicated region
    $region97: #{ensemble_forward.1} parent=5 // pred_check
      _
    $region98: #{ensemble_forward.1} parent=5 // pred_check_branch
      %721 = sbr.rel (%p718) target = $region100
    $region99: #{ensemble_forward.1} parent=5 // pred_region
      %s722 = ssub.s32 %s26, 1
      %p723 = scmp.lt.s32.totalorder %s36, 0
      %s724 = scalar_select %p723, %s36, 0
      %s725 = smul.addr %s724, 36
      %s726 = smul.addr %s725, 8
      %s727 = scalar_lea.vmem %s0, %s726
      %p728 = pneg %p64
      %p729 = pneg %p61
      %p730 = pneg %p85
      %p731 = pneg %p82
      %p732 = pneg %p106
      %p733 = pneg %p103
      %p734 = pneg %p127
      %p735 = pneg %p124
      %p736 = pneg %p148
      %p737 = pneg %p145
      %p738 = scmp.lt.s32.totalorder %s35, 1
      %s739 = scalar_select %p738, %s35, 1
      %s740 = smul.addr %s739, 8
      %s741 = scalar_lea.vmem %s5, %s740
      %p742 = pneg %p174
      %p743 = pneg %p171
      %p744 = scmp.lt.s32.totalorder %s35, 1
      %s745 = scalar_select %p744, %s35, 1
      %s746 = smul.addr %s745, 8
      %s747 = scalar_lea.vmem %s6, %s746
      %p748 = pneg %p200
      %p749 = pneg %p197
      %p750 = scmp.lt.s32.totalorder %s35, 1
      %s751 = scalar_select %p750, %s35, 1
      %s752 = smul.addr %s751, 9
      %s753 = smul.addr %s752, 8
      %s754 = scalar_lea.vmem %s7, %s753
      %p755 = pneg %p226
      %p756 = pneg %p223
      %p757 = scmp.lt.s32.totalorder %s35, 1
      %s758 = scalar_select %p757, %s35, 1
      %s759 = smul.addr %s758, 8
      %s760 = scalar_lea.vmem %s8, %s759
      %p761 = pneg %p252
      %p762 = pneg %p249
      %p763 = scmp.lt.s32.totalorder %s35, 1
      %s764 = scalar_select %p763, %s35, 1
      %s765 = smul.addr %s764, 18
      %s766 = smul.addr %s765, 8
      %s767 = scalar_lea.vmem %s9, %s766
      %p768 = pneg %p278
      %p769 = pneg %p275
      %p770 = scmp.lt.s32.totalorder %s35, 1
      %s771 = scalar_select %p770, %s35, 1
      %s772 = smul.addr %s771, 2
      %s773 = smul.addr %s772, 8
      %s774 = scalar_lea.vmem %s10, %s773
      %p775 = pneg %p304
      %p776 = pneg %p301
      %p777 = scmp.lt.s32.totalorder %s35, 1
      %s778 = scalar_select %p777, %s35, 1
      %s779 = smul.addr %s778, 18
      %s780 = smul.addr %s779, 8
      %s781 = scalar_lea.vmem %s11, %s780
      %p782 = pneg %p330
      %p783 = pneg %p327
      %p784 = scmp.lt.s32.totalorder %s35, 1
      %s785 = scalar_select %p784, %s35, 1
      %s786 = smul.addr %s785, 2
      %s787 = smul.addr %s786, 8
      %s788 = scalar_lea.vmem %s12, %s787
      %p789 = pneg %p356
      %p790 = pneg %p353
      %p791 = scmp.lt.s32.totalorder %s35, 1
      %s792 = scalar_select %p791, %s35, 1
      %s793 = smul.addr %s792, 9
      %s794 = smul.addr %s793, 8
      %s795 = scalar_lea.vmem %s13, %s794
      %p796 = pneg %p382
      %p797 = pneg %p379
      %p798 = scmp.lt.s32.totalorder %s35, 1
      %s799 = scalar_select %p798, %s35, 1
      %s800 = smul.addr %s799, 9
      %s801 = smul.addr %s800, 8
      %s802 = scalar_lea.vmem %s14, %s801
      %p803 = pneg %p408
      %p804 = pneg %p405
      %p805 = scmp.lt.s32.totalorder %s35, 1
      %s806 = scalar_select %p805, %s35, 1
      %s807 = smul.addr %s806, 8
      %s808 = scalar_lea.vmem %s15, %s807
      %p809 = pneg %p434
      %p810 = pneg %p431
      %p811 = scmp.lt.s32.totalorder %s35, 1
      %s812 = scalar_select %p811, %s35, 1
      %s813 = smul.addr %s812, 9
      %s814 = smul.addr %s813, 8
      %s815 = scalar_lea.vmem %s16, %s814
      %p816 = pneg %p460
      %p817 = pneg %p457
      %p818 = scmp.lt.s32.totalorder %s35, 1
      %s819 = scalar_select %p818, %s35, 1
      %s820 = smul.addr %s819, 8
      %s821 = scalar_lea.vmem %s17, %s820
      %p822 = pneg %p486
      %p823 = pneg %p483
      %p824 = scmp.lt.s32.totalorder %s35, 1
      %s825 = scalar_select %p824, %s35, 1
      %s826 = scalar_lea.vmem %s18, %s825
      %p827 = pneg %p512
      %p828 = pneg %p509
      %p829 = scmp.lt.s32.totalorder %s35, 1
      %s830 = scalar_select %p829, %s35, 1
      %s831 = scalar_lea.vmem %s19, %s830
      %p832 = pneg %p538
      %p833 = pneg %p535
      %p834 = pneg %p566
      %p835 = pneg %p563
      %p836 = scmp.lt.s32.totalorder %s35, 1
      %s837 = scalar_select %p836, %s35, 1
      %p838 = scmp.lt.s32.totalorder %s36, 0
      %s839 = scalar_select %p838, %s36, 0
      %s840 = smul.addr %s839, 4
      %s841 = smul.addr %s837, 4
      %s842 = sadd.s32 %s840, %s841
      %s843 = scalar_lea.vmem %s20, %s842
      %p844 = scmp.lt.s32.totalorder %s36, 0
      %s845 = scalar_select %p844, %s36, 0
      %s846 = smul.addr %s845, 36
      %s847 = smul.addr %s846, 8
      %s848 = scalar_lea.vmem %s0, %s847
      %p849 = scmp.lt.s32.totalorder %s35, 1
      %s850 = scalar_select %p849, %s35, 1
      %s851 = smul.addr %s850, 8
      %s852 = scalar_lea.vmem %s5, %s851
      %p853 = scmp.lt.s32.totalorder %s35, 1
      %s854 = scalar_select %p853, %s35, 1
      %s855 = smul.addr %s854, 8
      %s856 = scalar_lea.vmem %s6, %s855
      %p857 = scmp.lt.s32.totalorder %s35, 1
      %s858 = scalar_select %p857, %s35, 1
      %s859 = smul.addr %s858, 9
      %s860 = smul.addr %s859, 8
      %s861 = scalar_lea.vmem %s7, %s860
      %p862 = scmp.lt.s32.totalorder %s35, 1
      %s863 = scalar_select %p862, %s35, 1
      %s864 = smul.addr %s863, 8
      %s865 = scalar_lea.vmem %s8, %s864
      %p866 = scmp.lt.s32.totalorder %s35, 1
      %s867 = scalar_select %p866, %s35, 1
      %s868 = smul.addr %s867, 18
      %s869 = smul.addr %s868, 8
      %s870 = scalar_lea.vmem %s9, %s869
      %p871 = scmp.lt.s32.totalorder %s35, 1
      %s872 = scalar_select %p871, %s35, 1
      %s873 = smul.addr %s872, 2
      %s874 = smul.addr %s873, 8
      %s875 = scalar_lea.vmem %s10, %s874
      %p876 = scmp.lt.s32.totalorder %s35, 1
      %s877 = scalar_select %p876, %s35, 1
      %s878 = smul.addr %s877, 18
      %s879 = smul.addr %s878, 8
      %s880 = scalar_lea.vmem %s11, %s879
      %p881 = scmp.lt.s32.totalorder %s35, 1
      %s882 = scalar_select %p881, %s35, 1
      %s883 = smul.addr %s882, 2
      %s884 = smul.addr %s883, 8
      %s885 = scalar_lea.vmem %s12, %s884
      %p886 = scmp.lt.s32.totalorder %s35, 1
      %s887 = scalar_select %p886, %s35, 1
      %s888 = smul.addr %s887, 9
      %s889 = smul.addr %s888, 8
      %s890 = scalar_lea.vmem %s13, %s889
      %p891 = scmp.lt.s32.totalorder %s35, 1
      %s892 = scalar_select %p891, %s35, 1
      %s893 = smul.addr %s892, 9
      %s894 = smul.addr %s893, 8
      %s895 = scalar_lea.vmem %s14, %s894
      %p896 = scmp.lt.s32.totalorder %s35, 1
      %s897 = scalar_select %p896, %s35, 1
      %s898 = smul.addr %s897, 8
      %s899 = scalar_lea.vmem %s15, %s898
      %p900 = scmp.lt.s32.totalorder %s35, 1
      %s901 = scalar_select %p900, %s35, 1
      %s902 = smul.addr %s901, 9
      %s903 = smul.addr %s902, 8
      %s904 = scalar_lea.vmem %s16, %s903
      %p905 = scmp.lt.s32.totalorder %s35, 1
      %s906 = scalar_select %p905, %s35, 1
      %s907 = smul.addr %s906, 8
      %s908 = scalar_lea.vmem %s17, %s907
      %p909 = scmp.lt.s32.totalorder %s35, 1
      %s910 = scalar_select %p909, %s35, 1
      %s911 = scalar_lea.vmem %s18, %s910
      %p912 = scmp.lt.s32.totalorder %s35, 1
      %s913 = scalar_select %p912, %s35, 1
      %s914 = scalar_lea.vmem %s19, %s913
      %p915 = scmp.lt.s32.totalorder %s35, 1
      %s916 = scalar_select %p915, %s35, 1
      %p917 = scmp.lt.s32.totalorder %s36, 0
      %s918 = scalar_select %p917, %s36, 0
      %s919 = smul.addr %s918, 4
      %s920 = smul.addr %s916, 4
      %s921 = sadd.s32 %s919, %s920
      %s922 = scalar_lea.vmem %s20, %s921
      %v923 = vld [vmem:[%s848] sm:$0xff]
      %v924 = vld [vmem:[%s848 + $0x8] sm:$0xff]
      %v925 = vld [vmem:[%s848 + $0x10] sm:$0xff]
      %v926 = vld [vmem:[%s848 + $0x18] sm:$0xff]
      %v927 = vld [vmem:[%s848 + $0x20] sm:$0xff]
      %v928 = vld [vmem:[%s848 + $0x28] sm:$0xff]
      %v929 = vld [vmem:[%s848 + $0x30] sm:$0xff]
      %v930 = vld [vmem:[%s848 + $0x38] sm:$0xff]
      %v931 = vld [vmem:[%s848 + $0x40] sm:$0xff]
      %v932 = vld [vmem:[%s848 + $0x48] sm:$0xff]
      %v933 = vld [vmem:[%s848 + $0x50] sm:$0xff]
      %v934 = vld [vmem:[%s848 + $0x58] sm:$0xff]
      %v935 = vld [vmem:[%s848 + $0x60] sm:$0xff]
      %v936 = vld [vmem:[%s848 + $0x68] sm:$0xff]
      %v937 = vld [vmem:[%s848 + $0x70] sm:$0xff]
      %v938 = vld [vmem:[%s848 + $0x78] sm:$0xff]
      %v939 = vld [vmem:[%s848 + $0x80] sm:$0xff]
      %v940 = vld [vmem:[%s848 + $0x88] sm:$0xff]
      %v941 = vld [vmem:[%s848 + $0x90] sm:$0xff]
      %v942 = vld [vmem:[%s848 + $0x98] sm:$0xff]
      %v943 = vld [vmem:[%s848 + $0xa0] sm:$0xff]
      %v944 = vld [vmem:[%s848 + $0xa8] sm:$0xff]
      %v945 = vld [vmem:[%s848 + $0xb0] sm:$0xff]
      %v946 = vld [vmem:[%s848 + $0xb8] sm:$0xff]
      %v947 = vld [vmem:[%s848 + $0xc0] sm:$0xff]
      %v948 = vld [vmem:[%s848 + $0xc8] sm:$0xff]
      %v949 = vld [vmem:[%s848 + $0xd0] sm:$0xff]
      %v950 = vld [vmem:[%s848 + $0xd8] sm:$0xff]
      %v951 = vld [vmem:[%s848 + $0xe0] sm:$0xff]
      %v952 = vld [vmem:[%s848 + $0xe8] sm:$0xff]
      %v953 = vld [vmem:[%s848 + $0xf0] sm:$0xff]
      %v954 = vld [vmem:[%s848 + $0xf8] sm:$0xff]
      %v955 = vld [vmem:[%s848 + $0x100] sm:$0xff]
      %v956 = vld [vmem:[%s848 + $0x108] sm:$0xff]
      %v957 = vld [vmem:[%s848 + $0x110] sm:$0xff]
      %v958 = vld [vmem:[%s848 + $0x118] sm:$0xff]
      %v959 = vld [vmem:[%s852] sm:$0xff]
      %v960 = vld [vmem:[%s856] sm:$0xff]
      %962 = vset.pattern.permute.xlu0 0
      %963 = vperm.xlu0 %962, %v960
      %v964 = vpop.permute.xlu0 %963
      %vm966 = vcmask 588800
      %v968 = vsel %vm966, %v959, 0
      %970 = vmatprep.subr.mxu0 0.0
      %971 = vmatpush1.msra.mxu0 0.0
      %972 = vmatprep.subr.mxu0 0.0
      %973 = vmatpush1.msra.mxu0 0.0
      %974 = vmatprep.subr.mxu0 0.0
      %975 = vmatpush1.msra.mxu0 0.0
      %976 = vmatprep.subr.mxu0 0.0
      %977 = vmatpush1.msra.mxu0 0.0
      %978 = vmatprep.subr.mxu0 0.0
      %979 = vmatpush1.msra.mxu0 0.0
      %980 = vmatprep.subr.mxu0 0.0
      %981 = vmatpush1.msra.mxu0 0.0
      %982 = vmatprep.subr.mxu0 0.0
      %983 = vmatpush1.msra.mxu0 0.0
      %984 = vmatprep.subr.mxu0 %v956
      %985 = vmatpush1.msra.mxu0 %v955
      %986 = vmatprep.subr.mxu0 %v952
      %987 = vmatpush1.msra.mxu0 %v951
      %988 = vmatprep.subr.mxu0 %v948
      %989 = vmatpush1.msra.mxu0 %v947
      %990 = vmatprep.subr.mxu0 %v944
      %991 = vmatpush1.msra.mxu0 %v943
      %992 = vmatprep.subr.mxu0 %v940
      %993 = vmatpush1.msra.mxu0 %v939
      %994 = vmatprep.subr.mxu0 %v936
      %995 = vmatpush1.msra.mxu0 %v935
      %996 = vmatprep.subr.mxu0 %v932
      %997 = vmatpush1.msra.mxu0 %v931
      %998 = vmatprep.subr.mxu0 %v928
      %999 = vmatpush1.msra.mxu0 %v927
      %1000 = vmatprep.subr.mxu0 %v924
      %1001 = vmatpush1.msra.mxu0 %v923
      %1002 = vmatprep.subr.mxu0 0.0
      %1003 = vmatpush2.msra.mxu0 0.0
      %1004 = vmatprep.subr.mxu0 0.0
      %1005 = vmatpush2.msra.mxu0 0.0
      %1006 = vmatprep.subr.mxu0 0.0
      %1007 = vmatpush2.msra.mxu0 0.0
      %1008 = vmatprep.subr.mxu0 0.0
      %1009 = vmatpush2.msra.mxu0 0.0
      %1010 = vmatprep.subr.mxu0 0.0
      %1011 = vmatpush2.msra.mxu0 0.0
      %1012 = vmatprep.subr.mxu0 0.0
      %1013 = vmatpush2.msra.mxu0 0.0
      %1014 = vmatprep.subr.mxu0 0.0
      %1015 = vmatpush2.msra.mxu0 0.0
      %1016 = vmatprep.subr.mxu0 0.0
      %1017 = vmatpush2.msra.mxu0 0.0
      %1018 = vmatprep.subr.mxu0 0.0
      %1019 = vmatpush2.msra.mxu0 0.0
      %1020 = vmatprep.subr.mxu0 0.0
      %1021 = vmatpush2.msra.mxu0 0.0
      %1022 = vmatprep.subr.mxu0 0.0
      %1023 = vmatpush2.msra.mxu0 0.0
      %1024 = vmatprep.subr.mxu0 0.0
      %1025 = vmatpush2.msra.mxu0 0.0
      %1026 = vmatprep.subr.mxu0 0.0
      %1027 = vmatpush2.msra.mxu0 0.0
      %1028 = vmatprep.subr.mxu0 0.0
      %1029 = vmatpush2.msra.mxu0 0.0
      %1030 = vmatprep.subr.mxu0 0.0
      %1031 = vmatpush2.msra.mxu0 0.0
      %1032 = vmatprep.subr.mxu0 0.0
      %1033 = vmatpush2.msra.mxu0 0.0
      %1034 = vmatprep.mubr.f32.mxu0 0.0
      %1035 = vmatmul.mubr.f32.gmra.mxu0 %v968
      %v1036 = vpop.f32.mrf.mxu0
      %v1037 = vadd.f32 %v964, %v1036
      %v1038 = vpop.f32.mrf.mxu0
      %v1039 = vadd.f32 %v964, %v1038
      %1040 = vdwg.mxu0
      %1041 = vmatprep.subr.mxu0 0.0
      %1042 = vmatpush1.msra.mxu0 0.0
      %1043 = vmatprep.subr.mxu0 0.0
      %1044 = vmatpush1.msra.mxu0 0.0
      %1045 = vmatprep.subr.mxu0 0.0
      %1046 = vmatpush1.msra.mxu0 0.0
      %1047 = vmatprep.subr.mxu0 0.0
      %1048 = vmatpush1.msra.mxu0 0.0
      %1049 = vmatprep.subr.mxu0 0.0
      %1050 = vmatpush1.msra.mxu0 0.0
      %1051 = vmatprep.subr.mxu0 0.0
      %1052 = vmatpush1.msra.mxu0 0.0
      %1053 = vmatprep.subr.mxu0 0.0
      %1054 = vmatpush1.msra.mxu0 0.0
      %1055 = vmatprep.subr.mxu0 %v958
      %1056 = vmatpush1.msra.mxu0 %v957
      %1057 = vmatprep.subr.mxu0 %v954
      %1058 = vmatpush1.msra.mxu0 %v953
      %1059 = vmatprep.subr.mxu0 %v950
      %1060 = vmatpush1.msra.mxu0 %v949
      %1061 = vmatprep.subr.mxu0 %v946
      %1062 = vmatpush1.msra.mxu0 %v945
      %1063 = vmatprep.subr.mxu0 %v942
      %1064 = vmatpush1.msra.mxu0 %v941
      %1065 = vmatprep.subr.mxu0 %v938
      %1066 = vmatpush1.msra.mxu0 %v937
      %1067 = vmatprep.subr.mxu0 %v934
      %1068 = vmatpush1.msra.mxu0 %v933
      %1069 = vmatprep.subr.mxu0 %v930
      %1070 = vmatpush1.msra.mxu0 %v929
      %1071 = vmatprep.subr.mxu0 %v926
      %1072 = vmatpush1.msra.mxu0 %v925
      %1073 = vmatprep.subr.mxu0 0.0
      %1074 = vmatpush2.msra.mxu0 0.0
      %1075 = vmatprep.subr.mxu0 0.0
      %1076 = vmatpush2.msra.mxu0 0.0
      %1077 = vmatprep.subr.mxu0 0.0
      %1078 = vmatpush2.msra.mxu0 0.0
      %1079 = vmatprep.subr.mxu0 0.0
      %1080 = vmatpush2.msra.mxu0 0.0
      %1081 = vmatprep.subr.mxu0 0.0
      %1082 = vmatpush2.msra.mxu0 0.0
      %1083 = vmatprep.subr.mxu0 0.0
      %1084 = vmatpush2.msra.mxu0 0.0
      %1085 = vmatprep.subr.mxu0 0.0
      %1086 = vmatpush2.msra.mxu0 0.0
      %1087 = vmatprep.subr.mxu0 0.0
      %1088 = vmatpush2.msra.mxu0 0.0
      %1089 = vmatprep.subr.mxu0 0.0
      %1090 = vmatpush2.msra.mxu0 0.0
      %1091 = vmatprep.subr.mxu0 0.0
      %1092 = vmatpush2.msra.mxu0 0.0
      %1093 = vmatprep.subr.mxu0 0.0
      %1094 = vmatpush2.msra.mxu0 0.0
      %1095 = vmatprep.subr.mxu0 0.0
      %1096 = vmatpush2.msra.mxu0 0.0
      %1097 = vmatprep.subr.mxu0 0.0
      %1098 = vmatpush2.msra.mxu0 0.0
      %1099 = vmatprep.subr.mxu0 0.0
      %1100 = vmatpush2.msra.mxu0 0.0
      %1101 = vmatprep.subr.mxu0 0.0
      %1102 = vmatpush2.msra.mxu0 0.0
      %1103 = vmatprep.subr.mxu0 0.0
      %1104 = vmatpush2.msra.mxu0 0.0
      %1105 = vmatprep.mubr.f32.mxu0 0.0
      %1106 = vmatmul.mubr.f32.gmra.mxu0 %v968
      %v1107 = vpop.f32.mrf.mxu0
      %v1108 = vadd.f32 %v964, %v1107
      %v1109 = vpop.f32.mrf.mxu0
      %v1110 = vadd.f32 %v964, %v1109
      %1111 = vdwg.mxu0
      %v1112 = vmax.f32 %v1037, 0.0
      %v1113 = vmax.f32 %v1039, 0.0
      %v1114 = vmax.f32 %v1108, 0.0
      %v1115 = vmax.f32 %v1110, 0.0
      %1116 = vrot.lane.b32.xlu0 %v1112, 17
      %v1117 = vpop.permute.xlu0 %1116
      %1118 = vrot.lane.b32.xlu0 %v1113, 17
      %v1119 = vpop.permute.xlu0 %1118
      %1120 = vrot.lane.b32.xlu0 %v1114, 17
      %v1121 = vpop.permute.xlu0 %1120
      %1122 = vrot.lane.b32.xlu0 %v1115, 17
      %v1123 = vpop.permute.xlu0 %1122
      %v1124 = vlaneseq
      %v1125 = vand.u32 %v1124, 127
      %vm1126 = vcmp.lt.s32.totalorder %v1125, 17
      %v1127 = vsel %vm1126, %v1121, %v1123
      %v1128 = vsel %vm1126, %v1119, %v1121
      %v1129 = vsel %vm1126, %v1117, %v1119
      %v1130 = vsel %vm1126, %v1123, %v1117
      %v1131 = vld [vmem:[%s3] sm:$0xf]
      %v1133 = vlaneseq
      %v1134 = vshrl.u32 %v1133, 7
      %v1135 = vsub.s32 0, %v1134
      %v1136 = vrot.slane %v1131, %v1135
      %v1137 = vlaneseq
      %v1138 = vshrl.u32 %v1137, 7
      %v1139 = vsub.s32 1, %v1138
      %v1140 = vrot.slane %v1131, %v1139
      %v1141 = vlaneseq
      %v1142 = vshrl.u32 %v1141, 7
      %v1143 = vsub.s32 2, %v1142
      %v1144 = vrot.slane %v1131, %v1143
      %v1145 = vlaneseq
      %v1146 = vshrl.u32 %v1145, 7
      %v1147 = vsub.s32 3, %v1146
      %v1148 = vrot.slane %v1131, %v1147
      %v1153 = vmul.f32 %v1130, %v1136
      %v1154 = vmul.f32 %v1129, %v1140
      %v1155 = vmul.f32 %v1128, %v1144
      %v1156 = vmul.f32 %v1127, %v1148
      %v1157 = vld [vmem:[%s861] sm:$0xff]
      %1158 = vrot.lane.b32.xlu0 %v1112, 16
      %v1159 = vpop.permute.xlu0 %1158
      %1160 = vrot.lane.b32.xlu0 %v1113, 16
      %v1161 = vpop.permute.xlu0 %1160
      %1162 = vrot.lane.b32.xlu0 %v1114, 16
      %v1163 = vpop.permute.xlu0 %1162
      %1164 = vrot.lane.b32.xlu0 %v1115, 16
      %v1165 = vpop.permute.xlu0 %1164
      %vm1166 = vcmp.lt.s32.totalorder %v1125, 16
      %v1167 = vsel %vm1166, %v1163, %v1165
      %v1168 = vsel %vm1166, %v1161, %v1163
      %v1169 = vsel %vm1166, %v1159, %v1161
      %v1170 = vsel %vm1166, %v1165, %v1159
      %s1171 = scalar_lea.vmem %s3, 4
      %v1172 = vld [vmem:[%s1171] sm:$0xf]
      %v1174 = vlaneseq
      %v1175 = vshrl.u32 %v1174, 7
      %v1176 = vsub.s32 0, %v1175
      %v1177 = vrot.slane %v1172, %v1176
      %v1178 = vlaneseq
      %v1179 = vshrl.u32 %v1178, 7
      %v1180 = vsub.s32 1, %v1179
      %v1181 = vrot.slane %v1172, %v1180
      %v1182 = vlaneseq
      %v1183 = vshrl.u32 %v1182, 7
      %v1184 = vsub.s32 2, %v1183
      %v1185 = vrot.slane %v1172, %v1184
      %v1186 = vlaneseq
      %v1187 = vshrl.u32 %v1186, 7
      %v1188 = vsub.s32 3, %v1187
      %v1189 = vrot.slane %v1172, %v1188
      %v1194 = vmul.f32 %v1170, %v1177
      %v1195 = vmul.f32 %v1169, %v1181
      %v1196 = vmul.f32 %v1168, %v1185
      %v1197 = vmul.f32 %v1167, %v1189
      %s1198 = scalar_lea.vmem %s861, 8
      %v1199 = vld [vmem:[%s1198] sm:$0xff]
      %vm1200 = vcmask 64512
      %v1202 = vsel %vm1200, %v1199, 0
      %1204 = vmatprep.subr.mxu0 0.0
      %1205 = vmatpush1.msra.mxu0 0.0
      %1206 = vmatprep.subr.mxu0 0.0
      %1207 = vmatpush1.msra.mxu0 0.0
      %1208 = vmatprep.subr.mxu0 0.0
      %1209 = vmatpush1.msra.mxu0 0.0
      %1210 = vmatprep.subr.mxu0 0.0
      %1211 = vmatpush1.msra.mxu0 0.0
      %1212 = vmatprep.subr.mxu0 0.0
      %1213 = vmatpush1.msra.mxu0 0.0
      %1214 = vmatprep.subr.mxu0 0.0
      %1215 = vmatpush1.msra.mxu0 0.0
      %1216 = vmatprep.subr.mxu0 0.0
      %1217 = vmatpush1.msra.mxu0 0.0
      %1218 = vmatprep.subr.mxu0 0.0
      %1219 = vmatpush1.msra.mxu0 0.0
      %1220 = vmatprep.subr.mxu0 0.0
      %1221 = vmatpush1.msra.mxu0 0.0
      %1222 = vmatprep.subr.mxu0 0.0
      %1223 = vmatpush1.msra.mxu0 0.0
      %1224 = vmatprep.subr.mxu0 0.0
      %1225 = vmatpush1.msra.mxu0 0.0
      %1226 = vmatprep.subr.mxu0 0.0
      %1227 = vmatpush1.msra.mxu0 0.0
      %1228 = vmatprep.subr.mxu0 0.0
      %1229 = vmatpush1.msra.mxu0 0.0
      %1230 = vmatprep.subr.mxu0 0.0
      %1231 = vmatpush1.msra.mxu0 0.0
      %1232 = vmatprep.subr.mxu0 0.0
      %1233 = vmatpush1.msra.mxu0 0.0
      %1234 = vmatprep.subr.mxu0 %v1195
      %1235 = vmatpush1.msra.mxu0 %v1194
      %1236 = vmatprep.subr.mxu0 0.0
      %1237 = vmatpush2.msra.mxu0 0.0
      %1238 = vmatprep.subr.mxu0 0.0
      %1239 = vmatpush2.msra.mxu0 0.0
      %1240 = vmatprep.subr.mxu0 0.0
      %1241 = vmatpush2.msra.mxu0 0.0
      %1242 = vmatprep.subr.mxu0 0.0
      %1243 = vmatpush2.msra.mxu0 0.0
      %1244 = vmatprep.subr.mxu0 0.0
      %1245 = vmatpush2.msra.mxu0 0.0
      %1246 = vmatprep.subr.mxu0 0.0
      %1247 = vmatpush2.msra.mxu0 0.0
      %1248 = vmatprep.subr.mxu0 0.0
      %1249 = vmatpush2.msra.mxu0 0.0
      %1250 = vmatprep.subr.mxu0 0.0
      %1251 = vmatpush2.msra.mxu0 0.0
      %1252 = vmatprep.subr.mxu0 0.0
      %1253 = vmatpush2.msra.mxu0 0.0
      %1254 = vmatprep.subr.mxu0 0.0
      %1255 = vmatpush2.msra.mxu0 0.0
      %1256 = vmatprep.subr.mxu0 0.0
      %1257 = vmatpush2.msra.mxu0 0.0
      %1258 = vmatprep.subr.mxu0 0.0
      %1259 = vmatpush2.msra.mxu0 0.0
      %1260 = vmatprep.subr.mxu0 0.0
      %1261 = vmatpush2.msra.mxu0 0.0
      %1262 = vmatprep.subr.mxu0 0.0
      %1263 = vmatpush2.msra.mxu0 0.0
      %1264 = vmatprep.subr.mxu0 0.0
      %1265 = vmatpush2.msra.mxu0 0.0
      %1266 = vmatprep.subr.mxu0 0.0
      %1267 = vmatpush2.msra.mxu0 0.0
      %1268 = vmatprep.mubr.f32.mxu0 0.0
      %1269 = vmatmul.mubr.f32.gmra.mxu0 %v1202
      %v1270 = vpop.f32.mrf.mxu0
      %v1271 = vadd.f32 0.0, %v1270
      %v1272 = vpop.f32.mrf.mxu0
      %v1273 = vadd.f32 0.0, %v1272
      %1274 = vdwg.mxu0
      %1275 = vmatprep.subr.mxu0 0.0
      %1276 = vmatpush1.msra.mxu0 0.0
      %1277 = vmatprep.subr.mxu0 0.0
      %1278 = vmatpush1.msra.mxu0 0.0
      %1279 = vmatprep.subr.mxu0 0.0
      %1280 = vmatpush1.msra.mxu0 0.0
      %1281 = vmatprep.subr.mxu0 0.0
      %1282 = vmatpush1.msra.mxu0 0.0
      %1283 = vmatprep.subr.mxu0 0.0
      %1284 = vmatpush1.msra.mxu0 0.0
      %1285 = vmatprep.subr.mxu0 0.0
      %1286 = vmatpush1.msra.mxu0 0.0
      %1287 = vmatprep.subr.mxu0 0.0
      %1288 = vmatpush1.msra.mxu0 0.0
      %1289 = vmatprep.subr.mxu0 0.0
      %1290 = vmatpush1.msra.mxu0 0.0
      %1291 = vmatprep.subr.mxu0 0.0
      %1292 = vmatpush1.msra.mxu0 0.0
      %1293 = vmatprep.subr.mxu0 0.0
      %1294 = vmatpush1.msra.mxu0 0.0
      %1295 = vmatprep.subr.mxu0 0.0
      %1296 = vmatpush1.msra.mxu0 0.0
      %1297 = vmatprep.subr.mxu0 0.0
      %1298 = vmatpush1.msra.mxu0 0.0
      %1299 = vmatprep.subr.mxu0 0.0
      %1300 = vmatpush1.msra.mxu0 0.0
      %1301 = vmatprep.subr.mxu0 0.0
      %1302 = vmatpush1.msra.mxu0 0.0
      %1303 = vmatprep.subr.mxu0 0.0
      %1304 = vmatpush1.msra.mxu0 0.0
      %1305 = vmatprep.subr.mxu0 %v1197
      %1306 = vmatpush1.msra.mxu0 %v1196
      %1307 = vmatprep.subr.mxu0 0.0
      %1308 = vmatpush2.msra.mxu0 0.0
      %1309 = vmatprep.subr.mxu0 0.0
      %1310 = vmatpush2.msra.mxu0 0.0
      %1311 = vmatprep.subr.mxu0 0.0
      %1312 = vmatpush2.msra.mxu0 0.0
      %1313 = vmatprep.subr.mxu0 0.0
      %1314 = vmatpush2.msra.mxu0 0.0
      %1315 = vmatprep.subr.mxu0 0.0
      %1316 = vmatpush2.msra.mxu0 0.0
      %1317 = vmatprep.subr.mxu0 0.0
      %1318 = vmatpush2.msra.mxu0 0.0
      %1319 = vmatprep.subr.mxu0 0.0
      %1320 = vmatpush2.msra.mxu0 0.0
      %1321 = vmatprep.subr.mxu0 0.0
      %1322 = vmatpush2.msra.mxu0 0.0
      %1323 = vmatprep.subr.mxu0 0.0
      %1324 = vmatpush2.msra.mxu0 0.0
      %1325 = vmatprep.subr.mxu0 0.0
      %1326 = vmatpush2.msra.mxu0 0.0
      %1327 = vmatprep.subr.mxu0 0.0
      %1328 = vmatpush2.msra.mxu0 0.0
      %1329 = vmatprep.subr.mxu0 0.0
      %1330 = vmatpush2.msra.mxu0 0.0
      %1331 = vmatprep.subr.mxu0 0.0
      %1332 = vmatpush2.msra.mxu0 0.0
      %1333 = vmatprep.subr.mxu0 0.0
      %1334 = vmatpush2.msra.mxu0 0.0
      %1335 = vmatprep.subr.mxu0 0.0
      %1336 = vmatpush2.msra.mxu0 0.0
      %1337 = vmatprep.subr.mxu0 0.0
      %1338 = vmatpush2.msra.mxu0 0.0
      %1339 = vmatprep.mubr.f32.mxu0 0.0
      %1340 = vmatmul.mubr.f32.gmra.mxu0 %v1202
      %v1341 = vpop.f32.mrf.mxu0
      %v1342 = vadd.f32 0.0, %v1341
      %v1343 = vpop.f32.mrf.mxu0
      %v1344 = vadd.f32 0.0, %v1343
      %1345 = vdwg.mxu0
      %v1347 = vsel %vm1200, %v1157, 0
      %1349 = vmatprep.subr.mxu0 0.0
      %1350 = vmatpush1.msra.mxu0 0.0
      %1351 = vmatprep.subr.mxu0 0.0
      %1352 = vmatpush1.msra.mxu0 0.0
      %1353 = vmatprep.subr.mxu0 0.0
      %1354 = vmatpush1.msra.mxu0 0.0
      %1355 = vmatprep.subr.mxu0 0.0
      %1356 = vmatpush1.msra.mxu0 0.0
      %1357 = vmatprep.subr.mxu0 0.0
      %1358 = vmatpush1.msra.mxu0 0.0
      %1359 = vmatprep.subr.mxu0 0.0
      %1360 = vmatpush1.msra.mxu0 0.0
      %1361 = vmatprep.subr.mxu0 0.0
      %1362 = vmatpush1.msra.mxu0 0.0
      %1363 = vmatprep.subr.mxu0 0.0
      %1364 = vmatpush1.msra.mxu0 0.0
      %1365 = vmatprep.subr.mxu0 0.0
      %1366 = vmatpush1.msra.mxu0 0.0
      %1367 = vmatprep.subr.mxu0 0.0
      %1368 = vmatpush1.msra.mxu0 0.0
      %1369 = vmatprep.subr.mxu0 0.0
      %1370 = vmatpush1.msra.mxu0 0.0
      %1371 = vmatprep.subr.mxu0 0.0
      %1372 = vmatpush1.msra.mxu0 0.0
      %1373 = vmatprep.subr.mxu0 0.0
      %1374 = vmatpush1.msra.mxu0 0.0
      %1375 = vmatprep.subr.mxu0 0.0
      %1376 = vmatpush1.msra.mxu0 0.0
      %1377 = vmatprep.subr.mxu0 0.0
      %1378 = vmatpush1.msra.mxu0 0.0
      %1379 = vmatprep.subr.mxu0 %v1154
      %1380 = vmatpush1.msra.mxu0 %v1153
      %1381 = vmatprep.subr.mxu0 0.0
      %1382 = vmatpush2.msra.mxu0 0.0
      %1383 = vmatprep.subr.mxu0 0.0
      %1384 = vmatpush2.msra.mxu0 0.0
      %1385 = vmatprep.subr.mxu0 0.0
      %1386 = vmatpush2.msra.mxu0 0.0
      %1387 = vmatprep.subr.mxu0 0.0
      %1388 = vmatpush2.msra.mxu0 0.0
      %1389 = vmatprep.subr.mxu0 0.0
      %1390 = vmatpush2.msra.mxu0 0.0
      %1391 = vmatprep.subr.mxu0 0.0
      %1392 = vmatpush2.msra.mxu0 0.0
      %1393 = vmatprep.subr.mxu0 0.0
      %1394 = vmatpush2.msra.mxu0 0.0
      %1395 = vmatprep.subr.mxu0 0.0
      %1396 = vmatpush2.msra.mxu0 0.0
      %1397 = vmatprep.subr.mxu0 0.0
      %1398 = vmatpush2.msra.mxu0 0.0
      %1399 = vmatprep.subr.mxu0 0.0
      %1400 = vmatpush2.msra.mxu0 0.0
      %1401 = vmatprep.subr.mxu0 0.0
      %1402 = vmatpush2.msra.mxu0 0.0
      %1403 = vmatprep.subr.mxu0 0.0
      %1404 = vmatpush2.msra.mxu0 0.0
      %1405 = vmatprep.subr.mxu0 0.0
      %1406 = vmatpush2.msra.mxu0 0.0
      %1407 = vmatprep.subr.mxu0 0.0
      %1408 = vmatpush2.msra.mxu0 0.0
      %1409 = vmatprep.subr.mxu0 0.0
      %1410 = vmatpush2.msra.mxu0 0.0
      %1411 = vmatprep.subr.mxu0 0.0
      %1412 = vmatpush2.msra.mxu0 0.0
      %1413 = vmatprep.mubr.f32.mxu0 0.0
      %1414 = vmatmul.mubr.f32.gmra.mxu0 %v1347
      %v1415 = vpop.f32.mrf.mxu0
      %v1416 = vadd.f32 %v1271, %v1415
      %v1417 = vpop.f32.mrf.mxu0
      %v1418 = vadd.f32 %v1273, %v1417
      %1419 = vdwg.mxu0
      %1420 = vmatprep.subr.mxu0 0.0
      %1421 = vmatpush1.msra.mxu0 0.0
      %1422 = vmatprep.subr.mxu0 0.0
      %1423 = vmatpush1.msra.mxu0 0.0
      %1424 = vmatprep.subr.mxu0 0.0
      %1425 = vmatpush1.msra.mxu0 0.0
      %1426 = vmatprep.subr.mxu0 0.0
      %1427 = vmatpush1.msra.mxu0 0.0
      %1428 = vmatprep.subr.mxu0 0.0
      %1429 = vmatpush1.msra.mxu0 0.0
      %1430 = vmatprep.subr.mxu0 0.0
      %1431 = vmatpush1.msra.mxu0 0.0
      %1432 = vmatprep.subr.mxu0 0.0
      %1433 = vmatpush1.msra.mxu0 0.0
      %1434 = vmatprep.subr.mxu0 0.0
      %1435 = vmatpush1.msra.mxu0 0.0
      %1436 = vmatprep.subr.mxu0 0.0
      %1437 = vmatpush1.msra.mxu0 0.0
      %1438 = vmatprep.subr.mxu0 0.0
      %1439 = vmatpush1.msra.mxu0 0.0
      %1440 = vmatprep.subr.mxu0 0.0
      %1441 = vmatpush1.msra.mxu0 0.0
      %1442 = vmatprep.subr.mxu0 0.0
      %1443 = vmatpush1.msra.mxu0 0.0
      %1444 = vmatprep.subr.mxu0 0.0
      %1445 = vmatpush1.msra.mxu0 0.0
      %1446 = vmatprep.subr.mxu0 0.0
      %1447 = vmatpush1.msra.mxu0 0.0
      %1448 = vmatprep.subr.mxu0 0.0
      %1449 = vmatpush1.msra.mxu0 0.0
      %1450 = vmatprep.subr.mxu0 %v1156
      %1451 = vmatpush1.msra.mxu0 %v1155
      %1452 = vmatprep.subr.mxu0 0.0
      %1453 = vmatpush2.msra.mxu0 0.0
      %1454 = vmatprep.subr.mxu0 0.0
      %1455 = vmatpush2.msra.mxu0 0.0
      %1456 = vmatprep.subr.mxu0 0.0
      %1457 = vmatpush2.msra.mxu0 0.0
      %1458 = vmatprep.subr.mxu0 0.0
      %1459 = vmatpush2.msra.mxu0 0.0
      %1460 = vmatprep.subr.mxu0 0.0
      %1461 = vmatpush2.msra.mxu0 0.0
      %1462 = vmatprep.subr.mxu0 0.0
      %1463 = vmatpush2.msra.mxu0 0.0
      %1464 = vmatprep.subr.mxu0 0.0
      %1465 = vmatpush2.msra.mxu0 0.0
      %1466 = vmatprep.subr.mxu0 0.0
      %1467 = vmatpush2.msra.mxu0 0.0
      %1468 = vmatprep.subr.mxu0 0.0
      %1469 = vmatpush2.msra.mxu0 0.0
      %1470 = vmatprep.subr.mxu0 0.0
      %1471 = vmatpush2.msra.mxu0 0.0
      %1472 = vmatprep.subr.mxu0 0.0
      %1473 = vmatpush2.msra.mxu0 0.0
      %1474 = vmatprep.subr.mxu0 0.0
      %1475 = vmatpush2.msra.mxu0 0.0
      %1476 = vmatprep.subr.mxu0 0.0
      %1477 = vmatpush2.msra.mxu0 0.0
      %1478 = vmatprep.subr.mxu0 0.0
      %1479 = vmatpush2.msra.mxu0 0.0
      %1480 = vmatprep.subr.mxu0 0.0
      %1481 = vmatpush2.msra.mxu0 0.0
      %1482 = vmatprep.subr.mxu0 0.0
      %1483 = vmatpush2.msra.mxu0 0.0
      %1484 = vmatprep.mubr.f32.mxu0 0.0
      %1485 = vmatmul.mubr.f32.gmra.mxu0 %v1347
      %v1486 = vpop.f32.mrf.mxu0
      %v1487 = vadd.f32 %v1342, %v1486
      %v1488 = vpop.f32.mrf.mxu0
      %v1489 = vadd.f32 %v1344, %v1488
      %1490 = vdwg.mxu0
      %1491 = vrot.lane.b32.xlu0 %v1112, 15
      %v1492 = vpop.permute.xlu0 %1491
      %1493 = vrot.lane.b32.xlu0 %v1113, 15
      %v1494 = vpop.permute.xlu0 %1493
      %1495 = vrot.lane.b32.xlu0 %v1114, 15
      %v1496 = vpop.permute.xlu0 %1495
      %1497 = vrot.lane.b32.xlu0 %v1115, 15
      %v1498 = vpop.permute.xlu0 %1497
      %vm1499 = vcmp.lt.s32.totalorder %v1125, 15
      %v1500 = vsel %vm1499, %v1496, %v1498
      %v1501 = vsel %vm1499, %v1494, %v1496
      %v1502 = vsel %vm1499, %v1492, %v1494
      %v1503 = vsel %vm1499, %v1498, %v1492
      %s1504 = scalar_lea.vmem %s3, 8
      %v1505 = vld [vmem:[%s1504] sm:$0xf]
      %v1507 = vlaneseq
      %v1508 = vshrl.u32 %v1507, 7
      %v1509 = vsub.s32 0, %v1508
      %v1510 = vrot.slane %v1505, %v1509
      %v1511 = vlaneseq
      %v1512 = vshrl.u32 %v1511, 7
      %v1513 = vsub.s32 1, %v1512
      %v1514 = vrot.slane %v1505, %v1513
      %v1515 = vlaneseq
      %v1516 = vshrl.u32 %v1515, 7
      %v1517 = vsub.s32 2, %v1516
      %v1518 = vrot.slane %v1505, %v1517
      %v1519 = vlaneseq
      %v1520 = vshrl.u32 %v1519, 7
      %v1521 = vsub.s32 3, %v1520
      %v1522 = vrot.slane %v1505, %v1521
      %v1527 = vmul.f32 %v1503, %v1510
      %v1528 = vmul.f32 %v1502, %v1514
      %v1529 = vmul.f32 %v1501, %v1518
      %v1530 = vmul.f32 %v1500, %v1522
      %s1531 = scalar_lea.vmem %s861, 16
      %v1532 = vld [vmem:[%s1531] sm:$0xff]
      %v1534 = vsel %vm1200, %v1532, 0
      %1536 = vmatprep.subr.mxu0 0.0
      %1537 = vmatpush1.msra.mxu0 0.0
      %1538 = vmatprep.subr.mxu0 0.0
      %1539 = vmatpush1.msra.mxu0 0.0
      %1540 = vmatprep.subr.mxu0 0.0
      %1541 = vmatpush1.msra.mxu0 0.0
      %1542 = vmatprep.subr.mxu0 0.0
      %1543 = vmatpush1.msra.mxu0 0.0
      %1544 = vmatprep.subr.mxu0 0.0
      %1545 = vmatpush1.msra.mxu0 0.0
      %1546 = vmatprep.subr.mxu0 0.0
      %1547 = vmatpush1.msra.mxu0 0.0
      %1548 = vmatprep.subr.mxu0 0.0
      %1549 = vmatpush1.msra.mxu0 0.0
      %1550 = vmatprep.subr.mxu0 0.0
      %1551 = vmatpush1.msra.mxu0 0.0
      %1552 = vmatprep.subr.mxu0 0.0
      %1553 = vmatpush1.msra.mxu0 0.0
      %1554 = vmatprep.subr.mxu0 0.0
      %1555 = vmatpush1.msra.mxu0 0.0
      %1556 = vmatprep.subr.mxu0 0.0
      %1557 = vmatpush1.msra.mxu0 0.0
      %1558 = vmatprep.subr.mxu0 0.0
      %1559 = vmatpush1.msra.mxu0 0.0
      %1560 = vmatprep.subr.mxu0 0.0
      %1561 = vmatpush1.msra.mxu0 0.0
      %1562 = vmatprep.subr.mxu0 0.0
      %1563 = vmatpush1.msra.mxu0 0.0
      %1564 = vmatprep.subr.mxu0 0.0
      %1565 = vmatpush1.msra.mxu0 0.0
      %1566 = vmatprep.subr.mxu0 %v1528
      %1567 = vmatpush1.msra.mxu0 %v1527
      %1568 = vmatprep.subr.mxu0 0.0
      %1569 = vmatpush2.msra.mxu0 0.0
      %1570 = vmatprep.subr.mxu0 0.0
      %1571 = vmatpush2.msra.mxu0 0.0
      %1572 = vmatprep.subr.mxu0 0.0
      %1573 = vmatpush2.msra.mxu0 0.0
      %1574 = vmatprep.subr.mxu0 0.0
      %1575 = vmatpush2.msra.mxu0 0.0
      %1576 = vmatprep.subr.mxu0 0.0
      %1577 = vmatpush2.msra.mxu0 0.0
      %1578 = vmatprep.subr.mxu0 0.0
      %1579 = vmatpush2.msra.mxu0 0.0
      %1580 = vmatprep.subr.mxu0 0.0
      %1581 = vmatpush2.msra.mxu0 0.0
      %1582 = vmatprep.subr.mxu0 0.0
      %1583 = vmatpush2.msra.mxu0 0.0
      %1584 = vmatprep.subr.mxu0 0.0
      %1585 = vmatpush2.msra.mxu0 0.0
      %1586 = vmatprep.subr.mxu0 0.0
      %1587 = vmatpush2.msra.mxu0 0.0
      %1588 = vmatprep.subr.mxu0 0.0
      %1589 = vmatpush2.msra.mxu0 0.0
      %1590 = vmatprep.subr.mxu0 0.0
      %1591 = vmatpush2.msra.mxu0 0.0
      %1592 = vmatprep.subr.mxu0 0.0
      %1593 = vmatpush2.msra.mxu0 0.0
      %1594 = vmatprep.subr.mxu0 0.0
      %1595 = vmatpush2.msra.mxu0 0.0
      %1596 = vmatprep.subr.mxu0 0.0
      %1597 = vmatpush2.msra.mxu0 0.0
      %1598 = vmatprep.subr.mxu0 0.0
      %1599 = vmatpush2.msra.mxu0 0.0
      %1600 = vmatprep.mubr.f32.mxu0 0.0
      %1601 = vmatmul.mubr.f32.gmra.mxu0 %v1534
      %v1602 = vpop.f32.mrf.mxu0
      %v1603 = vadd.f32 0.0, %v1602
      %v1604 = vpop.f32.mrf.mxu0
      %v1605 = vadd.f32 0.0, %v1604
      %1606 = vdwg.mxu0
      %1607 = vmatprep.subr.mxu0 0.0
      %1608 = vmatpush1.msra.mxu0 0.0
      %1609 = vmatprep.subr.mxu0 0.0
      %1610 = vmatpush1.msra.mxu0 0.0
      %1611 = vmatprep.subr.mxu0 0.0
      %1612 = vmatpush1.msra.mxu0 0.0
      %1613 = vmatprep.subr.mxu0 0.0
      %1614 = vmatpush1.msra.mxu0 0.0
      %1615 = vmatprep.subr.mxu0 0.0
      %1616 = vmatpush1.msra.mxu0 0.0
      %1617 = vmatprep.subr.mxu0 0.0
      %1618 = vmatpush1.msra.mxu0 0.0
      %1619 = vmatprep.subr.mxu0 0.0
      %1620 = vmatpush1.msra.mxu0 0.0
      %1621 = vmatprep.subr.mxu0 0.0
      %1622 = vmatpush1.msra.mxu0 0.0
      %1623 = vmatprep.subr.mxu0 0.0
      %1624 = vmatpush1.msra.mxu0 0.0
      %1625 = vmatprep.subr.mxu0 0.0
      %1626 = vmatpush1.msra.mxu0 0.0
      %1627 = vmatprep.subr.mxu0 0.0
      %1628 = vmatpush1.msra.mxu0 0.0
      %1629 = vmatprep.subr.mxu0 0.0
      %1630 = vmatpush1.msra.mxu0 0.0
      %1631 = vmatprep.subr.mxu0 0.0
      %1632 = vmatpush1.msra.mxu0 0.0
      %1633 = vmatprep.subr.mxu0 0.0
      %1634 = vmatpush1.msra.mxu0 0.0
      %1635 = vmatprep.subr.mxu0 0.0
      %1636 = vmatpush1.msra.mxu0 0.0
      %1637 = vmatprep.subr.mxu0 %v1530
      %1638 = vmatpush1.msra.mxu0 %v1529
      %1639 = vmatprep.subr.mxu0 0.0
      %1640 = vmatpush2.msra.mxu0 0.0
      %1641 = vmatprep.subr.mxu0 0.0
      %1642 = vmatpush2.msra.mxu0 0.0
      %1643 = vmatprep.subr.mxu0 0.0
      %1644 = vmatpush2.msra.mxu0 0.0
      %1645 = vmatprep.subr.mxu0 0.0
      %1646 = vmatpush2.msra.mxu0 0.0
      %1647 = vmatprep.subr.mxu0 0.0
      %1648 = vmatpush2.msra.mxu0 0.0
      %1649 = vmatprep.subr.mxu0 0.0
      %1650 = vmatpush2.msra.mxu0 0.0
      %1651 = vmatprep.subr.mxu0 0.0
      %1652 = vmatpush2.msra.mxu0 0.0
      %1653 = vmatprep.subr.mxu0 0.0
      %1654 = vmatpush2.msra.mxu0 0.0
      %1655 = vmatprep.subr.mxu0 0.0
      %1656 = vmatpush2.msra.mxu0 0.0
      %1657 = vmatprep.subr.mxu0 0.0
      %1658 = vmatpush2.msra.mxu0 0.0
      %1659 = vmatprep.subr.mxu0 0.0
      %1660 = vmatpush2.msra.mxu0 0.0
      %1661 = vmatprep.subr.mxu0 0.0
      %1662 = vmatpush2.msra.mxu0 0.0
      %1663 = vmatprep.subr.mxu0 0.0
      %1664 = vmatpush2.msra.mxu0 0.0
      %1665 = vmatprep.subr.mxu0 0.0
      %1666 = vmatpush2.msra.mxu0 0.0
      %1667 = vmatprep.subr.mxu0 0.0
      %1668 = vmatpush2.msra.mxu0 0.0
      %1669 = vmatprep.subr.mxu0 0.0
      %1670 = vmatpush2.msra.mxu0 0.0
      %1671 = vmatprep.mubr.f32.mxu0 0.0
      %1672 = vmatmul.mubr.f32.gmra.mxu0 %v1534
      %v1673 = vpop.f32.mrf.mxu0
      %v1674 = vadd.f32 0.0, %v1673
      %v1675 = vpop.f32.mrf.mxu0
      %v1676 = vadd.f32 0.0, %v1675
      %1677 = vdwg.mxu0
      %v1678 = vadd.f32 %v1416, %v1603
      %v1679 = vadd.f32 %v1418, %v1605
      %v1680 = vadd.f32 %v1487, %v1674
      %v1681 = vadd.f32 %v1489, %v1676
      %1682 = vrot.lane.b32.xlu0 %v1112, 1
      %v1683 = vpop.permute.xlu0 %1682
      %1684 = vrot.lane.b32.xlu0 %v1113, 1
      %v1685 = vpop.permute.xlu0 %1684
      %1686 = vrot.lane.b32.xlu0 %v1114, 1
      %v1687 = vpop.permute.xlu0 %1686
      %1688 = vrot.lane.b32.xlu0 %v1115, 1
      %v1689 = vpop.permute.xlu0 %1688
      %vm1690 = vcmp.lt.s32.totalorder %v1125, 1
      %v1691 = vsel %vm1690, %v1687, %v1689
      %v1692 = vsel %vm1690, %v1685, %v1687
      %v1693 = vsel %vm1690, %v1683, %v1685
      %v1694 = vsel %vm1690, %v1689, %v1683
      %s1695 = scalar_lea.vmem %s3, 12
      %v1696 = vld [vmem:[%s1695] sm:$0xf]
      %v1698 = vlaneseq
      %v1699 = vshrl.u32 %v1698, 7
      %v1700 = vsub.s32 0, %v1699
      %v1701 = vrot.slane %v1696, %v1700
      %v1702 = vlaneseq
      %v1703 = vshrl.u32 %v1702, 7
      %v1704 = vsub.s32 1, %v1703
      %v1705 = vrot.slane %v1696, %v1704
      %v1706 = vlaneseq
      %v1707 = vshrl.u32 %v1706, 7
      %v1708 = vsub.s32 2, %v1707
      %v1709 = vrot.slane %v1696, %v1708
      %v1710 = vlaneseq
      %v1711 = vshrl.u32 %v1710, 7
      %v1712 = vsub.s32 3, %v1711
      %v1713 = vrot.slane %v1696, %v1712
      %v1718 = vmul.f32 %v1694, %v1701
      %v1719 = vmul.f32 %v1693, %v1705
      %v1720 = vmul.f32 %v1692, %v1709
      %v1721 = vmul.f32 %v1691, %v1713
      %s1722 = scalar_lea.vmem %s861, 24
      %v1723 = vld [vmem:[%s1722] sm:$0xff]
      %v1725 = vsel %vm1200, %v1723, 0
      %1727 = vmatprep.subr.mxu0 0.0
      %1728 = vmatpush1.msra.mxu0 0.0
      %1729 = vmatprep.subr.mxu0 0.0
      %1730 = vmatpush1.msra.mxu0 0.0
      %1731 = vmatprep.subr.mxu0 0.0
      %1732 = vmatpush1.msra.mxu0 0.0
      %1733 = vmatprep.subr.mxu0 0.0
      %1734 = vmatpush1.msra.mxu0 0.0
      %1735 = vmatprep.subr.mxu0 0.0
      %1736 = vmatpush1.msra.mxu0 0.0
      %1737 = vmatprep.subr.mxu0 0.0
      %1738 = vmatpush1.msra.mxu0 0.0
      %1739 = vmatprep.subr.mxu0 0.0
      %1740 = vmatpush1.msra.mxu0 0.0
      %1741 = vmatprep.subr.mxu0 0.0
      %1742 = vmatpush1.msra.mxu0 0.0
      %1743 = vmatprep.subr.mxu0 0.0
      %1744 = vmatpush1.msra.mxu0 0.0
      %1745 = vmatprep.subr.mxu0 0.0
      %1746 = vmatpush1.msra.mxu0 0.0
      %1747 = vmatprep.subr.mxu0 0.0
      %1748 = vmatpush1.msra.mxu0 0.0
      %1749 = vmatprep.subr.mxu0 0.0
      %1750 = vmatpush1.msra.mxu0 0.0
      %1751 = vmatprep.subr.mxu0 0.0
      %1752 = vmatpush1.msra.mxu0 0.0
      %1753 = vmatprep.subr.mxu0 0.0
      %1754 = vmatpush1.msra.mxu0 0.0
      %1755 = vmatprep.subr.mxu0 0.0
      %1756 = vmatpush1.msra.mxu0 0.0
      %1757 = vmatprep.subr.mxu0 %v1719
      %1758 = vmatpush1.msra.mxu0 %v1718
      %1759 = vmatprep.subr.mxu0 0.0
      %1760 = vmatpush2.msra.mxu0 0.0
      %1761 = vmatprep.subr.mxu0 0.0
      %1762 = vmatpush2.msra.mxu0 0.0
      %1763 = vmatprep.subr.mxu0 0.0
      %1764 = vmatpush2.msra.mxu0 0.0
      %1765 = vmatprep.subr.mxu0 0.0
      %1766 = vmatpush2.msra.mxu0 0.0
      %1767 = vmatprep.subr.mxu0 0.0
      %1768 = vmatpush2.msra.mxu0 0.0
      %1769 = vmatprep.subr.mxu0 0.0
      %1770 = vmatpush2.msra.mxu0 0.0
      %1771 = vmatprep.subr.mxu0 0.0
      %1772 = vmatpush2.msra.mxu0 0.0
      %1773 = vmatprep.subr.mxu0 0.0
      %1774 = vmatpush2.msra.mxu0 0.0
      %1775 = vmatprep.subr.mxu0 0.0
      %1776 = vmatpush2.msra.mxu0 0.0
      %1777 = vmatprep.subr.mxu0 0.0
      %1778 = vmatpush2.msra.mxu0 0.0
      %1779 = vmatprep.subr.mxu0 0.0
      %1780 = vmatpush2.msra.mxu0 0.0
      %1781 = vmatprep.subr.mxu0 0.0
      %1782 = vmatpush2.msra.mxu0 0.0
      %1783 = vmatprep.subr.mxu0 0.0
      %1784 = vmatpush2.msra.mxu0 0.0
      %1785 = vmatprep.subr.mxu0 0.0
      %1786 = vmatpush2.msra.mxu0 0.0
      %1787 = vmatprep.subr.mxu0 0.0
      %1788 = vmatpush2.msra.mxu0 0.0
      %1789 = vmatprep.subr.mxu0 0.0
      %1790 = vmatpush2.msra.mxu0 0.0
      %1791 = vmatprep.mubr.f32.mxu0 0.0
      %1792 = vmatmul.mubr.f32.gmra.mxu0 %v1725
      %v1793 = vpop.f32.mrf.mxu0
      %v1794 = vadd.f32 0.0, %v1793
      %v1795 = vpop.f32.mrf.mxu0
      %v1796 = vadd.f32 0.0, %v1795
      %1797 = vdwg.mxu0
      %1798 = vmatprep.subr.mxu0 0.0
      %1799 = vmatpush1.msra.mxu0 0.0
      %1800 = vmatprep.subr.mxu0 0.0
      %1801 = vmatpush1.msra.mxu0 0.0
      %1802 = vmatprep.subr.mxu0 0.0
      %1803 = vmatpush1.msra.mxu0 0.0
      %1804 = vmatprep.subr.mxu0 0.0
      %1805 = vmatpush1.msra.mxu0 0.0
      %1806 = vmatprep.subr.mxu0 0.0
      %1807 = vmatpush1.msra.mxu0 0.0
      %1808 = vmatprep.subr.mxu0 0.0
      %1809 = vmatpush1.msra.mxu0 0.0
      %1810 = vmatprep.subr.mxu0 0.0
      %1811 = vmatpush1.msra.mxu0 0.0
      %1812 = vmatprep.subr.mxu0 0.0
      %1813 = vmatpush1.msra.mxu0 0.0
      %1814 = vmatprep.subr.mxu0 0.0
      %1815 = vmatpush1.msra.mxu0 0.0
      %1816 = vmatprep.subr.mxu0 0.0
      %1817 = vmatpush1.msra.mxu0 0.0
      %1818 = vmatprep.subr.mxu0 0.0
      %1819 = vmatpush1.msra.mxu0 0.0
      %1820 = vmatprep.subr.mxu0 0.0
      %1821 = vmatpush1.msra.mxu0 0.0
      %1822 = vmatprep.subr.mxu0 0.0
      %1823 = vmatpush1.msra.mxu0 0.0
      %1824 = vmatprep.subr.mxu0 0.0
      %1825 = vmatpush1.msra.mxu0 0.0
      %1826 = vmatprep.subr.mxu0 0.0
      %1827 = vmatpush1.msra.mxu0 0.0
      %1828 = vmatprep.subr.mxu0 %v1721
      %1829 = vmatpush1.msra.mxu0 %v1720
      %1830 = vmatprep.subr.mxu0 0.0
      %1831 = vmatpush2.msra.mxu0 0.0
      %1832 = vmatprep.subr.mxu0 0.0
      %1833 = vmatpush2.msra.mxu0 0.0
      %1834 = vmatprep.subr.mxu0 0.0
      %1835 = vmatpush2.msra.mxu0 0.0
      %1836 = vmatprep.subr.mxu0 0.0
      %1837 = vmatpush2.msra.mxu0 0.0
      %1838 = vmatprep.subr.mxu0 0.0
      %1839 = vmatpush2.msra.mxu0 0.0
      %1840 = vmatprep.subr.mxu0 0.0
      %1841 = vmatpush2.msra.mxu0 0.0
      %1842 = vmatprep.subr.mxu0 0.0
      %1843 = vmatpush2.msra.mxu0 0.0
      %1844 = vmatprep.subr.mxu0 0.0
      %1845 = vmatpush2.msra.mxu0 0.0
      %1846 = vmatprep.subr.mxu0 0.0
      %1847 = vmatpush2.msra.mxu0 0.0
      %1848 = vmatprep.subr.mxu0 0.0
      %1849 = vmatpush2.msra.mxu0 0.0
      %1850 = vmatprep.subr.mxu0 0.0
      %1851 = vmatpush2.msra.mxu0 0.0
      %1852 = vmatprep.subr.mxu0 0.0
      %1853 = vmatpush2.msra.mxu0 0.0
      %1854 = vmatprep.subr.mxu0 0.0
      %1855 = vmatpush2.msra.mxu0 0.0
      %1856 = vmatprep.subr.mxu0 0.0
      %1857 = vmatpush2.msra.mxu0 0.0
      %1858 = vmatprep.subr.mxu0 0.0
      %1859 = vmatpush2.msra.mxu0 0.0
      %1860 = vmatprep.subr.mxu0 0.0
      %1861 = vmatpush2.msra.mxu0 0.0
      %1862 = vmatprep.mubr.f32.mxu0 0.0
      %1863 = vmatmul.mubr.f32.gmra.mxu0 %v1725
      %v1864 = vpop.f32.mrf.mxu0
      %v1865 = vadd.f32 0.0, %v1864
      %v1866 = vpop.f32.mrf.mxu0
      %v1867 = vadd.f32 0.0, %v1866
      %1868 = vdwg.mxu0
      %v1869 = vadd.f32 %v1678, %v1794
      %v1870 = vadd.f32 %v1679, %v1796
      %v1871 = vadd.f32 %v1680, %v1865
      %v1872 = vadd.f32 %v1681, %v1867
      %s1873 = scalar_lea.vmem %s861, 32
      %v1874 = vld [vmem:[%s1873] sm:$0xff]
      %v1876 = vsel %vm1200, %v1874, 0
      %1878 = vmatprep.subr.mxu0 0.0
      %1879 = vmatpush1.msra.mxu0 0.0
      %1880 = vmatprep.subr.mxu0 0.0
      %1881 = vmatpush1.msra.mxu0 0.0
      %1882 = vmatprep.subr.mxu0 0.0
      %1883 = vmatpush1.msra.mxu0 0.0
      %1884 = vmatprep.subr.mxu0 0.0
      %1885 = vmatpush1.msra.mxu0 0.0
      %1886 = vmatprep.subr.mxu0 0.0
      %1887 = vmatpush1.msra.mxu0 0.0
      %1888 = vmatprep.subr.mxu0 0.0
      %1889 = vmatpush1.msra.mxu0 0.0
      %1890 = vmatprep.subr.mxu0 0.0
      %1891 = vmatpush1.msra.mxu0 0.0
      %1892 = vmatprep.subr.mxu0 0.0
      %1893 = vmatpush1.msra.mxu0 0.0
      %1894 = vmatprep.subr.mxu0 0.0
      %1895 = vmatpush1.msra.mxu0 0.0
      %1896 = vmatprep.subr.mxu0 0.0
      %1897 = vmatpush1.msra.mxu0 0.0
      %1898 = vmatprep.subr.mxu0 0.0
      %1899 = vmatpush1.msra.mxu0 0.0
      %1900 = vmatprep.subr.mxu0 0.0
      %1901 = vmatpush1.msra.mxu0 0.0
      %1902 = vmatprep.subr.mxu0 0.0
      %1903 = vmatpush1.msra.mxu0 0.0
      %1904 = vmatprep.subr.mxu0 0.0
      %1905 = vmatpush1.msra.mxu0 0.0
      %1906 = vmatprep.subr.mxu0 0.0
      %1907 = vmatpush1.msra.mxu0 0.0
      %1908 = vmatprep.subr.mxu0 %v1113
      %1909 = vmatpush1.msra.mxu0 %v1112
      %1910 = vmatprep.subr.mxu0 0.0
      %1911 = vmatpush2.msra.mxu0 0.0
      %1912 = vmatprep.subr.mxu0 0.0
      %1913 = vmatpush2.msra.mxu0 0.0
      %1914 = vmatprep.subr.mxu0 0.0
      %1915 = vmatpush2.msra.mxu0 0.0
      %1916 = vmatprep.subr.mxu0 0.0
      %1917 = vmatpush2.msra.mxu0 0.0
      %1918 = vmatprep.subr.mxu0 0.0
      %1919 = vmatpush2.msra.mxu0 0.0
      %1920 = vmatprep.subr.mxu0 0.0
      %1921 = vmatpush2.msra.mxu0 0.0
      %1922 = vmatprep.subr.mxu0 0.0
      %1923 = vmatpush2.msra.mxu0 0.0
      %1924 = vmatprep.subr.mxu0 0.0
      %1925 = vmatpush2.msra.mxu0 0.0
      %1926 = vmatprep.subr.mxu0 0.0
      %1927 = vmatpush2.msra.mxu0 0.0
      %1928 = vmatprep.subr.mxu0 0.0
      %1929 = vmatpush2.msra.mxu0 0.0
      %1930 = vmatprep.subr.mxu0 0.0
      %1931 = vmatpush2.msra.mxu0 0.0
      %1932 = vmatprep.subr.mxu0 0.0
      %1933 = vmatpush2.msra.mxu0 0.0
      %1934 = vmatprep.subr.mxu0 0.0
      %1935 = vmatpush2.msra.mxu0 0.0
      %1936 = vmatprep.subr.mxu0 0.0
      %1937 = vmatpush2.msra.mxu0 0.0
      %1938 = vmatprep.subr.mxu0 0.0
      %1939 = vmatpush2.msra.mxu0 0.0
      %1940 = vmatprep.subr.mxu0 0.0
      %1941 = vmatpush2.msra.mxu0 0.0
      %1942 = vmatprep.mubr.f32.mxu0 0.0
      %1943 = vmatmul.mubr.f32.gmra.mxu0 %v1876
      %v1944 = vpop.f32.mrf.mxu0
      %v1945 = vadd.f32 0.0, %v1944
      %v1946 = vpop.f32.mrf.mxu0
      %v1947 = vadd.f32 0.0, %v1946
      %1948 = vdwg.mxu0
      %1949 = vmatprep.subr.mxu0 0.0
      %1950 = vmatpush1.msra.mxu0 0.0
      %1951 = vmatprep.subr.mxu0 0.0
      %1952 = vmatpush1.msra.mxu0 0.0
      %1953 = vmatprep.subr.mxu0 0.0
      %1954 = vmatpush1.msra.mxu0 0.0
      %1955 = vmatprep.subr.mxu0 0.0
      %1956 = vmatpush1.msra.mxu0 0.0
      %1957 = vmatprep.subr.mxu0 0.0
      %1958 = vmatpush1.msra.mxu0 0.0
      %1959 = vmatprep.subr.mxu0 0.0
      %1960 = vmatpush1.msra.mxu0 0.0
      %1961 = vmatprep.subr.mxu0 0.0
      %1962 = vmatpush1.msra.mxu0 0.0
      %1963 = vmatprep.subr.mxu0 0.0
      %1964 = vmatpush1.msra.mxu0 0.0
      %1965 = vmatprep.subr.mxu0 0.0
      %1966 = vmatpush1.msra.mxu0 0.0
      %1967 = vmatprep.subr.mxu0 0.0
      %1968 = vmatpush1.msra.mxu0 0.0
      %1969 = vmatprep.subr.mxu0 0.0
      %1970 = vmatpush1.msra.mxu0 0.0
      %1971 = vmatprep.subr.mxu0 0.0
      %1972 = vmatpush1.msra.mxu0 0.0
      %1973 = vmatprep.subr.mxu0 0.0
      %1974 = vmatpush1.msra.mxu0 0.0
      %1975 = vmatprep.subr.mxu0 0.0
      %1976 = vmatpush1.msra.mxu0 0.0
      %1977 = vmatprep.subr.mxu0 0.0
      %1978 = vmatpush1.msra.mxu0 0.0
      %1979 = vmatprep.subr.mxu0 %v1115
      %1980 = vmatpush1.msra.mxu0 %v1114
      %1981 = vmatprep.subr.mxu0 0.0
      %1982 = vmatpush2.msra.mxu0 0.0
      %1983 = vmatprep.subr.mxu0 0.0
      %1984 = vmatpush2.msra.mxu0 0.0
      %1985 = vmatprep.subr.mxu0 0.0
      %1986 = vmatpush2.msra.mxu0 0.0
      %1987 = vmatprep.subr.mxu0 0.0
      %1988 = vmatpush2.msra.mxu0 0.0
      %1989 = vmatprep.subr.mxu0 0.0
      %1990 = vmatpush2.msra.mxu0 0.0
      %1991 = vmatprep.subr.mxu0 0.0
      %1992 = vmatpush2.msra.mxu0 0.0
      %1993 = vmatprep.subr.mxu0 0.0
      %1994 = vmatpush2.msra.mxu0 0.0
      %1995 = vmatprep.subr.mxu0 0.0
      %1996 = vmatpush2.msra.mxu0 0.0
      %1997 = vmatprep.subr.mxu0 0.0
      %1998 = vmatpush2.msra.mxu0 0.0
      %1999 = vmatprep.subr.mxu0 0.0
      %2000 = vmatpush2.msra.mxu0 0.0
      %2001 = vmatprep.subr.mxu0 0.0
      %2002 = vmatpush2.msra.mxu0 0.0
      %2003 = vmatprep.subr.mxu0 0.0
      %2004 = vmatpush2.msra.mxu0 0.0
      %2005 = vmatprep.subr.mxu0 0.0
      %2006 = vmatpush2.msra.mxu0 0.0
      %2007 = vmatprep.subr.mxu0 0.0
      %2008 = vmatpush2.msra.mxu0 0.0
      %2009 = vmatprep.subr.mxu0 0.0
      %2010 = vmatpush2.msra.mxu0 0.0
      %2011 = vmatprep.subr.mxu0 0.0
      %2012 = vmatpush2.msra.mxu0 0.0
      %2013 = vmatprep.mubr.f32.mxu0 0.0
      %2014 = vmatmul.mubr.f32.gmra.mxu0 %v1876
      %v2015 = vpop.f32.mrf.mxu0
      %v2016 = vadd.f32 0.0, %v2015
      %v2017 = vpop.f32.mrf.mxu0
      %v2018 = vadd.f32 0.0, %v2017
      %2019 = vdwg.mxu0
      %v2020 = vadd.f32 %v1869, %v1945
      %v2021 = vadd.f32 %v1870, %v1947
      %v2022 = vadd.f32 %v1871, %v2016
      %v2023 = vadd.f32 %v1872, %v2018
      %2024 = vrot.lane.b32.xlu0 %v1112, 127
      %v2025 = vpop.permute.xlu0 %2024
      %2026 = vrot.lane.b32.xlu0 %v1113, 127
      %v2027 = vpop.permute.xlu0 %2026
      %2028 = vrot.lane.b32.xlu0 %v1114, 127
      %v2029 = vpop.permute.xlu0 %2028
      %2030 = vrot.lane.b32.xlu0 %v1115, 127
      %v2031 = vpop.permute.xlu0 %2030
      %vm2032 = vcmp.lt.s32.totalorder %v1125, 127
      %v2033 = vsel %vm2032, %v2029, %v2031
      %v2034 = vsel %vm2032, %v2027, %v2029
      %v2035 = vsel %vm2032, %v2025, %v2027
      %v2036 = vsel %vm2032, %v2031, %v2025
      %s2037 = scalar_lea.vmem %s3, 20
      %v2038 = vld [vmem:[%s2037] sm:$0xf]
      %v2040 = vlaneseq
      %v2041 = vshrl.u32 %v2040, 7
      %v2042 = vsub.s32 0, %v2041
      %v2043 = vrot.slane %v2038, %v2042
      %v2044 = vlaneseq
      %v2045 = vshrl.u32 %v2044, 7
      %v2046 = vsub.s32 1, %v2045
      %v2047 = vrot.slane %v2038, %v2046
      %v2048 = vlaneseq
      %v2049 = vshrl.u32 %v2048, 7
      %v2050 = vsub.s32 2, %v2049
      %v2051 = vrot.slane %v2038, %v2050
      %v2052 = vlaneseq
      %v2053 = vshrl.u32 %v2052, 7
      %v2054 = vsub.s32 3, %v2053
      %v2055 = vrot.slane %v2038, %v2054
      %v2060 = vmul.f32 %v2035, %v2043
      %v2061 = vmul.f32 %v2034, %v2047
      %v2062 = vmul.f32 %v2033, %v2051
      %v2063 = vmul.f32 %v2036, %v2055
      %s2064 = scalar_lea.vmem %s861, 40
      %v2065 = vld [vmem:[%s2064] sm:$0xff]
      %v2067 = vsel %vm1200, %v2065, 0
      %2069 = vmatprep.subr.mxu0 0.0
      %2070 = vmatpush1.msra.mxu0 0.0
      %2071 = vmatprep.subr.mxu0 0.0
      %2072 = vmatpush1.msra.mxu0 0.0
      %2073 = vmatprep.subr.mxu0 0.0
      %2074 = vmatpush1.msra.mxu0 0.0
      %2075 = vmatprep.subr.mxu0 0.0
      %2076 = vmatpush1.msra.mxu0 0.0
      %2077 = vmatprep.subr.mxu0 0.0
      %2078 = vmatpush1.msra.mxu0 0.0
      %2079 = vmatprep.subr.mxu0 0.0
      %2080 = vmatpush1.msra.mxu0 0.0
      %2081 = vmatprep.subr.mxu0 0.0
      %2082 = vmatpush1.msra.mxu0 0.0
      %2083 = vmatprep.subr.mxu0 0.0
      %2084 = vmatpush1.msra.mxu0 0.0
      %2085 = vmatprep.subr.mxu0 0.0
      %2086 = vmatpush1.msra.mxu0 0.0
      %2087 = vmatprep.subr.mxu0 0.0
      %2088 = vmatpush1.msra.mxu0 0.0
      %2089 = vmatprep.subr.mxu0 0.0
      %2090 = vmatpush1.msra.mxu0 0.0
      %2091 = vmatprep.subr.mxu0 0.0
      %2092 = vmatpush1.msra.mxu0 0.0
      %2093 = vmatprep.subr.mxu0 0.0
      %2094 = vmatpush1.msra.mxu0 0.0
      %2095 = vmatprep.subr.mxu0 0.0
      %2096 = vmatpush1.msra.mxu0 0.0
      %2097 = vmatprep.subr.mxu0 0.0
      %2098 = vmatpush1.msra.mxu0 0.0
      %2099 = vmatprep.subr.mxu0 %v2061
      %2100 = vmatpush1.msra.mxu0 %v2060
      %2101 = vmatprep.subr.mxu0 0.0
      %2102 = vmatpush2.msra.mxu0 0.0
      %2103 = vmatprep.subr.mxu0 0.0
      %2104 = vmatpush2.msra.mxu0 0.0
      %2105 = vmatprep.subr.mxu0 0.0
      %2106 = vmatpush2.msra.mxu0 0.0
      %2107 = vmatprep.subr.mxu0 0.0
      %2108 = vmatpush2.msra.mxu0 0.0
      %2109 = vmatprep.subr.mxu0 0.0
      %2110 = vmatpush2.msra.mxu0 0.0
      %2111 = vmatprep.subr.mxu0 0.0
      %2112 = vmatpush2.msra.mxu0 0.0
      %2113 = vmatprep.subr.mxu0 0.0
      %2114 = vmatpush2.msra.mxu0 0.0
      %2115 = vmatprep.subr.mxu0 0.0
      %2116 = vmatpush2.msra.mxu0 0.0
      %2117 = vmatprep.subr.mxu0 0.0
      %2118 = vmatpush2.msra.mxu0 0.0
      %2119 = vmatprep.subr.mxu0 0.0
      %2120 = vmatpush2.msra.mxu0 0.0
      %2121 = vmatprep.subr.mxu0 0.0
      %2122 = vmatpush2.msra.mxu0 0.0
      %2123 = vmatprep.subr.mxu0 0.0
      %2124 = vmatpush2.msra.mxu0 0.0
      %2125 = vmatprep.subr.mxu0 0.0
      %2126 = vmatpush2.msra.mxu0 0.0
      %2127 = vmatprep.subr.mxu0 0.0
      %2128 = vmatpush2.msra.mxu0 0.0
      %2129 = vmatprep.subr.mxu0 0.0
      %2130 = vmatpush2.msra.mxu0 0.0
      %2131 = vmatprep.subr.mxu0 0.0
      %2132 = vmatpush2.msra.mxu0 0.0
      %2133 = vmatprep.mubr.f32.mxu0 0.0
      %2134 = vmatmul.mubr.f32.gmra.mxu0 %v2067
      %v2135 = vpop.f32.mrf.mxu0
      %v2136 = vadd.f32 0.0, %v2135
      %v2137 = vpop.f32.mrf.mxu0
      %v2138 = vadd.f32 0.0, %v2137
      %2139 = vdwg.mxu0
      %2140 = vmatprep.subr.mxu0 0.0
      %2141 = vmatpush1.msra.mxu0 0.0
      %2142 = vmatprep.subr.mxu0 0.0
      %2143 = vmatpush1.msra.mxu0 0.0
      %2144 = vmatprep.subr.mxu0 0.0
      %2145 = vmatpush1.msra.mxu0 0.0
      %2146 = vmatprep.subr.mxu0 0.0
      %2147 = vmatpush1.msra.mxu0 0.0
      %2148 = vmatprep.subr.mxu0 0.0
      %2149 = vmatpush1.msra.mxu0 0.0
      %2150 = vmatprep.subr.mxu0 0.0
      %2151 = vmatpush1.msra.mxu0 0.0
      %2152 = vmatprep.subr.mxu0 0.0
      %2153 = vmatpush1.msra.mxu0 0.0
      %2154 = vmatprep.subr.mxu0 0.0
      %2155 = vmatpush1.msra.mxu0 0.0
      %2156 = vmatprep.subr.mxu0 0.0
      %2157 = vmatpush1.msra.mxu0 0.0
      %2158 = vmatprep.subr.mxu0 0.0
      %2159 = vmatpush1.msra.mxu0 0.0
      %2160 = vmatprep.subr.mxu0 0.0
      %2161 = vmatpush1.msra.mxu0 0.0
      %2162 = vmatprep.subr.mxu0 0.0
      %2163 = vmatpush1.msra.mxu0 0.0
      %2164 = vmatprep.subr.mxu0 0.0
      %2165 = vmatpush1.msra.mxu0 0.0
      %2166 = vmatprep.subr.mxu0 0.0
      %2167 = vmatpush1.msra.mxu0 0.0
      %2168 = vmatprep.subr.mxu0 0.0
      %2169 = vmatpush1.msra.mxu0 0.0
      %2170 = vmatprep.subr.mxu0 %v2063
      %2171 = vmatpush1.msra.mxu0 %v2062
      %2172 = vmatprep.subr.mxu0 0.0
      %2173 = vmatpush2.msra.mxu0 0.0
      %2174 = vmatprep.subr.mxu0 0.0
      %2175 = vmatpush2.msra.mxu0 0.0
      %2176 = vmatprep.subr.mxu0 0.0
      %2177 = vmatpush2.msra.mxu0 0.0
      %2178 = vmatprep.subr.mxu0 0.0
      %2179 = vmatpush2.msra.mxu0 0.0
      %2180 = vmatprep.subr.mxu0 0.0
      %2181 = vmatpush2.msra.mxu0 0.0
      %2182 = vmatprep.subr.mxu0 0.0
      %2183 = vmatpush2.msra.mxu0 0.0
      %2184 = vmatprep.subr.mxu0 0.0
      %2185 = vmatpush2.msra.mxu0 0.0
      %2186 = vmatprep.subr.mxu0 0.0
      %2187 = vmatpush2.msra.mxu0 0.0
      %2188 = vmatprep.subr.mxu0 0.0
      %2189 = vmatpush2.msra.mxu0 0.0
      %2190 = vmatprep.subr.mxu0 0.0
      %2191 = vmatpush2.msra.mxu0 0.0
      %2192 = vmatprep.subr.mxu0 0.0
      %2193 = vmatpush2.msra.mxu0 0.0
      %2194 = vmatprep.subr.mxu0 0.0
      %2195 = vmatpush2.msra.mxu0 0.0
      %2196 = vmatprep.subr.mxu0 0.0
      %2197 = vmatpush2.msra.mxu0 0.0
      %2198 = vmatprep.subr.mxu0 0.0
      %2199 = vmatpush2.msra.mxu0 0.0
      %2200 = vmatprep.subr.mxu0 0.0
      %2201 = vmatpush2.msra.mxu0 0.0
      %2202 = vmatprep.subr.mxu0 0.0
      %2203 = vmatpush2.msra.mxu0 0.0
      %2204 = vmatprep.mubr.f32.mxu0 0.0
      %2205 = vmatmul.mubr.f32.gmra.mxu0 %v2067
      %v2206 = vpop.f32.mrf.mxu0
      %v2207 = vadd.f32 0.0, %v2206
      %v2208 = vpop.f32.mrf.mxu0
      %v2209 = vadd.f32 0.0, %v2208
      %2210 = vdwg.mxu0
      %v2211 = vadd.f32 %v2020, %v2136
      %v2212 = vadd.f32 %v2021, %v2138
      %v2213 = vadd.f32 %v2022, %v2207
      %v2214 = vadd.f32 %v2023, %v2209
      %2215 = vrot.lane.b32.xlu0 %v1112, 113
      %v2216 = vpop.permute.xlu0 %2215
      %2217 = vrot.lane.b32.xlu0 %v1113, 113
      %v2218 = vpop.permute.xlu0 %2217
      %2219 = vrot.lane.b32.xlu0 %v1114, 113
      %v2220 = vpop.permute.xlu0 %2219
      %2221 = vrot.lane.b32.xlu0 %v1115, 113
      %v2222 = vpop.permute.xlu0 %2221
      %vm2223 = vcmp.lt.s32.totalorder %v1125, 113
      %v2224 = vsel %vm2223, %v2220, %v2222
      %v2225 = vsel %vm2223, %v2218, %v2220
      %v2226 = vsel %vm2223, %v2216, %v2218
      %v2227 = vsel %vm2223, %v2222, %v2216
      %s2228 = scalar_lea.vmem %s3, 24
      %v2229 = vld [vmem:[%s2228] sm:$0xf]
      %v2231 = vlaneseq
      %v2232 = vshrl.u32 %v2231, 7
      %v2233 = vsub.s32 0, %v2232
      %v2234 = vrot.slane %v2229, %v2233
      %v2235 = vlaneseq
      %v2236 = vshrl.u32 %v2235, 7
      %v2237 = vsub.s32 1, %v2236
      %v2238 = vrot.slane %v2229, %v2237
      %v2239 = vlaneseq
      %v2240 = vshrl.u32 %v2239, 7
      %v2241 = vsub.s32 2, %v2240
      %v2242 = vrot.slane %v2229, %v2241
      %v2243 = vlaneseq
      %v2244 = vshrl.u32 %v2243, 7
      %v2245 = vsub.s32 3, %v2244
      %v2246 = vrot.slane %v2229, %v2245
      %v2251 = vmul.f32 %v2226, %v2234
      %v2252 = vmul.f32 %v2225, %v2238
      %v2253 = vmul.f32 %v2224, %v2242
      %v2254 = vmul.f32 %v2227, %v2246
      %s2255 = scalar_lea.vmem %s861, 48
      %v2256 = vld [vmem:[%s2255] sm:$0xff]
      %v2258 = vsel %vm1200, %v2256, 0
      %2260 = vmatprep.subr.mxu0 0.0
      %2261 = vmatpush1.msra.mxu0 0.0
      %2262 = vmatprep.subr.mxu0 0.0
      %2263 = vmatpush1.msra.mxu0 0.0
      %2264 = vmatprep.subr.mxu0 0.0
      %2265 = vmatpush1.msra.mxu0 0.0
      %2266 = vmatprep.subr.mxu0 0.0
      %2267 = vmatpush1.msra.mxu0 0.0
      %2268 = vmatprep.subr.mxu0 0.0
      %2269 = vmatpush1.msra.mxu0 0.0
      %2270 = vmatprep.subr.mxu0 0.0
      %2271 = vmatpush1.msra.mxu0 0.0
      %2272 = vmatprep.subr.mxu0 0.0
      %2273 = vmatpush1.msra.mxu0 0.0
      %2274 = vmatprep.subr.mxu0 0.0
      %2275 = vmatpush1.msra.mxu0 0.0
      %2276 = vmatprep.subr.mxu0 0.0
      %2277 = vmatpush1.msra.mxu0 0.0
      %2278 = vmatprep.subr.mxu0 0.0
      %2279 = vmatpush1.msra.mxu0 0.0
      %2280 = vmatprep.subr.mxu0 0.0
      %2281 = vmatpush1.msra.mxu0 0.0
      %2282 = vmatprep.subr.mxu0 0.0
      %2283 = vmatpush1.msra.mxu0 0.0
      %2284 = vmatprep.subr.mxu0 0.0
      %2285 = vmatpush1.msra.mxu0 0.0
      %2286 = vmatprep.subr.mxu0 0.0
      %2287 = vmatpush1.msra.mxu0 0.0
      %2288 = vmatprep.subr.mxu0 0.0
      %2289 = vmatpush1.msra.mxu0 0.0
      %2290 = vmatprep.subr.mxu0 %v2252
      %2291 = vmatpush1.msra.mxu0 %v2251
      %2292 = vmatprep.subr.mxu0 0.0
      %2293 = vmatpush2.msra.mxu0 0.0
      %2294 = vmatprep.subr.mxu0 0.0
      %2295 = vmatpush2.msra.mxu0 0.0
      %2296 = vmatprep.subr.mxu0 0.0
      %2297 = vmatpush2.msra.mxu0 0.0
      %2298 = vmatprep.subr.mxu0 0.0
      %2299 = vmatpush2.msra.mxu0 0.0
      %2300 = vmatprep.subr.mxu0 0.0
      %2301 = vmatpush2.msra.mxu0 0.0
      %2302 = vmatprep.subr.mxu0 0.0
      %2303 = vmatpush2.msra.mxu0 0.0
      %2304 = vmatprep.subr.mxu0 0.0
      %2305 = vmatpush2.msra.mxu0 0.0
      %2306 = vmatprep.subr.mxu0 0.0
      %2307 = vmatpush2.msra.mxu0 0.0
      %2308 = vmatprep.subr.mxu0 0.0
      %2309 = vmatpush2.msra.mxu0 0.0
      %2310 = vmatprep.subr.mxu0 0.0
      %2311 = vmatpush2.msra.mxu0 0.0
      %2312 = vmatprep.subr.mxu0 0.0
      %2313 = vmatpush2.msra.mxu0 0.0
      %2314 = vmatprep.subr.mxu0 0.0
      %2315 = vmatpush2.msra.mxu0 0.0
      %2316 = vmatprep.subr.mxu0 0.0
      %2317 = vmatpush2.msra.mxu0 0.0
      %2318 = vmatprep.subr.mxu0 0.0
      %2319 = vmatpush2.msra.mxu0 0.0
      %2320 = vmatprep.subr.mxu0 0.0
      %2321 = vmatpush2.msra.mxu0 0.0
      %2322 = vmatprep.subr.mxu0 0.0
      %2323 = vmatpush2.msra.mxu0 0.0
      %2324 = vmatprep.mubr.f32.mxu0 0.0
      %2325 = vmatmul.mubr.f32.gmra.mxu0 %v2258
      %v2326 = vpop.f32.mrf.mxu0
      %v2327 = vadd.f32 0.0, %v2326
      %v2328 = vpop.f32.mrf.mxu0
      %v2329 = vadd.f32 0.0, %v2328
      %2330 = vdwg.mxu0
      %2331 = vmatprep.subr.mxu0 0.0
      %2332 = vmatpush1.msra.mxu0 0.0
      %2333 = vmatprep.subr.mxu0 0.0
      %2334 = vmatpush1.msra.mxu0 0.0
      %2335 = vmatprep.subr.mxu0 0.0
      %2336 = vmatpush1.msra.mxu0 0.0
      %2337 = vmatprep.subr.mxu0 0.0
      %2338 = vmatpush1.msra.mxu0 0.0
      %2339 = vmatprep.subr.mxu0 0.0
      %2340 = vmatpush1.msra.mxu0 0.0
      %2341 = vmatprep.subr.mxu0 0.0
      %2342 = vmatpush1.msra.mxu0 0.0
      %2343 = vmatprep.subr.mxu0 0.0
      %2344 = vmatpush1.msra.mxu0 0.0
      %2345 = vmatprep.subr.mxu0 0.0
      %2346 = vmatpush1.msra.mxu0 0.0
      %2347 = vmatprep.subr.mxu0 0.0
      %2348 = vmatpush1.msra.mxu0 0.0
      %2349 = vmatprep.subr.mxu0 0.0
      %2350 = vmatpush1.msra.mxu0 0.0
      %2351 = vmatprep.subr.mxu0 0.0
      %2352 = vmatpush1.msra.mxu0 0.0
      %2353 = vmatprep.subr.mxu0 0.0
      %2354 = vmatpush1.msra.mxu0 0.0
      %2355 = vmatprep.subr.mxu0 0.0
      %2356 = vmatpush1.msra.mxu0 0.0
      %2357 = vmatprep.subr.mxu0 0.0
      %2358 = vmatpush1.msra.mxu0 0.0
      %2359 = vmatprep.subr.mxu0 0.0
      %2360 = vmatpush1.msra.mxu0 0.0
      %2361 = vmatprep.subr.mxu0 %v2254
      %2362 = vmatpush1.msra.mxu0 %v2253
      %2363 = vmatprep.subr.mxu0 0.0
      %2364 = vmatpush2.msra.mxu0 0.0
      %2365 = vmatprep.subr.mxu0 0.0
      %2366 = vmatpush2.msra.mxu0 0.0
      %2367 = vmatprep.subr.mxu0 0.0
      %2368 = vmatpush2.msra.mxu0 0.0
      %2369 = vmatprep.subr.mxu0 0.0
      %2370 = vmatpush2.msra.mxu0 0.0
      %2371 = vmatprep.subr.mxu0 0.0
      %2372 = vmatpush2.msra.mxu0 0.0
      %2373 = vmatprep.subr.mxu0 0.0
      %2374 = vmatpush2.msra.mxu0 0.0
      %2375 = vmatprep.subr.mxu0 0.0
      %2376 = vmatpush2.msra.mxu0 0.0
      %2377 = vmatprep.subr.mxu0 0.0
      %2378 = vmatpush2.msra.mxu0 0.0
      %2379 = vmatprep.subr.mxu0 0.0
      %2380 = vmatpush2.msra.mxu0 0.0
      %2381 = vmatprep.subr.mxu0 0.0
      %2382 = vmatpush2.msra.mxu0 0.0
      %2383 = vmatprep.subr.mxu0 0.0
      %2384 = vmatpush2.msra.mxu0 0.0
      %2385 = vmatprep.subr.mxu0 0.0
      %2386 = vmatpush2.msra.mxu0 0.0
      %2387 = vmatprep.subr.mxu0 0.0
      %2388 = vmatpush2.msra.mxu0 0.0
      %2389 = vmatprep.subr.mxu0 0.0
      %2390 = vmatpush2.msra.mxu0 0.0
      %2391 = vmatprep.subr.mxu0 0.0
      %2392 = vmatpush2.msra.mxu0 0.0
      %2393 = vmatprep.subr.mxu0 0.0
      %2394 = vmatpush2.msra.mxu0 0.0
      %2395 = vmatprep.mubr.f32.mxu0 0.0
      %2396 = vmatmul.mubr.f32.gmra.mxu0 %v2258
      %v2397 = vpop.f32.mrf.mxu0
      %v2398 = vadd.f32 0.0, %v2397
      %v2399 = vpop.f32.mrf.mxu0
      %v2400 = vadd.f32 0.0, %v2399
      %2401 = vdwg.mxu0
      %v2402 = vadd.f32 %v2211, %v2327
      %v2403 = vadd.f32 %v2212, %v2329
      %v2404 = vadd.f32 %v2213, %v2398
      %v2405 = vadd.f32 %v2214, %v2400
      %2406 = vrot.lane.b32.xlu0 %v1112, 112
      %v2407 = vpop.permute.xlu0 %2406
      %2408 = vrot.lane.b32.xlu0 %v1113, 112
      %v2409 = vpop.permute.xlu0 %2408
      %2410 = vrot.lane.b32.xlu0 %v1114, 112
      %v2411 = vpop.permute.xlu0 %2410
      %2412 = vrot.lane.b32.xlu0 %v1115, 112
      %v2413 = vpop.permute.xlu0 %2412
      %vm2414 = vcmp.lt.s32.totalorder %v1125, 112
      %v2415 = vsel %vm2414, %v2411, %v2413
      %v2416 = vsel %vm2414, %v2409, %v2411
      %v2417 = vsel %vm2414, %v2407, %v2409
      %v2418 = vsel %vm2414, %v2413, %v2407
      %s2419 = scalar_lea.vmem %s3, 28
      %v2420 = vld [vmem:[%s2419] sm:$0xf]
      %v2422 = vlaneseq
      %v2423 = vshrl.u32 %v2422, 7
      %v2424 = vsub.s32 0, %v2423
      %v2425 = vrot.slane %v2420, %v2424
      %v2426 = vlaneseq
      %v2427 = vshrl.u32 %v2426, 7
      %v2428 = vsub.s32 1, %v2427
      %v2429 = vrot.slane %v2420, %v2428
      %v2430 = vlaneseq
      %v2431 = vshrl.u32 %v2430, 7
      %v2432 = vsub.s32 2, %v2431
      %v2433 = vrot.slane %v2420, %v2432
      %v2434 = vlaneseq
      %v2435 = vshrl.u32 %v2434, 7
      %v2436 = vsub.s32 3, %v2435
      %v2437 = vrot.slane %v2420, %v2436
      %v2442 = vmul.f32 %v2417, %v2425
      %v2443 = vmul.f32 %v2416, %v2429
      %v2444 = vmul.f32 %v2415, %v2433
      %v2445 = vmul.f32 %v2418, %v2437
      %s2446 = scalar_lea.vmem %s861, 56
      %v2447 = vld [vmem:[%s2446] sm:$0xff]
      %v2449 = vsel %vm1200, %v2447, 0
      %2451 = vmatprep.subr.mxu0 0.0
      %2452 = vmatpush1.msra.mxu0 0.0
      %2453 = vmatprep.subr.mxu0 0.0
      %2454 = vmatpush1.msra.mxu0 0.0
      %2455 = vmatprep.subr.mxu0 0.0
      %2456 = vmatpush1.msra.mxu0 0.0
      %2457 = vmatprep.subr.mxu0 0.0
      %2458 = vmatpush1.msra.mxu0 0.0
      %2459 = vmatprep.subr.mxu0 0.0
      %2460 = vmatpush1.msra.mxu0 0.0
      %2461 = vmatprep.subr.mxu0 0.0
      %2462 = vmatpush1.msra.mxu0 0.0
      %2463 = vmatprep.subr.mxu0 0.0
      %2464 = vmatpush1.msra.mxu0 0.0
      %2465 = vmatprep.subr.mxu0 0.0
      %2466 = vmatpush1.msra.mxu0 0.0
      %2467 = vmatprep.subr.mxu0 0.0
      %2468 = vmatpush1.msra.mxu0 0.0
      %2469 = vmatprep.subr.mxu0 0.0
      %2470 = vmatpush1.msra.mxu0 0.0
      %2471 = vmatprep.subr.mxu0 0.0
      %2472 = vmatpush1.msra.mxu0 0.0
      %2473 = vmatprep.subr.mxu0 0.0
      %2474 = vmatpush1.msra.mxu0 0.0
      %2475 = vmatprep.subr.mxu0 0.0
      %2476 = vmatpush1.msra.mxu0 0.0
      %2477 = vmatprep.subr.mxu0 0.0
      %2478 = vmatpush1.msra.mxu0 0.0
      %2479 = vmatprep.subr.mxu0 0.0
      %2480 = vmatpush1.msra.mxu0 0.0
      %2481 = vmatprep.subr.mxu0 %v2443
      %2482 = vmatpush1.msra.mxu0 %v2442
      %2483 = vmatprep.subr.mxu0 0.0
      %2484 = vmatpush2.msra.mxu0 0.0
      %2485 = vmatprep.subr.mxu0 0.0
      %2486 = vmatpush2.msra.mxu0 0.0
      %2487 = vmatprep.subr.mxu0 0.0
      %2488 = vmatpush2.msra.mxu0 0.0
      %2489 = vmatprep.subr.mxu0 0.0
      %2490 = vmatpush2.msra.mxu0 0.0
      %2491 = vmatprep.subr.mxu0 0.0
      %2492 = vmatpush2.msra.mxu0 0.0
      %2493 = vmatprep.subr.mxu0 0.0
      %2494 = vmatpush2.msra.mxu0 0.0
      %2495 = vmatprep.subr.mxu0 0.0
      %2496 = vmatpush2.msra.mxu0 0.0
      %2497 = vmatprep.subr.mxu0 0.0
      %2498 = vmatpush2.msra.mxu0 0.0
      %2499 = vmatprep.subr.mxu0 0.0
      %2500 = vmatpush2.msra.mxu0 0.0
      %2501 = vmatprep.subr.mxu0 0.0
      %2502 = vmatpush2.msra.mxu0 0.0
      %2503 = vmatprep.subr.mxu0 0.0
      %2504 = vmatpush2.msra.mxu0 0.0
      %2505 = vmatprep.subr.mxu0 0.0
      %2506 = vmatpush2.msra.mxu0 0.0
      %2507 = vmatprep.subr.mxu0 0.0
      %2508 = vmatpush2.msra.mxu0 0.0
      %2509 = vmatprep.subr.mxu0 0.0
      %2510 = vmatpush2.msra.mxu0 0.0
      %2511 = vmatprep.subr.mxu0 0.0
      %2512 = vmatpush2.msra.mxu0 0.0
      %2513 = vmatprep.subr.mxu0 0.0
      %2514 = vmatpush2.msra.mxu0 0.0
      %2515 = vmatprep.mubr.f32.mxu0 0.0
      %2516 = vmatmul.mubr.f32.gmra.mxu0 %v2449
      %v2517 = vpop.f32.mrf.mxu0
      %v2518 = vadd.f32 0.0, %v2517
      %v2519 = vpop.f32.mrf.mxu0
      %v2520 = vadd.f32 0.0, %v2519
      %2521 = vdwg.mxu0
      %2522 = vmatprep.subr.mxu0 0.0
      %2523 = vmatpush1.msra.mxu0 0.0
      %2524 = vmatprep.subr.mxu0 0.0
      %2525 = vmatpush1.msra.mxu0 0.0
      %2526 = vmatprep.subr.mxu0 0.0
      %2527 = vmatpush1.msra.mxu0 0.0
      %2528 = vmatprep.subr.mxu0 0.0
      %2529 = vmatpush1.msra.mxu0 0.0
      %2530 = vmatprep.subr.mxu0 0.0
      %2531 = vmatpush1.msra.mxu0 0.0
      %2532 = vmatprep.subr.mxu0 0.0
      %2533 = vmatpush1.msra.mxu0 0.0
      %2534 = vmatprep.subr.mxu0 0.0
      %2535 = vmatpush1.msra.mxu0 0.0
      %2536 = vmatprep.subr.mxu0 0.0
      %2537 = vmatpush1.msra.mxu0 0.0
      %2538 = vmatprep.subr.mxu0 0.0
      %2539 = vmatpush1.msra.mxu0 0.0
      %2540 = vmatprep.subr.mxu0 0.0
      %2541 = vmatpush1.msra.mxu0 0.0
      %2542 = vmatprep.subr.mxu0 0.0
      %2543 = vmatpush1.msra.mxu0 0.0
      %2544 = vmatprep.subr.mxu0 0.0
      %2545 = vmatpush1.msra.mxu0 0.0
      %2546 = vmatprep.subr.mxu0 0.0
      %2547 = vmatpush1.msra.mxu0 0.0
      %2548 = vmatprep.subr.mxu0 0.0
      %2549 = vmatpush1.msra.mxu0 0.0
      %2550 = vmatprep.subr.mxu0 0.0
      %2551 = vmatpush1.msra.mxu0 0.0
      %2552 = vmatprep.subr.mxu0 %v2445
      %2553 = vmatpush1.msra.mxu0 %v2444
      %2554 = vmatprep.subr.mxu0 0.0
      %2555 = vmatpush2.msra.mxu0 0.0
      %2556 = vmatprep.subr.mxu0 0.0
      %2557 = vmatpush2.msra.mxu0 0.0
      %2558 = vmatprep.subr.mxu0 0.0
      %2559 = vmatpush2.msra.mxu0 0.0
      %2560 = vmatprep.subr.mxu0 0.0
      %2561 = vmatpush2.msra.mxu0 0.0
      %2562 = vmatprep.subr.mxu0 0.0
      %2563 = vmatpush2.msra.mxu0 0.0
      %2564 = vmatprep.subr.mxu0 0.0
      %2565 = vmatpush2.msra.mxu0 0.0
      %2566 = vmatprep.subr.mxu0 0.0
      %2567 = vmatpush2.msra.mxu0 0.0
      %2568 = vmatprep.subr.mxu0 0.0
      %2569 = vmatpush2.msra.mxu0 0.0
      %2570 = vmatprep.subr.mxu0 0.0
      %2571 = vmatpush2.msra.mxu0 0.0
      %2572 = vmatprep.subr.mxu0 0.0
      %2573 = vmatpush2.msra.mxu0 0.0
      %2574 = vmatprep.subr.mxu0 0.0
      %2575 = vmatpush2.msra.mxu0 0.0
      %2576 = vmatprep.subr.mxu0 0.0
      %2577 = vmatpush2.msra.mxu0 0.0
      %2578 = vmatprep.subr.mxu0 0.0
      %2579 = vmatpush2.msra.mxu0 0.0
      %2580 = vmatprep.subr.mxu0 0.0
      %2581 = vmatpush2.msra.mxu0 0.0
      %2582 = vmatprep.subr.mxu0 0.0
      %2583 = vmatpush2.msra.mxu0 0.0
      %2584 = vmatprep.subr.mxu0 0.0
      %2585 = vmatpush2.msra.mxu0 0.0
      %2586 = vmatprep.mubr.f32.mxu0 0.0
      %2587 = vmatmul.mubr.f32.gmra.mxu0 %v2449
      %v2588 = vpop.f32.mrf.mxu0
      %v2589 = vadd.f32 0.0, %v2588
      %v2590 = vpop.f32.mrf.mxu0
      %v2591 = vadd.f32 0.0, %v2590
      %2592 = vdwg.mxu0
      %v2593 = vadd.f32 %v2402, %v2518
      %v2594 = vadd.f32 %v2403, %v2520
      %v2595 = vadd.f32 %v2404, %v2589
      %v2596 = vadd.f32 %v2405, %v2591
      %2597 = vrot.lane.b32.xlu0 %v1112, 111
      %v2598 = vpop.permute.xlu0 %2597
      %2599 = vrot.lane.b32.xlu0 %v1113, 111
      %v2600 = vpop.permute.xlu0 %2599
      %2601 = vrot.lane.b32.xlu0 %v1114, 111
      %v2602 = vpop.permute.xlu0 %2601
      %2603 = vrot.lane.b32.xlu0 %v1115, 111
      %v2604 = vpop.permute.xlu0 %2603
      %vm2605 = vcmp.lt.s32.totalorder %v1125, 111
      %v2606 = vsel %vm2605, %v2602, %v2604
      %v2607 = vsel %vm2605, %v2600, %v2602
      %v2608 = vsel %vm2605, %v2598, %v2600
      %v2609 = vsel %vm2605, %v2604, %v2598
      %s2610 = scalar_lea.vmem %s3, 32
      %v2611 = vld [vmem:[%s2610] sm:$0xf]
      %v2613 = vlaneseq
      %v2614 = vshrl.u32 %v2613, 7
      %v2615 = vsub.s32 0, %v2614
      %v2616 = vrot.slane %v2611, %v2615
      %v2617 = vlaneseq
      %v2618 = vshrl.u32 %v2617, 7
      %v2619 = vsub.s32 1, %v2618
      %v2620 = vrot.slane %v2611, %v2619
      %v2621 = vlaneseq
      %v2622 = vshrl.u32 %v2621, 7
      %v2623 = vsub.s32 2, %v2622
      %v2624 = vrot.slane %v2611, %v2623
      %v2625 = vlaneseq
      %v2626 = vshrl.u32 %v2625, 7
      %v2627 = vsub.s32 3, %v2626
      %v2628 = vrot.slane %v2611, %v2627
      %v2633 = vmul.f32 %v2608, %v2616
      %v2634 = vmul.f32 %v2607, %v2620
      %v2635 = vmul.f32 %v2606, %v2624
      %v2636 = vmul.f32 %v2609, %v2628
      %s2637 = scalar_lea.vmem %s861, 64
      %v2638 = vld [vmem:[%s2637] sm:$0xff]
      %v2640 = vsel %vm1200, %v2638, 0
      %2642 = vmatprep.subr.mxu0 0.0
      %2643 = vmatpush1.msra.mxu0 0.0
      %2644 = vmatprep.subr.mxu0 0.0
      %2645 = vmatpush1.msra.mxu0 0.0
      %2646 = vmatprep.subr.mxu0 0.0
      %2647 = vmatpush1.msra.mxu0 0.0
      %2648 = vmatprep.subr.mxu0 0.0
      %2649 = vmatpush1.msra.mxu0 0.0
      %2650 = vmatprep.subr.mxu0 0.0
      %2651 = vmatpush1.msra.mxu0 0.0
      %2652 = vmatprep.subr.mxu0 0.0
      %2653 = vmatpush1.msra.mxu0 0.0
      %2654 = vmatprep.subr.mxu0 0.0
      %2655 = vmatpush1.msra.mxu0 0.0
      %2656 = vmatprep.subr.mxu0 0.0
      %2657 = vmatpush1.msra.mxu0 0.0
      %2658 = vmatprep.subr.mxu0 0.0
      %2659 = vmatpush1.msra.mxu0 0.0
      %2660 = vmatprep.subr.mxu0 0.0
      %2661 = vmatpush1.msra.mxu0 0.0
      %2662 = vmatprep.subr.mxu0 0.0
      %2663 = vmatpush1.msra.mxu0 0.0
      %2664 = vmatprep.subr.mxu0 0.0
      %2665 = vmatpush1.msra.mxu0 0.0
      %2666 = vmatprep.subr.mxu0 0.0
      %2667 = vmatpush1.msra.mxu0 0.0
      %2668 = vmatprep.subr.mxu0 0.0
      %2669 = vmatpush1.msra.mxu0 0.0
      %2670 = vmatprep.subr.mxu0 0.0
      %2671 = vmatpush1.msra.mxu0 0.0
      %2672 = vmatprep.subr.mxu0 %v2634
      %2673 = vmatpush1.msra.mxu0 %v2633
      %2674 = vmatprep.subr.mxu0 0.0
      %2675 = vmatpush2.msra.mxu0 0.0
      %2676 = vmatprep.subr.mxu0 0.0
      %2677 = vmatpush2.msra.mxu0 0.0
      %2678 = vmatprep.subr.mxu0 0.0
      %2679 = vmatpush2.msra.mxu0 0.0
      %2680 = vmatprep.subr.mxu0 0.0
      %2681 = vmatpush2.msra.mxu0 0.0
      %2682 = vmatprep.subr.mxu0 0.0
      %2683 = vmatpush2.msra.mxu0 0.0
      %2684 = vmatprep.subr.mxu0 0.0
      %2685 = vmatpush2.msra.mxu0 0.0
      %2686 = vmatprep.subr.mxu0 0.0
      %2687 = vmatpush2.msra.mxu0 0.0
      %2688 = vmatprep.subr.mxu0 0.0
      %2689 = vmatpush2.msra.mxu0 0.0
      %2690 = vmatprep.subr.mxu0 0.0
      %2691 = vmatpush2.msra.mxu0 0.0
      %2692 = vmatprep.subr.mxu0 0.0
      %2693 = vmatpush2.msra.mxu0 0.0
      %2694 = vmatprep.subr.mxu0 0.0
      %2695 = vmatpush2.msra.mxu0 0.0
      %2696 = vmatprep.subr.mxu0 0.0
      %2697 = vmatpush2.msra.mxu0 0.0
      %2698 = vmatprep.subr.mxu0 0.0
      %2699 = vmatpush2.msra.mxu0 0.0
      %2700 = vmatprep.subr.mxu0 0.0
      %2701 = vmatpush2.msra.mxu0 0.0
      %2702 = vmatprep.subr.mxu0 0.0
      %2703 = vmatpush2.msra.mxu0 0.0
      %2704 = vmatprep.subr.mxu0 0.0
      %2705 = vmatpush2.msra.mxu0 0.0
      %2706 = vmatprep.mubr.f32.mxu0 0.0
      %2707 = vmatmul.mubr.f32.gmra.mxu0 %v2640
      %v2708 = vpop.f32.mrf.mxu0
      %v2709 = vadd.f32 0.0, %v2708
      %v2710 = vpop.f32.mrf.mxu0
      %v2711 = vadd.f32 0.0, %v2710
      %2712 = vdwg.mxu0
      %2713 = vmatprep.subr.mxu0 0.0
      %2714 = vmatpush1.msra.mxu0 0.0
      %2715 = vmatprep.subr.mxu0 0.0
      %2716 = vmatpush1.msra.mxu0 0.0
      %2717 = vmatprep.subr.mxu0 0.0
      %2718 = vmatpush1.msra.mxu0 0.0
      %2719 = vmatprep.subr.mxu0 0.0
      %2720 = vmatpush1.msra.mxu0 0.0
      %2721 = vmatprep.subr.mxu0 0.0
      %2722 = vmatpush1.msra.mxu0 0.0
      %2723 = vmatprep.subr.mxu0 0.0
      %2724 = vmatpush1.msra.mxu0 0.0
      %2725 = vmatprep.subr.mxu0 0.0
      %2726 = vmatpush1.msra.mxu0 0.0
      %2727 = vmatprep.subr.mxu0 0.0
      %2728 = vmatpush1.msra.mxu0 0.0
      %2729 = vmatprep.subr.mxu0 0.0
      %2730 = vmatpush1.msra.mxu0 0.0
      %2731 = vmatprep.subr.mxu0 0.0
      %2732 = vmatpush1.msra.mxu0 0.0
      %2733 = vmatprep.subr.mxu0 0.0
      %2734 = vmatpush1.msra.mxu0 0.0
      %2735 = vmatprep.subr.mxu0 0.0
      %2736 = vmatpush1.msra.mxu0 0.0
      %2737 = vmatprep.subr.mxu0 0.0
      %2738 = vmatpush1.msra.mxu0 0.0
      %2739 = vmatprep.subr.mxu0 0.0
      %2740 = vmatpush1.msra.mxu0 0.0
      %2741 = vmatprep.subr.mxu0 0.0
      %2742 = vmatpush1.msra.mxu0 0.0
      %2743 = vmatprep.subr.mxu0 %v2636
      %2744 = vmatpush1.msra.mxu0 %v2635
      %2745 = vmatprep.subr.mxu0 0.0
      %2746 = vmatpush2.msra.mxu0 0.0
      %2747 = vmatprep.subr.mxu0 0.0
      %2748 = vmatpush2.msra.mxu0 0.0
      %2749 = vmatprep.subr.mxu0 0.0
      %2750 = vmatpush2.msra.mxu0 0.0
      %2751 = vmatprep.subr.mxu0 0.0
      %2752 = vmatpush2.msra.mxu0 0.0
      %2753 = vmatprep.subr.mxu0 0.0
      %2754 = vmatpush2.msra.mxu0 0.0
      %2755 = vmatprep.subr.mxu0 0.0
      %2756 = vmatpush2.msra.mxu0 0.0
      %2757 = vmatprep.subr.mxu0 0.0
      %2758 = vmatpush2.msra.mxu0 0.0
      %2759 = vmatprep.subr.mxu0 0.0
      %2760 = vmatpush2.msra.mxu0 0.0
      %2761 = vmatprep.subr.mxu0 0.0
      %2762 = vmatpush2.msra.mxu0 0.0
      %2763 = vmatprep.subr.mxu0 0.0
      %2764 = vmatpush2.msra.mxu0 0.0
      %2765 = vmatprep.subr.mxu0 0.0
      %2766 = vmatpush2.msra.mxu0 0.0
      %2767 = vmatprep.subr.mxu0 0.0
      %2768 = vmatpush2.msra.mxu0 0.0
      %2769 = vmatprep.subr.mxu0 0.0
      %2770 = vmatpush2.msra.mxu0 0.0
      %2771 = vmatprep.subr.mxu0 0.0
      %2772 = vmatpush2.msra.mxu0 0.0
      %2773 = vmatprep.subr.mxu0 0.0
      %2774 = vmatpush2.msra.mxu0 0.0
      %2775 = vmatprep.subr.mxu0 0.0
      %2776 = vmatpush2.msra.mxu0 0.0
      %2777 = vmatprep.mubr.f32.mxu0 0.0
      %2778 = vmatmul.mubr.f32.gmra.mxu0 %v2640
      %v2779 = vpop.f32.mrf.mxu0
      %v2780 = vadd.f32 0.0, %v2779
      %v2781 = vpop.f32.mrf.mxu0
      %v2782 = vadd.f32 0.0, %v2781
      %2783 = vdwg.mxu0
      %v2784 = vadd.f32 %v2593, %v2709
      %v2785 = vadd.f32 %v2594, %v2711
      %v2786 = vadd.f32 %v2595, %v2780
      %v2787 = vadd.f32 %v2596, %v2782
      %v2788 = vld [vmem:[%s865] sm:$0xff]
      %2790 = vset.pattern.permute.xlu0 0
      %2791 = vperm.xlu0 %2790, %v2788
      %v2792 = vpop.permute.xlu0 %2791
      %v2794 = vadd.f32 %v2784, %v2792
      %v2795 = vadd.f32 %v2785, %v2792
      %v2796 = vadd.f32 %v2786, %v2792
      %v2797 = vadd.f32 %v2787, %v2792
      %v2798 = vmax.f32 %v2794, 0.0
      %v2799 = vmax.f32 %v2795, 0.0
      %v2800 = vmax.f32 %v2796, 0.0
      %v2801 = vmax.f32 %v2797, 0.0
      %2802 = vrot.lane.b32.xlu0 %v2798, 127
      %v2803 = vpop.permute.xlu0 %2802
      %2804 = vrot.lane.b32.xlu0 %v2799, 127
      %v2805 = vpop.permute.xlu0 %2804
      %2806 = vrot.lane.b32.xlu0 %v2800, 127
      %v2807 = vpop.permute.xlu0 %2806
      %2808 = vrot.lane.b32.xlu0 %v2801, 127
      %v2809 = vpop.permute.xlu0 %2808
      %v2810 = vsel %vm2032, %v2807, %v2809
      %v2811 = vsel %vm2032, %v2805, %v2807
      %v2812 = vsel %vm2032, %v2803, %v2805
      %v2813 = vsel %vm2032, %v2809, %v2803
      %v2814 = vmax.f32 %v2798, %v2812
      %v2815 = vmax.f32 %v2799, %v2811
      %v2816 = vmax.f32 %v2800, %v2810
      %v2817 = vmax.f32 %v2801, %v2813
      %2818 = vrot.lane.b32.xlu0 %v2814, 112
      %v2819 = vpop.permute.xlu0 %2818
      %2820 = vrot.lane.b32.xlu0 %v2815, 112
      %v2821 = vpop.permute.xlu0 %2820
      %2822 = vrot.lane.b32.xlu0 %v2816, 112
      %v2823 = vpop.permute.xlu0 %2822
      %2824 = vrot.lane.b32.xlu0 %v2817, 112
      %v2825 = vpop.permute.xlu0 %2824
      %v2826 = vsel %vm2414, %v2823, %v2825
      %v2827 = vsel %vm2414, %v2821, %v2823
      %v2828 = vsel %vm2414, %v2819, %v2821
      %v2829 = vsel %vm2414, %v2825, %v2819
      %v2830 = vmax.f32 %v2814, %v2828
      %v2831 = vmax.f32 %v2815, %v2827
      %v2832 = vmax.f32 %v2816, %v2826
      %v2833 = vmax.f32 %v2817, %v2829
      %v2834 = vld [vmem:[%s1] sm:$0xff]
      %v2835 = vld [vmem:[%s1 + $0x8] sm:$0xff]
      %v2836 = vld [vmem:[%s1 + $0x10] sm:$0xff]
      %v2837 = vld [vmem:[%s1 + $0x18] sm:$0xff]
      %v2838 = vld [vmem:[%s1 + $0x20] sm:$0xff]
      %v2839 = vld [vmem:[%s1 + $0x28] sm:$0xff]
      %v2840 = vld [vmem:[%s1 + $0x30] sm:$0xff]
      %v2841 = vld [vmem:[%s1 + $0x38] sm:$0xff]
      %v2842 = vld [vmem:[%s1 + $0x40] sm:$0xff]
      %v2843 = vld [vmem:[%s1 + $0x48] sm:$0xff]
      %v2844 = vld [vmem:[%s1 + $0x50] sm:$0xff]
      %v2845 = vld [vmem:[%s1 + $0x58] sm:$0xff]
      %v2846 = vld [vmem:[%s1 + $0x60] sm:$0xff]
      %v2847 = vld [vmem:[%s1 + $0x68] sm:$0xff]
      %v2848 = vld [vmem:[%s1 + $0x70] sm:$0xff]
      %v2849 = vld [vmem:[%s1 + $0x78] sm:$0xff]
      %v2850 = vld [vmem:[%s1 + $0x80] sm:$0xff]
      %v2851 = vld [vmem:[%s1 + $0x88] sm:$0xff]
      %v2852 = vld [vmem:[%s1 + $0x90] sm:$0xff]
      %v2853 = vld [vmem:[%s1 + $0x98] sm:$0xff]
      %v2854 = vld [vmem:[%s1 + $0xa0] sm:$0xff]
      %v2855 = vld [vmem:[%s1 + $0xa8] sm:$0xff]
      %v2856 = vld [vmem:[%s1 + $0xb0] sm:$0xff]
      %v2857 = vld [vmem:[%s1 + $0xb8] sm:$0xff]
      %v2858 = vld [vmem:[%s1 + $0xc0] sm:$0xff]
      %v2859 = vld [vmem:[%s1 + $0xc8] sm:$0xff]
      %v2860 = vld [vmem:[%s1 + $0xd0] sm:$0xff]
      %v2861 = vld [vmem:[%s1 + $0xd8] sm:$0xff]
      %v2862 = vld [vmem:[%s1 + $0xe0] sm:$0xff]
      %v2863 = vld [vmem:[%s1 + $0xe8] sm:$0xff]
      %v2864 = vld [vmem:[%s1 + $0xf0] sm:$0xff]
      %v2865 = vld [vmem:[%s1 + $0xf8] sm:$0xff]
      %2866 = vmatprep.subr.mxu0 0.0
      %2867 = vmatpush1.msra.mxu0 %v2849
      %2868 = vmatprep.subr.mxu0 0.0
      %2869 = vmatpush1.msra.mxu0 %v2848
      %2870 = vmatprep.subr.mxu0 0.0
      %2871 = vmatpush1.msra.mxu0 %v2847
      %2872 = vmatprep.subr.mxu0 0.0
      %2873 = vmatpush1.msra.mxu0 %v2846
      %2874 = vmatprep.subr.mxu0 0.0
      %2875 = vmatpush1.msra.mxu0 %v2845
      %2876 = vmatprep.subr.mxu0 0.0
      %2877 = vmatpush1.msra.mxu0 %v2844
      %2878 = vmatprep.subr.mxu0 0.0
      %2879 = vmatpush1.msra.mxu0 %v2843
      %2880 = vmatprep.subr.mxu0 0.0
      %2881 = vmatpush1.msra.mxu0 %v2842
      %2882 = vmatprep.subr.mxu0 0.0
      %2883 = vmatpush1.msra.mxu0 %v2841
      %2884 = vmatprep.subr.mxu0 0.0
      %2885 = vmatpush1.msra.mxu0 %v2840
      %2886 = vmatprep.subr.mxu0 0.0
      %2887 = vmatpush1.msra.mxu0 %v2839
      %2888 = vmatprep.subr.mxu0 0.0
      %2889 = vmatpush1.msra.mxu0 %v2838
      %2890 = vmatprep.subr.mxu0 0.0
      %2891 = vmatpush1.msra.mxu0 %v2837
      %2892 = vmatprep.subr.mxu0 0.0
      %2893 = vmatpush1.msra.mxu0 %v2836
      %2894 = vmatprep.subr.mxu0 0.0
      %2895 = vmatpush1.msra.mxu0 %v2835
      %2896 = vmatprep.subr.mxu0 0.0
      %2897 = vmatpush1.msra.mxu0 %v2834
      %2898 = vmatprep.subr.mxu0 0.0
      %2899 = vmatpush2.msra.mxu0 %v2865
      %2900 = vmatprep.subr.mxu0 0.0
      %2901 = vmatpush2.msra.mxu0 %v2864
      %2902 = vmatprep.subr.mxu0 0.0
      %2903 = vmatpush2.msra.mxu0 %v2863
      %2904 = vmatprep.subr.mxu0 0.0
      %2905 = vmatpush2.msra.mxu0 %v2862
      %2906 = vmatprep.subr.mxu0 0.0
      %2907 = vmatpush2.msra.mxu0 %v2861
      %2908 = vmatprep.subr.mxu0 0.0
      %2909 = vmatpush2.msra.mxu0 %v2860
      %2910 = vmatprep.subr.mxu0 0.0
      %2911 = vmatpush2.msra.mxu0 %v2859
      %2912 = vmatprep.subr.mxu0 0.0
      %2913 = vmatpush2.msra.mxu0 %v2858
      %2914 = vmatprep.subr.mxu0 0.0
      %2915 = vmatpush2.msra.mxu0 %v2857
      %2916 = vmatprep.subr.mxu0 0.0
      %2917 = vmatpush2.msra.mxu0 %v2856
      %2918 = vmatprep.subr.mxu0 0.0
      %2919 = vmatpush2.msra.mxu0 %v2855
      %2920 = vmatprep.subr.mxu0 0.0
      %2921 = vmatpush2.msra.mxu0 %v2854
      %2922 = vmatprep.subr.mxu0 0.0
      %2923 = vmatpush2.msra.mxu0 %v2853
      %2924 = vmatprep.subr.mxu0 0.0
      %2925 = vmatpush2.msra.mxu0 %v2852
      %2926 = vmatprep.subr.mxu0 0.0
      %2927 = vmatpush2.msra.mxu0 %v2851
      %2928 = vmatprep.subr.mxu0 0.0
      %2929 = vmatpush2.msra.mxu0 %v2850
      %2930 = vmatprep.mubr.f32.mxu0 %v2831
      %2931 = vmatmul.mubr.f32.gmra.mxu0 %v2830
      %v2932 = vpop.f32.mrf.mxu0
      %v2933 = vadd.f32 0.0, %v2932
      %v2934 = vpop.f32.mrf.mxu0
      %2935 = vdwg.mxu0
      %2936 = vmatprep.subr.mxu0 0.0
      %2937 = vmatpush1.msra.mxu0 %v2849
      %2938 = vmatprep.subr.mxu0 0.0
      %2939 = vmatpush1.msra.mxu0 %v2848
      %2940 = vmatprep.subr.mxu0 0.0
      %2941 = vmatpush1.msra.mxu0 %v2847
      %2942 = vmatprep.subr.mxu0 0.0
      %2943 = vmatpush1.msra.mxu0 %v2846
      %2944 = vmatprep.subr.mxu0 0.0
      %2945 = vmatpush1.msra.mxu0 %v2845
      %2946 = vmatprep.subr.mxu0 0.0
      %2947 = vmatpush1.msra.mxu0 %v2844
      %2948 = vmatprep.subr.mxu0 0.0
      %2949 = vmatpush1.msra.mxu0 %v2843
      %2950 = vmatprep.subr.mxu0 0.0
      %2951 = vmatpush1.msra.mxu0 %v2842
      %2952 = vmatprep.subr.mxu0 0.0
      %2953 = vmatpush1.msra.mxu0 %v2841
      %2954 = vmatprep.subr.mxu0 0.0
      %2955 = vmatpush1.msra.mxu0 %v2840
      %2956 = vmatprep.subr.mxu0 0.0
      %2957 = vmatpush1.msra.mxu0 %v2839
      %2958 = vmatprep.subr.mxu0 0.0
      %2959 = vmatpush1.msra.mxu0 %v2838
      %2960 = vmatprep.subr.mxu0 0.0
      %2961 = vmatpush1.msra.mxu0 %v2837
      %2962 = vmatprep.subr.mxu0 0.0
      %2963 = vmatpush1.msra.mxu0 %v2836
      %2964 = vmatprep.subr.mxu0 0.0
      %2965 = vmatpush1.msra.mxu0 %v2835
      %2966 = vmatprep.subr.mxu0 0.0
      %2967 = vmatpush1.msra.mxu0 %v2834
      %2968 = vmatprep.subr.mxu0 0.0
      %2969 = vmatpush2.msra.mxu0 %v2865
      %2970 = vmatprep.subr.mxu0 0.0
      %2971 = vmatpush2.msra.mxu0 %v2864
      %2972 = vmatprep.subr.mxu0 0.0
      %2973 = vmatpush2.msra.mxu0 %v2863
      %2974 = vmatprep.subr.mxu0 0.0
      %2975 = vmatpush2.msra.mxu0 %v2862
      %2976 = vmatprep.subr.mxu0 0.0
      %2977 = vmatpush2.msra.mxu0 %v2861
      %2978 = vmatprep.subr.mxu0 0.0
      %2979 = vmatpush2.msra.mxu0 %v2860
      %2980 = vmatprep.subr.mxu0 0.0
      %2981 = vmatpush2.msra.mxu0 %v2859
      %2982 = vmatprep.subr.mxu0 0.0
      %2983 = vmatpush2.msra.mxu0 %v2858
      %2984 = vmatprep.subr.mxu0 0.0
      %2985 = vmatpush2.msra.mxu0 %v2857
      %2986 = vmatprep.subr.mxu0 0.0
      %2987 = vmatpush2.msra.mxu0 %v2856
      %2988 = vmatprep.subr.mxu0 0.0
      %2989 = vmatpush2.msra.mxu0 %v2855
      %2990 = vmatprep.subr.mxu0 0.0
      %2991 = vmatpush2.msra.mxu0 %v2854
      %2992 = vmatprep.subr.mxu0 0.0
      %2993 = vmatpush2.msra.mxu0 %v2853
      %2994 = vmatprep.subr.mxu0 0.0
      %2995 = vmatpush2.msra.mxu0 %v2852
      %2996 = vmatprep.subr.mxu0 0.0
      %2997 = vmatpush2.msra.mxu0 %v2851
      %2998 = vmatprep.subr.mxu0 0.0
      %2999 = vmatpush2.msra.mxu0 %v2850
      %3000 = vmatprep.mubr.f32.mxu0 %v2833
      %3001 = vmatmul.mubr.f32.gmra.mxu0 %v2832
      %v3002 = vpop.f32.mrf.mxu0
      %v3003 = vadd.f32 0.0, %v3002
      %v3004 = vpop.f32.mrf.mxu0
      %3005 = vdwg.mxu0
      %3006 = vrot.lane.b32.xlu0 %v2933, 9
      %v3007 = vpop.permute.xlu0 %3006
      %3008 = vrot.lane.b32.xlu0 %v3003, 9
      %v3009 = vpop.permute.xlu0 %3008
      %vm3010 = vcmp.lt.s32.totalorder %v1125, 9
      %v3011 = vsel %vm3010, %v3007, %v3009
      %v3012 = vsel %vm3010, %v3009, %v3007
      %v3013 = vld [vmem:[%s4] sm:$0x3]
      %v3015 = vlaneseq
      %v3016 = vshrl.u32 %v3015, 7
      %v3017 = vsub.s32 0, %v3016
      %v3018 = vrot.slane %v3013, %v3017
      %v3019 = vlaneseq
      %v3020 = vshrl.u32 %v3019, 7
      %v3021 = vsub.s32 1, %v3020
      %v3022 = vrot.slane %v3013, %v3021
      %v3025 = vmul.f32 %v3012, %v3018
      %v3026 = vmul.f32 %v3011, %v3022
      %v3027 = vld [vmem:[%s870] sm:$0xff]
      %v3028 = vld [vmem:[%s870 + $0x8] sm:$0xff]
      %3029 = vrot.lane.b32.xlu0 %v2933, 8
      %v3030 = vpop.permute.xlu0 %3029
      %3031 = vrot.lane.b32.xlu0 %v3003, 8
      %v3032 = vpop.permute.xlu0 %3031
      %vm3033 = vcmp.lt.s32.totalorder %v1125, 8
      %v3034 = vsel %vm3033, %v3030, %v3032
      %v3035 = vsel %vm3033, %v3032, %v3030
      %s3036 = scalar_lea.vmem %s4, 2
      %v3037 = vld [vmem:[%s3036] sm:$0x3]
      %v3039 = vlaneseq
      %v3040 = vshrl.u32 %v3039, 7
      %v3041 = vsub.s32 0, %v3040
      %v3042 = vrot.slane %v3037, %v3041
      %v3043 = vlaneseq
      %v3044 = vshrl.u32 %v3043, 7
      %v3045 = vsub.s32 1, %v3044
      %v3046 = vrot.slane %v3037, %v3045
      %v3049 = vmul.f32 %v3035, %v3042
      %v3050 = vmul.f32 %v3034, %v3046
      %s3051 = scalar_lea.vmem %s870, 16
      %v3052 = vld [vmem:[%s3051] sm:$0xff]
      %v3053 = vld [vmem:[%s3051 + $0x8] sm:$0xff]
      %v3055 = vsel %vm1200, %v3052, 0
      %v3058 = vsel %vm1200, %v3053, 0
      %3060 = vmatprep.subr.mxu0 0.0
      %3061 = vmatpush1.msra.mxu0 0.0
      %3062 = vmatprep.subr.mxu0 0.0
      %3063 = vmatpush1.msra.mxu0 0.0
      %3064 = vmatprep.subr.mxu0 0.0
      %3065 = vmatpush1.msra.mxu0 0.0
      %3066 = vmatprep.subr.mxu0 0.0
      %3067 = vmatpush1.msra.mxu0 0.0
      %3068 = vmatprep.subr.mxu0 0.0
      %3069 = vmatpush1.msra.mxu0 0.0
      %3070 = vmatprep.subr.mxu0 0.0
      %3071 = vmatpush1.msra.mxu0 0.0
      %3072 = vmatprep.subr.mxu0 0.0
      %3073 = vmatpush1.msra.mxu0 0.0
      %3074 = vmatprep.subr.mxu0 0.0
      %3075 = vmatpush1.msra.mxu0 0.0
      %3076 = vmatprep.subr.mxu0 0.0
      %3077 = vmatpush1.msra.mxu0 0.0
      %3078 = vmatprep.subr.mxu0 0.0
      %3079 = vmatpush1.msra.mxu0 0.0
      %3080 = vmatprep.subr.mxu0 0.0
      %3081 = vmatpush1.msra.mxu0 0.0
      %3082 = vmatprep.subr.mxu0 0.0
      %3083 = vmatpush1.msra.mxu0 0.0
      %3084 = vmatprep.subr.mxu0 0.0
      %3085 = vmatpush1.msra.mxu0 0.0
      %3086 = vmatprep.subr.mxu0 0.0
      %3087 = vmatpush1.msra.mxu0 0.0
      %3088 = vmatprep.subr.mxu0 0.0
      %3089 = vmatpush1.msra.mxu0 0.0
      %3090 = vmatprep.subr.mxu0 %v3050
      %3091 = vmatpush1.msra.mxu0 %v3049
      %3092 = vmatprep.subr.mxu0 0.0
      %3093 = vmatpush2.msra.mxu0 0.0
      %3094 = vmatprep.subr.mxu0 0.0
      %3095 = vmatpush2.msra.mxu0 0.0
      %3096 = vmatprep.subr.mxu0 0.0
      %3097 = vmatpush2.msra.mxu0 0.0
      %3098 = vmatprep.subr.mxu0 0.0
      %3099 = vmatpush2.msra.mxu0 0.0
      %3100 = vmatprep.subr.mxu0 0.0
      %3101 = vmatpush2.msra.mxu0 0.0
      %3102 = vmatprep.subr.mxu0 0.0
      %3103 = vmatpush2.msra.mxu0 0.0
      %3104 = vmatprep.subr.mxu0 0.0
      %3105 = vmatpush2.msra.mxu0 0.0
      %3106 = vmatprep.subr.mxu0 0.0
      %3107 = vmatpush2.msra.mxu0 0.0
      %3108 = vmatprep.subr.mxu0 0.0
      %3109 = vmatpush2.msra.mxu0 0.0
      %3110 = vmatprep.subr.mxu0 0.0
      %3111 = vmatpush2.msra.mxu0 0.0
      %3112 = vmatprep.subr.mxu0 0.0
      %3113 = vmatpush2.msra.mxu0 0.0
      %3114 = vmatprep.subr.mxu0 0.0
      %3115 = vmatpush2.msra.mxu0 0.0
      %3116 = vmatprep.subr.mxu0 0.0
      %3117 = vmatpush2.msra.mxu0 0.0
      %3118 = vmatprep.subr.mxu0 0.0
      %3119 = vmatpush2.msra.mxu0 0.0
      %3120 = vmatprep.subr.mxu0 0.0
      %3121 = vmatpush2.msra.mxu0 0.0
      %3122 = vmatprep.subr.mxu0 0.0
      %3123 = vmatpush2.msra.mxu0 0.0
      %3124 = vmatprep.mubr.f32.mxu0 0.0
      %3125 = vmatmul.mubr.f32.gmra.mxu0 %v3055
      %v3126 = vpop.f32.mrf.mxu0
      %v3127 = vadd.f32 0.0, %v3126
      %v3128 = vpop.f32.mrf.mxu0
      %v3129 = vadd.f32 0.0, %v3128
      %3130 = vmatprep.mubr.f32.mxu0 0.0
      %3131 = vmatmul.mubr.f32.gmra.mxu0 %v3058
      %v3132 = vpop.f32.mrf.mxu0
      %v3133 = vadd.f32 0.0, %v3132
      %v3134 = vpop.f32.mrf.mxu0
      %v3135 = vadd.f32 0.0, %v3134
      %3136 = vdwg.mxu0
      %v3138 = vsel %vm1200, %v3027, 0
      %v3141 = vsel %vm1200, %v3028, 0
      %3143 = vmatprep.subr.mxu0 0.0
      %3144 = vmatpush1.msra.mxu0 0.0
      %3145 = vmatprep.subr.mxu0 0.0
      %3146 = vmatpush1.msra.mxu0 0.0
      %3147 = vmatprep.subr.mxu0 0.0
      %3148 = vmatpush1.msra.mxu0 0.0
      %3149 = vmatprep.subr.mxu0 0.0
      %3150 = vmatpush1.msra.mxu0 0.0
      %3151 = vmatprep.subr.mxu0 0.0
      %3152 = vmatpush1.msra.mxu0 0.0
      %3153 = vmatprep.subr.mxu0 0.0
      %3154 = vmatpush1.msra.mxu0 0.0
      %3155 = vmatprep.subr.mxu0 0.0
      %3156 = vmatpush1.msra.mxu0 0.0
      %3157 = vmatprep.subr.mxu0 0.0
      %3158 = vmatpush1.msra.mxu0 0.0
      %3159 = vmatprep.subr.mxu0 0.0
      %3160 = vmatpush1.msra.mxu0 0.0
      %3161 = vmatprep.subr.mxu0 0.0
      %3162 = vmatpush1.msra.mxu0 0.0
      %3163 = vmatprep.subr.mxu0 0.0
      %3164 = vmatpush1.msra.mxu0 0.0
      %3165 = vmatprep.subr.mxu0 0.0
      %3166 = vmatpush1.msra.mxu0 0.0
      %3167 = vmatprep.subr.mxu0 0.0
      %3168 = vmatpush1.msra.mxu0 0.0
      %3169 = vmatprep.subr.mxu0 0.0
      %3170 = vmatpush1.msra.mxu0 0.0
      %3171 = vmatprep.subr.mxu0 0.0
      %3172 = vmatpush1.msra.mxu0 0.0
      %3173 = vmatprep.subr.mxu0 %v3026
      %3174 = vmatpush1.msra.mxu0 %v3025
      %3175 = vmatprep.subr.mxu0 0.0
      %3176 = vmatpush2.msra.mxu0 0.0
      %3177 = vmatprep.subr.mxu0 0.0
      %3178 = vmatpush2.msra.mxu0 0.0
      %3179 = vmatprep.subr.mxu0 0.0
      %3180 = vmatpush2.msra.mxu0 0.0
      %3181 = vmatprep.subr.mxu0 0.0
      %3182 = vmatpush2.msra.mxu0 0.0
      %3183 = vmatprep.subr.mxu0 0.0
      %3184 = vmatpush2.msra.mxu0 0.0
      %3185 = vmatprep.subr.mxu0 0.0
      %3186 = vmatpush2.msra.mxu0 0.0
      %3187 = vmatprep.subr.mxu0 0.0
      %3188 = vmatpush2.msra.mxu0 0.0
      %3189 = vmatprep.subr.mxu0 0.0
      %3190 = vmatpush2.msra.mxu0 0.0
      %3191 = vmatprep.subr.mxu0 0.0
      %3192 = vmatpush2.msra.mxu0 0.0
      %3193 = vmatprep.subr.mxu0 0.0
      %3194 = vmatpush2.msra.mxu0 0.0
      %3195 = vmatprep.subr.mxu0 0.0
      %3196 = vmatpush2.msra.mxu0 0.0
      %3197 = vmatprep.subr.mxu0 0.0
      %3198 = vmatpush2.msra.mxu0 0.0
      %3199 = vmatprep.subr.mxu0 0.0
      %3200 = vmatpush2.msra.mxu0 0.0
      %3201 = vmatprep.subr.mxu0 0.0
      %3202 = vmatpush2.msra.mxu0 0.0
      %3203 = vmatprep.subr.mxu0 0.0
      %3204 = vmatpush2.msra.mxu0 0.0
      %3205 = vmatprep.subr.mxu0 0.0
      %3206 = vmatpush2.msra.mxu0 0.0
      %3207 = vmatprep.mubr.f32.mxu0 0.0
      %3208 = vmatmul.mubr.f32.gmra.mxu0 %v3138
      %v3209 = vpop.f32.mrf.mxu0
      %v3210 = vadd.f32 %v3127, %v3209
      %v3211 = vpop.f32.mrf.mxu0
      %v3212 = vadd.f32 %v3129, %v3211
      %3213 = vmatprep.mubr.f32.mxu0 0.0
      %3214 = vmatmul.mubr.f32.gmra.mxu0 %v3141
      %v3215 = vpop.f32.mrf.mxu0
      %v3216 = vadd.f32 %v3133, %v3215
      %v3217 = vpop.f32.mrf.mxu0
      %v3218 = vadd.f32 %v3135, %v3217
      %3219 = vdwg.mxu0
      %3220 = vrot.lane.b32.xlu0 %v2933, 7
      %v3221 = vpop.permute.xlu0 %3220
      %3222 = vrot.lane.b32.xlu0 %v3003, 7
      %v3223 = vpop.permute.xlu0 %3222
      %vm3224 = vcmp.lt.s32.totalorder %v1125, 7
      %v3225 = vsel %vm3224, %v3221, %v3223
      %v3226 = vsel %vm3224, %v3223, %v3221
      %s3227 = scalar_lea.vmem %s4, 4
      %v3228 = vld [vmem:[%s3227] sm:$0x3]
      %v3230 = vlaneseq
      %v3231 = vshrl.u32 %v3230, 7
      %v3232 = vsub.s32 0, %v3231
      %v3233 = vrot.slane %v3228, %v3232
      %v3234 = vlaneseq
      %v3235 = vshrl.u32 %v3234, 7
      %v3236 = vsub.s32 1, %v3235
      %v3237 = vrot.slane %v3228, %v3236
      %v3240 = vmul.f32 %v3226, %v3233
      %v3241 = vmul.f32 %v3225, %v3237
      %s3242 = scalar_lea.vmem %s870, 32
      %v3243 = vld [vmem:[%s3242] sm:$0xff]
      %v3244 = vld [vmem:[%s3242 + $0x8] sm:$0xff]
      %v3246 = vsel %vm1200, %v3243, 0
      %v3249 = vsel %vm1200, %v3244, 0
      %3251 = vmatprep.subr.mxu0 0.0
      %3252 = vmatpush1.msra.mxu0 0.0
      %3253 = vmatprep.subr.mxu0 0.0
      %3254 = vmatpush1.msra.mxu0 0.0
      %3255 = vmatprep.subr.mxu0 0.0
      %3256 = vmatpush1.msra.mxu0 0.0
      %3257 = vmatprep.subr.mxu0 0.0
      %3258 = vmatpush1.msra.mxu0 0.0
      %3259 = vmatprep.subr.mxu0 0.0
      %3260 = vmatpush1.msra.mxu0 0.0
      %3261 = vmatprep.subr.mxu0 0.0
      %3262 = vmatpush1.msra.mxu0 0.0
      %3263 = vmatprep.subr.mxu0 0.0
      %3264 = vmatpush1.msra.mxu0 0.0
      %3265 = vmatprep.subr.mxu0 0.0
      %3266 = vmatpush1.msra.mxu0 0.0
      %3267 = vmatprep.subr.mxu0 0.0
      %3268 = vmatpush1.msra.mxu0 0.0
      %3269 = vmatprep.subr.mxu0 0.0
      %3270 = vmatpush1.msra.mxu0 0.0
      %3271 = vmatprep.subr.mxu0 0.0
      %3272 = vmatpush1.msra.mxu0 0.0
      %3273 = vmatprep.subr.mxu0 0.0
      %3274 = vmatpush1.msra.mxu0 0.0
      %3275 = vmatprep.subr.mxu0 0.0
      %3276 = vmatpush1.msra.mxu0 0.0
      %3277 = vmatprep.subr.mxu0 0.0
      %3278 = vmatpush1.msra.mxu0 0.0
      %3279 = vmatprep.subr.mxu0 0.0
      %3280 = vmatpush1.msra.mxu0 0.0
      %3281 = vmatprep.subr.mxu0 %v3241
      %3282 = vmatpush1.msra.mxu0 %v3240
      %3283 = vmatprep.subr.mxu0 0.0
      %3284 = vmatpush2.msra.mxu0 0.0
      %3285 = vmatprep.subr.mxu0 0.0
      %3286 = vmatpush2.msra.mxu0 0.0
      %3287 = vmatprep.subr.mxu0 0.0
      %3288 = vmatpush2.msra.mxu0 0.0
      %3289 = vmatprep.subr.mxu0 0.0
      %3290 = vmatpush2.msra.mxu0 0.0
      %3291 = vmatprep.subr.mxu0 0.0
      %3292 = vmatpush2.msra.mxu0 0.0
      %3293 = vmatprep.subr.mxu0 0.0
      %3294 = vmatpush2.msra.mxu0 0.0
      %3295 = vmatprep.subr.mxu0 0.0
      %3296 = vmatpush2.msra.mxu0 0.0
      %3297 = vmatprep.subr.mxu0 0.0
      %3298 = vmatpush2.msra.mxu0 0.0
      %3299 = vmatprep.subr.mxu0 0.0
      %3300 = vmatpush2.msra.mxu0 0.0
      %3301 = vmatprep.subr.mxu0 0.0
      %3302 = vmatpush2.msra.mxu0 0.0
      %3303 = vmatprep.subr.mxu0 0.0
      %3304 = vmatpush2.msra.mxu0 0.0
      %3305 = vmatprep.subr.mxu0 0.0
      %3306 = vmatpush2.msra.mxu0 0.0
      %3307 = vmatprep.subr.mxu0 0.0
      %3308 = vmatpush2.msra.mxu0 0.0
      %3309 = vmatprep.subr.mxu0 0.0
      %3310 = vmatpush2.msra.mxu0 0.0
      %3311 = vmatprep.subr.mxu0 0.0
      %3312 = vmatpush2.msra.mxu0 0.0
      %3313 = vmatprep.subr.mxu0 0.0
      %3314 = vmatpush2.msra.mxu0 0.0
      %3315 = vmatprep.mubr.f32.mxu0 0.0
      %3316 = vmatmul.mubr.f32.gmra.mxu0 %v3246
      %v3317 = vpop.f32.mrf.mxu0
      %v3318 = vadd.f32 0.0, %v3317
      %v3319 = vpop.f32.mrf.mxu0
      %v3320 = vadd.f32 0.0, %v3319
      %3321 = vmatprep.mubr.f32.mxu0 0.0
      %3322 = vmatmul.mubr.f32.gmra.mxu0 %v3249
      %v3323 = vpop.f32.mrf.mxu0
      %v3324 = vadd.f32 0.0, %v3323
      %v3325 = vpop.f32.mrf.mxu0
      %v3326 = vadd.f32 0.0, %v3325
      %3327 = vdwg.mxu0
      %v3328 = vadd.f32 %v3210, %v3318
      %v3329 = vadd.f32 %v3212, %v3320
      %v3330 = vadd.f32 %v3216, %v3324
      %v3331 = vadd.f32 %v3218, %v3326
      %3332 = vrot.lane.b32.xlu0 %v2933, 1
      %v3333 = vpop.permute.xlu0 %3332
      %3334 = vrot.lane.b32.xlu0 %v3003, 1
      %v3335 = vpop.permute.xlu0 %3334
      %v3336 = vsel %vm1690, %v3333, %v3335
      %v3337 = vsel %vm1690, %v3335, %v3333
      %s3338 = scalar_lea.vmem %s4, 6
      %v3339 = vld [vmem:[%s3338] sm:$0x3]
      %v3341 = vlaneseq
      %v3342 = vshrl.u32 %v3341, 7
      %v3343 = vsub.s32 0, %v3342
      %v3344 = vrot.slane %v3339, %v3343
      %v3345 = vlaneseq
      %v3346 = vshrl.u32 %v3345, 7
      %v3347 = vsub.s32 1, %v3346
      %v3348 = vrot.slane %v3339, %v3347
      %v3351 = vmul.f32 %v3337, %v3344
      %v3352 = vmul.f32 %v3336, %v3348
      %s3353 = scalar_lea.vmem %s870, 48
      %v3354 = vld [vmem:[%s3353] sm:$0xff]
      %v3355 = vld [vmem:[%s3353 + $0x8] sm:$0xff]
      %v3357 = vsel %vm1200, %v3354, 0
      %v3360 = vsel %vm1200, %v3355, 0
      %3362 = vmatprep.subr.mxu0 0.0
      %3363 = vmatpush1.msra.mxu0 0.0
      %3364 = vmatprep.subr.mxu0 0.0
      %3365 = vmatpush1.msra.mxu0 0.0
      %3366 = vmatprep.subr.mxu0 0.0
      %3367 = vmatpush1.msra.mxu0 0.0
      %3368 = vmatprep.subr.mxu0 0.0
      %3369 = vmatpush1.msra.mxu0 0.0
      %3370 = vmatprep.subr.mxu0 0.0
      %3371 = vmatpush1.msra.mxu0 0.0
      %3372 = vmatprep.subr.mxu0 0.0
      %3373 = vmatpush1.msra.mxu0 0.0
      %3374 = vmatprep.subr.mxu0 0.0
      %3375 = vmatpush1.msra.mxu0 0.0
      %3376 = vmatprep.subr.mxu0 0.0
      %3377 = vmatpush1.msra.mxu0 0.0
      %3378 = vmatprep.subr.mxu0 0.0
      %3379 = vmatpush1.msra.mxu0 0.0
      %3380 = vmatprep.subr.mxu0 0.0
      %3381 = vmatpush1.msra.mxu0 0.0
      %3382 = vmatprep.subr.mxu0 0.0
      %3383 = vmatpush1.msra.mxu0 0.0
      %3384 = vmatprep.subr.mxu0 0.0
      %3385 = vmatpush1.msra.mxu0 0.0
      %3386 = vmatprep.subr.mxu0 0.0
      %3387 = vmatpush1.msra.mxu0 0.0
      %3388 = vmatprep.subr.mxu0 0.0
      %3389 = vmatpush1.msra.mxu0 0.0
      %3390 = vmatprep.subr.mxu0 0.0
      %3391 = vmatpush1.msra.mxu0 0.0
      %3392 = vmatprep.subr.mxu0 %v3352
      %3393 = vmatpush1.msra.mxu0 %v3351
      %3394 = vmatprep.subr.mxu0 0.0
      %3395 = vmatpush2.msra.mxu0 0.0
      %3396 = vmatprep.subr.mxu0 0.0
      %3397 = vmatpush2.msra.mxu0 0.0
      %3398 = vmatprep.subr.mxu0 0.0
      %3399 = vmatpush2.msra.mxu0 0.0
      %3400 = vmatprep.subr.mxu0 0.0
      %3401 = vmatpush2.msra.mxu0 0.0
      %3402 = vmatprep.subr.mxu0 0.0
      %3403 = vmatpush2.msra.mxu0 0.0
      %3404 = vmatprep.subr.mxu0 0.0
      %3405 = vmatpush2.msra.mxu0 0.0
      %3406 = vmatprep.subr.mxu0 0.0
      %3407 = vmatpush2.msra.mxu0 0.0
      %3408 = vmatprep.subr.mxu0 0.0
      %3409 = vmatpush2.msra.mxu0 0.0
      %3410 = vmatprep.subr.mxu0 0.0
      %3411 = vmatpush2.msra.mxu0 0.0
      %3412 = vmatprep.subr.mxu0 0.0
      %3413 = vmatpush2.msra.mxu0 0.0
      %3414 = vmatprep.subr.mxu0 0.0
      %3415 = vmatpush2.msra.mxu0 0.0
      %3416 = vmatprep.subr.mxu0 0.0
      %3417 = vmatpush2.msra.mxu0 0.0
      %3418 = vmatprep.subr.mxu0 0.0
      %3419 = vmatpush2.msra.mxu0 0.0
      %3420 = vmatprep.subr.mxu0 0.0
      %3421 = vmatpush2.msra.mxu0 0.0
      %3422 = vmatprep.subr.mxu0 0.0
      %3423 = vmatpush2.msra.mxu0 0.0
      %3424 = vmatprep.subr.mxu0 0.0
      %3425 = vmatpush2.msra.mxu0 0.0
      %3426 = vmatprep.mubr.f32.mxu0 0.0
      %3427 = vmatmul.mubr.f32.gmra.mxu0 %v3357
      %v3428 = vpop.f32.mrf.mxu0
      %v3429 = vadd.f32 0.0, %v3428
      %v3430 = vpop.f32.mrf.mxu0
      %v3431 = vadd.f32 0.0, %v3430
      %3432 = vmatprep.mubr.f32.mxu0 0.0
      %3433 = vmatmul.mubr.f32.gmra.mxu0 %v3360
      %v3434 = vpop.f32.mrf.mxu0
      %v3435 = vadd.f32 0.0, %v3434
      %v3436 = vpop.f32.mrf.mxu0
      %v3437 = vadd.f32 0.0, %v3436
      %3438 = vdwg.mxu0
      %v3439 = vadd.f32 %v3328, %v3429
      %v3440 = vadd.f32 %v3329, %v3431
      %v3441 = vadd.f32 %v3330, %v3435
      %v3442 = vadd.f32 %v3331, %v3437
      %s3443 = scalar_lea.vmem %s4, 8
      %v3444 = vld [vmem:[%s3443] sm:$0x3]
      %v3446 = vlaneseq
      %v3447 = vshrl.u32 %v3446, 7
      %v3448 = vsub.s32 0, %v3447
      %v3449 = vrot.slane %v3444, %v3448
      %v3450 = vlaneseq
      %v3451 = vshrl.u32 %v3450, 7
      %v3452 = vsub.s32 1, %v3451
      %v3453 = vrot.slane %v3444, %v3452
      %v3456 = vmul.f32 %v2933, %v3449
      %v3457 = vmul.f32 %v3003, %v3453
      %s3458 = scalar_lea.vmem %s870, 64
      %v3459 = vld [vmem:[%s3458] sm:$0xff]
      %v3460 = vld [vmem:[%s3458 + $0x8] sm:$0xff]
      %v3462 = vsel %vm1200, %v3459, 0
      %v3465 = vsel %vm1200, %v3460, 0
      %3467 = vmatprep.subr.mxu0 0.0
      %3468 = vmatpush1.msra.mxu0 0.0
      %3469 = vmatprep.subr.mxu0 0.0
      %3470 = vmatpush1.msra.mxu0 0.0
      %3471 = vmatprep.subr.mxu0 0.0
      %3472 = vmatpush1.msra.mxu0 0.0
      %3473 = vmatprep.subr.mxu0 0.0
      %3474 = vmatpush1.msra.mxu0 0.0
      %3475 = vmatprep.subr.mxu0 0.0
      %3476 = vmatpush1.msra.mxu0 0.0
      %3477 = vmatprep.subr.mxu0 0.0
      %3478 = vmatpush1.msra.mxu0 0.0
      %3479 = vmatprep.subr.mxu0 0.0
      %3480 = vmatpush1.msra.mxu0 0.0
      %3481 = vmatprep.subr.mxu0 0.0
      %3482 = vmatpush1.msra.mxu0 0.0
      %3483 = vmatprep.subr.mxu0 0.0
      %3484 = vmatpush1.msra.mxu0 0.0
      %3485 = vmatprep.subr.mxu0 0.0
      %3486 = vmatpush1.msra.mxu0 0.0
      %3487 = vmatprep.subr.mxu0 0.0
      %3488 = vmatpush1.msra.mxu0 0.0
      %3489 = vmatprep.subr.mxu0 0.0
      %3490 = vmatpush1.msra.mxu0 0.0
      %3491 = vmatprep.subr.mxu0 0.0
      %3492 = vmatpush1.msra.mxu0 0.0
      %3493 = vmatprep.subr.mxu0 0.0
      %3494 = vmatpush1.msra.mxu0 0.0
      %3495 = vmatprep.subr.mxu0 0.0
      %3496 = vmatpush1.msra.mxu0 0.0
      %3497 = vmatprep.subr.mxu0 %v3457
      %3498 = vmatpush1.msra.mxu0 %v3456
      %3499 = vmatprep.subr.mxu0 0.0
      %3500 = vmatpush2.msra.mxu0 0.0
      %3501 = vmatprep.subr.mxu0 0.0
      %3502 = vmatpush2.msra.mxu0 0.0
      %3503 = vmatprep.subr.mxu0 0.0
      %3504 = vmatpush2.msra.mxu0 0.0
      %3505 = vmatprep.subr.mxu0 0.0
      %3506 = vmatpush2.msra.mxu0 0.0
      %3507 = vmatprep.subr.mxu0 0.0
      %3508 = vmatpush2.msra.mxu0 0.0
      %3509 = vmatprep.subr.mxu0 0.0
      %3510 = vmatpush2.msra.mxu0 0.0
      %3511 = vmatprep.subr.mxu0 0.0
      %3512 = vmatpush2.msra.mxu0 0.0
      %3513 = vmatprep.subr.mxu0 0.0
      %3514 = vmatpush2.msra.mxu0 0.0
      %3515 = vmatprep.subr.mxu0 0.0
      %3516 = vmatpush2.msra.mxu0 0.0
      %3517 = vmatprep.subr.mxu0 0.0
      %3518 = vmatpush2.msra.mxu0 0.0
      %3519 = vmatprep.subr.mxu0 0.0
      %3520 = vmatpush2.msra.mxu0 0.0
      %3521 = vmatprep.subr.mxu0 0.0
      %3522 = vmatpush2.msra.mxu0 0.0
      %3523 = vmatprep.subr.mxu0 0.0
      %3524 = vmatpush2.msra.mxu0 0.0
      %3525 = vmatprep.subr.mxu0 0.0
      %3526 = vmatpush2.msra.mxu0 0.0
      %3527 = vmatprep.subr.mxu0 0.0
      %3528 = vmatpush2.msra.mxu0 0.0
      %3529 = vmatprep.subr.mxu0 0.0
      %3530 = vmatpush2.msra.mxu0 0.0
      %3531 = vmatprep.mubr.f32.mxu0 0.0
      %3532 = vmatmul.mubr.f32.gmra.mxu0 %v3462
      %v3533 = vpop.f32.mrf.mxu0
      %v3534 = vadd.f32 0.0, %v3533
      %v3535 = vpop.f32.mrf.mxu0
      %v3536 = vadd.f32 0.0, %v3535
      %3537 = vmatprep.mubr.f32.mxu0 0.0
      %3538 = vmatmul.mubr.f32.gmra.mxu0 %v3465
      %v3539 = vpop.f32.mrf.mxu0
      %v3540 = vadd.f32 0.0, %v3539
      %v3541 = vpop.f32.mrf.mxu0
      %v3542 = vadd.f32 0.0, %v3541
      %3543 = vdwg.mxu0
      %v3544 = vadd.f32 %v3439, %v3534
      %v3545 = vadd.f32 %v3440, %v3536
      %v3546 = vadd.f32 %v3441, %v3540
      %v3547 = vadd.f32 %v3442, %v3542
      %3548 = vrot.lane.b32.xlu0 %v2933, 127
      %v3549 = vpop.permute.xlu0 %3548
      %3550 = vrot.lane.b32.xlu0 %v3003, 127
      %v3551 = vpop.permute.xlu0 %3550
      %v3552 = vsel %vm2032, %v3549, %v3551
      %v3553 = vsel %vm2032, %v3551, %v3549
      %s3554 = scalar_lea.vmem %s4, 10
      %v3555 = vld [vmem:[%s3554] sm:$0x3]
      %v3557 = vlaneseq
      %v3558 = vshrl.u32 %v3557, 7
      %v3559 = vsub.s32 0, %v3558
      %v3560 = vrot.slane %v3555, %v3559
      %v3561 = vlaneseq
      %v3562 = vshrl.u32 %v3561, 7
      %v3563 = vsub.s32 1, %v3562
      %v3564 = vrot.slane %v3555, %v3563
      %v3567 = vmul.f32 %v3552, %v3560
      %v3568 = vmul.f32 %v3553, %v3564
      %s3569 = scalar_lea.vmem %s870, 80
      %v3570 = vld [vmem:[%s3569] sm:$0xff]
      %v3571 = vld [vmem:[%s3569 + $0x8] sm:$0xff]
      %v3573 = vsel %vm1200, %v3570, 0
      %v3576 = vsel %vm1200, %v3571, 0
      %3578 = vmatprep.subr.mxu0 0.0
      %3579 = vmatpush1.msra.mxu0 0.0
      %3580 = vmatprep.subr.mxu0 0.0
      %3581 = vmatpush1.msra.mxu0 0.0
      %3582 = vmatprep.subr.mxu0 0.0
      %3583 = vmatpush1.msra.mxu0 0.0
      %3584 = vmatprep.subr.mxu0 0.0
      %3585 = vmatpush1.msra.mxu0 0.0
      %3586 = vmatprep.subr.mxu0 0.0
      %3587 = vmatpush1.msra.mxu0 0.0
      %3588 = vmatprep.subr.mxu0 0.0
      %3589 = vmatpush1.msra.mxu0 0.0
      %3590 = vmatprep.subr.mxu0 0.0
      %3591 = vmatpush1.msra.mxu0 0.0
      %3592 = vmatprep.subr.mxu0 0.0
      %3593 = vmatpush1.msra.mxu0 0.0
      %3594 = vmatprep.subr.mxu0 0.0
      %3595 = vmatpush1.msra.mxu0 0.0
      %3596 = vmatprep.subr.mxu0 0.0
      %3597 = vmatpush1.msra.mxu0 0.0
      %3598 = vmatprep.subr.mxu0 0.0
      %3599 = vmatpush1.msra.mxu0 0.0
      %3600 = vmatprep.subr.mxu0 0.0
      %3601 = vmatpush1.msra.mxu0 0.0
      %3602 = vmatprep.subr.mxu0 0.0
      %3603 = vmatpush1.msra.mxu0 0.0
      %3604 = vmatprep.subr.mxu0 0.0
      %3605 = vmatpush1.msra.mxu0 0.0
      %3606 = vmatprep.subr.mxu0 0.0
      %3607 = vmatpush1.msra.mxu0 0.0
      %3608 = vmatprep.subr.mxu0 %v3568
      %3609 = vmatpush1.msra.mxu0 %v3567
      %3610 = vmatprep.subr.mxu0 0.0
      %3611 = vmatpush2.msra.mxu0 0.0
      %3612 = vmatprep.subr.mxu0 0.0
      %3613 = vmatpush2.msra.mxu0 0.0
      %3614 = vmatprep.subr.mxu0 0.0
      %3615 = vmatpush2.msra.mxu0 0.0
      %3616 = vmatprep.subr.mxu0 0.0
      %3617 = vmatpush2.msra.mxu0 0.0
      %3618 = vmatprep.subr.mxu0 0.0
      %3619 = vmatpush2.msra.mxu0 0.0
      %3620 = vmatprep.subr.mxu0 0.0
      %3621 = vmatpush2.msra.mxu0 0.0
      %3622 = vmatprep.subr.mxu0 0.0
      %3623 = vmatpush2.msra.mxu0 0.0
      %3624 = vmatprep.subr.mxu0 0.0
      %3625 = vmatpush2.msra.mxu0 0.0
      %3626 = vmatprep.subr.mxu0 0.0
      %3627 = vmatpush2.msra.mxu0 0.0
      %3628 = vmatprep.subr.mxu0 0.0
      %3629 = vmatpush2.msra.mxu0 0.0
      %3630 = vmatprep.subr.mxu0 0.0
      %3631 = vmatpush2.msra.mxu0 0.0
      %3632 = vmatprep.subr.mxu0 0.0
      %3633 = vmatpush2.msra.mxu0 0.0
      %3634 = vmatprep.subr.mxu0 0.0
      %3635 = vmatpush2.msra.mxu0 0.0
      %3636 = vmatprep.subr.mxu0 0.0
      %3637 = vmatpush2.msra.mxu0 0.0
      %3638 = vmatprep.subr.mxu0 0.0
      %3639 = vmatpush2.msra.mxu0 0.0
      %3640 = vmatprep.subr.mxu0 0.0
      %3641 = vmatpush2.msra.mxu0 0.0
      %3642 = vmatprep.mubr.f32.mxu0 0.0
      %3643 = vmatmul.mubr.f32.gmra.mxu0 %v3573
      %v3644 = vpop.f32.mrf.mxu0
      %v3645 = vadd.f32 0.0, %v3644
      %v3646 = vpop.f32.mrf.mxu0
      %v3647 = vadd.f32 0.0, %v3646
      %3648 = vmatprep.mubr.f32.mxu0 0.0
      %3649 = vmatmul.mubr.f32.gmra.mxu0 %v3576
      %v3650 = vpop.f32.mrf.mxu0
      %v3651 = vadd.f32 0.0, %v3650
      %v3652 = vpop.f32.mrf.mxu0
      %v3653 = vadd.f32 0.0, %v3652
      %3654 = vdwg.mxu0
      %v3655 = vadd.f32 %v3544, %v3645
      %v3656 = vadd.f32 %v3545, %v3647
      %v3657 = vadd.f32 %v3546, %v3651
      %v3658 = vadd.f32 %v3547, %v3653
      %3659 = vrot.lane.b32.xlu0 %v2933, 121
      %v3660 = vpop.permute.xlu0 %3659
      %3661 = vrot.lane.b32.xlu0 %v3003, 121
      %v3662 = vpop.permute.xlu0 %3661
      %vm3663 = vcmp.lt.s32.totalorder %v1125, 121
      %v3664 = vsel %vm3663, %v3660, %v3662
      %v3665 = vsel %vm3663, %v3662, %v3660
      %s3666 = scalar_lea.vmem %s4, 12
      %v3667 = vld [vmem:[%s3666] sm:$0x3]
      %v3669 = vlaneseq
      %v3670 = vshrl.u32 %v3669, 7
      %v3671 = vsub.s32 0, %v3670
      %v3672 = vrot.slane %v3667, %v3671
      %v3673 = vlaneseq
      %v3674 = vshrl.u32 %v3673, 7
      %v3675 = vsub.s32 1, %v3674
      %v3676 = vrot.slane %v3667, %v3675
      %v3679 = vmul.f32 %v3664, %v3672
      %v3680 = vmul.f32 %v3665, %v3676
      %s3681 = scalar_lea.vmem %s870, 96
      %v3682 = vld [vmem:[%s3681] sm:$0xff]
      %v3683 = vld [vmem:[%s3681 + $0x8] sm:$0xff]
      %v3685 = vsel %vm1200, %v3682, 0
      %v3688 = vsel %vm1200, %v3683, 0
      %3690 = vmatprep.subr.mxu0 0.0
      %3691 = vmatpush1.msra.mxu0 0.0
      %3692 = vmatprep.subr.mxu0 0.0
      %3693 = vmatpush1.msra.mxu0 0.0
      %3694 = vmatprep.subr.mxu0 0.0
      %3695 = vmatpush1.msra.mxu0 0.0
      %3696 = vmatprep.subr.mxu0 0.0
      %3697 = vmatpush1.msra.mxu0 0.0
      %3698 = vmatprep.subr.mxu0 0.0
      %3699 = vmatpush1.msra.mxu0 0.0
      %3700 = vmatprep.subr.mxu0 0.0
      %3701 = vmatpush1.msra.mxu0 0.0
      %3702 = vmatprep.subr.mxu0 0.0
      %3703 = vmatpush1.msra.mxu0 0.0
      %3704 = vmatprep.subr.mxu0 0.0
      %3705 = vmatpush1.msra.mxu0 0.0
      %3706 = vmatprep.subr.mxu0 0.0
      %3707 = vmatpush1.msra.mxu0 0.0
      %3708 = vmatprep.subr.mxu0 0.0
      %3709 = vmatpush1.msra.mxu0 0.0
      %3710 = vmatprep.subr.mxu0 0.0
      %3711 = vmatpush1.msra.mxu0 0.0
      %3712 = vmatprep.subr.mxu0 0.0
      %3713 = vmatpush1.msra.mxu0 0.0
      %3714 = vmatprep.subr.mxu0 0.0
      %3715 = vmatpush1.msra.mxu0 0.0
      %3716 = vmatprep.subr.mxu0 0.0
      %3717 = vmatpush1.msra.mxu0 0.0
      %3718 = vmatprep.subr.mxu0 0.0
      %3719 = vmatpush1.msra.mxu0 0.0
      %3720 = vmatprep.subr.mxu0 %v3680
      %3721 = vmatpush1.msra.mxu0 %v3679
      %3722 = vmatprep.subr.mxu0 0.0
      %3723 = vmatpush2.msra.mxu0 0.0
      %3724 = vmatprep.subr.mxu0 0.0
      %3725 = vmatpush2.msra.mxu0 0.0
      %3726 = vmatprep.subr.mxu0 0.0
      %3727 = vmatpush2.msra.mxu0 0.0
      %3728 = vmatprep.subr.mxu0 0.0
      %3729 = vmatpush2.msra.mxu0 0.0
      %3730 = vmatprep.subr.mxu0 0.0
      %3731 = vmatpush2.msra.mxu0 0.0
      %3732 = vmatprep.subr.mxu0 0.0
      %3733 = vmatpush2.msra.mxu0 0.0
      %3734 = vmatprep.subr.mxu0 0.0
      %3735 = vmatpush2.msra.mxu0 0.0
      %3736 = vmatprep.subr.mxu0 0.0
      %3737 = vmatpush2.msra.mxu0 0.0
      %3738 = vmatprep.subr.mxu0 0.0
      %3739 = vmatpush2.msra.mxu0 0.0
      %3740 = vmatprep.subr.mxu0 0.0
      %3741 = vmatpush2.msra.mxu0 0.0
      %3742 = vmatprep.subr.mxu0 0.0
      %3743 = vmatpush2.msra.mxu0 0.0
      %3744 = vmatprep.subr.mxu0 0.0
      %3745 = vmatpush2.msra.mxu0 0.0
      %3746 = vmatprep.subr.mxu0 0.0
      %3747 = vmatpush2.msra.mxu0 0.0
      %3748 = vmatprep.subr.mxu0 0.0
      %3749 = vmatpush2.msra.mxu0 0.0
      %3750 = vmatprep.subr.mxu0 0.0
      %3751 = vmatpush2.msra.mxu0 0.0
      %3752 = vmatprep.subr.mxu0 0.0
      %3753 = vmatpush2.msra.mxu0 0.0
      %3754 = vmatprep.mubr.f32.mxu0 0.0
      %3755 = vmatmul.mubr.f32.gmra.mxu0 %v3685
      %v3756 = vpop.f32.mrf.mxu0
      %v3757 = vadd.f32 0.0, %v3756
      %v3758 = vpop.f32.mrf.mxu0
      %v3759 = vadd.f32 0.0, %v3758
      %3760 = vmatprep.mubr.f32.mxu0 0.0
      %3761 = vmatmul.mubr.f32.gmra.mxu0 %v3688
      %v3762 = vpop.f32.mrf.mxu0
      %v3763 = vadd.f32 0.0, %v3762
      %v3764 = vpop.f32.mrf.mxu0
      %v3765 = vadd.f32 0.0, %v3764
      %3766 = vdwg.mxu0
      %v3767 = vadd.f32 %v3655, %v3757
      %v3768 = vadd.f32 %v3656, %v3759
      %v3769 = vadd.f32 %v3657, %v3763
      %v3770 = vadd.f32 %v3658, %v3765
      %3771 = vrot.lane.b32.xlu0 %v2933, 120
      %v3772 = vpop.permute.xlu0 %3771
      %3773 = vrot.lane.b32.xlu0 %v3003, 120
      %v3774 = vpop.permute.xlu0 %3773
      %vm3775 = vcmp.lt.s32.totalorder %v1125, 120
      %v3776 = vsel %vm3775, %v3772, %v3774
      %v3777 = vsel %vm3775, %v3774, %v3772
      %s3778 = scalar_lea.vmem %s4, 14
      %v3779 = vld [vmem:[%s3778] sm:$0x3]
      %v3781 = vlaneseq
      %v3782 = vshrl.u32 %v3781, 7
      %v3783 = vsub.s32 0, %v3782
      %v3784 = vrot.slane %v3779, %v3783
      %v3785 = vlaneseq
      %v3786 = vshrl.u32 %v3785, 7
      %v3787 = vsub.s32 1, %v3786
      %v3788 = vrot.slane %v3779, %v3787
      %v3791 = vmul.f32 %v3776, %v3784
      %v3792 = vmul.f32 %v3777, %v3788
      %s3793 = scalar_lea.vmem %s870, 112
      %v3794 = vld [vmem:[%s3793] sm:$0xff]
      %v3795 = vld [vmem:[%s3793 + $0x8] sm:$0xff]
      %v3797 = vsel %vm1200, %v3794, 0
      %v3800 = vsel %vm1200, %v3795, 0
      %3802 = vmatprep.subr.mxu0 0.0
      %3803 = vmatpush1.msra.mxu0 0.0
      %3804 = vmatprep.subr.mxu0 0.0
      %3805 = vmatpush1.msra.mxu0 0.0
      %3806 = vmatprep.subr.mxu0 0.0
      %3807 = vmatpush1.msra.mxu0 0.0
      %3808 = vmatprep.subr.mxu0 0.0
      %3809 = vmatpush1.msra.mxu0 0.0
      %3810 = vmatprep.subr.mxu0 0.0
      %3811 = vmatpush1.msra.mxu0 0.0
      %3812 = vmatprep.subr.mxu0 0.0
      %3813 = vmatpush1.msra.mxu0 0.0
      %3814 = vmatprep.subr.mxu0 0.0
      %3815 = vmatpush1.msra.mxu0 0.0
      %3816 = vmatprep.subr.mxu0 0.0
      %3817 = vmatpush1.msra.mxu0 0.0
      %3818 = vmatprep.subr.mxu0 0.0
      %3819 = vmatpush1.msra.mxu0 0.0
      %3820 = vmatprep.subr.mxu0 0.0
      %3821 = vmatpush1.msra.mxu0 0.0
      %3822 = vmatprep.subr.mxu0 0.0
      %3823 = vmatpush1.msra.mxu0 0.0
      %3824 = vmatprep.subr.mxu0 0.0
      %3825 = vmatpush1.msra.mxu0 0.0
      %3826 = vmatprep.subr.mxu0 0.0
      %3827 = vmatpush1.msra.mxu0 0.0
      %3828 = vmatprep.subr.mxu0 0.0
      %3829 = vmatpush1.msra.mxu0 0.0
      %3830 = vmatprep.subr.mxu0 0.0
      %3831 = vmatpush1.msra.mxu0 0.0
      %3832 = vmatprep.subr.mxu0 %v3792
      %3833 = vmatpush1.msra.mxu0 %v3791
      %3834 = vmatprep.subr.mxu0 0.0
      %3835 = vmatpush2.msra.mxu0 0.0
      %3836 = vmatprep.subr.mxu0 0.0
      %3837 = vmatpush2.msra.mxu0 0.0
      %3838 = vmatprep.subr.mxu0 0.0
      %3839 = vmatpush2.msra.mxu0 0.0
      %3840 = vmatprep.subr.mxu0 0.0
      %3841 = vmatpush2.msra.mxu0 0.0
      %3842 = vmatprep.subr.mxu0 0.0
      %3843 = vmatpush2.msra.mxu0 0.0
      %3844 = vmatprep.subr.mxu0 0.0
      %3845 = vmatpush2.msra.mxu0 0.0
      %3846 = vmatprep.subr.mxu0 0.0
      %3847 = vmatpush2.msra.mxu0 0.0
      %3848 = vmatprep.subr.mxu0 0.0
      %3849 = vmatpush2.msra.mxu0 0.0
      %3850 = vmatprep.subr.mxu0 0.0
      %3851 = vmatpush2.msra.mxu0 0.0
      %3852 = vmatprep.subr.mxu0 0.0
      %3853 = vmatpush2.msra.mxu0 0.0
      %3854 = vmatprep.subr.mxu0 0.0
      %3855 = vmatpush2.msra.mxu0 0.0
      %3856 = vmatprep.subr.mxu0 0.0
      %3857 = vmatpush2.msra.mxu0 0.0
      %3858 = vmatprep.subr.mxu0 0.0
      %3859 = vmatpush2.msra.mxu0 0.0
      %3860 = vmatprep.subr.mxu0 0.0
      %3861 = vmatpush2.msra.mxu0 0.0
      %3862 = vmatprep.subr.mxu0 0.0
      %3863 = vmatpush2.msra.mxu0 0.0
      %3864 = vmatprep.subr.mxu0 0.0
      %3865 = vmatpush2.msra.mxu0 0.0
      %3866 = vmatprep.mubr.f32.mxu0 0.0
      %3867 = vmatmul.mubr.f32.gmra.mxu0 %v3797
      %v3868 = vpop.f32.mrf.mxu0
      %v3869 = vadd.f32 0.0, %v3868
      %v3870 = vpop.f32.mrf.mxu0
      %v3871 = vadd.f32 0.0, %v3870
      %3872 = vmatprep.mubr.f32.mxu0 0.0
      %3873 = vmatmul.mubr.f32.gmra.mxu0 %v3800
      %v3874 = vpop.f32.mrf.mxu0
      %v3875 = vadd.f32 0.0, %v3874
      %v3876 = vpop.f32.mrf.mxu0
      %v3877 = vadd.f32 0.0, %v3876
      %3878 = vdwg.mxu0
      %v3879 = vadd.f32 %v3767, %v3869
      %v3880 = vadd.f32 %v3768, %v3871
      %v3881 = vadd.f32 %v3769, %v3875
      %v3882 = vadd.f32 %v3770, %v3877
      %3883 = vrot.lane.b32.xlu0 %v2933, 119
      %v3884 = vpop.permute.xlu0 %3883
      %3885 = vrot.lane.b32.xlu0 %v3003, 119
      %v3886 = vpop.permute.xlu0 %3885
      %vm3887 = vcmp.lt.s32.totalorder %v1125, 119
      %v3888 = vsel %vm3887, %v3884, %v3886
      %v3889 = vsel %vm3887, %v3886, %v3884
      %s3890 = scalar_lea.vmem %s4, 16
      %v3891 = vld [vmem:[%s3890] sm:$0x3]
      %v3893 = vlaneseq
      %v3894 = vshrl.u32 %v3893, 7
      %v3895 = vsub.s32 0, %v3894
      %v3896 = vrot.slane %v3891, %v3895
      %v3897 = vlaneseq
      %v3898 = vshrl.u32 %v3897, 7
      %v3899 = vsub.s32 1, %v3898
      %v3900 = vrot.slane %v3891, %v3899
      %v3903 = vmul.f32 %v3888, %v3896
      %v3904 = vmul.f32 %v3889, %v3900
      %s3905 = scalar_lea.vmem %s870, 128
      %v3906 = vld [vmem:[%s3905] sm:$0xff]
      %v3907 = vld [vmem:[%s3905 + $0x8] sm:$0xff]
      %v3909 = vsel %vm1200, %v3906, 0
      %v3912 = vsel %vm1200, %v3907, 0
      %3914 = vmatprep.subr.mxu0 0.0
      %3915 = vmatpush1.msra.mxu0 0.0
      %3916 = vmatprep.subr.mxu0 0.0
      %3917 = vmatpush1.msra.mxu0 0.0
      %3918 = vmatprep.subr.mxu0 0.0
      %3919 = vmatpush1.msra.mxu0 0.0
      %3920 = vmatprep.subr.mxu0 0.0
      %3921 = vmatpush1.msra.mxu0 0.0
      %3922 = vmatprep.subr.mxu0 0.0
      %3923 = vmatpush1.msra.mxu0 0.0
      %3924 = vmatprep.subr.mxu0 0.0
      %3925 = vmatpush1.msra.mxu0 0.0
      %3926 = vmatprep.subr.mxu0 0.0
      %3927 = vmatpush1.msra.mxu0 0.0
      %3928 = vmatprep.subr.mxu0 0.0
      %3929 = vmatpush1.msra.mxu0 0.0
      %3930 = vmatprep.subr.mxu0 0.0
      %3931 = vmatpush1.msra.mxu0 0.0
      %3932 = vmatprep.subr.mxu0 0.0
      %3933 = vmatpush1.msra.mxu0 0.0
      %3934 = vmatprep.subr.mxu0 0.0
      %3935 = vmatpush1.msra.mxu0 0.0
      %3936 = vmatprep.subr.mxu0 0.0
      %3937 = vmatpush1.msra.mxu0 0.0
      %3938 = vmatprep.subr.mxu0 0.0
      %3939 = vmatpush1.msra.mxu0 0.0
      %3940 = vmatprep.subr.mxu0 0.0
      %3941 = vmatpush1.msra.mxu0 0.0
      %3942 = vmatprep.subr.mxu0 0.0
      %3943 = vmatpush1.msra.mxu0 0.0
      %3944 = vmatprep.subr.mxu0 %v3904
      %3945 = vmatpush1.msra.mxu0 %v3903
      %3946 = vmatprep.subr.mxu0 0.0
      %3947 = vmatpush2.msra.mxu0 0.0
      %3948 = vmatprep.subr.mxu0 0.0
      %3949 = vmatpush2.msra.mxu0 0.0
      %3950 = vmatprep.subr.mxu0 0.0
      %3951 = vmatpush2.msra.mxu0 0.0
      %3952 = vmatprep.subr.mxu0 0.0
      %3953 = vmatpush2.msra.mxu0 0.0
      %3954 = vmatprep.subr.mxu0 0.0
      %3955 = vmatpush2.msra.mxu0 0.0
      %3956 = vmatprep.subr.mxu0 0.0
      %3957 = vmatpush2.msra.mxu0 0.0
      %3958 = vmatprep.subr.mxu0 0.0
      %3959 = vmatpush2.msra.mxu0 0.0
      %3960 = vmatprep.subr.mxu0 0.0
      %3961 = vmatpush2.msra.mxu0 0.0
      %3962 = vmatprep.subr.mxu0 0.0
      %3963 = vmatpush2.msra.mxu0 0.0
      %3964 = vmatprep.subr.mxu0 0.0
      %3965 = vmatpush2.msra.mxu0 0.0
      %3966 = vmatprep.subr.mxu0 0.0
      %3967 = vmatpush2.msra.mxu0 0.0
      %3968 = vmatprep.subr.mxu0 0.0
      %3969 = vmatpush2.msra.mxu0 0.0
      %3970 = vmatprep.subr.mxu0 0.0
      %3971 = vmatpush2.msra.mxu0 0.0
      %3972 = vmatprep.subr.mxu0 0.0
      %3973 = vmatpush2.msra.mxu0 0.0
      %3974 = vmatprep.subr.mxu0 0.0
      %3975 = vmatpush2.msra.mxu0 0.0
      %3976 = vmatprep.subr.mxu0 0.0
      %3977 = vmatpush2.msra.mxu0 0.0
      %3978 = vmatprep.mubr.f32.mxu0 0.0
      %3979 = vmatmul.mubr.f32.gmra.mxu0 %v3909
      %v3980 = vpop.f32.mrf.mxu0
      %v3981 = vadd.f32 0.0, %v3980
      %v3982 = vpop.f32.mrf.mxu0
      %v3983 = vadd.f32 0.0, %v3982
      %3984 = vmatprep.mubr.f32.mxu0 0.0
      %3985 = vmatmul.mubr.f32.gmra.mxu0 %v3912
      %v3986 = vpop.f32.mrf.mxu0
      %v3987 = vadd.f32 0.0, %v3986
      %v3988 = vpop.f32.mrf.mxu0
      %v3989 = vadd.f32 0.0, %v3988
      %3990 = vdwg.mxu0
      %v3991 = vadd.f32 %v3879, %v3981
      %v3992 = vadd.f32 %v3880, %v3983
      %v3993 = vadd.f32 %v3881, %v3987
      %v3994 = vadd.f32 %v3882, %v3989
      %v3995 = vld [vmem:[%s875] sm:$0xff]
      %v3996 = vld [vmem:[%s875 + $0x8] sm:$0xff]
      %3998 = vset.pattern.permute.xlu0 0
      %3999 = vperm.xlu0 %3998, %v3995
      %v4000 = vpop.permute.xlu0 %3999
      %4003 = vset.pattern.permute.xlu0 0
      %4004 = vperm.xlu0 %4003, %v3996
      %v4005 = vpop.permute.xlu0 %4004
      %v4007 = vadd.f32 %v3991, %v4000
      %v4008 = vadd.f32 %v3992, %v4000
      %v4009 = vadd.f32 %v3993, %v4005
      %v4010 = vadd.f32 %v3994, %v4005
      %v4011 = vmax.f32 %v4007, 0.0
      %v4012 = vmax.f32 %v4008, 0.0
      %v4013 = vmax.f32 %v4009, 0.0
      %v4014 = vmax.f32 %v4010, 0.0
      %4015 = vrot.lane.b32.xlu0 %v4011, 9
      %v4016 = vpop.permute.xlu0 %4015
      %4017 = vrot.lane.b32.xlu0 %v4013, 9
      %v4018 = vpop.permute.xlu0 %4017
      %4019 = vrot.lane.b32.xlu0 %v4012, 9
      %v4020 = vpop.permute.xlu0 %4019
      %4021 = vrot.lane.b32.xlu0 %v4014, 9
      %v4022 = vpop.permute.xlu0 %4021
      %v4023 = vsel %vm3010, %v4016, %v4020
      %v4024 = vsel %vm3010, %v4018, %v4022
      %v4025 = vsel %vm3010, %v4020, %v4016
      %v4026 = vsel %vm3010, %v4022, %v4018
      %v4027 = vmul.f32 %v4025, %v3018
      %v4028 = vmul.f32 %v4023, %v3022
      %v4029 = vmul.f32 %v4026, %v3018
      %v4030 = vmul.f32 %v4024, %v3022
      %v4031 = vld [vmem:[%s880] sm:$0xff]
      %v4032 = vld [vmem:[%s880 + $0x8] sm:$0xff]
      %4033 = vrot.lane.b32.xlu0 %v4011, 8
      %v4034 = vpop.permute.xlu0 %4033
      %4035 = vrot.lane.b32.xlu0 %v4013, 8
      %v4036 = vpop.permute.xlu0 %4035
      %4037 = vrot.lane.b32.xlu0 %v4012, 8
      %v4038 = vpop.permute.xlu0 %4037
      %4039 = vrot.lane.b32.xlu0 %v4014, 8
      %v4040 = vpop.permute.xlu0 %4039
      %v4041 = vsel %vm3033, %v4034, %v4038
      %v4042 = vsel %vm3033, %v4036, %v4040
      %v4043 = vsel %vm3033, %v4038, %v4034
      %v4044 = vsel %vm3033, %v4040, %v4036
      %v4045 = vmul.f32 %v4043, %v3042
      %v4046 = vmul.f32 %v4041, %v3046
      %v4047 = vmul.f32 %v4044, %v3042
      %v4048 = vmul.f32 %v4042, %v3046
      %s4049 = scalar_lea.vmem %s880, 16
      %v4050 = vld [vmem:[%s4049] sm:$0xff]
      %v4051 = vld [vmem:[%s4049 + $0x8] sm:$0xff]
      %vm4052 = vcmask 130048
      %v4054 = vsel %vm4052, %v4050, 0
      %v4057 = vsel %vm4052, %v4051, 0
      %4059 = vmatprep.subr.mxu0 0.0
      %4060 = vmatpush1.msra.mxu0 0.0
      %4061 = vmatprep.subr.mxu0 0.0
      %4062 = vmatpush1.msra.mxu0 0.0
      %4063 = vmatprep.subr.mxu0 0.0
      %4064 = vmatpush1.msra.mxu0 0.0
      %4065 = vmatprep.subr.mxu0 0.0
      %4066 = vmatpush1.msra.mxu0 0.0
      %4067 = vmatprep.subr.mxu0 0.0
      %4068 = vmatpush1.msra.mxu0 0.0
      %4069 = vmatprep.subr.mxu0 0.0
      %4070 = vmatpush1.msra.mxu0 0.0
      %4071 = vmatprep.subr.mxu0 0.0
      %4072 = vmatpush1.msra.mxu0 0.0
      %4073 = vmatprep.subr.mxu0 0.0
      %4074 = vmatpush1.msra.mxu0 0.0
      %4075 = vmatprep.subr.mxu0 0.0
      %4076 = vmatpush1.msra.mxu0 0.0
      %4077 = vmatprep.subr.mxu0 0.0
      %4078 = vmatpush1.msra.mxu0 0.0
      %4079 = vmatprep.subr.mxu0 0.0
      %4080 = vmatpush1.msra.mxu0 0.0
      %4081 = vmatprep.subr.mxu0 0.0
      %4082 = vmatpush1.msra.mxu0 0.0
      %4083 = vmatprep.subr.mxu0 0.0
      %4084 = vmatpush1.msra.mxu0 0.0
      %4085 = vmatprep.subr.mxu0 0.0
      %4086 = vmatpush1.msra.mxu0 0.0
      %4087 = vmatprep.subr.mxu0 %v4048
      %4088 = vmatpush1.msra.mxu0 %v4047
      %4089 = vmatprep.subr.mxu0 %v4046
      %4090 = vmatpush1.msra.mxu0 %v4045
      %4091 = vmatprep.subr.mxu0 0.0
      %4092 = vmatpush2.msra.mxu0 0.0
      %4093 = vmatprep.subr.mxu0 0.0
      %4094 = vmatpush2.msra.mxu0 0.0
      %4095 = vmatprep.subr.mxu0 0.0
      %4096 = vmatpush2.msra.mxu0 0.0
      %4097 = vmatprep.subr.mxu0 0.0
      %4098 = vmatpush2.msra.mxu0 0.0
      %4099 = vmatprep.subr.mxu0 0.0
      %4100 = vmatpush2.msra.mxu0 0.0
      %4101 = vmatprep.subr.mxu0 0.0
      %4102 = vmatpush2.msra.mxu0 0.0
      %4103 = vmatprep.subr.mxu0 0.0
      %4104 = vmatpush2.msra.mxu0 0.0
      %4105 = vmatprep.subr.mxu0 0.0
      %4106 = vmatpush2.msra.mxu0 0.0
      %4107 = vmatprep.subr.mxu0 0.0
      %4108 = vmatpush2.msra.mxu0 0.0
      %4109 = vmatprep.subr.mxu0 0.0
      %4110 = vmatpush2.msra.mxu0 0.0
      %4111 = vmatprep.subr.mxu0 0.0
      %4112 = vmatpush2.msra.mxu0 0.0
      %4113 = vmatprep.subr.mxu0 0.0
      %4114 = vmatpush2.msra.mxu0 0.0
      %4115 = vmatprep.subr.mxu0 0.0
      %4116 = vmatpush2.msra.mxu0 0.0
      %4117 = vmatprep.subr.mxu0 0.0
      %4118 = vmatpush2.msra.mxu0 0.0
      %4119 = vmatprep.subr.mxu0 0.0
      %4120 = vmatpush2.msra.mxu0 0.0
      %4121 = vmatprep.subr.mxu0 0.0
      %4122 = vmatpush2.msra.mxu0 0.0
      %4123 = vmatprep.mubr.f32.mxu0 0.0
      %4124 = vmatmul.mubr.f32.gmra.mxu0 %v4054
      %v4125 = vpop.f32.mrf.mxu0
      %v4126 = vadd.f32 0.0, %v4125
      %v4127 = vpop.f32.mrf.mxu0
      %v4128 = vadd.f32 0.0, %v4127
      %4129 = vmatprep.mubr.f32.mxu0 0.0
      %4130 = vmatmul.mubr.f32.gmra.mxu0 %v4057
      %v4131 = vpop.f32.mrf.mxu0
      %v4132 = vadd.f32 0.0, %v4131
      %v4133 = vpop.f32.mrf.mxu0
      %v4134 = vadd.f32 0.0, %v4133
      %4135 = vdwg.mxu0
      %v4137 = vsel %vm4052, %v4031, 0
      %v4140 = vsel %vm4052, %v4032, 0
      %4142 = vmatprep.subr.mxu0 0.0
      %4143 = vmatpush1.msra.mxu0 0.0
      %4144 = vmatprep.subr.mxu0 0.0
      %4145 = vmatpush1.msra.mxu0 0.0
      %4146 = vmatprep.subr.mxu0 0.0
      %4147 = vmatpush1.msra.mxu0 0.0
      %4148 = vmatprep.subr.mxu0 0.0
      %4149 = vmatpush1.msra.mxu0 0.0
      %4150 = vmatprep.subr.mxu0 0.0
      %4151 = vmatpush1.msra.mxu0 0.0
      %4152 = vmatprep.subr.mxu0 0.0
      %4153 = vmatpush1.msra.mxu0 0.0
      %4154 = vmatprep.subr.mxu0 0.0
      %4155 = vmatpush1.msra.mxu0 0.0
      %4156 = vmatprep.subr.mxu0 0.0
      %4157 = vmatpush1.msra.mxu0 0.0
      %4158 = vmatprep.subr.mxu0 0.0
      %4159 = vmatpush1.msra.mxu0 0.0
      %4160 = vmatprep.subr.mxu0 0.0
      %4161 = vmatpush1.msra.mxu0 0.0
      %4162 = vmatprep.subr.mxu0 0.0
      %4163 = vmatpush1.msra.mxu0 0.0
      %4164 = vmatprep.subr.mxu0 0.0
      %4165 = vmatpush1.msra.mxu0 0.0
      %4166 = vmatprep.subr.mxu0 0.0
      %4167 = vmatpush1.msra.mxu0 0.0
      %4168 = vmatprep.subr.mxu0 0.0
      %4169 = vmatpush1.msra.mxu0 0.0
      %4170 = vmatprep.subr.mxu0 %v4030
      %4171 = vmatpush1.msra.mxu0 %v4029
      %4172 = vmatprep.subr.mxu0 %v4028
      %4173 = vmatpush1.msra.mxu0 %v4027
      %4174 = vmatprep.subr.mxu0 0.0
      %4175 = vmatpush2.msra.mxu0 0.0
      %4176 = vmatprep.subr.mxu0 0.0
      %4177 = vmatpush2.msra.mxu0 0.0
      %4178 = vmatprep.subr.mxu0 0.0
      %4179 = vmatpush2.msra.mxu0 0.0
      %4180 = vmatprep.subr.mxu0 0.0
      %4181 = vmatpush2.msra.mxu0 0.0
      %4182 = vmatprep.subr.mxu0 0.0
      %4183 = vmatpush2.msra.mxu0 0.0
      %4184 = vmatprep.subr.mxu0 0.0
      %4185 = vmatpush2.msra.mxu0 0.0
      %4186 = vmatprep.subr.mxu0 0.0
      %4187 = vmatpush2.msra.mxu0 0.0
      %4188 = vmatprep.subr.mxu0 0.0
      %4189 = vmatpush2.msra.mxu0 0.0
      %4190 = vmatprep.subr.mxu0 0.0
      %4191 = vmatpush2.msra.mxu0 0.0
      %4192 = vmatprep.subr.mxu0 0.0
      %4193 = vmatpush2.msra.mxu0 0.0
      %4194 = vmatprep.subr.mxu0 0.0
      %4195 = vmatpush2.msra.mxu0 0.0
      %4196 = vmatprep.subr.mxu0 0.0
      %4197 = vmatpush2.msra.mxu0 0.0
      %4198 = vmatprep.subr.mxu0 0.0
      %4199 = vmatpush2.msra.mxu0 0.0
      %4200 = vmatprep.subr.mxu0 0.0
      %4201 = vmatpush2.msra.mxu0 0.0
      %4202 = vmatprep.subr.mxu0 0.0
      %4203 = vmatpush2.msra.mxu0 0.0
      %4204 = vmatprep.subr.mxu0 0.0
      %4205 = vmatpush2.msra.mxu0 0.0
      %4206 = vmatprep.mubr.f32.mxu0 0.0
      %4207 = vmatmul.mubr.f32.gmra.mxu0 %v4137
      %v4208 = vpop.f32.mrf.mxu0
      %v4209 = vadd.f32 %v4126, %v4208
      %v4210 = vpop.f32.mrf.mxu0
      %v4211 = vadd.f32 %v4128, %v4210
      %4212 = vmatprep.mubr.f32.mxu0 0.0
      %4213 = vmatmul.mubr.f32.gmra.mxu0 %v4140
      %v4214 = vpop.f32.mrf.mxu0
      %v4215 = vadd.f32 %v4132, %v4214
      %v4216 = vpop.f32.mrf.mxu0
      %v4217 = vadd.f32 %v4134, %v4216
      %4218 = vdwg.mxu0
      %4219 = vrot.lane.b32.xlu0 %v4011, 7
      %v4220 = vpop.permute.xlu0 %4219
      %4221 = vrot.lane.b32.xlu0 %v4013, 7
      %v4222 = vpop.permute.xlu0 %4221
      %4223 = vrot.lane.b32.xlu0 %v4012, 7
      %v4224 = vpop.permute.xlu0 %4223
      %4225 = vrot.lane.b32.xlu0 %v4014, 7
      %v4226 = vpop.permute.xlu0 %4225
      %v4227 = vsel %vm3224, %v4220, %v4224
      %v4228 = vsel %vm3224, %v4222, %v4226
      %v4229 = vsel %vm3224, %v4224, %v4220
      %v4230 = vsel %vm3224, %v4226, %v4222
      %v4231 = vmul.f32 %v4229, %v3233
      %v4232 = vmul.f32 %v4227, %v3237
      %v4233 = vmul.f32 %v4230, %v3233
      %v4234 = vmul.f32 %v4228, %v3237
      %s4235 = scalar_lea.vmem %s880, 32
      %v4236 = vld [vmem:[%s4235] sm:$0xff]
      %v4237 = vld [vmem:[%s4235 + $0x8] sm:$0xff]
      %v4239 = vsel %vm4052, %v4236, 0
      %v4242 = vsel %vm4052, %v4237, 0
      %4244 = vmatprep.subr.mxu0 0.0
      %4245 = vmatpush1.msra.mxu0 0.0
      %4246 = vmatprep.subr.mxu0 0.0
      %4247 = vmatpush1.msra.mxu0 0.0
      %4248 = vmatprep.subr.mxu0 0.0
      %4249 = vmatpush1.msra.mxu0 0.0
      %4250 = vmatprep.subr.mxu0 0.0
      %4251 = vmatpush1.msra.mxu0 0.0
      %4252 = vmatprep.subr.mxu0 0.0
      %4253 = vmatpush1.msra.mxu0 0.0
      %4254 = vmatprep.subr.mxu0 0.0
      %4255 = vmatpush1.msra.mxu0 0.0
      %4256 = vmatprep.subr.mxu0 0.0
      %4257 = vmatpush1.msra.mxu0 0.0
      %4258 = vmatprep.subr.mxu0 0.0
      %4259 = vmatpush1.msra.mxu0 0.0
      %4260 = vmatprep.subr.mxu0 0.0
      %4261 = vmatpush1.msra.mxu0 0.0
      %4262 = vmatprep.subr.mxu0 0.0
      %4263 = vmatpush1.msra.mxu0 0.0
      %4264 = vmatprep.subr.mxu0 0.0
      %4265 = vmatpush1.msra.mxu0 0.0
      %4266 = vmatprep.subr.mxu0 0.0
      %4267 = vmatpush1.msra.mxu0 0.0
      %4268 = vmatprep.subr.mxu0 0.0
      %4269 = vmatpush1.msra.mxu0 0.0
      %4270 = vmatprep.subr.mxu0 0.0
      %4271 = vmatpush1.msra.mxu0 0.0
      %4272 = vmatprep.subr.mxu0 %v4234
      %4273 = vmatpush1.msra.mxu0 %v4233
      %4274 = vmatprep.subr.mxu0 %v4232
      %4275 = vmatpush1.msra.mxu0 %v4231
      %4276 = vmatprep.subr.mxu0 0.0
      %4277 = vmatpush2.msra.mxu0 0.0
      %4278 = vmatprep.subr.mxu0 0.0
      %4279 = vmatpush2.msra.mxu0 0.0
      %4280 = vmatprep.subr.mxu0 0.0
      %4281 = vmatpush2.msra.mxu0 0.0
      %4282 = vmatprep.subr.mxu0 0.0
      %4283 = vmatpush2.msra.mxu0 0.0
      %4284 = vmatprep.subr.mxu0 0.0
      %4285 = vmatpush2.msra.mxu0 0.0
      %4286 = vmatprep.subr.mxu0 0.0
      %4287 = vmatpush2.msra.mxu0 0.0
      %4288 = vmatprep.subr.mxu0 0.0
      %4289 = vmatpush2.msra.mxu0 0.0
      %4290 = vmatprep.subr.mxu0 0.0
      %4291 = vmatpush2.msra.mxu0 0.0
      %4292 = vmatprep.subr.mxu0 0.0
      %4293 = vmatpush2.msra.mxu0 0.0
      %4294 = vmatprep.subr.mxu0 0.0
      %4295 = vmatpush2.msra.mxu0 0.0
      %4296 = vmatprep.subr.mxu0 0.0
      %4297 = vmatpush2.msra.mxu0 0.0
      %4298 = vmatprep.subr.mxu0 0.0
      %4299 = vmatpush2.msra.mxu0 0.0
      %4300 = vmatprep.subr.mxu0 0.0
      %4301 = vmatpush2.msra.mxu0 0.0
      %4302 = vmatprep.subr.mxu0 0.0
      %4303 = vmatpush2.msra.mxu0 0.0
      %4304 = vmatprep.subr.mxu0 0.0
      %4305 = vmatpush2.msra.mxu0 0.0
      %4306 = vmatprep.subr.mxu0 0.0
      %4307 = vmatpush2.msra.mxu0 0.0
      %4308 = vmatprep.mubr.f32.mxu0 0.0
      %4309 = vmatmul.mubr.f32.gmra.mxu0 %v4239
      %v4310 = vpop.f32.mrf.mxu0
      %v4311 = vadd.f32 0.0, %v4310
      %v4312 = vpop.f32.mrf.mxu0
      %v4313 = vadd.f32 0.0, %v4312
      %4314 = vmatprep.mubr.f32.mxu0 0.0
      %4315 = vmatmul.mubr.f32.gmra.mxu0 %v4242
      %v4316 = vpop.f32.mrf.mxu0
      %v4317 = vadd.f32 0.0, %v4316
      %v4318 = vpop.f32.mrf.mxu0
      %v4319 = vadd.f32 0.0, %v4318
      %4320 = vdwg.mxu0
      %v4321 = vadd.f32 %v4209, %v4311
      %v4322 = vadd.f32 %v4211, %v4313
      %v4323 = vadd.f32 %v4215, %v4317
      %v4324 = vadd.f32 %v4217, %v4319
      %4325 = vrot.lane.b32.xlu0 %v4011, 1
      %v4326 = vpop.permute.xlu0 %4325
      %4327 = vrot.lane.b32.xlu0 %v4013, 1
      %v4328 = vpop.permute.xlu0 %4327
      %4329 = vrot.lane.b32.xlu0 %v4012, 1
      %v4330 = vpop.permute.xlu0 %4329
      %4331 = vrot.lane.b32.xlu0 %v4014, 1
      %v4332 = vpop.permute.xlu0 %4331
      %v4333 = vsel %vm1690, %v4326, %v4330
      %v4334 = vsel %vm1690, %v4328, %v4332
      %v4335 = vsel %vm1690, %v4330, %v4326
      %v4336 = vsel %vm1690, %v4332, %v4328
      %v4337 = vmul.f32 %v4335, %v3344
      %v4338 = vmul.f32 %v4333, %v3348
      %v4339 = vmul.f32 %v4336, %v3344
      %v4340 = vmul.f32 %v4334, %v3348
      %s4341 = scalar_lea.vmem %s880, 48
      %v4342 = vld [vmem:[%s4341] sm:$0xff]
      %v4343 = vld [vmem:[%s4341 + $0x8] sm:$0xff]
      %v4345 = vsel %vm4052, %v4342, 0
      %v4348 = vsel %vm4052, %v4343, 0
      %4350 = vmatprep.subr.mxu0 0.0
      %4351 = vmatpush1.msra.mxu0 0.0
      %4352 = vmatprep.subr.mxu0 0.0
      %4353 = vmatpush1.msra.mxu0 0.0
      %4354 = vmatprep.subr.mxu0 0.0
      %4355 = vmatpush1.msra.mxu0 0.0
      %4356 = vmatprep.subr.mxu0 0.0
      %4357 = vmatpush1.msra.mxu0 0.0
      %4358 = vmatprep.subr.mxu0 0.0
      %4359 = vmatpush1.msra.mxu0 0.0
      %4360 = vmatprep.subr.mxu0 0.0
      %4361 = vmatpush1.msra.mxu0 0.0
      %4362 = vmatprep.subr.mxu0 0.0
      %4363 = vmatpush1.msra.mxu0 0.0
      %4364 = vmatprep.subr.mxu0 0.0
      %4365 = vmatpush1.msra.mxu0 0.0
      %4366 = vmatprep.subr.mxu0 0.0
      %4367 = vmatpush1.msra.mxu0 0.0
      %4368 = vmatprep.subr.mxu0 0.0
      %4369 = vmatpush1.msra.mxu0 0.0
      %4370 = vmatprep.subr.mxu0 0.0
      %4371 = vmatpush1.msra.mxu0 0.0
      %4372 = vmatprep.subr.mxu0 0.0
      %4373 = vmatpush1.msra.mxu0 0.0
      %4374 = vmatprep.subr.mxu0 0.0
      %4375 = vmatpush1.msra.mxu0 0.0
      %4376 = vmatprep.subr.mxu0 0.0
      %4377 = vmatpush1.msra.mxu0 0.0
      %4378 = vmatprep.subr.mxu0 %v4340
      %4379 = vmatpush1.msra.mxu0 %v4339
      %4380 = vmatprep.subr.mxu0 %v4338
      %4381 = vmatpush1.msra.mxu0 %v4337
      %4382 = vmatprep.subr.mxu0 0.0
      %4383 = vmatpush2.msra.mxu0 0.0
      %4384 = vmatprep.subr.mxu0 0.0
      %4385 = vmatpush2.msra.mxu0 0.0
      %4386 = vmatprep.subr.mxu0 0.0
      %4387 = vmatpush2.msra.mxu0 0.0
      %4388 = vmatprep.subr.mxu0 0.0
      %4389 = vmatpush2.msra.mxu0 0.0
      %4390 = vmatprep.subr.mxu0 0.0
      %4391 = vmatpush2.msra.mxu0 0.0
      %4392 = vmatprep.subr.mxu0 0.0
      %4393 = vmatpush2.msra.mxu0 0.0
      %4394 = vmatprep.subr.mxu0 0.0
      %4395 = vmatpush2.msra.mxu0 0.0
      %4396 = vmatprep.subr.mxu0 0.0
      %4397 = vmatpush2.msra.mxu0 0.0
      %4398 = vmatprep.subr.mxu0 0.0
      %4399 = vmatpush2.msra.mxu0 0.0
      %4400 = vmatprep.subr.mxu0 0.0
      %4401 = vmatpush2.msra.mxu0 0.0
      %4402 = vmatprep.subr.mxu0 0.0
      %4403 = vmatpush2.msra.mxu0 0.0
      %4404 = vmatprep.subr.mxu0 0.0
      %4405 = vmatpush2.msra.mxu0 0.0
      %4406 = vmatprep.subr.mxu0 0.0
      %4407 = vmatpush2.msra.mxu0 0.0
      %4408 = vmatprep.subr.mxu0 0.0
      %4409 = vmatpush2.msra.mxu0 0.0
      %4410 = vmatprep.subr.mxu0 0.0
      %4411 = vmatpush2.msra.mxu0 0.0
      %4412 = vmatprep.subr.mxu0 0.0
      %4413 = vmatpush2.msra.mxu0 0.0
      %4414 = vmatprep.mubr.f32.mxu0 0.0
      %4415 = vmatmul.mubr.f32.gmra.mxu0 %v4345
      %v4416 = vpop.f32.mrf.mxu0
      %v4417 = vadd.f32 0.0, %v4416
      %v4418 = vpop.f32.mrf.mxu0
      %v4419 = vadd.f32 0.0, %v4418
      %4420 = vmatprep.mubr.f32.mxu0 0.0
      %4421 = vmatmul.mubr.f32.gmra.mxu0 %v4348
      %v4422 = vpop.f32.mrf.mxu0
      %v4423 = vadd.f32 0.0, %v4422
      %v4424 = vpop.f32.mrf.mxu0
      %v4425 = vadd.f32 0.0, %v4424
      %4426 = vdwg.mxu0
      %v4427 = vadd.f32 %v4321, %v4417
      %v4428 = vadd.f32 %v4322, %v4419
      %v4429 = vadd.f32 %v4323, %v4423
      %v4430 = vadd.f32 %v4324, %v4425
      %v4431 = vmul.f32 %v4011, %v3449
      %v4432 = vmul.f32 %v4012, %v3453
      %v4433 = vmul.f32 %v4013, %v3449
      %v4434 = vmul.f32 %v4014, %v3453
      %s4435 = scalar_lea.vmem %s880, 64
      %v4436 = vld [vmem:[%s4435] sm:$0xff]
      %v4437 = vld [vmem:[%s4435 + $0x8] sm:$0xff]
      %v4439 = vsel %vm4052, %v4436, 0
      %v4442 = vsel %vm4052, %v4437, 0
      %4444 = vmatprep.subr.mxu0 0.0
      %4445 = vmatpush1.msra.mxu0 0.0
      %4446 = vmatprep.subr.mxu0 0.0
      %4447 = vmatpush1.msra.mxu0 0.0
      %4448 = vmatprep.subr.mxu0 0.0
      %4449 = vmatpush1.msra.mxu0 0.0
      %4450 = vmatprep.subr.mxu0 0.0
      %4451 = vmatpush1.msra.mxu0 0.0
      %4452 = vmatprep.subr.mxu0 0.0
      %4453 = vmatpush1.msra.mxu0 0.0
      %4454 = vmatprep.subr.mxu0 0.0
      %4455 = vmatpush1.msra.mxu0 0.0
      %4456 = vmatprep.subr.mxu0 0.0
      %4457 = vmatpush1.msra.mxu0 0.0
      %4458 = vmatprep.subr.mxu0 0.0
      %4459 = vmatpush1.msra.mxu0 0.0
      %4460 = vmatprep.subr.mxu0 0.0
      %4461 = vmatpush1.msra.mxu0 0.0
      %4462 = vmatprep.subr.mxu0 0.0
      %4463 = vmatpush1.msra.mxu0 0.0
      %4464 = vmatprep.subr.mxu0 0.0
      %4465 = vmatpush1.msra.mxu0 0.0
      %4466 = vmatprep.subr.mxu0 0.0
      %4467 = vmatpush1.msra.mxu0 0.0
      %4468 = vmatprep.subr.mxu0 0.0
      %4469 = vmatpush1.msra.mxu0 0.0
      %4470 = vmatprep.subr.mxu0 0.0
      %4471 = vmatpush1.msra.mxu0 0.0
      %4472 = vmatprep.subr.mxu0 %v4434
      %4473 = vmatpush1.msra.mxu0 %v4433
      %4474 = vmatprep.subr.mxu0 %v4432
      %4475 = vmatpush1.msra.mxu0 %v4431
      %4476 = vmatprep.subr.mxu0 0.0
      %4477 = vmatpush2.msra.mxu0 0.0
      %4478 = vmatprep.subr.mxu0 0.0
      %4479 = vmatpush2.msra.mxu0 0.0
      %4480 = vmatprep.subr.mxu0 0.0
      %4481 = vmatpush2.msra.mxu0 0.0
      %4482 = vmatprep.subr.mxu0 0.0
      %4483 = vmatpush2.msra.mxu0 0.0
      %4484 = vmatprep.subr.mxu0 0.0
      %4485 = vmatpush2.msra.mxu0 0.0
      %4486 = vmatprep.subr.mxu0 0.0
      %4487 = vmatpush2.msra.mxu0 0.0
      %4488 = vmatprep.subr.mxu0 0.0
      %4489 = vmatpush2.msra.mxu0 0.0
      %4490 = vmatprep.subr.mxu0 0.0
      %4491 = vmatpush2.msra.mxu0 0.0
      %4492 = vmatprep.subr.mxu0 0.0
      %4493 = vmatpush2.msra.mxu0 0.0
      %4494 = vmatprep.subr.mxu0 0.0
      %4495 = vmatpush2.msra.mxu0 0.0
      %4496 = vmatprep.subr.mxu0 0.0
      %4497 = vmatpush2.msra.mxu0 0.0
      %4498 = vmatprep.subr.mxu0 0.0
      %4499 = vmatpush2.msra.mxu0 0.0
      %4500 = vmatprep.subr.mxu0 0.0
      %4501 = vmatpush2.msra.mxu0 0.0
      %4502 = vmatprep.subr.mxu0 0.0
      %4503 = vmatpush2.msra.mxu0 0.0
      %4504 = vmatprep.subr.mxu0 0.0
      %4505 = vmatpush2.msra.mxu0 0.0
      %4506 = vmatprep.subr.mxu0 0.0
      %4507 = vmatpush2.msra.mxu0 0.0
      %4508 = vmatprep.mubr.f32.mxu0 0.0
      %4509 = vmatmul.mubr.f32.gmra.mxu0 %v4439
      %v4510 = vpop.f32.mrf.mxu0
      %v4511 = vadd.f32 0.0, %v4510
      %v4512 = vpop.f32.mrf.mxu0
      %v4513 = vadd.f32 0.0, %v4512
      %4514 = vmatprep.mubr.f32.mxu0 0.0
      %4515 = vmatmul.mubr.f32.gmra.mxu0 %v4442
      %v4516 = vpop.f32.mrf.mxu0
      %v4517 = vadd.f32 0.0, %v4516
      %v4518 = vpop.f32.mrf.mxu0
      %v4519 = vadd.f32 0.0, %v4518
      %4520 = vdwg.mxu0
      %v4521 = vadd.f32 %v4427, %v4511
      %v4522 = vadd.f32 %v4428, %v4513
      %v4523 = vadd.f32 %v4429, %v4517
      %v4524 = vadd.f32 %v4430, %v4519
      %4525 = vrot.lane.b32.xlu0 %v4011, 127
      %v4526 = vpop.permute.xlu0 %4525
      %4527 = vrot.lane.b32.xlu0 %v4013, 127
      %v4528 = vpop.permute.xlu0 %4527
      %4529 = vrot.lane.b32.xlu0 %v4012, 127
      %v4530 = vpop.permute.xlu0 %4529
      %4531 = vrot.lane.b32.xlu0 %v4014, 127
      %v4532 = vpop.permute.xlu0 %4531
      %v4533 = vsel %vm2032, %v4526, %v4530
      %v4534 = vsel %vm2032, %v4528, %v4532
      %v4535 = vsel %vm2032, %v4530, %v4526
      %v4536 = vsel %vm2032, %v4532, %v4528
      %v4537 = vmul.f32 %v4533, %v3560
      %v4538 = vmul.f32 %v4535, %v3564
      %v4539 = vmul.f32 %v4534, %v3560
      %v4540 = vmul.f32 %v4536, %v3564
      %s4541 = scalar_lea.vmem %s880, 80
      %v4542 = vld [vmem:[%s4541] sm:$0xff]
      %v4543 = vld [vmem:[%s4541 + $0x8] sm:$0xff]
      %v4545 = vsel %vm4052, %v4542, 0
      %v4548 = vsel %vm4052, %v4543, 0
      %4550 = vmatprep.subr.mxu0 0.0
      %4551 = vmatpush1.msra.mxu0 0.0
      %4552 = vmatprep.subr.mxu0 0.0
      %4553 = vmatpush1.msra.mxu0 0.0
      %4554 = vmatprep.subr.mxu0 0.0
      %4555 = vmatpush1.msra.mxu0 0.0
      %4556 = vmatprep.subr.mxu0 0.0
      %4557 = vmatpush1.msra.mxu0 0.0
      %4558 = vmatprep.subr.mxu0 0.0
      %4559 = vmatpush1.msra.mxu0 0.0
      %4560 = vmatprep.subr.mxu0 0.0
      %4561 = vmatpush1.msra.mxu0 0.0
      %4562 = vmatprep.subr.mxu0 0.0
      %4563 = vmatpush1.msra.mxu0 0.0
      %4564 = vmatprep.subr.mxu0 0.0
      %4565 = vmatpush1.msra.mxu0 0.0
      %4566 = vmatprep.subr.mxu0 0.0
      %4567 = vmatpush1.msra.mxu0 0.0
      %4568 = vmatprep.subr.mxu0 0.0
      %4569 = vmatpush1.msra.mxu0 0.0
      %4570 = vmatprep.subr.mxu0 0.0
      %4571 = vmatpush1.msra.mxu0 0.0
      %4572 = vmatprep.subr.mxu0 0.0
      %4573 = vmatpush1.msra.mxu0 0.0
      %4574 = vmatprep.subr.mxu0 0.0
      %4575 = vmatpush1.msra.mxu0 0.0
      %4576 = vmatprep.subr.mxu0 0.0
      %4577 = vmatpush1.msra.mxu0 0.0
      %4578 = vmatprep.subr.mxu0 %v4540
      %4579 = vmatpush1.msra.mxu0 %v4539
      %4580 = vmatprep.subr.mxu0 %v4538
      %4581 = vmatpush1.msra.mxu0 %v4537
      %4582 = vmatprep.subr.mxu0 0.0
      %4583 = vmatpush2.msra.mxu0 0.0
      %4584 = vmatprep.subr.mxu0 0.0
      %4585 = vmatpush2.msra.mxu0 0.0
      %4586 = vmatprep.subr.mxu0 0.0
      %4587 = vmatpush2.msra.mxu0 0.0
      %4588 = vmatprep.subr.mxu0 0.0
      %4589 = vmatpush2.msra.mxu0 0.0
      %4590 = vmatprep.subr.mxu0 0.0
      %4591 = vmatpush2.msra.mxu0 0.0
      %4592 = vmatprep.subr.mxu0 0.0
      %4593 = vmatpush2.msra.mxu0 0.0
      %4594 = vmatprep.subr.mxu0 0.0
      %4595 = vmatpush2.msra.mxu0 0.0
      %4596 = vmatprep.subr.mxu0 0.0
      %4597 = vmatpush2.msra.mxu0 0.0
      %4598 = vmatprep.subr.mxu0 0.0
      %4599 = vmatpush2.msra.mxu0 0.0
      %4600 = vmatprep.subr.mxu0 0.0
      %4601 = vmatpush2.msra.mxu0 0.0
      %4602 = vmatprep.subr.mxu0 0.0
      %4603 = vmatpush2.msra.mxu0 0.0
      %4604 = vmatprep.subr.mxu0 0.0
      %4605 = vmatpush2.msra.mxu0 0.0
      %4606 = vmatprep.subr.mxu0 0.0
      %4607 = vmatpush2.msra.mxu0 0.0
      %4608 = vmatprep.subr.mxu0 0.0
      %4609 = vmatpush2.msra.mxu0 0.0
      %4610 = vmatprep.subr.mxu0 0.0
      %4611 = vmatpush2.msra.mxu0 0.0
      %4612 = vmatprep.subr.mxu0 0.0
      %4613 = vmatpush2.msra.mxu0 0.0
      %4614 = vmatprep.mubr.f32.mxu0 0.0
      %4615 = vmatmul.mubr.f32.gmra.mxu0 %v4545
      %v4616 = vpop.f32.mrf.mxu0
      %v4617 = vadd.f32 0.0, %v4616
      %v4618 = vpop.f32.mrf.mxu0
      %v4619 = vadd.f32 0.0, %v4618
      %4620 = vmatprep.mubr.f32.mxu0 0.0
      %4621 = vmatmul.mubr.f32.gmra.mxu0 %v4548
      %v4622 = vpop.f32.mrf.mxu0
      %v4623 = vadd.f32 0.0, %v4622
      %v4624 = vpop.f32.mrf.mxu0
      %v4625 = vadd.f32 0.0, %v4624
      %4626 = vdwg.mxu0
      %v4627 = vadd.f32 %v4521, %v4617
      %v4628 = vadd.f32 %v4522, %v4619
      %v4629 = vadd.f32 %v4523, %v4623
      %v4630 = vadd.f32 %v4524, %v4625
      %4631 = vrot.lane.b32.xlu0 %v4011, 121
      %v4632 = vpop.permute.xlu0 %4631
      %4633 = vrot.lane.b32.xlu0 %v4013, 121
      %v4634 = vpop.permute.xlu0 %4633
      %4635 = vrot.lane.b32.xlu0 %v4012, 121
      %v4636 = vpop.permute.xlu0 %4635
      %4637 = vrot.lane.b32.xlu0 %v4014, 121
      %v4638 = vpop.permute.xlu0 %4637
      %v4639 = vsel %vm3663, %v4632, %v4636
      %v4640 = vsel %vm3663, %v4634, %v4638
      %v4641 = vsel %vm3663, %v4636, %v4632
      %v4642 = vsel %vm3663, %v4638, %v4634
      %v4643 = vmul.f32 %v4639, %v3672
      %v4644 = vmul.f32 %v4641, %v3676
      %v4645 = vmul.f32 %v4640, %v3672
      %v4646 = vmul.f32 %v4642, %v3676
      %s4647 = scalar_lea.vmem %s880, 96
      %v4648 = vld [vmem:[%s4647] sm:$0xff]
      %v4649 = vld [vmem:[%s4647 + $0x8] sm:$0xff]
      %v4651 = vsel %vm4052, %v4648, 0
      %v4654 = vsel %vm4052, %v4649, 0
      %4656 = vmatprep.subr.mxu0 0.0
      %4657 = vmatpush1.msra.mxu0 0.0
      %4658 = vmatprep.subr.mxu0 0.0
      %4659 = vmatpush1.msra.mxu0 0.0
      %4660 = vmatprep.subr.mxu0 0.0
      %4661 = vmatpush1.msra.mxu0 0.0
      %4662 = vmatprep.subr.mxu0 0.0
      %4663 = vmatpush1.msra.mxu0 0.0
      %4664 = vmatprep.subr.mxu0 0.0
      %4665 = vmatpush1.msra.mxu0 0.0
      %4666 = vmatprep.subr.mxu0 0.0
      %4667 = vmatpush1.msra.mxu0 0.0
      %4668 = vmatprep.subr.mxu0 0.0
      %4669 = vmatpush1.msra.mxu0 0.0
      %4670 = vmatprep.subr.mxu0 0.0
      %4671 = vmatpush1.msra.mxu0 0.0
      %4672 = vmatprep.subr.mxu0 0.0
      %4673 = vmatpush1.msra.mxu0 0.0
      %4674 = vmatprep.subr.mxu0 0.0
      %4675 = vmatpush1.msra.mxu0 0.0
      %4676 = vmatprep.subr.mxu0 0.0
      %4677 = vmatpush1.msra.mxu0 0.0
      %4678 = vmatprep.subr.mxu0 0.0
      %4679 = vmatpush1.msra.mxu0 0.0
      %4680 = vmatprep.subr.mxu0 0.0
      %4681 = vmatpush1.msra.mxu0 0.0
      %4682 = vmatprep.subr.mxu0 0.0
      %4683 = vmatpush1.msra.mxu0 0.0
      %4684 = vmatprep.subr.mxu0 %v4646
      %4685 = vmatpush1.msra.mxu0 %v4645
      %4686 = vmatprep.subr.mxu0 %v4644
      %4687 = vmatpush1.msra.mxu0 %v4643
      %4688 = vmatprep.subr.mxu0 0.0
      %4689 = vmatpush2.msra.mxu0 0.0
      %4690 = vmatprep.subr.mxu0 0.0
      %4691 = vmatpush2.msra.mxu0 0.0
      %4692 = vmatprep.subr.mxu0 0.0
      %4693 = vmatpush2.msra.mxu0 0.0
      %4694 = vmatprep.subr.mxu0 0.0
      %4695 = vmatpush2.msra.mxu0 0.0
      %4696 = vmatprep.subr.mxu0 0.0
      %4697 = vmatpush2.msra.mxu0 0.0
      %4698 = vmatprep.subr.mxu0 0.0
      %4699 = vmatpush2.msra.mxu0 0.0
      %4700 = vmatprep.subr.mxu0 0.0
      %4701 = vmatpush2.msra.mxu0 0.0
      %4702 = vmatprep.subr.mxu0 0.0
      %4703 = vmatpush2.msra.mxu0 0.0
      %4704 = vmatprep.subr.mxu0 0.0
      %4705 = vmatpush2.msra.mxu0 0.0
      %4706 = vmatprep.subr.mxu0 0.0
      %4707 = vmatpush2.msra.mxu0 0.0
      %4708 = vmatprep.subr.mxu0 0.0
      %4709 = vmatpush2.msra.mxu0 0.0
      %4710 = vmatprep.subr.mxu0 0.0
      %4711 = vmatpush2.msra.mxu0 0.0
      %4712 = vmatprep.subr.mxu0 0.0
      %4713 = vmatpush2.msra.mxu0 0.0
      %4714 = vmatprep.subr.mxu0 0.0
      %4715 = vmatpush2.msra.mxu0 0.0
      %4716 = vmatprep.subr.mxu0 0.0
      %4717 = vmatpush2.msra.mxu0 0.0
      %4718 = vmatprep.subr.mxu0 0.0
      %4719 = vmatpush2.msra.mxu0 0.0
      %4720 = vmatprep.mubr.f32.mxu0 0.0
      %4721 = vmatmul.mubr.f32.gmra.mxu0 %v4651
      %v4722 = vpop.f32.mrf.mxu0
      %v4723 = vadd.f32 0.0, %v4722
      %v4724 = vpop.f32.mrf.mxu0
      %v4725 = vadd.f32 0.0, %v4724
      %4726 = vmatprep.mubr.f32.mxu0 0.0
      %4727 = vmatmul.mubr.f32.gmra.mxu0 %v4654
      %v4728 = vpop.f32.mrf.mxu0
      %v4729 = vadd.f32 0.0, %v4728
      %v4730 = vpop.f32.mrf.mxu0
      %v4731 = vadd.f32 0.0, %v4730
      %4732 = vdwg.mxu0
      %v4733 = vadd.f32 %v4627, %v4723
      %v4734 = vadd.f32 %v4628, %v4725
      %v4735 = vadd.f32 %v4629, %v4729
      %v4736 = vadd.f32 %v4630, %v4731
      %4737 = vrot.lane.b32.xlu0 %v4011, 120
      %v4738 = vpop.permute.xlu0 %4737
      %4739 = vrot.lane.b32.xlu0 %v4013, 120
      %v4740 = vpop.permute.xlu0 %4739
      %4741 = vrot.lane.b32.xlu0 %v4012, 120
      %v4742 = vpop.permute.xlu0 %4741
      %4743 = vrot.lane.b32.xlu0 %v4014, 120
      %v4744 = vpop.permute.xlu0 %4743
      %v4745 = vsel %vm3775, %v4738, %v4742
      %v4746 = vsel %vm3775, %v4740, %v4744
      %v4747 = vsel %vm3775, %v4742, %v4738
      %v4748 = vsel %vm3775, %v4744, %v4740
      %v4749 = vmul.f32 %v4745, %v3784
      %v4750 = vmul.f32 %v4747, %v3788
      %v4751 = vmul.f32 %v4746, %v3784
      %v4752 = vmul.f32 %v4748, %v3788
      %s4753 = scalar_lea.vmem %s880, 112
      %v4754 = vld [vmem:[%s4753] sm:$0xff]
      %v4755 = vld [vmem:[%s4753 + $0x8] sm:$0xff]
      %v4757 = vsel %vm4052, %v4754, 0
      %v4760 = vsel %vm4052, %v4755, 0
      %4762 = vmatprep.subr.mxu0 0.0
      %4763 = vmatpush1.msra.mxu0 0.0
      %4764 = vmatprep.subr.mxu0 0.0
      %4765 = vmatpush1.msra.mxu0 0.0
      %4766 = vmatprep.subr.mxu0 0.0
      %4767 = vmatpush1.msra.mxu0 0.0
      %4768 = vmatprep.subr.mxu0 0.0
      %4769 = vmatpush1.msra.mxu0 0.0
      %4770 = vmatprep.subr.mxu0 0.0
      %4771 = vmatpush1.msra.mxu0 0.0
      %4772 = vmatprep.subr.mxu0 0.0
      %4773 = vmatpush1.msra.mxu0 0.0
      %4774 = vmatprep.subr.mxu0 0.0
      %4775 = vmatpush1.msra.mxu0 0.0
      %4776 = vmatprep.subr.mxu0 0.0
      %4777 = vmatpush1.msra.mxu0 0.0
      %4778 = vmatprep.subr.mxu0 0.0
      %4779 = vmatpush1.msra.mxu0 0.0
      %4780 = vmatprep.subr.mxu0 0.0
      %4781 = vmatpush1.msra.mxu0 0.0
      %4782 = vmatprep.subr.mxu0 0.0
      %4783 = vmatpush1.msra.mxu0 0.0
      %4784 = vmatprep.subr.mxu0 0.0
      %4785 = vmatpush1.msra.mxu0 0.0
      %4786 = vmatprep.subr.mxu0 0.0
      %4787 = vmatpush1.msra.mxu0 0.0
      %4788 = vmatprep.subr.mxu0 0.0
      %4789 = vmatpush1.msra.mxu0 0.0
      %4790 = vmatprep.subr.mxu0 %v4752
      %4791 = vmatpush1.msra.mxu0 %v4751
      %4792 = vmatprep.subr.mxu0 %v4750
      %4793 = vmatpush1.msra.mxu0 %v4749
      %4794 = vmatprep.subr.mxu0 0.0
      %4795 = vmatpush2.msra.mxu0 0.0
      %4796 = vmatprep.subr.mxu0 0.0
      %4797 = vmatpush2.msra.mxu0 0.0
      %4798 = vmatprep.subr.mxu0 0.0
      %4799 = vmatpush2.msra.mxu0 0.0
      %4800 = vmatprep.subr.mxu0 0.0
      %4801 = vmatpush2.msra.mxu0 0.0
      %4802 = vmatprep.subr.mxu0 0.0
      %4803 = vmatpush2.msra.mxu0 0.0
      %4804 = vmatprep.subr.mxu0 0.0
      %4805 = vmatpush2.msra.mxu0 0.0
      %4806 = vmatprep.subr.mxu0 0.0
      %4807 = vmatpush2.msra.mxu0 0.0
      %4808 = vmatprep.subr.mxu0 0.0
      %4809 = vmatpush2.msra.mxu0 0.0
      %4810 = vmatprep.subr.mxu0 0.0
      %4811 = vmatpush2.msra.mxu0 0.0
      %4812 = vmatprep.subr.mxu0 0.0
      %4813 = vmatpush2.msra.mxu0 0.0
      %4814 = vmatprep.subr.mxu0 0.0
      %4815 = vmatpush2.msra.mxu0 0.0
      %4816 = vmatprep.subr.mxu0 0.0
      %4817 = vmatpush2.msra.mxu0 0.0
      %4818 = vmatprep.subr.mxu0 0.0
      %4819 = vmatpush2.msra.mxu0 0.0
      %4820 = vmatprep.subr.mxu0 0.0
      %4821 = vmatpush2.msra.mxu0 0.0
      %4822 = vmatprep.subr.mxu0 0.0
      %4823 = vmatpush2.msra.mxu0 0.0
      %4824 = vmatprep.subr.mxu0 0.0
      %4825 = vmatpush2.msra.mxu0 0.0
      %4826 = vmatprep.mubr.f32.mxu0 0.0
      %4827 = vmatmul.mubr.f32.gmra.mxu0 %v4757
      %v4828 = vpop.f32.mrf.mxu0
      %v4829 = vadd.f32 0.0, %v4828
      %v4830 = vpop.f32.mrf.mxu0
      %v4831 = vadd.f32 0.0, %v4830
      %4832 = vmatprep.mubr.f32.mxu0 0.0
      %4833 = vmatmul.mubr.f32.gmra.mxu0 %v4760
      %v4834 = vpop.f32.mrf.mxu0
      %v4835 = vadd.f32 0.0, %v4834
      %v4836 = vpop.f32.mrf.mxu0
      %v4837 = vadd.f32 0.0, %v4836
      %4838 = vdwg.mxu0
      %v4839 = vadd.f32 %v4733, %v4829
      %v4840 = vadd.f32 %v4734, %v4831
      %v4841 = vadd.f32 %v4735, %v4835
      %v4842 = vadd.f32 %v4736, %v4837
      %4843 = vrot.lane.b32.xlu0 %v4011, 119
      %v4844 = vpop.permute.xlu0 %4843
      %4845 = vrot.lane.b32.xlu0 %v4013, 119
      %v4846 = vpop.permute.xlu0 %4845
      %4847 = vrot.lane.b32.xlu0 %v4012, 119
      %v4848 = vpop.permute.xlu0 %4847
      %4849 = vrot.lane.b32.xlu0 %v4014, 119
      %v4850 = vpop.permute.xlu0 %4849
      %v4851 = vsel %vm3887, %v4844, %v4848
      %v4852 = vsel %vm3887, %v4846, %v4850
      %v4853 = vsel %vm3887, %v4848, %v4844
      %v4854 = vsel %vm3887, %v4850, %v4846
      %v4855 = vmul.f32 %v4851, %v3896
      %v4856 = vmul.f32 %v4853, %v3900
      %v4857 = vmul.f32 %v4852, %v3896
      %v4858 = vmul.f32 %v4854, %v3900
      %s4859 = scalar_lea.vmem %s880, 128
      %v4860 = vld [vmem:[%s4859] sm:$0xff]
      %v4861 = vld [vmem:[%s4859 + $0x8] sm:$0xff]
      %v4863 = vsel %vm4052, %v4860, 0
      %v4866 = vsel %vm4052, %v4861, 0
      %4868 = vmatprep.subr.mxu0 0.0
      %4869 = vmatpush1.msra.mxu0 0.0
      %4870 = vmatprep.subr.mxu0 0.0
      %4871 = vmatpush1.msra.mxu0 0.0
      %4872 = vmatprep.subr.mxu0 0.0
      %4873 = vmatpush1.msra.mxu0 0.0
      %4874 = vmatprep.subr.mxu0 0.0
      %4875 = vmatpush1.msra.mxu0 0.0
      %4876 = vmatprep.subr.mxu0 0.0
      %4877 = vmatpush1.msra.mxu0 0.0
      %4878 = vmatprep.subr.mxu0 0.0
      %4879 = vmatpush1.msra.mxu0 0.0
      %4880 = vmatprep.subr.mxu0 0.0
      %4881 = vmatpush1.msra.mxu0 0.0
      %4882 = vmatprep.subr.mxu0 0.0
      %4883 = vmatpush1.msra.mxu0 0.0
      %4884 = vmatprep.subr.mxu0 0.0
      %4885 = vmatpush1.msra.mxu0 0.0
      %4886 = vmatprep.subr.mxu0 0.0
      %4887 = vmatpush1.msra.mxu0 0.0
      %4888 = vmatprep.subr.mxu0 0.0
      %4889 = vmatpush1.msra.mxu0 0.0
      %4890 = vmatprep.subr.mxu0 0.0
      %4891 = vmatpush1.msra.mxu0 0.0
      %4892 = vmatprep.subr.mxu0 0.0
      %4893 = vmatpush1.msra.mxu0 0.0
      %4894 = vmatprep.subr.mxu0 0.0
      %4895 = vmatpush1.msra.mxu0 0.0
      %4896 = vmatprep.subr.mxu0 %v4858
      %4897 = vmatpush1.msra.mxu0 %v4857
      %4898 = vmatprep.subr.mxu0 %v4856
      %4899 = vmatpush1.msra.mxu0 %v4855
      %4900 = vmatprep.subr.mxu0 0.0
      %4901 = vmatpush2.msra.mxu0 0.0
      %4902 = vmatprep.subr.mxu0 0.0
      %4903 = vmatpush2.msra.mxu0 0.0
      %4904 = vmatprep.subr.mxu0 0.0
      %4905 = vmatpush2.msra.mxu0 0.0
      %4906 = vmatprep.subr.mxu0 0.0
      %4907 = vmatpush2.msra.mxu0 0.0
      %4908 = vmatprep.subr.mxu0 0.0
      %4909 = vmatpush2.msra.mxu0 0.0
      %4910 = vmatprep.subr.mxu0 0.0
      %4911 = vmatpush2.msra.mxu0 0.0
      %4912 = vmatprep.subr.mxu0 0.0
      %4913 = vmatpush2.msra.mxu0 0.0
      %4914 = vmatprep.subr.mxu0 0.0
      %4915 = vmatpush2.msra.mxu0 0.0
      %4916 = vmatprep.subr.mxu0 0.0
      %4917 = vmatpush2.msra.mxu0 0.0
      %4918 = vmatprep.subr.mxu0 0.0
      %4919 = vmatpush2.msra.mxu0 0.0
      %4920 = vmatprep.subr.mxu0 0.0
      %4921 = vmatpush2.msra.mxu0 0.0
      %4922 = vmatprep.subr.mxu0 0.0
      %4923 = vmatpush2.msra.mxu0 0.0
      %4924 = vmatprep.subr.mxu0 0.0
      %4925 = vmatpush2.msra.mxu0 0.0
      %4926 = vmatprep.subr.mxu0 0.0
      %4927 = vmatpush2.msra.mxu0 0.0
      %4928 = vmatprep.subr.mxu0 0.0
      %4929 = vmatpush2.msra.mxu0 0.0
      %4930 = vmatprep.subr.mxu0 0.0
      %4931 = vmatpush2.msra.mxu0 0.0
      %4932 = vmatprep.mubr.f32.mxu0 0.0
      %4933 = vmatmul.mubr.f32.gmra.mxu0 %v4863
      %v4934 = vpop.f32.mrf.mxu0
      %v4935 = vadd.f32 0.0, %v4934
      %v4936 = vpop.f32.mrf.mxu0
      %v4937 = vadd.f32 0.0, %v4936
      %4938 = vmatprep.mubr.f32.mxu0 0.0
      %4939 = vmatmul.mubr.f32.gmra.mxu0 %v4866
      %v4940 = vpop.f32.mrf.mxu0
      %v4941 = vadd.f32 0.0, %v4940
      %v4942 = vpop.f32.mrf.mxu0
      %v4943 = vadd.f32 0.0, %v4942
      %4944 = vdwg.mxu0
      %v4945 = vadd.f32 %v4839, %v4935
      %v4946 = vadd.f32 %v4840, %v4937
      %v4947 = vadd.f32 %v4841, %v4941
      %v4948 = vadd.f32 %v4842, %v4943
      %v4949 = vld [vmem:[%s885] sm:$0xff]
      %v4950 = vld [vmem:[%s885 + $0x8] sm:$0xff]
      %4952 = vset.pattern.permute.xlu0 0
      %4953 = vperm.xlu0 %4952, %v4949
      %v4954 = vpop.permute.xlu0 %4953
      %4957 = vset.pattern.permute.xlu0 0
      %4958 = vperm.xlu0 %4957, %v4950
      %v4959 = vpop.permute.xlu0 %4958
      %v4961 = vadd.f32 %v4945, %v4954
      %v4962 = vadd.f32 %v4946, %v4954
      %v4963 = vadd.f32 %v4947, %v4959
      %v4964 = vadd.f32 %v4948, %v4959
      %v4965 = vmax.f32 %v4961, 0.0
      %v4966 = vmax.f32 %v4962, 0.0
      %v4967 = vmax.f32 %v4963, 0.0
      %v4968 = vmax.f32 %v4964, 0.0
      %v4969 = vld [vmem:[%s2] sm:$0xff]
      %v4970 = vld [vmem:[%s2 + $0x8] sm:$0xff]
      %v4971 = vld [vmem:[%s2 + $0x10] sm:$0xff]
      %v4972 = vld [vmem:[%s2 + $0x18] sm:$0xff]
      %v4973 = vld [vmem:[%s2 + $0x20] sm:$0xff]
      %v4974 = vld [vmem:[%s2 + $0x28] sm:$0xff]
      %v4975 = vld [vmem:[%s2 + $0x30] sm:$0xff]
      %v4976 = vld [vmem:[%s2 + $0x38] sm:$0xff]
      %v4977 = vld [vmem:[%s2 + $0x40] sm:$0xff]
      %v4978 = vld [vmem:[%s2 + $0x48] sm:$0xff]
      %v4979 = vld [vmem:[%s2 + $0x50] sm:$0xff]
      %v4980 = vld [vmem:[%s2 + $0x58] sm:$0xff]
      %v4981 = vld [vmem:[%s2 + $0x60] sm:$0xff]
      %v4982 = vld [vmem:[%s2 + $0x68] sm:$0xff]
      %v4983 = vld [vmem:[%s2 + $0x70] sm:$0xff]
      %v4984 = vld [vmem:[%s2 + $0x78] sm:$0xff]
      %v4985 = vld [vmem:[%s2 + $0x80] sm:$0xff]
      %v4986 = vld [vmem:[%s2 + $0x88] sm:$0xff]
      %v4987 = vld [vmem:[%s2 + $0x90] sm:$0xff]
      %v4988 = vld [vmem:[%s2 + $0x98] sm:$0xff]
      %v4989 = vld [vmem:[%s2 + $0xa0] sm:$0xff]
      %v4990 = vld [vmem:[%s2 + $0xa8] sm:$0xff]
      %v4991 = vld [vmem:[%s2 + $0xb0] sm:$0xff]
      %v4992 = vld [vmem:[%s2 + $0xb8] sm:$0xff]
      %v4993 = vld [vmem:[%s2 + $0xc0] sm:$0xff]
      %v4994 = vld [vmem:[%s2 + $0xc8] sm:$0xff]
      %v4995 = vld [vmem:[%s2 + $0xd0] sm:$0xff]
      %v4996 = vld [vmem:[%s2 + $0xd8] sm:$0xff]
      %v4997 = vld [vmem:[%s2 + $0xe0] sm:$0xff]
      %v4998 = vld [vmem:[%s2 + $0xe8] sm:$0xff]
      %v4999 = vld [vmem:[%s2 + $0xf0] sm:$0xff]
      %v5000 = vld [vmem:[%s2 + $0xf8] sm:$0xff]
      %5001 = vmatprep.subr.mxu0 %v5000
      %5002 = vmatpush1.msra.mxu0 %v4999
      %5003 = vmatprep.subr.mxu0 %v4998
      %5004 = vmatpush1.msra.mxu0 %v4997
      %5005 = vmatprep.subr.mxu0 %v4996
      %5006 = vmatpush1.msra.mxu0 %v4995
      %5007 = vmatprep.subr.mxu0 %v4994
      %5008 = vmatpush1.msra.mxu0 %v4993
      %5009 = vmatprep.subr.mxu0 %v4992
      %5010 = vmatpush1.msra.mxu0 %v4991
      %5011 = vmatprep.subr.mxu0 %v4990
      %5012 = vmatpush1.msra.mxu0 %v4989
      %5013 = vmatprep.subr.mxu0 %v4988
      %5014 = vmatpush1.msra.mxu0 %v4987
      %5015 = vmatprep.subr.mxu0 %v4986
      %5016 = vmatpush1.msra.mxu0 %v4985
      %5017 = vmatprep.subr.mxu0 %v4984
      %5018 = vmatpush1.msra.mxu0 %v4983
      %5019 = vmatprep.subr.mxu0 %v4982
      %5020 = vmatpush1.msra.mxu0 %v4981
      %5021 = vmatprep.subr.mxu0 %v4980
      %5022 = vmatpush1.msra.mxu0 %v4979
      %5023 = vmatprep.subr.mxu0 %v4978
      %5024 = vmatpush1.msra.mxu0 %v4977
      %5025 = vmatprep.subr.mxu0 %v4976
      %5026 = vmatpush1.msra.mxu0 %v4975
      %5027 = vmatprep.subr.mxu0 %v4974
      %5028 = vmatpush1.msra.mxu0 %v4973
      %5029 = vmatprep.subr.mxu0 %v4972
      %5030 = vmatpush1.msra.mxu0 %v4971
      %5031 = vmatprep.subr.mxu0 %v4970
      %5032 = vmatpush1.msra.mxu0 %v4969
      %5033 = vmatprep.subr.mxu0 0.0
      %5034 = vmatpush2.msra.mxu0 0.0
      %5035 = vmatprep.subr.mxu0 0.0
      %5036 = vmatpush2.msra.mxu0 0.0
      %5037 = vmatprep.subr.mxu0 0.0
      %5038 = vmatpush2.msra.mxu0 0.0
      %5039 = vmatprep.subr.mxu0 0.0
      %5040 = vmatpush2.msra.mxu0 0.0
      %5041 = vmatprep.subr.mxu0 0.0
      %5042 = vmatpush2.msra.mxu0 0.0
      %5043 = vmatprep.subr.mxu0 0.0
      %5044 = vmatpush2.msra.mxu0 0.0
      %5045 = vmatprep.subr.mxu0 0.0
      %5046 = vmatpush2.msra.mxu0 0.0
      %5047 = vmatprep.subr.mxu0 0.0
      %5048 = vmatpush2.msra.mxu0 0.0
      %5049 = vmatprep.subr.mxu0 0.0
      %5050 = vmatpush2.msra.mxu0 0.0
      %5051 = vmatprep.subr.mxu0 0.0
      %5052 = vmatpush2.msra.mxu0 0.0
      %5053 = vmatprep.subr.mxu0 0.0
      %5054 = vmatpush2.msra.mxu0 0.0
      %5055 = vmatprep.subr.mxu0 0.0
      %5056 = vmatpush2.msra.mxu0 0.0
      %5057 = vmatprep.subr.mxu0 0.0
      %5058 = vmatpush2.msra.mxu0 0.0
      %5059 = vmatprep.subr.mxu0 0.0
      %5060 = vmatpush2.msra.mxu0 0.0
      %5061 = vmatprep.subr.mxu0 0.0
      %5062 = vmatpush2.msra.mxu0 0.0
      %5063 = vmatprep.subr.mxu0 0.0
      %5064 = vmatpush2.msra.mxu0 0.0
      %5065 = vmatprep.mubr.f32.mxu0 0.0
      %5066 = vmatmul.mubr.f32.gmra.mxu0 %v4965
      %v5067 = vpop.f32.mrf.mxu0
      %v5068 = vadd.f32 0.0, %v5067
      %v5069 = vpop.f32.mrf.mxu0
      %v5070 = vadd.f32 0.0, %v5069
      %5071 = vmatprep.mubr.f32.mxu0 0.0
      %5072 = vmatmul.mubr.f32.gmra.mxu0 %v4967
      %v5073 = vpop.f32.mrf.mxu0
      %v5074 = vadd.f32 0.0, %v5073
      %v5075 = vpop.f32.mrf.mxu0
      %v5076 = vadd.f32 0.0, %v5075
      %5077 = vdwg.mxu0
      %5078 = vmatprep.subr.mxu0 %v5000
      %5079 = vmatpush1.msra.mxu0 %v4999
      %5080 = vmatprep.subr.mxu0 %v4998
      %5081 = vmatpush1.msra.mxu0 %v4997
      %5082 = vmatprep.subr.mxu0 %v4996
      %5083 = vmatpush1.msra.mxu0 %v4995
      %5084 = vmatprep.subr.mxu0 %v4994
      %5085 = vmatpush1.msra.mxu0 %v4993
      %5086 = vmatprep.subr.mxu0 %v4992
      %5087 = vmatpush1.msra.mxu0 %v4991
      %5088 = vmatprep.subr.mxu0 %v4990
      %5089 = vmatpush1.msra.mxu0 %v4989
      %5090 = vmatprep.subr.mxu0 %v4988
      %5091 = vmatpush1.msra.mxu0 %v4987
      %5092 = vmatprep.subr.mxu0 %v4986
      %5093 = vmatpush1.msra.mxu0 %v4985
      %5094 = vmatprep.subr.mxu0 %v4984
      %5095 = vmatpush1.msra.mxu0 %v4983
      %5096 = vmatprep.subr.mxu0 %v4982
      %5097 = vmatpush1.msra.mxu0 %v4981
      %5098 = vmatprep.subr.mxu0 %v4980
      %5099 = vmatpush1.msra.mxu0 %v4979
      %5100 = vmatprep.subr.mxu0 %v4978
      %5101 = vmatpush1.msra.mxu0 %v4977
      %5102 = vmatprep.subr.mxu0 %v4976
      %5103 = vmatpush1.msra.mxu0 %v4975
      %5104 = vmatprep.subr.mxu0 %v4974
      %5105 = vmatpush1.msra.mxu0 %v4973
      %5106 = vmatprep.subr.mxu0 %v4972
      %5107 = vmatpush1.msra.mxu0 %v4971
      %5108 = vmatprep.subr.mxu0 %v4970
      %5109 = vmatpush1.msra.mxu0 %v4969
      %5110 = vmatprep.subr.mxu0 0.0
      %5111 = vmatpush2.msra.mxu0 0.0
      %5112 = vmatprep.subr.mxu0 0.0
      %5113 = vmatpush2.msra.mxu0 0.0
      %5114 = vmatprep.subr.mxu0 0.0
      %5115 = vmatpush2.msra.mxu0 0.0
      %5116 = vmatprep.subr.mxu0 0.0
      %5117 = vmatpush2.msra.mxu0 0.0
      %5118 = vmatprep.subr.mxu0 0.0
      %5119 = vmatpush2.msra.mxu0 0.0
      %5120 = vmatprep.subr.mxu0 0.0
      %5121 = vmatpush2.msra.mxu0 0.0
      %5122 = vmatprep.subr.mxu0 0.0
      %5123 = vmatpush2.msra.mxu0 0.0
      %5124 = vmatprep.subr.mxu0 0.0
      %5125 = vmatpush2.msra.mxu0 0.0
      %5126 = vmatprep.subr.mxu0 0.0
      %5127 = vmatpush2.msra.mxu0 0.0
      %5128 = vmatprep.subr.mxu0 0.0
      %5129 = vmatpush2.msra.mxu0 0.0
      %5130 = vmatprep.subr.mxu0 0.0
      %5131 = vmatpush2.msra.mxu0 0.0
      %5132 = vmatprep.subr.mxu0 0.0
      %5133 = vmatpush2.msra.mxu0 0.0
      %5134 = vmatprep.subr.mxu0 0.0
      %5135 = vmatpush2.msra.mxu0 0.0
      %5136 = vmatprep.subr.mxu0 0.0
      %5137 = vmatpush2.msra.mxu0 0.0
      %5138 = vmatprep.subr.mxu0 0.0
      %5139 = vmatpush2.msra.mxu0 0.0
      %5140 = vmatprep.subr.mxu0 0.0
      %5141 = vmatpush2.msra.mxu0 0.0
      %5142 = vmatprep.mubr.f32.mxu0 0.0
      %5143 = vmatmul.mubr.f32.gmra.mxu0 %v4966
      %v5144 = vpop.f32.mrf.mxu0
      %v5145 = vadd.f32 0.0, %v5144
      %v5146 = vpop.f32.mrf.mxu0
      %v5147 = vadd.f32 0.0, %v5146
      %5148 = vmatprep.mubr.f32.mxu0 0.0
      %5149 = vmatmul.mubr.f32.gmra.mxu0 %v4968
      %v5150 = vpop.f32.mrf.mxu0
      %v5151 = vadd.f32 0.0, %v5150
      %v5152 = vpop.f32.mrf.mxu0
      %v5153 = vadd.f32 0.0, %v5152
      %5154 = vdwg.mxu0
      %v5155 = vld [vmem:[%s890] sm:$0xff]
      %v5157 = vsel %vm4052, %v5155, 0
      %5159 = vmatprep.subr.mxu0 0.0
      %5160 = vmatpush1.msra.mxu0 0.0
      %5161 = vmatprep.subr.mxu0 0.0
      %5162 = vmatpush1.msra.mxu0 0.0
      %5163 = vmatprep.subr.mxu0 0.0
      %5164 = vmatpush1.msra.mxu0 0.0
      %5165 = vmatprep.subr.mxu0 0.0
      %5166 = vmatpush1.msra.mxu0 0.0
      %5167 = vmatprep.subr.mxu0 0.0
      %5168 = vmatpush1.msra.mxu0 0.0
      %5169 = vmatprep.subr.mxu0 0.0
      %5170 = vmatpush1.msra.mxu0 0.0
      %5171 = vmatprep.subr.mxu0 0.0
      %5172 = vmatpush1.msra.mxu0 0.0
      %5173 = vmatprep.subr.mxu0 0.0
      %5174 = vmatpush1.msra.mxu0 0.0
      %5175 = vmatprep.subr.mxu0 0.0
      %5176 = vmatpush1.msra.mxu0 0.0
      %5177 = vmatprep.subr.mxu0 0.0
      %5178 = vmatpush1.msra.mxu0 0.0
      %5179 = vmatprep.subr.mxu0 0.0
      %5180 = vmatpush1.msra.mxu0 0.0
      %5181 = vmatprep.subr.mxu0 0.0
      %5182 = vmatpush1.msra.mxu0 0.0
      %5183 = vmatprep.subr.mxu0 0.0
      %5184 = vmatpush1.msra.mxu0 0.0
      %5185 = vmatprep.subr.mxu0 0.0
      %5186 = vmatpush1.msra.mxu0 0.0
      %5187 = vmatprep.subr.mxu0 %v5076
      %5188 = vmatpush1.msra.mxu0 %v5074
      %5189 = vmatprep.subr.mxu0 %v5070
      %5190 = vmatpush1.msra.mxu0 %v5068
      %5191 = vmatprep.subr.mxu0 0.0
      %5192 = vmatpush2.msra.mxu0 0.0
      %5193 = vmatprep.subr.mxu0 0.0
      %5194 = vmatpush2.msra.mxu0 0.0
      %5195 = vmatprep.subr.mxu0 0.0
      %5196 = vmatpush2.msra.mxu0 0.0
      %5197 = vmatprep.subr.mxu0 0.0
      %5198 = vmatpush2.msra.mxu0 0.0
      %5199 = vmatprep.subr.mxu0 0.0
      %5200 = vmatpush2.msra.mxu0 0.0
      %5201 = vmatprep.subr.mxu0 0.0
      %5202 = vmatpush2.msra.mxu0 0.0
      %5203 = vmatprep.subr.mxu0 0.0
      %5204 = vmatpush2.msra.mxu0 0.0
      %5205 = vmatprep.subr.mxu0 0.0
      %5206 = vmatpush2.msra.mxu0 0.0
      %5207 = vmatprep.subr.mxu0 0.0
      %5208 = vmatpush2.msra.mxu0 0.0
      %5209 = vmatprep.subr.mxu0 0.0
      %5210 = vmatpush2.msra.mxu0 0.0
      %5211 = vmatprep.subr.mxu0 0.0
      %5212 = vmatpush2.msra.mxu0 0.0
      %5213 = vmatprep.subr.mxu0 0.0
      %5214 = vmatpush2.msra.mxu0 0.0
      %5215 = vmatprep.subr.mxu0 0.0
      %5216 = vmatpush2.msra.mxu0 0.0
      %5217 = vmatprep.subr.mxu0 0.0
      %5218 = vmatpush2.msra.mxu0 0.0
      %5219 = vmatprep.subr.mxu0 0.0
      %5220 = vmatpush2.msra.mxu0 0.0
      %5221 = vmatprep.subr.mxu0 0.0
      %5222 = vmatpush2.msra.mxu0 0.0
      %5223 = vmatprep.mubr.f32.mxu0 0.0
      %5224 = vmatmul.mubr.f32.gmra.mxu0 %v5157
      %v5225 = vpop.f32.mrf.mxu0
      %v5226 = vadd.f32 0.0, %v5225
      %v5227 = vpop.f32.mrf.mxu0
      %v5228 = vadd.f32 0.0, %v5227
      %5229 = vdwg.mxu0
      %5230 = vmatprep.subr.mxu0 0.0
      %5231 = vmatpush1.msra.mxu0 0.0
      %5232 = vmatprep.subr.mxu0 0.0
      %5233 = vmatpush1.msra.mxu0 0.0
      %5234 = vmatprep.subr.mxu0 0.0
      %5235 = vmatpush1.msra.mxu0 0.0
      %5236 = vmatprep.subr.mxu0 0.0
      %5237 = vmatpush1.msra.mxu0 0.0
      %5238 = vmatprep.subr.mxu0 0.0
      %5239 = vmatpush1.msra.mxu0 0.0
      %5240 = vmatprep.subr.mxu0 0.0
      %5241 = vmatpush1.msra.mxu0 0.0
      %5242 = vmatprep.subr.mxu0 0.0
      %5243 = vmatpush1.msra.mxu0 0.0
      %5244 = vmatprep.subr.mxu0 0.0
      %5245 = vmatpush1.msra.mxu0 0.0
      %5246 = vmatprep.subr.mxu0 0.0
      %5247 = vmatpush1.msra.mxu0 0.0
      %5248 = vmatprep.subr.mxu0 0.0
      %5249 = vmatpush1.msra.mxu0 0.0
      %5250 = vmatprep.subr.mxu0 0.0
      %5251 = vmatpush1.msra.mxu0 0.0
      %5252 = vmatprep.subr.mxu0 0.0
      %5253 = vmatpush1.msra.mxu0 0.0
      %5254 = vmatprep.subr.mxu0 0.0
      %5255 = vmatpush1.msra.mxu0 0.0
      %5256 = vmatprep.subr.mxu0 0.0
      %5257 = vmatpush1.msra.mxu0 0.0
      %5258 = vmatprep.subr.mxu0 %v5153
      %5259 = vmatpush1.msra.mxu0 %v5151
      %5260 = vmatprep.subr.mxu0 %v5147
      %5261 = vmatpush1.msra.mxu0 %v5145
      %5262 = vmatprep.subr.mxu0 0.0
      %5263 = vmatpush2.msra.mxu0 0.0
      %5264 = vmatprep.subr.mxu0 0.0
      %5265 = vmatpush2.msra.mxu0 0.0
      %5266 = vmatprep.subr.mxu0 0.0
      %5267 = vmatpush2.msra.mxu0 0.0
      %5268 = vmatprep.subr.mxu0 0.0
      %5269 = vmatpush2.msra.mxu0 0.0
      %5270 = vmatprep.subr.mxu0 0.0
      %5271 = vmatpush2.msra.mxu0 0.0
      %5272 = vmatprep.subr.mxu0 0.0
      %5273 = vmatpush2.msra.mxu0 0.0
      %5274 = vmatprep.subr.mxu0 0.0
      %5275 = vmatpush2.msra.mxu0 0.0
      %5276 = vmatprep.subr.mxu0 0.0
      %5277 = vmatpush2.msra.mxu0 0.0
      %5278 = vmatprep.subr.mxu0 0.0
      %5279 = vmatpush2.msra.mxu0 0.0
      %5280 = vmatprep.subr.mxu0 0.0
      %5281 = vmatpush2.msra.mxu0 0.0
      %5282 = vmatprep.subr.mxu0 0.0
      %5283 = vmatpush2.msra.mxu0 0.0
      %5284 = vmatprep.subr.mxu0 0.0
      %5285 = vmatpush2.msra.mxu0 0.0
      %5286 = vmatprep.subr.mxu0 0.0
      %5287 = vmatpush2.msra.mxu0 0.0
      %5288 = vmatprep.subr.mxu0 0.0
      %5289 = vmatpush2.msra.mxu0 0.0
      %5290 = vmatprep.subr.mxu0 0.0
      %5291 = vmatpush2.msra.mxu0 0.0
      %5292 = vmatprep.subr.mxu0 0.0
      %5293 = vmatpush2.msra.mxu0 0.0
      %5294 = vmatprep.mubr.f32.mxu0 0.0
      %5295 = vmatmul.mubr.f32.gmra.mxu0 %v5157
      %v5296 = vpop.f32.mrf.mxu0
      %v5297 = vadd.f32 0.0, %v5296
      %v5298 = vpop.f32.mrf.mxu0
      %v5299 = vadd.f32 0.0, %v5298
      %5300 = vdwg.mxu0
      %5301 = vrot.lane.b32.xlu0 %v5226, 17
      %v5302 = vpop.permute.xlu0 %5301
      %5303 = vrot.lane.b32.xlu0 %v5228, 17
      %v5304 = vpop.permute.xlu0 %5303
      %5305 = vrot.lane.b32.xlu0 %v5297, 17
      %v5306 = vpop.permute.xlu0 %5305
      %5307 = vrot.lane.b32.xlu0 %v5299, 17
      %v5308 = vpop.permute.xlu0 %5307
      %v5309 = vsel %vm1126, %v5306, %v5308
      %v5310 = vsel %vm1126, %v5304, %v5306
      %v5311 = vsel %vm1126, %v5302, %v5304
      %v5312 = vsel %vm1126, %v5308, %v5302
      %v5313 = vmul.f32 %v5312, %v1136
      %v5314 = vmul.f32 %v5311, %v1140
      %v5315 = vmul.f32 %v5310, %v1144
      %v5316 = vmul.f32 %v5309, %v1148
      %v5317 = vadd.f32 %v5313, 0.0
      %v5318 = vadd.f32 %v5314, 0.0
      %v5319 = vadd.f32 %v5315, 0.0
      %v5320 = vadd.f32 %v5316, 0.0
      %s5321 = scalar_lea.vmem %s890, 8
      %v5322 = vld [vmem:[%s5321] sm:$0xff]
      %v5324 = vsel %vm4052, %v5322, 0
      %5326 = vmatprep.subr.mxu0 0.0
      %5327 = vmatpush1.msra.mxu0 0.0
      %5328 = vmatprep.subr.mxu0 0.0
      %5329 = vmatpush1.msra.mxu0 0.0
      %5330 = vmatprep.subr.mxu0 0.0
      %5331 = vmatpush1.msra.mxu0 0.0
      %5332 = vmatprep.subr.mxu0 0.0
      %5333 = vmatpush1.msra.mxu0 0.0
      %5334 = vmatprep.subr.mxu0 0.0
      %5335 = vmatpush1.msra.mxu0 0.0
      %5336 = vmatprep.subr.mxu0 0.0
      %5337 = vmatpush1.msra.mxu0 0.0
      %5338 = vmatprep.subr.mxu0 0.0
      %5339 = vmatpush1.msra.mxu0 0.0
      %5340 = vmatprep.subr.mxu0 0.0
      %5341 = vmatpush1.msra.mxu0 0.0
      %5342 = vmatprep.subr.mxu0 0.0
      %5343 = vmatpush1.msra.mxu0 0.0
      %5344 = vmatprep.subr.mxu0 0.0
      %5345 = vmatpush1.msra.mxu0 0.0
      %5346 = vmatprep.subr.mxu0 0.0
      %5347 = vmatpush1.msra.mxu0 0.0
      %5348 = vmatprep.subr.mxu0 0.0
      %5349 = vmatpush1.msra.mxu0 0.0
      %5350 = vmatprep.subr.mxu0 0.0
      %5351 = vmatpush1.msra.mxu0 0.0
      %5352 = vmatprep.subr.mxu0 0.0
      %5353 = vmatpush1.msra.mxu0 0.0
      %5354 = vmatprep.subr.mxu0 %v5076
      %5355 = vmatpush1.msra.mxu0 %v5074
      %5356 = vmatprep.subr.mxu0 %v5070
      %5357 = vmatpush1.msra.mxu0 %v5068
      %5358 = vmatprep.subr.mxu0 0.0
      %5359 = vmatpush2.msra.mxu0 0.0
      %5360 = vmatprep.subr.mxu0 0.0
      %5361 = vmatpush2.msra.mxu0 0.0
      %5362 = vmatprep.subr.mxu0 0.0
      %5363 = vmatpush2.msra.mxu0 0.0
      %5364 = vmatprep.subr.mxu0 0.0
      %5365 = vmatpush2.msra.mxu0 0.0
      %5366 = vmatprep.subr.mxu0 0.0
      %5367 = vmatpush2.msra.mxu0 0.0
      %5368 = vmatprep.subr.mxu0 0.0
      %5369 = vmatpush2.msra.mxu0 0.0
      %5370 = vmatprep.subr.mxu0 0.0
      %5371 = vmatpush2.msra.mxu0 0.0
      %5372 = vmatprep.subr.mxu0 0.0
      %5373 = vmatpush2.msra.mxu0 0.0
      %5374 = vmatprep.subr.mxu0 0.0
      %5375 = vmatpush2.msra.mxu0 0.0
      %5376 = vmatprep.subr.mxu0 0.0
      %5377 = vmatpush2.msra.mxu0 0.0
      %5378 = vmatprep.subr.mxu0 0.0
      %5379 = vmatpush2.msra.mxu0 0.0
      %5380 = vmatprep.subr.mxu0 0.0
      %5381 = vmatpush2.msra.mxu0 0.0
      %5382 = vmatprep.subr.mxu0 0.0
      %5383 = vmatpush2.msra.mxu0 0.0
      %5384 = vmatprep.subr.mxu0 0.0
      %5385 = vmatpush2.msra.mxu0 0.0
      %5386 = vmatprep.subr.mxu0 0.0
      %5387 = vmatpush2.msra.mxu0 0.0
      %5388 = vmatprep.subr.mxu0 0.0
      %5389 = vmatpush2.msra.mxu0 0.0
      %5390 = vmatprep.mubr.f32.mxu0 0.0
      %5391 = vmatmul.mubr.f32.gmra.mxu0 %v5324
      %v5392 = vpop.f32.mrf.mxu0
      %v5393 = vadd.f32 0.0, %v5392
      %v5394 = vpop.f32.mrf.mxu0
      %v5395 = vadd.f32 0.0, %v5394
      %5396 = vdwg.mxu0
      %5397 = vmatprep.subr.mxu0 0.0
      %5398 = vmatpush1.msra.mxu0 0.0
      %5399 = vmatprep.subr.mxu0 0.0
      %5400 = vmatpush1.msra.mxu0 0.0
      %5401 = vmatprep.subr.mxu0 0.0
      %5402 = vmatpush1.msra.mxu0 0.0
      %5403 = vmatprep.subr.mxu0 0.0
      %5404 = vmatpush1.msra.mxu0 0.0
      %5405 = vmatprep.subr.mxu0 0.0
      %5406 = vmatpush1.msra.mxu0 0.0
      %5407 = vmatprep.subr.mxu0 0.0
      %5408 = vmatpush1.msra.mxu0 0.0
      %5409 = vmatprep.subr.mxu0 0.0
      %5410 = vmatpush1.msra.mxu0 0.0
      %5411 = vmatprep.subr.mxu0 0.0
      %5412 = vmatpush1.msra.mxu0 0.0
      %5413 = vmatprep.subr.mxu0 0.0
      %5414 = vmatpush1.msra.mxu0 0.0
      %5415 = vmatprep.subr.mxu0 0.0
      %5416 = vmatpush1.msra.mxu0 0.0
      %5417 = vmatprep.subr.mxu0 0.0
      %5418 = vmatpush1.msra.mxu0 0.0
      %5419 = vmatprep.subr.mxu0 0.0
      %5420 = vmatpush1.msra.mxu0 0.0
      %5421 = vmatprep.subr.mxu0 0.0
      %5422 = vmatpush1.msra.mxu0 0.0
      %5423 = vmatprep.subr.mxu0 0.0
      %5424 = vmatpush1.msra.mxu0 0.0
      %5425 = vmatprep.subr.mxu0 %v5153
      %5426 = vmatpush1.msra.mxu0 %v5151
      %5427 = vmatprep.subr.mxu0 %v5147
      %5428 = vmatpush1.msra.mxu0 %v5145
      %5429 = vmatprep.subr.mxu0 0.0
      %5430 = vmatpush2.msra.mxu0 0.0
      %5431 = vmatprep.subr.mxu0 0.0
      %5432 = vmatpush2.msra.mxu0 0.0
      %5433 = vmatprep.subr.mxu0 0.0
      %5434 = vmatpush2.msra.mxu0 0.0
      %5435 = vmatprep.subr.mxu0 0.0
      %5436 = vmatpush2.msra.mxu0 0.0
      %5437 = vmatprep.subr.mxu0 0.0
      %5438 = vmatpush2.msra.mxu0 0.0
      %5439 = vmatprep.subr.mxu0 0.0
      %5440 = vmatpush2.msra.mxu0 0.0
      %5441 = vmatprep.subr.mxu0 0.0
      %5442 = vmatpush2.msra.mxu0 0.0
      %5443 = vmatprep.subr.mxu0 0.0
      %5444 = vmatpush2.msra.mxu0 0.0
      %5445 = vmatprep.subr.mxu0 0.0
      %5446 = vmatpush2.msra.mxu0 0.0
      %5447 = vmatprep.subr.mxu0 0.0
      %5448 = vmatpush2.msra.mxu0 0.0
      %5449 = vmatprep.subr.mxu0 0.0
      %5450 = vmatpush2.msra.mxu0 0.0
      %5451 = vmatprep.subr.mxu0 0.0
      %5452 = vmatpush2.msra.mxu0 0.0
      %5453 = vmatprep.subr.mxu0 0.0
      %5454 = vmatpush2.msra.mxu0 0.0
      %5455 = vmatprep.subr.mxu0 0.0
      %5456 = vmatpush2.msra.mxu0 0.0
      %5457 = vmatprep.subr.mxu0 0.0
      %5458 = vmatpush2.msra.mxu0 0.0
      %5459 = vmatprep.subr.mxu0 0.0
      %5460 = vmatpush2.msra.mxu0 0.0
      %5461 = vmatprep.mubr.f32.mxu0 0.0
      %5462 = vmatmul.mubr.f32.gmra.mxu0 %v5324
      %v5463 = vpop.f32.mrf.mxu0
      %v5464 = vadd.f32 0.0, %v5463
      %v5465 = vpop.f32.mrf.mxu0
      %v5466 = vadd.f32 0.0, %v5465
      %5467 = vdwg.mxu0
      %5468 = vrot.lane.b32.xlu0 %v5393, 16
      %v5469 = vpop.permute.xlu0 %5468
      %5470 = vrot.lane.b32.xlu0 %v5395, 16
      %v5471 = vpop.permute.xlu0 %5470
      %5472 = vrot.lane.b32.xlu0 %v5464, 16
      %v5473 = vpop.permute.xlu0 %5472
      %5474 = vrot.lane.b32.xlu0 %v5466, 16
      %v5475 = vpop.permute.xlu0 %5474
      %v5476 = vsel %vm1166, %v5473, %v5475
      %v5477 = vsel %vm1166, %v5471, %v5473
      %v5478 = vsel %vm1166, %v5469, %v5471
      %v5479 = vsel %vm1166, %v5475, %v5469
      %v5480 = vmul.f32 %v5479, %v1177
      %v5481 = vmul.f32 %v5478, %v1181
      %v5482 = vmul.f32 %v5477, %v1185
      %v5483 = vmul.f32 %v5476, %v1189
      %v5484 = vadd.f32 %v5317, %v5480
      %v5485 = vadd.f32 %v5318, %v5481
      %v5486 = vadd.f32 %v5319, %v5482
      %v5487 = vadd.f32 %v5320, %v5483
      %s5488 = scalar_lea.vmem %s890, 16
      %v5489 = vld [vmem:[%s5488] sm:$0xff]
      %v5491 = vsel %vm4052, %v5489, 0
      %5493 = vmatprep.subr.mxu0 0.0
      %5494 = vmatpush1.msra.mxu0 0.0
      %5495 = vmatprep.subr.mxu0 0.0
      %5496 = vmatpush1.msra.mxu0 0.0
      %5497 = vmatprep.subr.mxu0 0.0
      %5498 = vmatpush1.msra.mxu0 0.0
      %5499 = vmatprep.subr.mxu0 0.0
      %5500 = vmatpush1.msra.mxu0 0.0
      %5501 = vmatprep.subr.mxu0 0.0
      %5502 = vmatpush1.msra.mxu0 0.0
      %5503 = vmatprep.subr.mxu0 0.0
      %5504 = vmatpush1.msra.mxu0 0.0
      %5505 = vmatprep.subr.mxu0 0.0
      %5506 = vmatpush1.msra.mxu0 0.0
      %5507 = vmatprep.subr.mxu0 0.0
      %5508 = vmatpush1.msra.mxu0 0.0
      %5509 = vmatprep.subr.mxu0 0.0
      %5510 = vmatpush1.msra.mxu0 0.0
      %5511 = vmatprep.subr.mxu0 0.0
      %5512 = vmatpush1.msra.mxu0 0.0
      %5513 = vmatprep.subr.mxu0 0.0
      %5514 = vmatpush1.msra.mxu0 0.0
      %5515 = vmatprep.subr.mxu0 0.0
      %5516 = vmatpush1.msra.mxu0 0.0
      %5517 = vmatprep.subr.mxu0 0.0
      %5518 = vmatpush1.msra.mxu0 0.0
      %5519 = vmatprep.subr.mxu0 0.0
      %5520 = vmatpush1.msra.mxu0 0.0
      %5521 = vmatprep.subr.mxu0 %v5076
      %5522 = vmatpush1.msra.mxu0 %v5074
      %5523 = vmatprep.subr.mxu0 %v5070
      %5524 = vmatpush1.msra.mxu0 %v5068
      %5525 = vmatprep.subr.mxu0 0.0
      %5526 = vmatpush2.msra.mxu0 0.0
      %5527 = vmatprep.subr.mxu0 0.0
      %5528 = vmatpush2.msra.mxu0 0.0
      %5529 = vmatprep.subr.mxu0 0.0
      %5530 = vmatpush2.msra.mxu0 0.0
      %5531 = vmatprep.subr.mxu0 0.0
      %5532 = vmatpush2.msra.mxu0 0.0
      %5533 = vmatprep.subr.mxu0 0.0
      %5534 = vmatpush2.msra.mxu0 0.0
      %5535 = vmatprep.subr.mxu0 0.0
      %5536 = vmatpush2.msra.mxu0 0.0
      %5537 = vmatprep.subr.mxu0 0.0
      %5538 = vmatpush2.msra.mxu0 0.0
      %5539 = vmatprep.subr.mxu0 0.0
      %5540 = vmatpush2.msra.mxu0 0.0
      %5541 = vmatprep.subr.mxu0 0.0
      %5542 = vmatpush2.msra.mxu0 0.0
      %5543 = vmatprep.subr.mxu0 0.0
      %5544 = vmatpush2.msra.mxu0 0.0
      %5545 = vmatprep.subr.mxu0 0.0
      %5546 = vmatpush2.msra.mxu0 0.0
      %5547 = vmatprep.subr.mxu0 0.0
      %5548 = vmatpush2.msra.mxu0 0.0
      %5549 = vmatprep.subr.mxu0 0.0
      %5550 = vmatpush2.msra.mxu0 0.0
      %5551 = vmatprep.subr.mxu0 0.0
      %5552 = vmatpush2.msra.mxu0 0.0
      %5553 = vmatprep.subr.mxu0 0.0
      %5554 = vmatpush2.msra.mxu0 0.0
      %5555 = vmatprep.subr.mxu0 0.0
      %5556 = vmatpush2.msra.mxu0 0.0
      %5557 = vmatprep.mubr.f32.mxu0 0.0
      %5558 = vmatmul.mubr.f32.gmra.mxu0 %v5491
      %v5559 = vpop.f32.mrf.mxu0
      %v5560 = vadd.f32 0.0, %v5559
      %v5561 = vpop.f32.mrf.mxu0
      %v5562 = vadd.f32 0.0, %v5561
      %5563 = vdwg.mxu0
      %5564 = vmatprep.subr.mxu0 0.0
      %5565 = vmatpush1.msra.mxu0 0.0
      %5566 = vmatprep.subr.mxu0 0.0
      %5567 = vmatpush1.msra.mxu0 0.0
      %5568 = vmatprep.subr.mxu0 0.0
      %5569 = vmatpush1.msra.mxu0 0.0
      %5570 = vmatprep.subr.mxu0 0.0
      %5571 = vmatpush1.msra.mxu0 0.0
      %5572 = vmatprep.subr.mxu0 0.0
      %5573 = vmatpush1.msra.mxu0 0.0
      %5574 = vmatprep.subr.mxu0 0.0
      %5575 = vmatpush1.msra.mxu0 0.0
      %5576 = vmatprep.subr.mxu0 0.0
      %5577 = vmatpush1.msra.mxu0 0.0
      %5578 = vmatprep.subr.mxu0 0.0
      %5579 = vmatpush1.msra.mxu0 0.0
      %5580 = vmatprep.subr.mxu0 0.0
      %5581 = vmatpush1.msra.mxu0 0.0
      %5582 = vmatprep.subr.mxu0 0.0
      %5583 = vmatpush1.msra.mxu0 0.0
      %5584 = vmatprep.subr.mxu0 0.0
      %5585 = vmatpush1.msra.mxu0 0.0
      %5586 = vmatprep.subr.mxu0 0.0
      %5587 = vmatpush1.msra.mxu0 0.0
      %5588 = vmatprep.subr.mxu0 0.0
      %5589 = vmatpush1.msra.mxu0 0.0
      %5590 = vmatprep.subr.mxu0 0.0
      %5591 = vmatpush1.msra.mxu0 0.0
      %5592 = vmatprep.subr.mxu0 %v5153
      %5593 = vmatpush1.msra.mxu0 %v5151
      %5594 = vmatprep.subr.mxu0 %v5147
      %5595 = vmatpush1.msra.mxu0 %v5145
      %5596 = vmatprep.subr.mxu0 0.0
      %5597 = vmatpush2.msra.mxu0 0.0
      %5598 = vmatprep.subr.mxu0 0.0
      %5599 = vmatpush2.msra.mxu0 0.0
      %5600 = vmatprep.subr.mxu0 0.0
      %5601 = vmatpush2.msra.mxu0 0.0
      %5602 = vmatprep.subr.mxu0 0.0
      %5603 = vmatpush2.msra.mxu0 0.0
      %5604 = vmatprep.subr.mxu0 0.0
      %5605 = vmatpush2.msra.mxu0 0.0
      %5606 = vmatprep.subr.mxu0 0.0
      %5607 = vmatpush2.msra.mxu0 0.0
      %5608 = vmatprep.subr.mxu0 0.0
      %5609 = vmatpush2.msra.mxu0 0.0
      %5610 = vmatprep.subr.mxu0 0.0
      %5611 = vmatpush2.msra.mxu0 0.0
      %5612 = vmatprep.subr.mxu0 0.0
      %5613 = vmatpush2.msra.mxu0 0.0
      %5614 = vmatprep.subr.mxu0 0.0
      %5615 = vmatpush2.msra.mxu0 0.0
      %5616 = vmatprep.subr.mxu0 0.0
      %5617 = vmatpush2.msra.mxu0 0.0
      %5618 = vmatprep.subr.mxu0 0.0
      %5619 = vmatpush2.msra.mxu0 0.0
      %5620 = vmatprep.subr.mxu0 0.0
      %5621 = vmatpush2.msra.mxu0 0.0
      %5622 = vmatprep.subr.mxu0 0.0
      %5623 = vmatpush2.msra.mxu0 0.0
      %5624 = vmatprep.subr.mxu0 0.0
      %5625 = vmatpush2.msra.mxu0 0.0
      %5626 = vmatprep.subr.mxu0 0.0
      %5627 = vmatpush2.msra.mxu0 0.0
      %5628 = vmatprep.mubr.f32.mxu0 0.0
      %5629 = vmatmul.mubr.f32.gmra.mxu0 %v5491
      %v5630 = vpop.f32.mrf.mxu0
      %v5631 = vadd.f32 0.0, %v5630
      %v5632 = vpop.f32.mrf.mxu0
      %v5633 = vadd.f32 0.0, %v5632
      %5634 = vdwg.mxu0
      %5635 = vrot.lane.b32.xlu0 %v5560, 15
      %v5636 = vpop.permute.xlu0 %5635
      %5637 = vrot.lane.b32.xlu0 %v5562, 15
      %v5638 = vpop.permute.xlu0 %5637
      %5639 = vrot.lane.b32.xlu0 %v5631, 15
      %v5640 = vpop.permute.xlu0 %5639
      %5641 = vrot.lane.b32.xlu0 %v5633, 15
      %v5642 = vpop.permute.xlu0 %5641
      %v5643 = vsel %vm1499, %v5640, %v5642
      %v5644 = vsel %vm1499, %v5638, %v5640
      %v5645 = vsel %vm1499, %v5636, %v5638
      %v5646 = vsel %vm1499, %v5642, %v5636
      %v5647 = vmul.f32 %v5646, %v1510
      %v5648 = vmul.f32 %v5645, %v1514
      %v5649 = vmul.f32 %v5644, %v1518
      %v5650 = vmul.f32 %v5643, %v1522
      %v5651 = vadd.f32 %v5484, %v5647
      %v5652 = vadd.f32 %v5485, %v5648
      %v5653 = vadd.f32 %v5486, %v5649
      %v5654 = vadd.f32 %v5487, %v5650
      %s5655 = scalar_lea.vmem %s890, 24
      %v5656 = vld [vmem:[%s5655] sm:$0xff]
      %v5658 = vsel %vm4052, %v5656, 0
      %5660 = vmatprep.subr.mxu0 0.0
      %5661 = vmatpush1.msra.mxu0 0.0
      %5662 = vmatprep.subr.mxu0 0.0
      %5663 = vmatpush1.msra.mxu0 0.0
      %5664 = vmatprep.subr.mxu0 0.0
      %5665 = vmatpush1.msra.mxu0 0.0
      %5666 = vmatprep.subr.mxu0 0.0
      %5667 = vmatpush1.msra.mxu0 0.0
      %5668 = vmatprep.subr.mxu0 0.0
      %5669 = vmatpush1.msra.mxu0 0.0
      %5670 = vmatprep.subr.mxu0 0.0
      %5671 = vmatpush1.msra.mxu0 0.0
      %5672 = vmatprep.subr.mxu0 0.0
      %5673 = vmatpush1.msra.mxu0 0.0
      %5674 = vmatprep.subr.mxu0 0.0
      %5675 = vmatpush1.msra.mxu0 0.0
      %5676 = vmatprep.subr.mxu0 0.0
      %5677 = vmatpush1.msra.mxu0 0.0
      %5678 = vmatprep.subr.mxu0 0.0
      %5679 = vmatpush1.msra.mxu0 0.0
      %5680 = vmatprep.subr.mxu0 0.0
      %5681 = vmatpush1.msra.mxu0 0.0
      %5682 = vmatprep.subr.mxu0 0.0
      %5683 = vmatpush1.msra.mxu0 0.0
      %5684 = vmatprep.subr.mxu0 0.0
      %5685 = vmatpush1.msra.mxu0 0.0
      %5686 = vmatprep.subr.mxu0 0.0
      %5687 = vmatpush1.msra.mxu0 0.0
      %5688 = vmatprep.subr.mxu0 %v5076
      %5689 = vmatpush1.msra.mxu0 %v5074
      %5690 = vmatprep.subr.mxu0 %v5070
      %5691 = vmatpush1.msra.mxu0 %v5068
      %5692 = vmatprep.subr.mxu0 0.0
      %5693 = vmatpush2.msra.mxu0 0.0
      %5694 = vmatprep.subr.mxu0 0.0
      %5695 = vmatpush2.msra.mxu0 0.0
      %5696 = vmatprep.subr.mxu0 0.0
      %5697 = vmatpush2.msra.mxu0 0.0
      %5698 = vmatprep.subr.mxu0 0.0
      %5699 = vmatpush2.msra.mxu0 0.0
      %5700 = vmatprep.subr.mxu0 0.0
      %5701 = vmatpush2.msra.mxu0 0.0
      %5702 = vmatprep.subr.mxu0 0.0
      %5703 = vmatpush2.msra.mxu0 0.0
      %5704 = vmatprep.subr.mxu0 0.0
      %5705 = vmatpush2.msra.mxu0 0.0
      %5706 = vmatprep.subr.mxu0 0.0
      %5707 = vmatpush2.msra.mxu0 0.0
      %5708 = vmatprep.subr.mxu0 0.0
      %5709 = vmatpush2.msra.mxu0 0.0
      %5710 = vmatprep.subr.mxu0 0.0
      %5711 = vmatpush2.msra.mxu0 0.0
      %5712 = vmatprep.subr.mxu0 0.0
      %5713 = vmatpush2.msra.mxu0 0.0
      %5714 = vmatprep.subr.mxu0 0.0
      %5715 = vmatpush2.msra.mxu0 0.0
      %5716 = vmatprep.subr.mxu0 0.0
      %5717 = vmatpush2.msra.mxu0 0.0
      %5718 = vmatprep.subr.mxu0 0.0
      %5719 = vmatpush2.msra.mxu0 0.0
      %5720 = vmatprep.subr.mxu0 0.0
      %5721 = vmatpush2.msra.mxu0 0.0
      %5722 = vmatprep.subr.mxu0 0.0
      %5723 = vmatpush2.msra.mxu0 0.0
      %5724 = vmatprep.mubr.f32.mxu0 0.0
      %5725 = vmatmul.mubr.f32.gmra.mxu0 %v5658
      %v5726 = vpop.f32.mrf.mxu0
      %v5727 = vadd.f32 0.0, %v5726
      %v5728 = vpop.f32.mrf.mxu0
      %v5729 = vadd.f32 0.0, %v5728
      %5730 = vdwg.mxu0
      %5731 = vmatprep.subr.mxu0 0.0
      %5732 = vmatpush1.msra.mxu0 0.0
      %5733 = vmatprep.subr.mxu0 0.0
      %5734 = vmatpush1.msra.mxu0 0.0
      %5735 = vmatprep.subr.mxu0 0.0
      %5736 = vmatpush1.msra.mxu0 0.0
      %5737 = vmatprep.subr.mxu0 0.0
      %5738 = vmatpush1.msra.mxu0 0.0
      %5739 = vmatprep.subr.mxu0 0.0
      %5740 = vmatpush1.msra.mxu0 0.0
      %5741 = vmatprep.subr.mxu0 0.0
      %5742 = vmatpush1.msra.mxu0 0.0
      %5743 = vmatprep.subr.mxu0 0.0
      %5744 = vmatpush1.msra.mxu0 0.0
      %5745 = vmatprep.subr.mxu0 0.0
      %5746 = vmatpush1.msra.mxu0 0.0
      %5747 = vmatprep.subr.mxu0 0.0
      %5748 = vmatpush1.msra.mxu0 0.0
      %5749 = vmatprep.subr.mxu0 0.0
      %5750 = vmatpush1.msra.mxu0 0.0
      %5751 = vmatprep.subr.mxu0 0.0
      %5752 = vmatpush1.msra.mxu0 0.0
      %5753 = vmatprep.subr.mxu0 0.0
      %5754 = vmatpush1.msra.mxu0 0.0
      %5755 = vmatprep.subr.mxu0 0.0
      %5756 = vmatpush1.msra.mxu0 0.0
      %5757 = vmatprep.subr.mxu0 0.0
      %5758 = vmatpush1.msra.mxu0 0.0
      %5759 = vmatprep.subr.mxu0 %v5153
      %5760 = vmatpush1.msra.mxu0 %v5151
      %5761 = vmatprep.subr.mxu0 %v5147
      %5762 = vmatpush1.msra.mxu0 %v5145
      %5763 = vmatprep.subr.mxu0 0.0
      %5764 = vmatpush2.msra.mxu0 0.0
      %5765 = vmatprep.subr.mxu0 0.0
      %5766 = vmatpush2.msra.mxu0 0.0
      %5767 = vmatprep.subr.mxu0 0.0
      %5768 = vmatpush2.msra.mxu0 0.0
      %5769 = vmatprep.subr.mxu0 0.0
      %5770 = vmatpush2.msra.mxu0 0.0
      %5771 = vmatprep.subr.mxu0 0.0
      %5772 = vmatpush2.msra.mxu0 0.0
      %5773 = vmatprep.subr.mxu0 0.0
      %5774 = vmatpush2.msra.mxu0 0.0
      %5775 = vmatprep.subr.mxu0 0.0
      %5776 = vmatpush2.msra.mxu0 0.0
      %5777 = vmatprep.subr.mxu0 0.0
      %5778 = vmatpush2.msra.mxu0 0.0
      %5779 = vmatprep.subr.mxu0 0.0
      %5780 = vmatpush2.msra.mxu0 0.0
      %5781 = vmatprep.subr.mxu0 0.0
      %5782 = vmatpush2.msra.mxu0 0.0
      %5783 = vmatprep.subr.mxu0 0.0
      %5784 = vmatpush2.msra.mxu0 0.0
      %5785 = vmatprep.subr.mxu0 0.0
      %5786 = vmatpush2.msra.mxu0 0.0
      %5787 = vmatprep.subr.mxu0 0.0
      %5788 = vmatpush2.msra.mxu0 0.0
      %5789 = vmatprep.subr.mxu0 0.0
      %5790 = vmatpush2.msra.mxu0 0.0
      %5791 = vmatprep.subr.mxu0 0.0
      %5792 = vmatpush2.msra.mxu0 0.0
      %5793 = vmatprep.subr.mxu0 0.0
      %5794 = vmatpush2.msra.mxu0 0.0
      %5795 = vmatprep.mubr.f32.mxu0 0.0
      %5796 = vmatmul.mubr.f32.gmra.mxu0 %v5658
      %v5797 = vpop.f32.mrf.mxu0
      %v5798 = vadd.f32 0.0, %v5797
      %v5799 = vpop.f32.mrf.mxu0
      %v5800 = vadd.f32 0.0, %v5799
      %5801 = vdwg.mxu0
      %5802 = vrot.lane.b32.xlu0 %v5727, 1
      %v5803 = vpop.permute.xlu0 %5802
      %5804 = vrot.lane.b32.xlu0 %v5729, 1
      %v5805 = vpop.permute.xlu0 %5804
      %5806 = vrot.lane.b32.xlu0 %v5798, 1
      %v5807 = vpop.permute.xlu0 %5806
      %5808 = vrot.lane.b32.xlu0 %v5800, 1
      %v5809 = vpop.permute.xlu0 %5808
      %v5810 = vsel %vm1690, %v5807, %v5809
      %v5811 = vsel %vm1690, %v5805, %v5807
      %v5812 = vsel %vm1690, %v5803, %v5805
      %v5813 = vsel %vm1690, %v5809, %v5803
      %v5814 = vmul.f32 %v5813, %v1701
      %v5815 = vmul.f32 %v5812, %v1705
      %v5816 = vmul.f32 %v5811, %v1709
      %v5817 = vmul.f32 %v5810, %v1713
      %v5818 = vadd.f32 %v5651, %v5814
      %v5819 = vadd.f32 %v5652, %v5815
      %v5820 = vadd.f32 %v5653, %v5816
      %v5821 = vadd.f32 %v5654, %v5817
      %s5822 = scalar_lea.vmem %s890, 32
      %v5823 = vld [vmem:[%s5822] sm:$0xff]
      %v5825 = vsel %vm4052, %v5823, 0
      %5827 = vmatprep.subr.mxu0 0.0
      %5828 = vmatpush1.msra.mxu0 0.0
      %5829 = vmatprep.subr.mxu0 0.0
      %5830 = vmatpush1.msra.mxu0 0.0
      %5831 = vmatprep.subr.mxu0 0.0
      %5832 = vmatpush1.msra.mxu0 0.0
      %5833 = vmatprep.subr.mxu0 0.0
      %5834 = vmatpush1.msra.mxu0 0.0
      %5835 = vmatprep.subr.mxu0 0.0
      %5836 = vmatpush1.msra.mxu0 0.0
      %5837 = vmatprep.subr.mxu0 0.0
      %5838 = vmatpush1.msra.mxu0 0.0
      %5839 = vmatprep.subr.mxu0 0.0
      %5840 = vmatpush1.msra.mxu0 0.0
      %5841 = vmatprep.subr.mxu0 0.0
      %5842 = vmatpush1.msra.mxu0 0.0
      %5843 = vmatprep.subr.mxu0 0.0
      %5844 = vmatpush1.msra.mxu0 0.0
      %5845 = vmatprep.subr.mxu0 0.0
      %5846 = vmatpush1.msra.mxu0 0.0
      %5847 = vmatprep.subr.mxu0 0.0
      %5848 = vmatpush1.msra.mxu0 0.0
      %5849 = vmatprep.subr.mxu0 0.0
      %5850 = vmatpush1.msra.mxu0 0.0
      %5851 = vmatprep.subr.mxu0 0.0
      %5852 = vmatpush1.msra.mxu0 0.0
      %5853 = vmatprep.subr.mxu0 0.0
      %5854 = vmatpush1.msra.mxu0 0.0
      %5855 = vmatprep.subr.mxu0 %v5076
      %5856 = vmatpush1.msra.mxu0 %v5074
      %5857 = vmatprep.subr.mxu0 %v5070
      %5858 = vmatpush1.msra.mxu0 %v5068
      %5859 = vmatprep.subr.mxu0 0.0
      %5860 = vmatpush2.msra.mxu0 0.0
      %5861 = vmatprep.subr.mxu0 0.0
      %5862 = vmatpush2.msra.mxu0 0.0
      %5863 = vmatprep.subr.mxu0 0.0
      %5864 = vmatpush2.msra.mxu0 0.0
      %5865 = vmatprep.subr.mxu0 0.0
      %5866 = vmatpush2.msra.mxu0 0.0
      %5867 = vmatprep.subr.mxu0 0.0
      %5868 = vmatpush2.msra.mxu0 0.0
      %5869 = vmatprep.subr.mxu0 0.0
      %5870 = vmatpush2.msra.mxu0 0.0
      %5871 = vmatprep.subr.mxu0 0.0
      %5872 = vmatpush2.msra.mxu0 0.0
      %5873 = vmatprep.subr.mxu0 0.0
      %5874 = vmatpush2.msra.mxu0 0.0
      %5875 = vmatprep.subr.mxu0 0.0
      %5876 = vmatpush2.msra.mxu0 0.0
      %5877 = vmatprep.subr.mxu0 0.0
      %5878 = vmatpush2.msra.mxu0 0.0
      %5879 = vmatprep.subr.mxu0 0.0
      %5880 = vmatpush2.msra.mxu0 0.0
      %5881 = vmatprep.subr.mxu0 0.0
      %5882 = vmatpush2.msra.mxu0 0.0
      %5883 = vmatprep.subr.mxu0 0.0
      %5884 = vmatpush2.msra.mxu0 0.0
      %5885 = vmatprep.subr.mxu0 0.0
      %5886 = vmatpush2.msra.mxu0 0.0
      %5887 = vmatprep.subr.mxu0 0.0
      %5888 = vmatpush2.msra.mxu0 0.0
      %5889 = vmatprep.subr.mxu0 0.0
      %5890 = vmatpush2.msra.mxu0 0.0
      %5891 = vmatprep.mubr.f32.mxu0 0.0
      %5892 = vmatmul.mubr.f32.gmra.mxu0 %v5825
      %v5893 = vpop.f32.mrf.mxu0
      %v5894 = vadd.f32 0.0, %v5893
      %v5895 = vpop.f32.mrf.mxu0
      %v5896 = vadd.f32 0.0, %v5895
      %5897 = vdwg.mxu0
      %5898 = vmatprep.subr.mxu0 0.0
      %5899 = vmatpush1.msra.mxu0 0.0
      %5900 = vmatprep.subr.mxu0 0.0
      %5901 = vmatpush1.msra.mxu0 0.0
      %5902 = vmatprep.subr.mxu0 0.0
      %5903 = vmatpush1.msra.mxu0 0.0
      %5904 = vmatprep.subr.mxu0 0.0
      %5905 = vmatpush1.msra.mxu0 0.0
      %5906 = vmatprep.subr.mxu0 0.0
      %5907 = vmatpush1.msra.mxu0 0.0
      %5908 = vmatprep.subr.mxu0 0.0
      %5909 = vmatpush1.msra.mxu0 0.0
      %5910 = vmatprep.subr.mxu0 0.0
      %5911 = vmatpush1.msra.mxu0 0.0
      %5912 = vmatprep.subr.mxu0 0.0
      %5913 = vmatpush1.msra.mxu0 0.0
      %5914 = vmatprep.subr.mxu0 0.0
      %5915 = vmatpush1.msra.mxu0 0.0
      %5916 = vmatprep.subr.mxu0 0.0
      %5917 = vmatpush1.msra.mxu0 0.0
      %5918 = vmatprep.subr.mxu0 0.0
      %5919 = vmatpush1.msra.mxu0 0.0
      %5920 = vmatprep.subr.mxu0 0.0
      %5921 = vmatpush1.msra.mxu0 0.0
      %5922 = vmatprep.subr.mxu0 0.0
      %5923 = vmatpush1.msra.mxu0 0.0
      %5924 = vmatprep.subr.mxu0 0.0
      %5925 = vmatpush1.msra.mxu0 0.0
      %5926 = vmatprep.subr.mxu0 %v5153
      %5927 = vmatpush1.msra.mxu0 %v5151
      %5928 = vmatprep.subr.mxu0 %v5147
      %5929 = vmatpush1.msra.mxu0 %v5145
      %5930 = vmatprep.subr.mxu0 0.0
      %5931 = vmatpush2.msra.mxu0 0.0
      %5932 = vmatprep.subr.mxu0 0.0
      %5933 = vmatpush2.msra.mxu0 0.0
      %5934 = vmatprep.subr.mxu0 0.0
      %5935 = vmatpush2.msra.mxu0 0.0
      %5936 = vmatprep.subr.mxu0 0.0
      %5937 = vmatpush2.msra.mxu0 0.0
      %5938 = vmatprep.subr.mxu0 0.0
      %5939 = vmatpush2.msra.mxu0 0.0
      %5940 = vmatprep.subr.mxu0 0.0
      %5941 = vmatpush2.msra.mxu0 0.0
      %5942 = vmatprep.subr.mxu0 0.0
      %5943 = vmatpush2.msra.mxu0 0.0
      %5944 = vmatprep.subr.mxu0 0.0
      %5945 = vmatpush2.msra.mxu0 0.0
      %5946 = vmatprep.subr.mxu0 0.0
      %5947 = vmatpush2.msra.mxu0 0.0
      %5948 = vmatprep.subr.mxu0 0.0
      %5949 = vmatpush2.msra.mxu0 0.0
      %5950 = vmatprep.subr.mxu0 0.0
      %5951 = vmatpush2.msra.mxu0 0.0
      %5952 = vmatprep.subr.mxu0 0.0
      %5953 = vmatpush2.msra.mxu0 0.0
      %5954 = vmatprep.subr.mxu0 0.0
      %5955 = vmatpush2.msra.mxu0 0.0
      %5956 = vmatprep.subr.mxu0 0.0
      %5957 = vmatpush2.msra.mxu0 0.0
      %5958 = vmatprep.subr.mxu0 0.0
      %5959 = vmatpush2.msra.mxu0 0.0
      %5960 = vmatprep.subr.mxu0 0.0
      %5961 = vmatpush2.msra.mxu0 0.0
      %5962 = vmatprep.mubr.f32.mxu0 0.0
      %5963 = vmatmul.mubr.f32.gmra.mxu0 %v5825
      %v5964 = vpop.f32.mrf.mxu0
      %v5965 = vadd.f32 0.0, %v5964
      %v5966 = vpop.f32.mrf.mxu0
      %v5967 = vadd.f32 0.0, %v5966
      %5968 = vdwg.mxu0
      %v5969 = vadd.f32 %v5818, %v5894
      %v5970 = vadd.f32 %v5819, %v5896
      %v5971 = vadd.f32 %v5820, %v5965
      %v5972 = vadd.f32 %v5821, %v5967
      %s5973 = scalar_lea.vmem %s890, 40
      %v5974 = vld [vmem:[%s5973] sm:$0xff]
      %v5976 = vsel %vm4052, %v5974, 0
      %5978 = vmatprep.subr.mxu0 0.0
      %5979 = vmatpush1.msra.mxu0 0.0
      %5980 = vmatprep.subr.mxu0 0.0
      %5981 = vmatpush1.msra.mxu0 0.0
      %5982 = vmatprep.subr.mxu0 0.0
      %5983 = vmatpush1.msra.mxu0 0.0
      %5984 = vmatprep.subr.mxu0 0.0
      %5985 = vmatpush1.msra.mxu0 0.0
      %5986 = vmatprep.subr.mxu0 0.0
      %5987 = vmatpush1.msra.mxu0 0.0
      %5988 = vmatprep.subr.mxu0 0.0
      %5989 = vmatpush1.msra.mxu0 0.0
      %5990 = vmatprep.subr.mxu0 0.0
      %5991 = vmatpush1.msra.mxu0 0.0
      %5992 = vmatprep.subr.mxu0 0.0
      %5993 = vmatpush1.msra.mxu0 0.0
      %5994 = vmatprep.subr.mxu0 0.0
      %5995 = vmatpush1.msra.mxu0 0.0
      %5996 = vmatprep.subr.mxu0 0.0
      %5997 = vmatpush1.msra.mxu0 0.0
      %5998 = vmatprep.subr.mxu0 0.0
      %5999 = vmatpush1.msra.mxu0 0.0
      %6000 = vmatprep.subr.mxu0 0.0
      %6001 = vmatpush1.msra.mxu0 0.0
      %6002 = vmatprep.subr.mxu0 0.0
      %6003 = vmatpush1.msra.mxu0 0.0
      %6004 = vmatprep.subr.mxu0 0.0
      %6005 = vmatpush1.msra.mxu0 0.0
      %6006 = vmatprep.subr.mxu0 %v5076
      %6007 = vmatpush1.msra.mxu0 %v5074
      %6008 = vmatprep.subr.mxu0 %v5070
      %6009 = vmatpush1.msra.mxu0 %v5068
      %6010 = vmatprep.subr.mxu0 0.0
      %6011 = vmatpush2.msra.mxu0 0.0
      %6012 = vmatprep.subr.mxu0 0.0
      %6013 = vmatpush2.msra.mxu0 0.0
      %6014 = vmatprep.subr.mxu0 0.0
      %6015 = vmatpush2.msra.mxu0 0.0
      %6016 = vmatprep.subr.mxu0 0.0
      %6017 = vmatpush2.msra.mxu0 0.0
      %6018 = vmatprep.subr.mxu0 0.0
      %6019 = vmatpush2.msra.mxu0 0.0
      %6020 = vmatprep.subr.mxu0 0.0
      %6021 = vmatpush2.msra.mxu0 0.0
      %6022 = vmatprep.subr.mxu0 0.0
      %6023 = vmatpush2.msra.mxu0 0.0
      %6024 = vmatprep.subr.mxu0 0.0
      %6025 = vmatpush2.msra.mxu0 0.0
      %6026 = vmatprep.subr.mxu0 0.0
      %6027 = vmatpush2.msra.mxu0 0.0
      %6028 = vmatprep.subr.mxu0 0.0
      %6029 = vmatpush2.msra.mxu0 0.0
      %6030 = vmatprep.subr.mxu0 0.0
      %6031 = vmatpush2.msra.mxu0 0.0
      %6032 = vmatprep.subr.mxu0 0.0
      %6033 = vmatpush2.msra.mxu0 0.0
      %6034 = vmatprep.subr.mxu0 0.0
      %6035 = vmatpush2.msra.mxu0 0.0
      %6036 = vmatprep.subr.mxu0 0.0
      %6037 = vmatpush2.msra.mxu0 0.0
      %6038 = vmatprep.subr.mxu0 0.0
      %6039 = vmatpush2.msra.mxu0 0.0
      %6040 = vmatprep.subr.mxu0 0.0
      %6041 = vmatpush2.msra.mxu0 0.0
      %6042 = vmatprep.mubr.f32.mxu0 0.0
      %6043 = vmatmul.mubr.f32.gmra.mxu0 %v5976
      %v6044 = vpop.f32.mrf.mxu0
      %v6045 = vadd.f32 0.0, %v6044
      %v6046 = vpop.f32.mrf.mxu0
      %v6047 = vadd.f32 0.0, %v6046
      %6048 = vdwg.mxu0
      %6049 = vmatprep.subr.mxu0 0.0
      %6050 = vmatpush1.msra.mxu0 0.0
      %6051 = vmatprep.subr.mxu0 0.0
      %6052 = vmatpush1.msra.mxu0 0.0
      %6053 = vmatprep.subr.mxu0 0.0
      %6054 = vmatpush1.msra.mxu0 0.0
      %6055 = vmatprep.subr.mxu0 0.0
      %6056 = vmatpush1.msra.mxu0 0.0
      %6057 = vmatprep.subr.mxu0 0.0
      %6058 = vmatpush1.msra.mxu0 0.0
      %6059 = vmatprep.subr.mxu0 0.0
      %6060 = vmatpush1.msra.mxu0 0.0
      %6061 = vmatprep.subr.mxu0 0.0
      %6062 = vmatpush1.msra.mxu0 0.0
      %6063 = vmatprep.subr.mxu0 0.0
      %6064 = vmatpush1.msra.mxu0 0.0
      %6065 = vmatprep.subr.mxu0 0.0
      %6066 = vmatpush1.msra.mxu0 0.0
      %6067 = vmatprep.subr.mxu0 0.0
      %6068 = vmatpush1.msra.mxu0 0.0
      %6069 = vmatprep.subr.mxu0 0.0
      %6070 = vmatpush1.msra.mxu0 0.0
      %6071 = vmatprep.subr.mxu0 0.0
      %6072 = vmatpush1.msra.mxu0 0.0
      %6073 = vmatprep.subr.mxu0 0.0
      %6074 = vmatpush1.msra.mxu0 0.0
      %6075 = vmatprep.subr.mxu0 0.0
      %6076 = vmatpush1.msra.mxu0 0.0
      %6077 = vmatprep.subr.mxu0 %v5153
      %6078 = vmatpush1.msra.mxu0 %v5151
      %6079 = vmatprep.subr.mxu0 %v5147
      %6080 = vmatpush1.msra.mxu0 %v5145
      %6081 = vmatprep.subr.mxu0 0.0
      %6082 = vmatpush2.msra.mxu0 0.0
      %6083 = vmatprep.subr.mxu0 0.0
      %6084 = vmatpush2.msra.mxu0 0.0
      %6085 = vmatprep.subr.mxu0 0.0
      %6086 = vmatpush2.msra.mxu0 0.0
      %6087 = vmatprep.subr.mxu0 0.0
      %6088 = vmatpush2.msra.mxu0 0.0
      %6089 = vmatprep.subr.mxu0 0.0
      %6090 = vmatpush2.msra.mxu0 0.0
      %6091 = vmatprep.subr.mxu0 0.0
      %6092 = vmatpush2.msra.mxu0 0.0
      %6093 = vmatprep.subr.mxu0 0.0
      %6094 = vmatpush2.msra.mxu0 0.0
      %6095 = vmatprep.subr.mxu0 0.0
      %6096 = vmatpush2.msra.mxu0 0.0
      %6097 = vmatprep.subr.mxu0 0.0
      %6098 = vmatpush2.msra.mxu0 0.0
      %6099 = vmatprep.subr.mxu0 0.0
      %6100 = vmatpush2.msra.mxu0 0.0
      %6101 = vmatprep.subr.mxu0 0.0
      %6102 = vmatpush2.msra.mxu0 0.0
      %6103 = vmatprep.subr.mxu0 0.0
      %6104 = vmatpush2.msra.mxu0 0.0
      %6105 = vmatprep.subr.mxu0 0.0
      %6106 = vmatpush2.msra.mxu0 0.0
      %6107 = vmatprep.subr.mxu0 0.0
      %6108 = vmatpush2.msra.mxu0 0.0
      %6109 = vmatprep.subr.mxu0 0.0
      %6110 = vmatpush2.msra.mxu0 0.0
      %6111 = vmatprep.subr.mxu0 0.0
      %6112 = vmatpush2.msra.mxu0 0.0
      %6113 = vmatprep.mubr.f32.mxu0 0.0
      %6114 = vmatmul.mubr.f32.gmra.mxu0 %v5976
      %v6115 = vpop.f32.mrf.mxu0
      %v6116 = vadd.f32 0.0, %v6115
      %v6117 = vpop.f32.mrf.mxu0
      %v6118 = vadd.f32 0.0, %v6117
      %6119 = vdwg.mxu0
      %6120 = vrot.lane.b32.xlu0 %v6045, 127
      %v6121 = vpop.permute.xlu0 %6120
      %6122 = vrot.lane.b32.xlu0 %v6047, 127
      %v6123 = vpop.permute.xlu0 %6122
      %6124 = vrot.lane.b32.xlu0 %v6116, 127
      %v6125 = vpop.permute.xlu0 %6124
      %6126 = vrot.lane.b32.xlu0 %v6118, 127
      %v6127 = vpop.permute.xlu0 %6126
      %v6128 = vsel %vm2032, %v6125, %v6127
      %v6129 = vsel %vm2032, %v6123, %v6125
      %v6130 = vsel %vm2032, %v6121, %v6123
      %v6131 = vsel %vm2032, %v6127, %v6121
      %v6132 = vmul.f32 %v6130, %v2043
      %v6133 = vmul.f32 %v6129, %v2047
      %v6134 = vmul.f32 %v6128, %v2051
      %v6135 = vmul.f32 %v6131, %v2055
      %v6136 = vadd.f32 %v5969, %v6132
      %v6137 = vadd.f32 %v5970, %v6133
      %v6138 = vadd.f32 %v5971, %v6134
      %v6139 = vadd.f32 %v5972, %v6135
      %s6140 = scalar_lea.vmem %s890, 48
      %v6141 = vld [vmem:[%s6140] sm:$0xff]
      %v6143 = vsel %vm4052, %v6141, 0
      %6145 = vmatprep.subr.mxu0 0.0
      %6146 = vmatpush1.msra.mxu0 0.0
      %6147 = vmatprep.subr.mxu0 0.0
      %6148 = vmatpush1.msra.mxu0 0.0
      %6149 = vmatprep.subr.mxu0 0.0
      %6150 = vmatpush1.msra.mxu0 0.0
      %6151 = vmatprep.subr.mxu0 0.0
      %6152 = vmatpush1.msra.mxu0 0.0
      %6153 = vmatprep.subr.mxu0 0.0
      %6154 = vmatpush1.msra.mxu0 0.0
      %6155 = vmatprep.subr.mxu0 0.0
      %6156 = vmatpush1.msra.mxu0 0.0
      %6157 = vmatprep.subr.mxu0 0.0
      %6158 = vmatpush1.msra.mxu0 0.0
      %6159 = vmatprep.subr.mxu0 0.0
      %6160 = vmatpush1.msra.mxu0 0.0
      %6161 = vmatprep.subr.mxu0 0.0
      %6162 = vmatpush1.msra.mxu0 0.0
      %6163 = vmatprep.subr.mxu0 0.0
      %6164 = vmatpush1.msra.mxu0 0.0
      %6165 = vmatprep.subr.mxu0 0.0
      %6166 = vmatpush1.msra.mxu0 0.0
      %6167 = vmatprep.subr.mxu0 0.0
      %6168 = vmatpush1.msra.mxu0 0.0
      %6169 = vmatprep.subr.mxu0 0.0
      %6170 = vmatpush1.msra.mxu0 0.0
      %6171 = vmatprep.subr.mxu0 0.0
      %6172 = vmatpush1.msra.mxu0 0.0
      %6173 = vmatprep.subr.mxu0 %v5076
      %6174 = vmatpush1.msra.mxu0 %v5074
      %6175 = vmatprep.subr.mxu0 %v5070
      %6176 = vmatpush1.msra.mxu0 %v5068
      %6177 = vmatprep.subr.mxu0 0.0
      %6178 = vmatpush2.msra.mxu0 0.0
      %6179 = vmatprep.subr.mxu0 0.0
      %6180 = vmatpush2.msra.mxu0 0.0
      %6181 = vmatprep.subr.mxu0 0.0
      %6182 = vmatpush2.msra.mxu0 0.0
      %6183 = vmatprep.subr.mxu0 0.0
      %6184 = vmatpush2.msra.mxu0 0.0
      %6185 = vmatprep.subr.mxu0 0.0
      %6186 = vmatpush2.msra.mxu0 0.0
      %6187 = vmatprep.subr.mxu0 0.0
      %6188 = vmatpush2.msra.mxu0 0.0
      %6189 = vmatprep.subr.mxu0 0.0
      %6190 = vmatpush2.msra.mxu0 0.0
      %6191 = vmatprep.subr.mxu0 0.0
      %6192 = vmatpush2.msra.mxu0 0.0
      %6193 = vmatprep.subr.mxu0 0.0
      %6194 = vmatpush2.msra.mxu0 0.0
      %6195 = vmatprep.subr.mxu0 0.0
      %6196 = vmatpush2.msra.mxu0 0.0
      %6197 = vmatprep.subr.mxu0 0.0
      %6198 = vmatpush2.msra.mxu0 0.0
      %6199 = vmatprep.subr.mxu0 0.0
      %6200 = vmatpush2.msra.mxu0 0.0
      %6201 = vmatprep.subr.mxu0 0.0
      %6202 = vmatpush2.msra.mxu0 0.0
      %6203 = vmatprep.subr.mxu0 0.0
      %6204 = vmatpush2.msra.mxu0 0.0
      %6205 = vmatprep.subr.mxu0 0.0
      %6206 = vmatpush2.msra.mxu0 0.0
      %6207 = vmatprep.subr.mxu0 0.0
      %6208 = vmatpush2.msra.mxu0 0.0
      %6209 = vmatprep.mubr.f32.mxu0 0.0
      %6210 = vmatmul.mubr.f32.gmra.mxu0 %v6143
      %v6211 = vpop.f32.mrf.mxu0
      %v6212 = vadd.f32 0.0, %v6211
      %v6213 = vpop.f32.mrf.mxu0
      %v6214 = vadd.f32 0.0, %v6213
      %6215 = vdwg.mxu0
      %6216 = vmatprep.subr.mxu0 0.0
      %6217 = vmatpush1.msra.mxu0 0.0
      %6218 = vmatprep.subr.mxu0 0.0
      %6219 = vmatpush1.msra.mxu0 0.0
      %6220 = vmatprep.subr.mxu0 0.0
      %6221 = vmatpush1.msra.mxu0 0.0
      %6222 = vmatprep.subr.mxu0 0.0
      %6223 = vmatpush1.msra.mxu0 0.0
      %6224 = vmatprep.subr.mxu0 0.0
      %6225 = vmatpush1.msra.mxu0 0.0
      %6226 = vmatprep.subr.mxu0 0.0
      %6227 = vmatpush1.msra.mxu0 0.0
      %6228 = vmatprep.subr.mxu0 0.0
      %6229 = vmatpush1.msra.mxu0 0.0
      %6230 = vmatprep.subr.mxu0 0.0
      %6231 = vmatpush1.msra.mxu0 0.0
      %6232 = vmatprep.subr.mxu0 0.0
      %6233 = vmatpush1.msra.mxu0 0.0
      %6234 = vmatprep.subr.mxu0 0.0
      %6235 = vmatpush1.msra.mxu0 0.0
      %6236 = vmatprep.subr.mxu0 0.0
      %6237 = vmatpush1.msra.mxu0 0.0
      %6238 = vmatprep.subr.mxu0 0.0
      %6239 = vmatpush1.msra.mxu0 0.0
      %6240 = vmatprep.subr.mxu0 0.0
      %6241 = vmatpush1.msra.mxu0 0.0
      %6242 = vmatprep.subr.mxu0 0.0
      %6243 = vmatpush1.msra.mxu0 0.0
      %6244 = vmatprep.subr.mxu0 %v5153
      %6245 = vmatpush1.msra.mxu0 %v5151
      %6246 = vmatprep.subr.mxu0 %v5147
      %6247 = vmatpush1.msra.mxu0 %v5145
      %6248 = vmatprep.subr.mxu0 0.0
      %6249 = vmatpush2.msra.mxu0 0.0
      %6250 = vmatprep.subr.mxu0 0.0
      %6251 = vmatpush2.msra.mxu0 0.0
      %6252 = vmatprep.subr.mxu0 0.0
      %6253 = vmatpush2.msra.mxu0 0.0
      %6254 = vmatprep.subr.mxu0 0.0
      %6255 = vmatpush2.msra.mxu0 0.0
      %6256 = vmatprep.subr.mxu0 0.0
      %6257 = vmatpush2.msra.mxu0 0.0
      %6258 = vmatprep.subr.mxu0 0.0
      %6259 = vmatpush2.msra.mxu0 0.0
      %6260 = vmatprep.subr.mxu0 0.0
      %6261 = vmatpush2.msra.mxu0 0.0
      %6262 = vmatprep.subr.mxu0 0.0
      %6263 = vmatpush2.msra.mxu0 0.0
      %6264 = vmatprep.subr.mxu0 0.0
      %6265 = vmatpush2.msra.mxu0 0.0
      %6266 = vmatprep.subr.mxu0 0.0
      %6267 = vmatpush2.msra.mxu0 0.0
      %6268 = vmatprep.subr.mxu0 0.0
      %6269 = vmatpush2.msra.mxu0 0.0
      %6270 = vmatprep.subr.mxu0 0.0
      %6271 = vmatpush2.msra.mxu0 0.0
      %6272 = vmatprep.subr.mxu0 0.0
      %6273 = vmatpush2.msra.mxu0 0.0
      %6274 = vmatprep.subr.mxu0 0.0
      %6275 = vmatpush2.msra.mxu0 0.0
      %6276 = vmatprep.subr.mxu0 0.0
      %6277 = vmatpush2.msra.mxu0 0.0
      %6278 = vmatprep.subr.mxu0 0.0
      %6279 = vmatpush2.msra.mxu0 0.0
      %6280 = vmatprep.mubr.f32.mxu0 0.0
      %6281 = vmatmul.mubr.f32.gmra.mxu0 %v6143
      %v6282 = vpop.f32.mrf.mxu0
      %v6283 = vadd.f32 0.0, %v6282
      %v6284 = vpop.f32.mrf.mxu0
      %v6285 = vadd.f32 0.0, %v6284
      %6286 = vdwg.mxu0
      %6287 = vrot.lane.b32.xlu0 %v6212, 113
      %v6288 = vpop.permute.xlu0 %6287
      %6289 = vrot.lane.b32.xlu0 %v6214, 113
      %v6290 = vpop.permute.xlu0 %6289
      %6291 = vrot.lane.b32.xlu0 %v6283, 113
      %v6292 = vpop.permute.xlu0 %6291
      %6293 = vrot.lane.b32.xlu0 %v6285, 113
      %v6294 = vpop.permute.xlu0 %6293
      %v6295 = vsel %vm2223, %v6292, %v6294
      %v6296 = vsel %vm2223, %v6290, %v6292
      %v6297 = vsel %vm2223, %v6288, %v6290
      %v6298 = vsel %vm2223, %v6294, %v6288
      %v6299 = vmul.f32 %v6297, %v2234
      %v6300 = vmul.f32 %v6296, %v2238
      %v6301 = vmul.f32 %v6295, %v2242
      %v6302 = vmul.f32 %v6298, %v2246
      %v6303 = vadd.f32 %v6136, %v6299
      %v6304 = vadd.f32 %v6137, %v6300
      %v6305 = vadd.f32 %v6138, %v6301
      %v6306 = vadd.f32 %v6139, %v6302
      %s6307 = scalar_lea.vmem %s890, 56
      %v6308 = vld [vmem:[%s6307] sm:$0xff]
      %v6310 = vsel %vm4052, %v6308, 0
      %6312 = vmatprep.subr.mxu0 0.0
      %6313 = vmatpush1.msra.mxu0 0.0
      %6314 = vmatprep.subr.mxu0 0.0
      %6315 = vmatpush1.msra.mxu0 0.0
      %6316 = vmatprep.subr.mxu0 0.0
      %6317 = vmatpush1.msra.mxu0 0.0
      %6318 = vmatprep.subr.mxu0 0.0
      %6319 = vmatpush1.msra.mxu0 0.0
      %6320 = vmatprep.subr.mxu0 0.0
      %6321 = vmatpush1.msra.mxu0 0.0
      %6322 = vmatprep.subr.mxu0 0.0
      %6323 = vmatpush1.msra.mxu0 0.0
      %6324 = vmatprep.subr.mxu0 0.0
      %6325 = vmatpush1.msra.mxu0 0.0
      %6326 = vmatprep.subr.mxu0 0.0
      %6327 = vmatpush1.msra.mxu0 0.0
      %6328 = vmatprep.subr.mxu0 0.0
      %6329 = vmatpush1.msra.mxu0 0.0
      %6330 = vmatprep.subr.mxu0 0.0
      %6331 = vmatpush1.msra.mxu0 0.0
      %6332 = vmatprep.subr.mxu0 0.0
      %6333 = vmatpush1.msra.mxu0 0.0
      %6334 = vmatprep.subr.mxu0 0.0
      %6335 = vmatpush1.msra.mxu0 0.0
      %6336 = vmatprep.subr.mxu0 0.0
      %6337 = vmatpush1.msra.mxu0 0.0
      %6338 = vmatprep.subr.mxu0 0.0
      %6339 = vmatpush1.msra.mxu0 0.0
      %6340 = vmatprep.subr.mxu0 %v5076
      %6341 = vmatpush1.msra.mxu0 %v5074
      %6342 = vmatprep.subr.mxu0 %v5070
      %6343 = vmatpush1.msra.mxu0 %v5068
      %6344 = vmatprep.subr.mxu0 0.0
      %6345 = vmatpush2.msra.mxu0 0.0
      %6346 = vmatprep.subr.mxu0 0.0
      %6347 = vmatpush2.msra.mxu0 0.0
      %6348 = vmatprep.subr.mxu0 0.0
      %6349 = vmatpush2.msra.mxu0 0.0
      %6350 = vmatprep.subr.mxu0 0.0
      %6351 = vmatpush2.msra.mxu0 0.0
      %6352 = vmatprep.subr.mxu0 0.0
      %6353 = vmatpush2.msra.mxu0 0.0
      %6354 = vmatprep.subr.mxu0 0.0
      %6355 = vmatpush2.msra.mxu0 0.0
      %6356 = vmatprep.subr.mxu0 0.0
      %6357 = vmatpush2.msra.mxu0 0.0
      %6358 = vmatprep.subr.mxu0 0.0
      %6359 = vmatpush2.msra.mxu0 0.0
      %6360 = vmatprep.subr.mxu0 0.0
      %6361 = vmatpush2.msra.mxu0 0.0
      %6362 = vmatprep.subr.mxu0 0.0
      %6363 = vmatpush2.msra.mxu0 0.0
      %6364 = vmatprep.subr.mxu0 0.0
      %6365 = vmatpush2.msra.mxu0 0.0
      %6366 = vmatprep.subr.mxu0 0.0
      %6367 = vmatpush2.msra.mxu0 0.0
      %6368 = vmatprep.subr.mxu0 0.0
      %6369 = vmatpush2.msra.mxu0 0.0
      %6370 = vmatprep.subr.mxu0 0.0
      %6371 = vmatpush2.msra.mxu0 0.0
      %6372 = vmatprep.subr.mxu0 0.0
      %6373 = vmatpush2.msra.mxu0 0.0
      %6374 = vmatprep.subr.mxu0 0.0
      %6375 = vmatpush2.msra.mxu0 0.0
      %6376 = vmatprep.mubr.f32.mxu0 0.0
      %6377 = vmatmul.mubr.f32.gmra.mxu0 %v6310
      %v6378 = vpop.f32.mrf.mxu0
      %v6379 = vadd.f32 0.0, %v6378
      %v6380 = vpop.f32.mrf.mxu0
      %v6381 = vadd.f32 0.0, %v6380
      %6382 = vdwg.mxu0
      %6383 = vmatprep.subr.mxu0 0.0
      %6384 = vmatpush1.msra.mxu0 0.0
      %6385 = vmatprep.subr.mxu0 0.0
      %6386 = vmatpush1.msra.mxu0 0.0
      %6387 = vmatprep.subr.mxu0 0.0
      %6388 = vmatpush1.msra.mxu0 0.0
      %6389 = vmatprep.subr.mxu0 0.0
      %6390 = vmatpush1.msra.mxu0 0.0
      %6391 = vmatprep.subr.mxu0 0.0
      %6392 = vmatpush1.msra.mxu0 0.0
      %6393 = vmatprep.subr.mxu0 0.0
      %6394 = vmatpush1.msra.mxu0 0.0
      %6395 = vmatprep.subr.mxu0 0.0
      %6396 = vmatpush1.msra.mxu0 0.0
      %6397 = vmatprep.subr.mxu0 0.0
      %6398 = vmatpush1.msra.mxu0 0.0
      %6399 = vmatprep.subr.mxu0 0.0
      %6400 = vmatpush1.msra.mxu0 0.0
      %6401 = vmatprep.subr.mxu0 0.0
      %6402 = vmatpush1.msra.mxu0 0.0
      %6403 = vmatprep.subr.mxu0 0.0
      %6404 = vmatpush1.msra.mxu0 0.0
      %6405 = vmatprep.subr.mxu0 0.0
      %6406 = vmatpush1.msra.mxu0 0.0
      %6407 = vmatprep.subr.mxu0 0.0
      %6408 = vmatpush1.msra.mxu0 0.0
      %6409 = vmatprep.subr.mxu0 0.0
      %6410 = vmatpush1.msra.mxu0 0.0
      %6411 = vmatprep.subr.mxu0 %v5153
      %6412 = vmatpush1.msra.mxu0 %v5151
      %6413 = vmatprep.subr.mxu0 %v5147
      %6414 = vmatpush1.msra.mxu0 %v5145
      %6415 = vmatprep.subr.mxu0 0.0
      %6416 = vmatpush2.msra.mxu0 0.0
      %6417 = vmatprep.subr.mxu0 0.0
      %6418 = vmatpush2.msra.mxu0 0.0
      %6419 = vmatprep.subr.mxu0 0.0
      %6420 = vmatpush2.msra.mxu0 0.0
      %6421 = vmatprep.subr.mxu0 0.0
      %6422 = vmatpush2.msra.mxu0 0.0
      %6423 = vmatprep.subr.mxu0 0.0
      %6424 = vmatpush2.msra.mxu0 0.0
      %6425 = vmatprep.subr.mxu0 0.0
      %6426 = vmatpush2.msra.mxu0 0.0
      %6427 = vmatprep.subr.mxu0 0.0
      %6428 = vmatpush2.msra.mxu0 0.0
      %6429 = vmatprep.subr.mxu0 0.0
      %6430 = vmatpush2.msra.mxu0 0.0
      %6431 = vmatprep.subr.mxu0 0.0
      %6432 = vmatpush2.msra.mxu0 0.0
      %6433 = vmatprep.subr.mxu0 0.0
      %6434 = vmatpush2.msra.mxu0 0.0
      %6435 = vmatprep.subr.mxu0 0.0
      %6436 = vmatpush2.msra.mxu0 0.0
      %6437 = vmatprep.subr.mxu0 0.0
      %6438 = vmatpush2.msra.mxu0 0.0
      %6439 = vmatprep.subr.mxu0 0.0
      %6440 = vmatpush2.msra.mxu0 0.0
      %6441 = vmatprep.subr.mxu0 0.0
      %6442 = vmatpush2.msra.mxu0 0.0
      %6443 = vmatprep.subr.mxu0 0.0
      %6444 = vmatpush2.msra.mxu0 0.0
      %6445 = vmatprep.subr.mxu0 0.0
      %6446 = vmatpush2.msra.mxu0 0.0
      %6447 = vmatprep.mubr.f32.mxu0 0.0
      %6448 = vmatmul.mubr.f32.gmra.mxu0 %v6310
      %v6449 = vpop.f32.mrf.mxu0
      %v6450 = vadd.f32 0.0, %v6449
      %v6451 = vpop.f32.mrf.mxu0
      %v6452 = vadd.f32 0.0, %v6451
      %6453 = vdwg.mxu0
      %6454 = vrot.lane.b32.xlu0 %v6379, 112
      %v6455 = vpop.permute.xlu0 %6454
      %6456 = vrot.lane.b32.xlu0 %v6381, 112
      %v6457 = vpop.permute.xlu0 %6456
      %6458 = vrot.lane.b32.xlu0 %v6450, 112
      %v6459 = vpop.permute.xlu0 %6458
      %6460 = vrot.lane.b32.xlu0 %v6452, 112
      %v6461 = vpop.permute.xlu0 %6460
      %v6462 = vsel %vm2414, %v6459, %v6461
      %v6463 = vsel %vm2414, %v6457, %v6459
      %v6464 = vsel %vm2414, %v6455, %v6457
      %v6465 = vsel %vm2414, %v6461, %v6455
      %v6466 = vmul.f32 %v6464, %v2425
      %v6467 = vmul.f32 %v6463, %v2429
      %v6468 = vmul.f32 %v6462, %v2433
      %v6469 = vmul.f32 %v6465, %v2437
      %v6470 = vadd.f32 %v6303, %v6466
      %v6471 = vadd.f32 %v6304, %v6467
      %v6472 = vadd.f32 %v6305, %v6468
      %v6473 = vadd.f32 %v6306, %v6469
      %s6474 = scalar_lea.vmem %s890, 64
      %v6475 = vld [vmem:[%s6474] sm:$0xff]
      %v6477 = vsel %vm4052, %v6475, 0
      %6479 = vmatprep.subr.mxu0 0.0
      %6480 = vmatpush1.msra.mxu0 0.0
      %6481 = vmatprep.subr.mxu0 0.0
      %6482 = vmatpush1.msra.mxu0 0.0
      %6483 = vmatprep.subr.mxu0 0.0
      %6484 = vmatpush1.msra.mxu0 0.0
      %6485 = vmatprep.subr.mxu0 0.0
      %6486 = vmatpush1.msra.mxu0 0.0
      %6487 = vmatprep.subr.mxu0 0.0
      %6488 = vmatpush1.msra.mxu0 0.0
      %6489 = vmatprep.subr.mxu0 0.0
      %6490 = vmatpush1.msra.mxu0 0.0
      %6491 = vmatprep.subr.mxu0 0.0
      %6492 = vmatpush1.msra.mxu0 0.0
      %6493 = vmatprep.subr.mxu0 0.0
      %6494 = vmatpush1.msra.mxu0 0.0
      %6495 = vmatprep.subr.mxu0 0.0
      %6496 = vmatpush1.msra.mxu0 0.0
      %6497 = vmatprep.subr.mxu0 0.0
      %6498 = vmatpush1.msra.mxu0 0.0
      %6499 = vmatprep.subr.mxu0 0.0
      %6500 = vmatpush1.msra.mxu0 0.0
      %6501 = vmatprep.subr.mxu0 0.0
      %6502 = vmatpush1.msra.mxu0 0.0
      %6503 = vmatprep.subr.mxu0 0.0
      %6504 = vmatpush1.msra.mxu0 0.0
      %6505 = vmatprep.subr.mxu0 0.0
      %6506 = vmatpush1.msra.mxu0 0.0
      %6507 = vmatprep.subr.mxu0 %v5076
      %6508 = vmatpush1.msra.mxu0 %v5074
      %6509 = vmatprep.subr.mxu0 %v5070
      %6510 = vmatpush1.msra.mxu0 %v5068
      %6511 = vmatprep.subr.mxu0 0.0
      %6512 = vmatpush2.msra.mxu0 0.0
      %6513 = vmatprep.subr.mxu0 0.0
      %6514 = vmatpush2.msra.mxu0 0.0
      %6515 = vmatprep.subr.mxu0 0.0
      %6516 = vmatpush2.msra.mxu0 0.0
      %6517 = vmatprep.subr.mxu0 0.0
      %6518 = vmatpush2.msra.mxu0 0.0
      %6519 = vmatprep.subr.mxu0 0.0
      %6520 = vmatpush2.msra.mxu0 0.0
      %6521 = vmatprep.subr.mxu0 0.0
      %6522 = vmatpush2.msra.mxu0 0.0
      %6523 = vmatprep.subr.mxu0 0.0
      %6524 = vmatpush2.msra.mxu0 0.0
      %6525 = vmatprep.subr.mxu0 0.0
      %6526 = vmatpush2.msra.mxu0 0.0
      %6527 = vmatprep.subr.mxu0 0.0
      %6528 = vmatpush2.msra.mxu0 0.0
      %6529 = vmatprep.subr.mxu0 0.0
      %6530 = vmatpush2.msra.mxu0 0.0
      %6531 = vmatprep.subr.mxu0 0.0
      %6532 = vmatpush2.msra.mxu0 0.0
      %6533 = vmatprep.subr.mxu0 0.0
      %6534 = vmatpush2.msra.mxu0 0.0
      %6535 = vmatprep.subr.mxu0 0.0
      %6536 = vmatpush2.msra.mxu0 0.0
      %6537 = vmatprep.subr.mxu0 0.0
      %6538 = vmatpush2.msra.mxu0 0.0
      %6539 = vmatprep.subr.mxu0 0.0
      %6540 = vmatpush2.msra.mxu0 0.0
      %6541 = vmatprep.subr.mxu0 0.0
      %6542 = vmatpush2.msra.mxu0 0.0
      %6543 = vmatprep.mubr.f32.mxu0 0.0
      %6544 = vmatmul.mubr.f32.gmra.mxu0 %v6477
      %v6545 = vpop.f32.mrf.mxu0
      %v6546 = vadd.f32 0.0, %v6545
      %v6547 = vpop.f32.mrf.mxu0
      %v6548 = vadd.f32 0.0, %v6547
      %6549 = vdwg.mxu0
      %6550 = vmatprep.subr.mxu0 0.0
      %6551 = vmatpush1.msra.mxu0 0.0
      %6552 = vmatprep.subr.mxu0 0.0
      %6553 = vmatpush1.msra.mxu0 0.0
      %6554 = vmatprep.subr.mxu0 0.0
      %6555 = vmatpush1.msra.mxu0 0.0
      %6556 = vmatprep.subr.mxu0 0.0
      %6557 = vmatpush1.msra.mxu0 0.0
      %6558 = vmatprep.subr.mxu0 0.0
      %6559 = vmatpush1.msra.mxu0 0.0
      %6560 = vmatprep.subr.mxu0 0.0
      %6561 = vmatpush1.msra.mxu0 0.0
      %6562 = vmatprep.subr.mxu0 0.0
      %6563 = vmatpush1.msra.mxu0 0.0
      %6564 = vmatprep.subr.mxu0 0.0
      %6565 = vmatpush1.msra.mxu0 0.0
      %6566 = vmatprep.subr.mxu0 0.0
      %6567 = vmatpush1.msra.mxu0 0.0
      %6568 = vmatprep.subr.mxu0 0.0
      %6569 = vmatpush1.msra.mxu0 0.0
      %6570 = vmatprep.subr.mxu0 0.0
      %6571 = vmatpush1.msra.mxu0 0.0
      %6572 = vmatprep.subr.mxu0 0.0
      %6573 = vmatpush1.msra.mxu0 0.0
      %6574 = vmatprep.subr.mxu0 0.0
      %6575 = vmatpush1.msra.mxu0 0.0
      %6576 = vmatprep.subr.mxu0 0.0
      %6577 = vmatpush1.msra.mxu0 0.0
      %6578 = vmatprep.subr.mxu0 %v5153
      %6579 = vmatpush1.msra.mxu0 %v5151
      %6580 = vmatprep.subr.mxu0 %v5147
      %6581 = vmatpush1.msra.mxu0 %v5145
      %6582 = vmatprep.subr.mxu0 0.0
      %6583 = vmatpush2.msra.mxu0 0.0
      %6584 = vmatprep.subr.mxu0 0.0
      %6585 = vmatpush2.msra.mxu0 0.0
      %6586 = vmatprep.subr.mxu0 0.0
      %6587 = vmatpush2.msra.mxu0 0.0
      %6588 = vmatprep.subr.mxu0 0.0
      %6589 = vmatpush2.msra.mxu0 0.0
      %6590 = vmatprep.subr.mxu0 0.0
      %6591 = vmatpush2.msra.mxu0 0.0
      %6592 = vmatprep.subr.mxu0 0.0
      %6593 = vmatpush2.msra.mxu0 0.0
      %6594 = vmatprep.subr.mxu0 0.0
      %6595 = vmatpush2.msra.mxu0 0.0
      %6596 = vmatprep.subr.mxu0 0.0
      %6597 = vmatpush2.msra.mxu0 0.0
      %6598 = vmatprep.subr.mxu0 0.0
      %6599 = vmatpush2.msra.mxu0 0.0
      %6600 = vmatprep.subr.mxu0 0.0
      %6601 = vmatpush2.msra.mxu0 0.0
      %6602 = vmatprep.subr.mxu0 0.0
      %6603 = vmatpush2.msra.mxu0 0.0
      %6604 = vmatprep.subr.mxu0 0.0
      %6605 = vmatpush2.msra.mxu0 0.0
      %6606 = vmatprep.subr.mxu0 0.0
      %6607 = vmatpush2.msra.mxu0 0.0
      %6608 = vmatprep.subr.mxu0 0.0
      %6609 = vmatpush2.msra.mxu0 0.0
      %6610 = vmatprep.subr.mxu0 0.0
      %6611 = vmatpush2.msra.mxu0 0.0
      %6612 = vmatprep.subr.mxu0 0.0
      %6613 = vmatpush2.msra.mxu0 0.0
      %6614 = vmatprep.mubr.f32.mxu0 0.0
      %6615 = vmatmul.mubr.f32.gmra.mxu0 %v6477
      %v6616 = vpop.f32.mrf.mxu0
      %v6617 = vadd.f32 0.0, %v6616
      %v6618 = vpop.f32.mrf.mxu0
      %v6619 = vadd.f32 0.0, %v6618
      %6620 = vdwg.mxu0
      %6621 = vrot.lane.b32.xlu0 %v6546, 111
      %v6622 = vpop.permute.xlu0 %6621
      %6623 = vrot.lane.b32.xlu0 %v6548, 111
      %v6624 = vpop.permute.xlu0 %6623
      %6625 = vrot.lane.b32.xlu0 %v6617, 111
      %v6626 = vpop.permute.xlu0 %6625
      %6627 = vrot.lane.b32.xlu0 %v6619, 111
      %v6628 = vpop.permute.xlu0 %6627
      %v6629 = vsel %vm2605, %v6626, %v6628
      %v6630 = vsel %vm2605, %v6624, %v6626
      %v6631 = vsel %vm2605, %v6622, %v6624
      %v6632 = vsel %vm2605, %v6628, %v6622
      %v6633 = vmul.f32 %v6631, %v2616
      %v6634 = vmul.f32 %v6630, %v2620
      %v6635 = vmul.f32 %v6629, %v2624
      %v6636 = vmul.f32 %v6632, %v2628
      %v6637 = vadd.f32 %v6470, %v6633
      %v6638 = vadd.f32 %v6471, %v6634
      %v6639 = vadd.f32 %v6472, %v6635
      %v6640 = vadd.f32 %v6473, %v6636
      %6641 = vrot.lane.b32.xlu0 %v2798, 17
      %v6642 = vpop.permute.xlu0 %6641
      %6643 = vrot.lane.b32.xlu0 %v2799, 17
      %v6644 = vpop.permute.xlu0 %6643
      %6645 = vrot.lane.b32.xlu0 %v2800, 17
      %v6646 = vpop.permute.xlu0 %6645
      %6647 = vrot.lane.b32.xlu0 %v2801, 17
      %v6648 = vpop.permute.xlu0 %6647
      %v6649 = vsel %vm1126, %v6646, %v6648
      %v6650 = vsel %vm1126, %v6644, %v6646
      %v6651 = vsel %vm1126, %v6642, %v6644
      %v6652 = vsel %vm1126, %v6648, %v6642
      %v6653 = vmul.f32 %v6652, %v1136
      %v6654 = vmul.f32 %v6651, %v1140
      %v6655 = vmul.f32 %v6650, %v1144
      %v6656 = vmul.f32 %v6649, %v1148
      %v6657 = vld [vmem:[%s895] sm:$0xff]
      %v6659 = vsel %vm1200, %v6657, 0
      %6661 = vmatprep.subr.mxu0 0.0
      %6662 = vmatpush1.msra.mxu0 0.0
      %6663 = vmatprep.subr.mxu0 0.0
      %6664 = vmatpush1.msra.mxu0 0.0
      %6665 = vmatprep.subr.mxu0 0.0
      %6666 = vmatpush1.msra.mxu0 0.0
      %6667 = vmatprep.subr.mxu0 0.0
      %6668 = vmatpush1.msra.mxu0 0.0
      %6669 = vmatprep.subr.mxu0 0.0
      %6670 = vmatpush1.msra.mxu0 0.0
      %6671 = vmatprep.subr.mxu0 0.0
      %6672 = vmatpush1.msra.mxu0 0.0
      %6673 = vmatprep.subr.mxu0 0.0
      %6674 = vmatpush1.msra.mxu0 0.0
      %6675 = vmatprep.subr.mxu0 0.0
      %6676 = vmatpush1.msra.mxu0 0.0
      %6677 = vmatprep.subr.mxu0 0.0
      %6678 = vmatpush1.msra.mxu0 0.0
      %6679 = vmatprep.subr.mxu0 0.0
      %6680 = vmatpush1.msra.mxu0 0.0
      %6681 = vmatprep.subr.mxu0 0.0
      %6682 = vmatpush1.msra.mxu0 0.0
      %6683 = vmatprep.subr.mxu0 0.0
      %6684 = vmatpush1.msra.mxu0 0.0
      %6685 = vmatprep.subr.mxu0 0.0
      %6686 = vmatpush1.msra.mxu0 0.0
      %6687 = vmatprep.subr.mxu0 0.0
      %6688 = vmatpush1.msra.mxu0 0.0
      %6689 = vmatprep.subr.mxu0 0.0
      %6690 = vmatpush1.msra.mxu0 0.0
      %6691 = vmatprep.subr.mxu0 %v6654
      %6692 = vmatpush1.msra.mxu0 %v6653
      %6693 = vmatprep.subr.mxu0 0.0
      %6694 = vmatpush2.msra.mxu0 0.0
      %6695 = vmatprep.subr.mxu0 0.0
      %6696 = vmatpush2.msra.mxu0 0.0
      %6697 = vmatprep.subr.mxu0 0.0
      %6698 = vmatpush2.msra.mxu0 0.0
      %6699 = vmatprep.subr.mxu0 0.0
      %6700 = vmatpush2.msra.mxu0 0.0
      %6701 = vmatprep.subr.mxu0 0.0
      %6702 = vmatpush2.msra.mxu0 0.0
      %6703 = vmatprep.subr.mxu0 0.0
      %6704 = vmatpush2.msra.mxu0 0.0
      %6705 = vmatprep.subr.mxu0 0.0
      %6706 = vmatpush2.msra.mxu0 0.0
      %6707 = vmatprep.subr.mxu0 0.0
      %6708 = vmatpush2.msra.mxu0 0.0
      %6709 = vmatprep.subr.mxu0 0.0
      %6710 = vmatpush2.msra.mxu0 0.0
      %6711 = vmatprep.subr.mxu0 0.0
      %6712 = vmatpush2.msra.mxu0 0.0
      %6713 = vmatprep.subr.mxu0 0.0
      %6714 = vmatpush2.msra.mxu0 0.0
      %6715 = vmatprep.subr.mxu0 0.0
      %6716 = vmatpush2.msra.mxu0 0.0
      %6717 = vmatprep.subr.mxu0 0.0
      %6718 = vmatpush2.msra.mxu0 0.0
      %6719 = vmatprep.subr.mxu0 0.0
      %6720 = vmatpush2.msra.mxu0 0.0
      %6721 = vmatprep.subr.mxu0 0.0
      %6722 = vmatpush2.msra.mxu0 0.0
      %6723 = vmatprep.subr.mxu0 0.0
      %6724 = vmatpush2.msra.mxu0 0.0
      %6725 = vmatprep.mubr.f32.mxu0 0.0
      %6726 = vmatmul.mubr.f32.gmra.mxu0 %v6659
      %v6727 = vpop.f32.mrf.mxu0
      %v6728 = vadd.f32 0.0, %v6727
      %v6729 = vpop.f32.mrf.mxu0
      %v6730 = vadd.f32 0.0, %v6729
      %6731 = vdwg.mxu0
      %6732 = vmatprep.subr.mxu0 0.0
      %6733 = vmatpush1.msra.mxu0 0.0
      %6734 = vmatprep.subr.mxu0 0.0
      %6735 = vmatpush1.msra.mxu0 0.0
      %6736 = vmatprep.subr.mxu0 0.0
      %6737 = vmatpush1.msra.mxu0 0.0
      %6738 = vmatprep.subr.mxu0 0.0
      %6739 = vmatpush1.msra.mxu0 0.0
      %6740 = vmatprep.subr.mxu0 0.0
      %6741 = vmatpush1.msra.mxu0 0.0
      %6742 = vmatprep.subr.mxu0 0.0
      %6743 = vmatpush1.msra.mxu0 0.0
      %6744 = vmatprep.subr.mxu0 0.0
      %6745 = vmatpush1.msra.mxu0 0.0
      %6746 = vmatprep.subr.mxu0 0.0
      %6747 = vmatpush1.msra.mxu0 0.0
      %6748 = vmatprep.subr.mxu0 0.0
      %6749 = vmatpush1.msra.mxu0 0.0
      %6750 = vmatprep.subr.mxu0 0.0
      %6751 = vmatpush1.msra.mxu0 0.0
      %6752 = vmatprep.subr.mxu0 0.0
      %6753 = vmatpush1.msra.mxu0 0.0
      %6754 = vmatprep.subr.mxu0 0.0
      %6755 = vmatpush1.msra.mxu0 0.0
      %6756 = vmatprep.subr.mxu0 0.0
      %6757 = vmatpush1.msra.mxu0 0.0
      %6758 = vmatprep.subr.mxu0 0.0
      %6759 = vmatpush1.msra.mxu0 0.0
      %6760 = vmatprep.subr.mxu0 0.0
      %6761 = vmatpush1.msra.mxu0 0.0
      %6762 = vmatprep.subr.mxu0 %v6656
      %6763 = vmatpush1.msra.mxu0 %v6655
      %6764 = vmatprep.subr.mxu0 0.0
      %6765 = vmatpush2.msra.mxu0 0.0
      %6766 = vmatprep.subr.mxu0 0.0
      %6767 = vmatpush2.msra.mxu0 0.0
      %6768 = vmatprep.subr.mxu0 0.0
      %6769 = vmatpush2.msra.mxu0 0.0
      %6770 = vmatprep.subr.mxu0 0.0
      %6771 = vmatpush2.msra.mxu0 0.0
      %6772 = vmatprep.subr.mxu0 0.0
      %6773 = vmatpush2.msra.mxu0 0.0
      %6774 = vmatprep.subr.mxu0 0.0
      %6775 = vmatpush2.msra.mxu0 0.0
      %6776 = vmatprep.subr.mxu0 0.0
      %6777 = vmatpush2.msra.mxu0 0.0
      %6778 = vmatprep.subr.mxu0 0.0
      %6779 = vmatpush2.msra.mxu0 0.0
      %6780 = vmatprep.subr.mxu0 0.0
      %6781 = vmatpush2.msra.mxu0 0.0
      %6782 = vmatprep.subr.mxu0 0.0
      %6783 = vmatpush2.msra.mxu0 0.0
      %6784 = vmatprep.subr.mxu0 0.0
      %6785 = vmatpush2.msra.mxu0 0.0
      %6786 = vmatprep.subr.mxu0 0.0
      %6787 = vmatpush2.msra.mxu0 0.0
      %6788 = vmatprep.subr.mxu0 0.0
      %6789 = vmatpush2.msra.mxu0 0.0
      %6790 = vmatprep.subr.mxu0 0.0
      %6791 = vmatpush2.msra.mxu0 0.0
      %6792 = vmatprep.subr.mxu0 0.0
      %6793 = vmatpush2.msra.mxu0 0.0
      %6794 = vmatprep.subr.mxu0 0.0
      %6795 = vmatpush2.msra.mxu0 0.0
      %6796 = vmatprep.mubr.f32.mxu0 0.0
      %6797 = vmatmul.mubr.f32.gmra.mxu0 %v6659
      %v6798 = vpop.f32.mrf.mxu0
      %v6799 = vadd.f32 0.0, %v6798
      %v6800 = vpop.f32.mrf.mxu0
      %v6801 = vadd.f32 0.0, %v6800
      %6802 = vdwg.mxu0
      %v6803 = vadd.f32 %v6637, %v6728
      %v6804 = vadd.f32 %v6638, %v6730
      %v6805 = vadd.f32 %v6639, %v6799
      %v6806 = vadd.f32 %v6640, %v6801
      %6807 = vrot.lane.b32.xlu0 %v2798, 16
      %v6808 = vpop.permute.xlu0 %6807
      %6809 = vrot.lane.b32.xlu0 %v2799, 16
      %v6810 = vpop.permute.xlu0 %6809
      %6811 = vrot.lane.b32.xlu0 %v2800, 16
      %v6812 = vpop.permute.xlu0 %6811
      %6813 = vrot.lane.b32.xlu0 %v2801, 16
      %v6814 = vpop.permute.xlu0 %6813
      %v6815 = vsel %vm1166, %v6812, %v6814
      %v6816 = vsel %vm1166, %v6810, %v6812
      %v6817 = vsel %vm1166, %v6808, %v6810
      %v6818 = vsel %vm1166, %v6814, %v6808
      %v6819 = vmul.f32 %v6818, %v1177
      %v6820 = vmul.f32 %v6817, %v1181
      %v6821 = vmul.f32 %v6816, %v1185
      %v6822 = vmul.f32 %v6815, %v1189
      %s6823 = scalar_lea.vmem %s895, 8
      %v6824 = vld [vmem:[%s6823] sm:$0xff]
      %v6826 = vsel %vm1200, %v6824, 0
      %6828 = vmatprep.subr.mxu0 0.0
      %6829 = vmatpush1.msra.mxu0 0.0
      %6830 = vmatprep.subr.mxu0 0.0
      %6831 = vmatpush1.msra.mxu0 0.0
      %6832 = vmatprep.subr.mxu0 0.0
      %6833 = vmatpush1.msra.mxu0 0.0
      %6834 = vmatprep.subr.mxu0 0.0
      %6835 = vmatpush1.msra.mxu0 0.0
      %6836 = vmatprep.subr.mxu0 0.0
      %6837 = vmatpush1.msra.mxu0 0.0
      %6838 = vmatprep.subr.mxu0 0.0
      %6839 = vmatpush1.msra.mxu0 0.0
      %6840 = vmatprep.subr.mxu0 0.0
      %6841 = vmatpush1.msra.mxu0 0.0
      %6842 = vmatprep.subr.mxu0 0.0
      %6843 = vmatpush1.msra.mxu0 0.0
      %6844 = vmatprep.subr.mxu0 0.0
      %6845 = vmatpush1.msra.mxu0 0.0
      %6846 = vmatprep.subr.mxu0 0.0
      %6847 = vmatpush1.msra.mxu0 0.0
      %6848 = vmatprep.subr.mxu0 0.0
      %6849 = vmatpush1.msra.mxu0 0.0
      %6850 = vmatprep.subr.mxu0 0.0
      %6851 = vmatpush1.msra.mxu0 0.0
      %6852 = vmatprep.subr.mxu0 0.0
      %6853 = vmatpush1.msra.mxu0 0.0
      %6854 = vmatprep.subr.mxu0 0.0
      %6855 = vmatpush1.msra.mxu0 0.0
      %6856 = vmatprep.subr.mxu0 0.0
      %6857 = vmatpush1.msra.mxu0 0.0
      %6858 = vmatprep.subr.mxu0 %v6820
      %6859 = vmatpush1.msra.mxu0 %v6819
      %6860 = vmatprep.subr.mxu0 0.0
      %6861 = vmatpush2.msra.mxu0 0.0
      %6862 = vmatprep.subr.mxu0 0.0
      %6863 = vmatpush2.msra.mxu0 0.0
      %6864 = vmatprep.subr.mxu0 0.0
      %6865 = vmatpush2.msra.mxu0 0.0
      %6866 = vmatprep.subr.mxu0 0.0
      %6867 = vmatpush2.msra.mxu0 0.0
      %6868 = vmatprep.subr.mxu0 0.0
      %6869 = vmatpush2.msra.mxu0 0.0
      %6870 = vmatprep.subr.mxu0 0.0
      %6871 = vmatpush2.msra.mxu0 0.0
      %6872 = vmatprep.subr.mxu0 0.0
      %6873 = vmatpush2.msra.mxu0 0.0
      %6874 = vmatprep.subr.mxu0 0.0
      %6875 = vmatpush2.msra.mxu0 0.0
      %6876 = vmatprep.subr.mxu0 0.0
      %6877 = vmatpush2.msra.mxu0 0.0
      %6878 = vmatprep.subr.mxu0 0.0
      %6879 = vmatpush2.msra.mxu0 0.0
      %6880 = vmatprep.subr.mxu0 0.0
      %6881 = vmatpush2.msra.mxu0 0.0
      %6882 = vmatprep.subr.mxu0 0.0
      %6883 = vmatpush2.msra.mxu0 0.0
      %6884 = vmatprep.subr.mxu0 0.0
      %6885 = vmatpush2.msra.mxu0 0.0
      %6886 = vmatprep.subr.mxu0 0.0
      %6887 = vmatpush2.msra.mxu0 0.0
      %6888 = vmatprep.subr.mxu0 0.0
      %6889 = vmatpush2.msra.mxu0 0.0
      %6890 = vmatprep.subr.mxu0 0.0
      %6891 = vmatpush2.msra.mxu0 0.0
      %6892 = vmatprep.mubr.f32.mxu0 0.0
      %6893 = vmatmul.mubr.f32.gmra.mxu0 %v6826
      %v6894 = vpop.f32.mrf.mxu0
      %v6895 = vadd.f32 0.0, %v6894
      %v6896 = vpop.f32.mrf.mxu0
      %v6897 = vadd.f32 0.0, %v6896
      %6898 = vdwg.mxu0
      %6899 = vmatprep.subr.mxu0 0.0
      %6900 = vmatpush1.msra.mxu0 0.0
      %6901 = vmatprep.subr.mxu0 0.0
      %6902 = vmatpush1.msra.mxu0 0.0
      %6903 = vmatprep.subr.mxu0 0.0
      %6904 = vmatpush1.msra.mxu0 0.0
      %6905 = vmatprep.subr.mxu0 0.0
      %6906 = vmatpush1.msra.mxu0 0.0
      %6907 = vmatprep.subr.mxu0 0.0
      %6908 = vmatpush1.msra.mxu0 0.0
      %6909 = vmatprep.subr.mxu0 0.0
      %6910 = vmatpush1.msra.mxu0 0.0
      %6911 = vmatprep.subr.mxu0 0.0
      %6912 = vmatpush1.msra.mxu0 0.0
      %6913 = vmatprep.subr.mxu0 0.0
      %6914 = vmatpush1.msra.mxu0 0.0
      %6915 = vmatprep.subr.mxu0 0.0
      %6916 = vmatpush1.msra.mxu0 0.0
      %6917 = vmatprep.subr.mxu0 0.0
      %6918 = vmatpush1.msra.mxu0 0.0
      %6919 = vmatprep.subr.mxu0 0.0
      %6920 = vmatpush1.msra.mxu0 0.0
      %6921 = vmatprep.subr.mxu0 0.0
      %6922 = vmatpush1.msra.mxu0 0.0
      %6923 = vmatprep.subr.mxu0 0.0
      %6924 = vmatpush1.msra.mxu0 0.0
      %6925 = vmatprep.subr.mxu0 0.0
      %6926 = vmatpush1.msra.mxu0 0.0
      %6927 = vmatprep.subr.mxu0 0.0
      %6928 = vmatpush1.msra.mxu0 0.0
      %6929 = vmatprep.subr.mxu0 %v6822
      %6930 = vmatpush1.msra.mxu0 %v6821
      %6931 = vmatprep.subr.mxu0 0.0
      %6932 = vmatpush2.msra.mxu0 0.0
      %6933 = vmatprep.subr.mxu0 0.0
      %6934 = vmatpush2.msra.mxu0 0.0
      %6935 = vmatprep.subr.mxu0 0.0
      %6936 = vmatpush2.msra.mxu0 0.0
      %6937 = vmatprep.subr.mxu0 0.0
      %6938 = vmatpush2.msra.mxu0 0.0
      %6939 = vmatprep.subr.mxu0 0.0
      %6940 = vmatpush2.msra.mxu0 0.0
      %6941 = vmatprep.subr.mxu0 0.0
      %6942 = vmatpush2.msra.mxu0 0.0
      %6943 = vmatprep.subr.mxu0 0.0
      %6944 = vmatpush2.msra.mxu0 0.0
      %6945 = vmatprep.subr.mxu0 0.0
      %6946 = vmatpush2.msra.mxu0 0.0
      %6947 = vmatprep.subr.mxu0 0.0
      %6948 = vmatpush2.msra.mxu0 0.0
      %6949 = vmatprep.subr.mxu0 0.0
      %6950 = vmatpush2.msra.mxu0 0.0
      %6951 = vmatprep.subr.mxu0 0.0
      %6952 = vmatpush2.msra.mxu0 0.0
      %6953 = vmatprep.subr.mxu0 0.0
      %6954 = vmatpush2.msra.mxu0 0.0
      %6955 = vmatprep.subr.mxu0 0.0
      %6956 = vmatpush2.msra.mxu0 0.0
      %6957 = vmatprep.subr.mxu0 0.0
      %6958 = vmatpush2.msra.mxu0 0.0
      %6959 = vmatprep.subr.mxu0 0.0
      %6960 = vmatpush2.msra.mxu0 0.0
      %6961 = vmatprep.subr.mxu0 0.0
      %6962 = vmatpush2.msra.mxu0 0.0
      %6963 = vmatprep.mubr.f32.mxu0 0.0
      %6964 = vmatmul.mubr.f32.gmra.mxu0 %v6826
      %v6965 = vpop.f32.mrf.mxu0
      %v6966 = vadd.f32 0.0, %v6965
      %v6967 = vpop.f32.mrf.mxu0
      %v6968 = vadd.f32 0.0, %v6967
      %6969 = vdwg.mxu0
      %v6970 = vadd.f32 %v6803, %v6895
      %v6971 = vadd.f32 %v6804, %v6897
      %v6972 = vadd.f32 %v6805, %v6966
      %v6973 = vadd.f32 %v6806, %v6968
      %6974 = vrot.lane.b32.xlu0 %v2798, 15
      %v6975 = vpop.permute.xlu0 %6974
      %6976 = vrot.lane.b32.xlu0 %v2799, 15
      %v6977 = vpop.permute.xlu0 %6976
      %6978 = vrot.lane.b32.xlu0 %v2800, 15
      %v6979 = vpop.permute.xlu0 %6978
      %6980 = vrot.lane.b32.xlu0 %v2801, 15
      %v6981 = vpop.permute.xlu0 %6980
      %v6982 = vsel %vm1499, %v6979, %v6981
      %v6983 = vsel %vm1499, %v6977, %v6979
      %v6984 = vsel %vm1499, %v6975, %v6977
      %v6985 = vsel %vm1499, %v6981, %v6975
      %v6986 = vmul.f32 %v6985, %v1510
      %v6987 = vmul.f32 %v6984, %v1514
      %v6988 = vmul.f32 %v6983, %v1518
      %v6989 = vmul.f32 %v6982, %v1522
      %s6990 = scalar_lea.vmem %s895, 16
      %v6991 = vld [vmem:[%s6990] sm:$0xff]
      %v6993 = vsel %vm1200, %v6991, 0
      %6995 = vmatprep.subr.mxu0 0.0
      %6996 = vmatpush1.msra.mxu0 0.0
      %6997 = vmatprep.subr.mxu0 0.0
      %6998 = vmatpush1.msra.mxu0 0.0
      %6999 = vmatprep.subr.mxu0 0.0
      %7000 = vmatpush1.msra.mxu0 0.0
      %7001 = vmatprep.subr.mxu0 0.0
      %7002 = vmatpush1.msra.mxu0 0.0
      %7003 = vmatprep.subr.mxu0 0.0
      %7004 = vmatpush1.msra.mxu0 0.0
      %7005 = vmatprep.subr.mxu0 0.0
      %7006 = vmatpush1.msra.mxu0 0.0
      %7007 = vmatprep.subr.mxu0 0.0
      %7008 = vmatpush1.msra.mxu0 0.0
      %7009 = vmatprep.subr.mxu0 0.0
      %7010 = vmatpush1.msra.mxu0 0.0
      %7011 = vmatprep.subr.mxu0 0.0
      %7012 = vmatpush1.msra.mxu0 0.0
      %7013 = vmatprep.subr.mxu0 0.0
      %7014 = vmatpush1.msra.mxu0 0.0
      %7015 = vmatprep.subr.mxu0 0.0
      %7016 = vmatpush1.msra.mxu0 0.0
      %7017 = vmatprep.subr.mxu0 0.0
      %7018 = vmatpush1.msra.mxu0 0.0
      %7019 = vmatprep.subr.mxu0 0.0
      %7020 = vmatpush1.msra.mxu0 0.0
      %7021 = vmatprep.subr.mxu0 0.0
      %7022 = vmatpush1.msra.mxu0 0.0
      %7023 = vmatprep.subr.mxu0 0.0
      %7024 = vmatpush1.msra.mxu0 0.0
      %7025 = vmatprep.subr.mxu0 %v6987
      %7026 = vmatpush1.msra.mxu0 %v6986
      %7027 = vmatprep.subr.mxu0 0.0
      %7028 = vmatpush2.msra.mxu0 0.0
      %7029 = vmatprep.subr.mxu0 0.0
      %7030 = vmatpush2.msra.mxu0 0.0
      %7031 = vmatprep.subr.mxu0 0.0
      %7032 = vmatpush2.msra.mxu0 0.0
      %7033 = vmatprep.subr.mxu0 0.0
      %7034 = vmatpush2.msra.mxu0 0.0
      %7035 = vmatprep.subr.mxu0 0.0
      %7036 = vmatpush2.msra.mxu0 0.0
      %7037 = vmatprep.subr.mxu0 0.0
      %7038 = vmatpush2.msra.mxu0 0.0
      %7039 = vmatprep.subr.mxu0 0.0
      %7040 = vmatpush2.msra.mxu0 0.0
      %7041 = vmatprep.subr.mxu0 0.0
      %7042 = vmatpush2.msra.mxu0 0.0
      %7043 = vmatprep.subr.mxu0 0.0
      %7044 = vmatpush2.msra.mxu0 0.0
      %7045 = vmatprep.subr.mxu0 0.0
      %7046 = vmatpush2.msra.mxu0 0.0
      %7047 = vmatprep.subr.mxu0 0.0
      %7048 = vmatpush2.msra.mxu0 0.0
      %7049 = vmatprep.subr.mxu0 0.0
      %7050 = vmatpush2.msra.mxu0 0.0
      %7051 = vmatprep.subr.mxu0 0.0
      %7052 = vmatpush2.msra.mxu0 0.0
      %7053 = vmatprep.subr.mxu0 0.0
      %7054 = vmatpush2.msra.mxu0 0.0
      %7055 = vmatprep.subr.mxu0 0.0
      %7056 = vmatpush2.msra.mxu0 0.0
      %7057 = vmatprep.subr.mxu0 0.0
      %7058 = vmatpush2.msra.mxu0 0.0
      %7059 = vmatprep.mubr.f32.mxu0 0.0
      %7060 = vmatmul.mubr.f32.gmra.mxu0 %v6993
      %v7061 = vpop.f32.mrf.mxu0
      %v7062 = vadd.f32 0.0, %v7061
      %v7063 = vpop.f32.mrf.mxu0
      %v7064 = vadd.f32 0.0, %v7063
      %7065 = vdwg.mxu0
      %7066 = vmatprep.subr.mxu0 0.0
      %7067 = vmatpush1.msra.mxu0 0.0
      %7068 = vmatprep.subr.mxu0 0.0
      %7069 = vmatpush1.msra.mxu0 0.0
      %7070 = vmatprep.subr.mxu0 0.0
      %7071 = vmatpush1.msra.mxu0 0.0
      %7072 = vmatprep.subr.mxu0 0.0
      %7073 = vmatpush1.msra.mxu0 0.0
      %7074 = vmatprep.subr.mxu0 0.0
      %7075 = vmatpush1.msra.mxu0 0.0
      %7076 = vmatprep.subr.mxu0 0.0
      %7077 = vmatpush1.msra.mxu0 0.0
      %7078 = vmatprep.subr.mxu0 0.0
      %7079 = vmatpush1.msra.mxu0 0.0
      %7080 = vmatprep.subr.mxu0 0.0
      %7081 = vmatpush1.msra.mxu0 0.0
      %7082 = vmatprep.subr.mxu0 0.0
      %7083 = vmatpush1.msra.mxu0 0.0
      %7084 = vmatprep.subr.mxu0 0.0
      %7085 = vmatpush1.msra.mxu0 0.0
      %7086 = vmatprep.subr.mxu0 0.0
      %7087 = vmatpush1.msra.mxu0 0.0
      %7088 = vmatprep.subr.mxu0 0.0
      %7089 = vmatpush1.msra.mxu0 0.0
      %7090 = vmatprep.subr.mxu0 0.0
      %7091 = vmatpush1.msra.mxu0 0.0
      %7092 = vmatprep.subr.mxu0 0.0
      %7093 = vmatpush1.msra.mxu0 0.0
      %7094 = vmatprep.subr.mxu0 0.0
      %7095 = vmatpush1.msra.mxu0 0.0
      %7096 = vmatprep.subr.mxu0 %v6989
      %7097 = vmatpush1.msra.mxu0 %v6988
      %7098 = vmatprep.subr.mxu0 0.0
      %7099 = vmatpush2.msra.mxu0 0.0
      %7100 = vmatprep.subr.mxu0 0.0
      %7101 = vmatpush2.msra.mxu0 0.0
      %7102 = vmatprep.subr.mxu0 0.0
      %7103 = vmatpush2.msra.mxu0 0.0
      %7104 = vmatprep.subr.mxu0 0.0
      %7105 = vmatpush2.msra.mxu0 0.0
      %7106 = vmatprep.subr.mxu0 0.0
      %7107 = vmatpush2.msra.mxu0 0.0
      %7108 = vmatprep.subr.mxu0 0.0
      %7109 = vmatpush2.msra.mxu0 0.0
      %7110 = vmatprep.subr.mxu0 0.0
      %7111 = vmatpush2.msra.mxu0 0.0
      %7112 = vmatprep.subr.mxu0 0.0
      %7113 = vmatpush2.msra.mxu0 0.0
      %7114 = vmatprep.subr.mxu0 0.0
      %7115 = vmatpush2.msra.mxu0 0.0
      %7116 = vmatprep.subr.mxu0 0.0
      %7117 = vmatpush2.msra.mxu0 0.0
      %7118 = vmatprep.subr.mxu0 0.0
      %7119 = vmatpush2.msra.mxu0 0.0
      %7120 = vmatprep.subr.mxu0 0.0
      %7121 = vmatpush2.msra.mxu0 0.0
      %7122 = vmatprep.subr.mxu0 0.0
      %7123 = vmatpush2.msra.mxu0 0.0
      %7124 = vmatprep.subr.mxu0 0.0
      %7125 = vmatpush2.msra.mxu0 0.0
      %7126 = vmatprep.subr.mxu0 0.0
      %7127 = vmatpush2.msra.mxu0 0.0
      %7128 = vmatprep.subr.mxu0 0.0
      %7129 = vmatpush2.msra.mxu0 0.0
      %7130 = vmatprep.mubr.f32.mxu0 0.0
      %7131 = vmatmul.mubr.f32.gmra.mxu0 %v6993
      %v7132 = vpop.f32.mrf.mxu0
      %v7133 = vadd.f32 0.0, %v7132
      %v7134 = vpop.f32.mrf.mxu0
      %v7135 = vadd.f32 0.0, %v7134
      %7136 = vdwg.mxu0
      %v7137 = vadd.f32 %v6970, %v7062
      %v7138 = vadd.f32 %v6971, %v7064
      %v7139 = vadd.f32 %v6972, %v7133
      %v7140 = vadd.f32 %v6973, %v7135
      %7141 = vrot.lane.b32.xlu0 %v2798, 1
      %v7142 = vpop.permute.xlu0 %7141
      %7143 = vrot.lane.b32.xlu0 %v2799, 1
      %v7144 = vpop.permute.xlu0 %7143
      %7145 = vrot.lane.b32.xlu0 %v2800, 1
      %v7146 = vpop.permute.xlu0 %7145
      %7147 = vrot.lane.b32.xlu0 %v2801, 1
      %v7148 = vpop.permute.xlu0 %7147
      %v7149 = vsel %vm1690, %v7146, %v7148
      %v7150 = vsel %vm1690, %v7144, %v7146
      %v7151 = vsel %vm1690, %v7142, %v7144
      %v7152 = vsel %vm1690, %v7148, %v7142
      %v7153 = vmul.f32 %v7152, %v1701
      %v7154 = vmul.f32 %v7151, %v1705
      %v7155 = vmul.f32 %v7150, %v1709
      %v7156 = vmul.f32 %v7149, %v1713
      %s7157 = scalar_lea.vmem %s895, 24
      %v7158 = vld [vmem:[%s7157] sm:$0xff]
      %v7160 = vsel %vm1200, %v7158, 0
      %7162 = vmatprep.subr.mxu0 0.0
      %7163 = vmatpush1.msra.mxu0 0.0
      %7164 = vmatprep.subr.mxu0 0.0
      %7165 = vmatpush1.msra.mxu0 0.0
      %7166 = vmatprep.subr.mxu0 0.0
      %7167 = vmatpush1.msra.mxu0 0.0
      %7168 = vmatprep.subr.mxu0 0.0
      %7169 = vmatpush1.msra.mxu0 0.0
      %7170 = vmatprep.subr.mxu0 0.0
      %7171 = vmatpush1.msra.mxu0 0.0
      %7172 = vmatprep.subr.mxu0 0.0
      %7173 = vmatpush1.msra.mxu0 0.0
      %7174 = vmatprep.subr.mxu0 0.0
      %7175 = vmatpush1.msra.mxu0 0.0
      %7176 = vmatprep.subr.mxu0 0.0
      %7177 = vmatpush1.msra.mxu0 0.0
      %7178 = vmatprep.subr.mxu0 0.0
      %7179 = vmatpush1.msra.mxu0 0.0
      %7180 = vmatprep.subr.mxu0 0.0
      %7181 = vmatpush1.msra.mxu0 0.0
      %7182 = vmatprep.subr.mxu0 0.0
      %7183 = vmatpush1.msra.mxu0 0.0
      %7184 = vmatprep.subr.mxu0 0.0
      %7185 = vmatpush1.msra.mxu0 0.0
      %7186 = vmatprep.subr.mxu0 0.0
      %7187 = vmatpush1.msra.mxu0 0.0
      %7188 = vmatprep.subr.mxu0 0.0
      %7189 = vmatpush1.msra.mxu0 0.0
      %7190 = vmatprep.subr.mxu0 0.0
      %7191 = vmatpush1.msra.mxu0 0.0
      %7192 = vmatprep.subr.mxu0 %v7154
      %7193 = vmatpush1.msra.mxu0 %v7153
      %7194 = vmatprep.subr.mxu0 0.0
      %7195 = vmatpush2.msra.mxu0 0.0
      %7196 = vmatprep.subr.mxu0 0.0
      %7197 = vmatpush2.msra.mxu0 0.0
      %7198 = vmatprep.subr.mxu0 0.0
      %7199 = vmatpush2.msra.mxu0 0.0
      %7200 = vmatprep.subr.mxu0 0.0
      %7201 = vmatpush2.msra.mxu0 0.0
      %7202 = vmatprep.subr.mxu0 0.0
      %7203 = vmatpush2.msra.mxu0 0.0
      %7204 = vmatprep.subr.mxu0 0.0
      %7205 = vmatpush2.msra.mxu0 0.0
      %7206 = vmatprep.subr.mxu0 0.0
      %7207 = vmatpush2.msra.mxu0 0.0
      %7208 = vmatprep.subr.mxu0 0.0
      %7209 = vmatpush2.msra.mxu0 0.0
      %7210 = vmatprep.subr.mxu0 0.0
      %7211 = vmatpush2.msra.mxu0 0.0
      %7212 = vmatprep.subr.mxu0 0.0
      %7213 = vmatpush2.msra.mxu0 0.0
      %7214 = vmatprep.subr.mxu0 0.0
      %7215 = vmatpush2.msra.mxu0 0.0
      %7216 = vmatprep.subr.mxu0 0.0
      %7217 = vmatpush2.msra.mxu0 0.0
      %7218 = vmatprep.subr.mxu0 0.0
      %7219 = vmatpush2.msra.mxu0 0.0
      %7220 = vmatprep.subr.mxu0 0.0
      %7221 = vmatpush2.msra.mxu0 0.0
      %7222 = vmatprep.subr.mxu0 0.0
      %7223 = vmatpush2.msra.mxu0 0.0
      %7224 = vmatprep.subr.mxu0 0.0
      %7225 = vmatpush2.msra.mxu0 0.0
      %7226 = vmatprep.mubr.f32.mxu0 0.0
      %7227 = vmatmul.mubr.f32.gmra.mxu0 %v7160
      %v7228 = vpop.f32.mrf.mxu0
      %v7229 = vadd.f32 0.0, %v7228
      %v7230 = vpop.f32.mrf.mxu0
      %v7231 = vadd.f32 0.0, %v7230
      %7232 = vdwg.mxu0
      %7233 = vmatprep.subr.mxu0 0.0
      %7234 = vmatpush1.msra.mxu0 0.0
      %7235 = vmatprep.subr.mxu0 0.0
      %7236 = vmatpush1.msra.mxu0 0.0
      %7237 = vmatprep.subr.mxu0 0.0
      %7238 = vmatpush1.msra.mxu0 0.0
      %7239 = vmatprep.subr.mxu0 0.0
      %7240 = vmatpush1.msra.mxu0 0.0
      %7241 = vmatprep.subr.mxu0 0.0
      %7242 = vmatpush1.msra.mxu0 0.0
      %7243 = vmatprep.subr.mxu0 0.0
      %7244 = vmatpush1.msra.mxu0 0.0
      %7245 = vmatprep.subr.mxu0 0.0
      %7246 = vmatpush1.msra.mxu0 0.0
      %7247 = vmatprep.subr.mxu0 0.0
      %7248 = vmatpush1.msra.mxu0 0.0
      %7249 = vmatprep.subr.mxu0 0.0
      %7250 = vmatpush1.msra.mxu0 0.0
      %7251 = vmatprep.subr.mxu0 0.0
      %7252 = vmatpush1.msra.mxu0 0.0
      %7253 = vmatprep.subr.mxu0 0.0
      %7254 = vmatpush1.msra.mxu0 0.0
      %7255 = vmatprep.subr.mxu0 0.0
      %7256 = vmatpush1.msra.mxu0 0.0
      %7257 = vmatprep.subr.mxu0 0.0
      %7258 = vmatpush1.msra.mxu0 0.0
      %7259 = vmatprep.subr.mxu0 0.0
      %7260 = vmatpush1.msra.mxu0 0.0
      %7261 = vmatprep.subr.mxu0 0.0
      %7262 = vmatpush1.msra.mxu0 0.0
      %7263 = vmatprep.subr.mxu0 %v7156
      %7264 = vmatpush1.msra.mxu0 %v7155
      %7265 = vmatprep.subr.mxu0 0.0
      %7266 = vmatpush2.msra.mxu0 0.0
      %7267 = vmatprep.subr.mxu0 0.0
      %7268 = vmatpush2.msra.mxu0 0.0
      %7269 = vmatprep.subr.mxu0 0.0
      %7270 = vmatpush2.msra.mxu0 0.0
      %7271 = vmatprep.subr.mxu0 0.0
      %7272 = vmatpush2.msra.mxu0 0.0
      %7273 = vmatprep.subr.mxu0 0.0
      %7274 = vmatpush2.msra.mxu0 0.0
      %7275 = vmatprep.subr.mxu0 0.0
      %7276 = vmatpush2.msra.mxu0 0.0
      %7277 = vmatprep.subr.mxu0 0.0
      %7278 = vmatpush2.msra.mxu0 0.0
      %7279 = vmatprep.subr.mxu0 0.0
      %7280 = vmatpush2.msra.mxu0 0.0
      %7281 = vmatprep.subr.mxu0 0.0
      %7282 = vmatpush2.msra.mxu0 0.0
      %7283 = vmatprep.subr.mxu0 0.0
      %7284 = vmatpush2.msra.mxu0 0.0
      %7285 = vmatprep.subr.mxu0 0.0
      %7286 = vmatpush2.msra.mxu0 0.0
      %7287 = vmatprep.subr.mxu0 0.0
      %7288 = vmatpush2.msra.mxu0 0.0
      %7289 = vmatprep.subr.mxu0 0.0
      %7290 = vmatpush2.msra.mxu0 0.0
      %7291 = vmatprep.subr.mxu0 0.0
      %7292 = vmatpush2.msra.mxu0 0.0
      %7293 = vmatprep.subr.mxu0 0.0
      %7294 = vmatpush2.msra.mxu0 0.0
      %7295 = vmatprep.subr.mxu0 0.0
      %7296 = vmatpush2.msra.mxu0 0.0
      %7297 = vmatprep.mubr.f32.mxu0 0.0
      %7298 = vmatmul.mubr.f32.gmra.mxu0 %v7160
      %v7299 = vpop.f32.mrf.mxu0
      %v7300 = vadd.f32 0.0, %v7299
      %v7301 = vpop.f32.mrf.mxu0
      %v7302 = vadd.f32 0.0, %v7301
      %7303 = vdwg.mxu0
      %v7304 = vadd.f32 %v7137, %v7229
      %v7305 = vadd.f32 %v7138, %v7231
      %v7306 = vadd.f32 %v7139, %v7300
      %v7307 = vadd.f32 %v7140, %v7302
      %s7308 = scalar_lea.vmem %s895, 32
      %v7309 = vld [vmem:[%s7308] sm:$0xff]
      %v7311 = vsel %vm1200, %v7309, 0
      %7313 = vmatprep.subr.mxu0 0.0
      %7314 = vmatpush1.msra.mxu0 0.0
      %7315 = vmatprep.subr.mxu0 0.0
      %7316 = vmatpush1.msra.mxu0 0.0
      %7317 = vmatprep.subr.mxu0 0.0
      %7318 = vmatpush1.msra.mxu0 0.0
      %7319 = vmatprep.subr.mxu0 0.0
      %7320 = vmatpush1.msra.mxu0 0.0
      %7321 = vmatprep.subr.mxu0 0.0
      %7322 = vmatpush1.msra.mxu0 0.0
      %7323 = vmatprep.subr.mxu0 0.0
      %7324 = vmatpush1.msra.mxu0 0.0
      %7325 = vmatprep.subr.mxu0 0.0
      %7326 = vmatpush1.msra.mxu0 0.0
      %7327 = vmatprep.subr.mxu0 0.0
      %7328 = vmatpush1.msra.mxu0 0.0
      %7329 = vmatprep.subr.mxu0 0.0
      %7330 = vmatpush1.msra.mxu0 0.0
      %7331 = vmatprep.subr.mxu0 0.0
      %7332 = vmatpush1.msra.mxu0 0.0
      %7333 = vmatprep.subr.mxu0 0.0
      %7334 = vmatpush1.msra.mxu0 0.0
      %7335 = vmatprep.subr.mxu0 0.0
      %7336 = vmatpush1.msra.mxu0 0.0
      %7337 = vmatprep.subr.mxu0 0.0
      %7338 = vmatpush1.msra.mxu0 0.0
      %7339 = vmatprep.subr.mxu0 0.0
      %7340 = vmatpush1.msra.mxu0 0.0
      %7341 = vmatprep.subr.mxu0 0.0
      %7342 = vmatpush1.msra.mxu0 0.0
      %7343 = vmatprep.subr.mxu0 %v2799
      %7344 = vmatpush1.msra.mxu0 %v2798
      %7345 = vmatprep.subr.mxu0 0.0
      %7346 = vmatpush2.msra.mxu0 0.0
      %7347 = vmatprep.subr.mxu0 0.0
      %7348 = vmatpush2.msra.mxu0 0.0
      %7349 = vmatprep.subr.mxu0 0.0
      %7350 = vmatpush2.msra.mxu0 0.0
      %7351 = vmatprep.subr.mxu0 0.0
      %7352 = vmatpush2.msra.mxu0 0.0
      %7353 = vmatprep.subr.mxu0 0.0
      %7354 = vmatpush2.msra.mxu0 0.0
      %7355 = vmatprep.subr.mxu0 0.0
      %7356 = vmatpush2.msra.mxu0 0.0
      %7357 = vmatprep.subr.mxu0 0.0
      %7358 = vmatpush2.msra.mxu0 0.0
      %7359 = vmatprep.subr.mxu0 0.0
      %7360 = vmatpush2.msra.mxu0 0.0
      %7361 = vmatprep.subr.mxu0 0.0
      %7362 = vmatpush2.msra.mxu0 0.0
      %7363 = vmatprep.subr.mxu0 0.0
      %7364 = vmatpush2.msra.mxu0 0.0
      %7365 = vmatprep.subr.mxu0 0.0
      %7366 = vmatpush2.msra.mxu0 0.0
      %7367 = vmatprep.subr.mxu0 0.0
      %7368 = vmatpush2.msra.mxu0 0.0
      %7369 = vmatprep.subr.mxu0 0.0
      %7370 = vmatpush2.msra.mxu0 0.0
      %7371 = vmatprep.subr.mxu0 0.0
      %7372 = vmatpush2.msra.mxu0 0.0
      %7373 = vmatprep.subr.mxu0 0.0
      %7374 = vmatpush2.msra.mxu0 0.0
      %7375 = vmatprep.subr.mxu0 0.0
      %7376 = vmatpush2.msra.mxu0 0.0
      %7377 = vmatprep.mubr.f32.mxu0 0.0
      %7378 = vmatmul.mubr.f32.gmra.mxu0 %v7311
      %v7379 = vpop.f32.mrf.mxu0
      %v7380 = vadd.f32 0.0, %v7379
      %v7381 = vpop.f32.mrf.mxu0
      %v7382 = vadd.f32 0.0, %v7381
      %7383 = vdwg.mxu0
      %7384 = vmatprep.subr.mxu0 0.0
      %7385 = vmatpush1.msra.mxu0 0.0
      %7386 = vmatprep.subr.mxu0 0.0
      %7387 = vmatpush1.msra.mxu0 0.0
      %7388 = vmatprep.subr.mxu0 0.0
      %7389 = vmatpush1.msra.mxu0 0.0
      %7390 = vmatprep.subr.mxu0 0.0
      %7391 = vmatpush1.msra.mxu0 0.0
      %7392 = vmatprep.subr.mxu0 0.0
      %7393 = vmatpush1.msra.mxu0 0.0
      %7394 = vmatprep.subr.mxu0 0.0
      %7395 = vmatpush1.msra.mxu0 0.0
      %7396 = vmatprep.subr.mxu0 0.0
      %7397 = vmatpush1.msra.mxu0 0.0
      %7398 = vmatprep.subr.mxu0 0.0
      %7399 = vmatpush1.msra.mxu0 0.0
      %7400 = vmatprep.subr.mxu0 0.0
      %7401 = vmatpush1.msra.mxu0 0.0
      %7402 = vmatprep.subr.mxu0 0.0
      %7403 = vmatpush1.msra.mxu0 0.0
      %7404 = vmatprep.subr.mxu0 0.0
      %7405 = vmatpush1.msra.mxu0 0.0
      %7406 = vmatprep.subr.mxu0 0.0
      %7407 = vmatpush1.msra.mxu0 0.0
      %7408 = vmatprep.subr.mxu0 0.0
      %7409 = vmatpush1.msra.mxu0 0.0
      %7410 = vmatprep.subr.mxu0 0.0
      %7411 = vmatpush1.msra.mxu0 0.0
      %7412 = vmatprep.subr.mxu0 0.0
      %7413 = vmatpush1.msra.mxu0 0.0
      %7414 = vmatprep.subr.mxu0 %v2801
      %7415 = vmatpush1.msra.mxu0 %v2800
      %7416 = vmatprep.subr.mxu0 0.0
      %7417 = vmatpush2.msra.mxu0 0.0
      %7418 = vmatprep.subr.mxu0 0.0
      %7419 = vmatpush2.msra.mxu0 0.0
      %7420 = vmatprep.subr.mxu0 0.0
      %7421 = vmatpush2.msra.mxu0 0.0
      %7422 = vmatprep.subr.mxu0 0.0
      %7423 = vmatpush2.msra.mxu0 0.0
      %7424 = vmatprep.subr.mxu0 0.0
      %7425 = vmatpush2.msra.mxu0 0.0
      %7426 = vmatprep.subr.mxu0 0.0
      %7427 = vmatpush2.msra.mxu0 0.0
      %7428 = vmatprep.subr.mxu0 0.0
      %7429 = vmatpush2.msra.mxu0 0.0
      %7430 = vmatprep.subr.mxu0 0.0
      %7431 = vmatpush2.msra.mxu0 0.0
      %7432 = vmatprep.subr.mxu0 0.0
      %7433 = vmatpush2.msra.mxu0 0.0
      %7434 = vmatprep.subr.mxu0 0.0
      %7435 = vmatpush2.msra.mxu0 0.0
      %7436 = vmatprep.subr.mxu0 0.0
      %7437 = vmatpush2.msra.mxu0 0.0
      %7438 = vmatprep.subr.mxu0 0.0
      %7439 = vmatpush2.msra.mxu0 0.0
      %7440 = vmatprep.subr.mxu0 0.0
      %7441 = vmatpush2.msra.mxu0 0.0
      %7442 = vmatprep.subr.mxu0 0.0
      %7443 = vmatpush2.msra.mxu0 0.0
      %7444 = vmatprep.subr.mxu0 0.0
      %7445 = vmatpush2.msra.mxu0 0.0
      %7446 = vmatprep.subr.mxu0 0.0
      %7447 = vmatpush2.msra.mxu0 0.0
      %7448 = vmatprep.mubr.f32.mxu0 0.0
      %7449 = vmatmul.mubr.f32.gmra.mxu0 %v7311
      %v7450 = vpop.f32.mrf.mxu0
      %v7451 = vadd.f32 0.0, %v7450
      %v7452 = vpop.f32.mrf.mxu0
      %v7453 = vadd.f32 0.0, %v7452
      %7454 = vdwg.mxu0
      %v7455 = vadd.f32 %v7304, %v7380
      %v7456 = vadd.f32 %v7305, %v7382
      %v7457 = vadd.f32 %v7306, %v7451
      %v7458 = vadd.f32 %v7307, %v7453
      %v7459 = vmul.f32 %v2812, %v2043
      %v7460 = vmul.f32 %v2811, %v2047
      %v7461 = vmul.f32 %v2810, %v2051
      %v7462 = vmul.f32 %v2813, %v2055
      %s7463 = scalar_lea.vmem %s895, 40
      %v7464 = vld [vmem:[%s7463] sm:$0xff]
      %v7466 = vsel %vm1200, %v7464, 0
      %7468 = vmatprep.subr.mxu0 0.0
      %7469 = vmatpush1.msra.mxu0 0.0
      %7470 = vmatprep.subr.mxu0 0.0
      %7471 = vmatpush1.msra.mxu0 0.0
      %7472 = vmatprep.subr.mxu0 0.0
      %7473 = vmatpush1.msra.mxu0 0.0
      %7474 = vmatprep.subr.mxu0 0.0
      %7475 = vmatpush1.msra.mxu0 0.0
      %7476 = vmatprep.subr.mxu0 0.0
      %7477 = vmatpush1.msra.mxu0 0.0
      %7478 = vmatprep.subr.mxu0 0.0
      %7479 = vmatpush1.msra.mxu0 0.0
      %7480 = vmatprep.subr.mxu0 0.0
      %7481 = vmatpush1.msra.mxu0 0.0
      %7482 = vmatprep.subr.mxu0 0.0
      %7483 = vmatpush1.msra.mxu0 0.0
      %7484 = vmatprep.subr.mxu0 0.0
      %7485 = vmatpush1.msra.mxu0 0.0
      %7486 = vmatprep.subr.mxu0 0.0
      %7487 = vmatpush1.msra.mxu0 0.0
      %7488 = vmatprep.subr.mxu0 0.0
      %7489 = vmatpush1.msra.mxu0 0.0
      %7490 = vmatprep.subr.mxu0 0.0
      %7491 = vmatpush1.msra.mxu0 0.0
      %7492 = vmatprep.subr.mxu0 0.0
      %7493 = vmatpush1.msra.mxu0 0.0
      %7494 = vmatprep.subr.mxu0 0.0
      %7495 = vmatpush1.msra.mxu0 0.0
      %7496 = vmatprep.subr.mxu0 0.0
      %7497 = vmatpush1.msra.mxu0 0.0
      %7498 = vmatprep.subr.mxu0 %v7460
      %7499 = vmatpush1.msra.mxu0 %v7459
      %7500 = vmatprep.subr.mxu0 0.0
      %7501 = vmatpush2.msra.mxu0 0.0
      %7502 = vmatprep.subr.mxu0 0.0
      %7503 = vmatpush2.msra.mxu0 0.0
      %7504 = vmatprep.subr.mxu0 0.0
      %7505 = vmatpush2.msra.mxu0 0.0
      %7506 = vmatprep.subr.mxu0 0.0
      %7507 = vmatpush2.msra.mxu0 0.0
      %7508 = vmatprep.subr.mxu0 0.0
      %7509 = vmatpush2.msra.mxu0 0.0
      %7510 = vmatprep.subr.mxu0 0.0
      %7511 = vmatpush2.msra.mxu0 0.0
      %7512 = vmatprep.subr.mxu0 0.0
      %7513 = vmatpush2.msra.mxu0 0.0
      %7514 = vmatprep.subr.mxu0 0.0
      %7515 = vmatpush2.msra.mxu0 0.0
      %7516 = vmatprep.subr.mxu0 0.0
      %7517 = vmatpush2.msra.mxu0 0.0
      %7518 = vmatprep.subr.mxu0 0.0
      %7519 = vmatpush2.msra.mxu0 0.0
      %7520 = vmatprep.subr.mxu0 0.0
      %7521 = vmatpush2.msra.mxu0 0.0
      %7522 = vmatprep.subr.mxu0 0.0
      %7523 = vmatpush2.msra.mxu0 0.0
      %7524 = vmatprep.subr.mxu0 0.0
      %7525 = vmatpush2.msra.mxu0 0.0
      %7526 = vmatprep.subr.mxu0 0.0
      %7527 = vmatpush2.msra.mxu0 0.0
      %7528 = vmatprep.subr.mxu0 0.0
      %7529 = vmatpush2.msra.mxu0 0.0
      %7530 = vmatprep.subr.mxu0 0.0
      %7531 = vmatpush2.msra.mxu0 0.0
      %7532 = vmatprep.mubr.f32.mxu0 0.0
      %7533 = vmatmul.mubr.f32.gmra.mxu0 %v7466
      %v7534 = vpop.f32.mrf.mxu0
      %v7535 = vadd.f32 0.0, %v7534
      %v7536 = vpop.f32.mrf.mxu0
      %v7537 = vadd.f32 0.0, %v7536
      %7538 = vdwg.mxu0
      %7539 = vmatprep.subr.mxu0 0.0
      %7540 = vmatpush1.msra.mxu0 0.0
      %7541 = vmatprep.subr.mxu0 0.0
      %7542 = vmatpush1.msra.mxu0 0.0
      %7543 = vmatprep.subr.mxu0 0.0
      %7544 = vmatpush1.msra.mxu0 0.0
      %7545 = vmatprep.subr.mxu0 0.0
      %7546 = vmatpush1.msra.mxu0 0.0
      %7547 = vmatprep.subr.mxu0 0.0
      %7548 = vmatpush1.msra.mxu0 0.0
      %7549 = vmatprep.subr.mxu0 0.0
      %7550 = vmatpush1.msra.mxu0 0.0
      %7551 = vmatprep.subr.mxu0 0.0
      %7552 = vmatpush1.msra.mxu0 0.0
      %7553 = vmatprep.subr.mxu0 0.0
      %7554 = vmatpush1.msra.mxu0 0.0
      %7555 = vmatprep.subr.mxu0 0.0
      %7556 = vmatpush1.msra.mxu0 0.0
      %7557 = vmatprep.subr.mxu0 0.0
      %7558 = vmatpush1.msra.mxu0 0.0
      %7559 = vmatprep.subr.mxu0 0.0
      %7560 = vmatpush1.msra.mxu0 0.0
      %7561 = vmatprep.subr.mxu0 0.0
      %7562 = vmatpush1.msra.mxu0 0.0
      %7563 = vmatprep.subr.mxu0 0.0
      %7564 = vmatpush1.msra.mxu0 0.0
      %7565 = vmatprep.subr.mxu0 0.0
      %7566 = vmatpush1.msra.mxu0 0.0
      %7567 = vmatprep.subr.mxu0 0.0
      %7568 = vmatpush1.msra.mxu0 0.0
      %7569 = vmatprep.subr.mxu0 %v7462
      %7570 = vmatpush1.msra.mxu0 %v7461
      %7571 = vmatprep.subr.mxu0 0.0
      %7572 = vmatpush2.msra.mxu0 0.0
      %7573 = vmatprep.subr.mxu0 0.0
      %7574 = vmatpush2.msra.mxu0 0.0
      %7575 = vmatprep.subr.mxu0 0.0
      %7576 = vmatpush2.msra.mxu0 0.0
      %7577 = vmatprep.subr.mxu0 0.0
      %7578 = vmatpush2.msra.mxu0 0.0
      %7579 = vmatprep.subr.mxu0 0.0
      %7580 = vmatpush2.msra.mxu0 0.0
      %7581 = vmatprep.subr.mxu0 0.0
      %7582 = vmatpush2.msra.mxu0 0.0
      %7583 = vmatprep.subr.mxu0 0.0
      %7584 = vmatpush2.msra.mxu0 0.0
      %7585 = vmatprep.subr.mxu0 0.0
      %7586 = vmatpush2.msra.mxu0 0.0
      %7587 = vmatprep.subr.mxu0 0.0
      %7588 = vmatpush2.msra.mxu0 0.0
      %7589 = vmatprep.subr.mxu0 0.0
      %7590 = vmatpush2.msra.mxu0 0.0
      %7591 = vmatprep.subr.mxu0 0.0
      %7592 = vmatpush2.msra.mxu0 0.0
      %7593 = vmatprep.subr.mxu0 0.0
      %7594 = vmatpush2.msra.mxu0 0.0
      %7595 = vmatprep.subr.mxu0 0.0
      %7596 = vmatpush2.msra.mxu0 0.0
      %7597 = vmatprep.subr.mxu0 0.0
      %7598 = vmatpush2.msra.mxu0 0.0
      %7599 = vmatprep.subr.mxu0 0.0
      %7600 = vmatpush2.msra.mxu0 0.0
      %7601 = vmatprep.subr.mxu0 0.0
      %7602 = vmatpush2.msra.mxu0 0.0
      %7603 = vmatprep.mubr.f32.mxu0 0.0
      %7604 = vmatmul.mubr.f32.gmra.mxu0 %v7466
      %v7605 = vpop.f32.mrf.mxu0
      %v7606 = vadd.f32 0.0, %v7605
      %v7607 = vpop.f32.mrf.mxu0
      %v7608 = vadd.f32 0.0, %v7607
      %7609 = vdwg.mxu0
      %v7610 = vadd.f32 %v7455, %v7535
      %v7611 = vadd.f32 %v7456, %v7537
      %v7612 = vadd.f32 %v7457, %v7606
      %v7613 = vadd.f32 %v7458, %v7608
      %7614 = vrot.lane.b32.xlu0 %v2798, 113
      %v7615 = vpop.permute.xlu0 %7614
      %7616 = vrot.lane.b32.xlu0 %v2799, 113
      %v7617 = vpop.permute.xlu0 %7616
      %7618 = vrot.lane.b32.xlu0 %v2800, 113
      %v7619 = vpop.permute.xlu0 %7618
      %7620 = vrot.lane.b32.xlu0 %v2801, 113
      %v7621 = vpop.permute.xlu0 %7620
      %v7622 = vsel %vm2223, %v7619, %v7621
      %v7623 = vsel %vm2223, %v7617, %v7619
      %v7624 = vsel %vm2223, %v7615, %v7617
      %v7625 = vsel %vm2223, %v7621, %v7615
      %v7626 = vmul.f32 %v7624, %v2234
      %v7627 = vmul.f32 %v7623, %v2238
      %v7628 = vmul.f32 %v7622, %v2242
      %v7629 = vmul.f32 %v7625, %v2246
      %s7630 = scalar_lea.vmem %s895, 48
      %v7631 = vld [vmem:[%s7630] sm:$0xff]
      %v7633 = vsel %vm1200, %v7631, 0
      %7635 = vmatprep.subr.mxu0 0.0
      %7636 = vmatpush1.msra.mxu0 0.0
      %7637 = vmatprep.subr.mxu0 0.0
      %7638 = vmatpush1.msra.mxu0 0.0
      %7639 = vmatprep.subr.mxu0 0.0
      %7640 = vmatpush1.msra.mxu0 0.0
      %7641 = vmatprep.subr.mxu0 0.0
      %7642 = vmatpush1.msra.mxu0 0.0
      %7643 = vmatprep.subr.mxu0 0.0
      %7644 = vmatpush1.msra.mxu0 0.0
      %7645 = vmatprep.subr.mxu0 0.0
      %7646 = vmatpush1.msra.mxu0 0.0
      %7647 = vmatprep.subr.mxu0 0.0
      %7648 = vmatpush1.msra.mxu0 0.0
      %7649 = vmatprep.subr.mxu0 0.0
      %7650 = vmatpush1.msra.mxu0 0.0
      %7651 = vmatprep.subr.mxu0 0.0
      %7652 = vmatpush1.msra.mxu0 0.0
      %7653 = vmatprep.subr.mxu0 0.0
      %7654 = vmatpush1.msra.mxu0 0.0
      %7655 = vmatprep.subr.mxu0 0.0
      %7656 = vmatpush1.msra.mxu0 0.0
      %7657 = vmatprep.subr.mxu0 0.0
      %7658 = vmatpush1.msra.mxu0 0.0
      %7659 = vmatprep.subr.mxu0 0.0
      %7660 = vmatpush1.msra.mxu0 0.0
      %7661 = vmatprep.subr.mxu0 0.0
      %7662 = vmatpush1.msra.mxu0 0.0
      %7663 = vmatprep.subr.mxu0 0.0
      %7664 = vmatpush1.msra.mxu0 0.0
      %7665 = vmatprep.subr.mxu0 %v7627
      %7666 = vmatpush1.msra.mxu0 %v7626
      %7667 = vmatprep.subr.mxu0 0.0
      %7668 = vmatpush2.msra.mxu0 0.0
      %7669 = vmatprep.subr.mxu0 0.0
      %7670 = vmatpush2.msra.mxu0 0.0
      %7671 = vmatprep.subr.mxu0 0.0
      %7672 = vmatpush2.msra.mxu0 0.0
      %7673 = vmatprep.subr.mxu0 0.0
      %7674 = vmatpush2.msra.mxu0 0.0
      %7675 = vmatprep.subr.mxu0 0.0
      %7676 = vmatpush2.msra.mxu0 0.0
      %7677 = vmatprep.subr.mxu0 0.0
      %7678 = vmatpush2.msra.mxu0 0.0
      %7679 = vmatprep.subr.mxu0 0.0
      %7680 = vmatpush2.msra.mxu0 0.0
      %7681 = vmatprep.subr.mxu0 0.0
      %7682 = vmatpush2.msra.mxu0 0.0
      %7683 = vmatprep.subr.mxu0 0.0
      %7684 = vmatpush2.msra.mxu0 0.0
      %7685 = vmatprep.subr.mxu0 0.0
      %7686 = vmatpush2.msra.mxu0 0.0
      %7687 = vmatprep.subr.mxu0 0.0
      %7688 = vmatpush2.msra.mxu0 0.0
      %7689 = vmatprep.subr.mxu0 0.0
      %7690 = vmatpush2.msra.mxu0 0.0
      %7691 = vmatprep.subr.mxu0 0.0
      %7692 = vmatpush2.msra.mxu0 0.0
      %7693 = vmatprep.subr.mxu0 0.0
      %7694 = vmatpush2.msra.mxu0 0.0
      %7695 = vmatprep.subr.mxu0 0.0
      %7696 = vmatpush2.msra.mxu0 0.0
      %7697 = vmatprep.subr.mxu0 0.0
      %7698 = vmatpush2.msra.mxu0 0.0
      %7699 = vmatprep.mubr.f32.mxu0 0.0
      %7700 = vmatmul.mubr.f32.gmra.mxu0 %v7633
      %v7701 = vpop.f32.mrf.mxu0
      %v7702 = vadd.f32 0.0, %v7701
      %v7703 = vpop.f32.mrf.mxu0
      %v7704 = vadd.f32 0.0, %v7703
      %7705 = vdwg.mxu0
      %7706 = vmatprep.subr.mxu0 0.0
      %7707 = vmatpush1.msra.mxu0 0.0
      %7708 = vmatprep.subr.mxu0 0.0
      %7709 = vmatpush1.msra.mxu0 0.0
      %7710 = vmatprep.subr.mxu0 0.0
      %7711 = vmatpush1.msra.mxu0 0.0
      %7712 = vmatprep.subr.mxu0 0.0
      %7713 = vmatpush1.msra.mxu0 0.0
      %7714 = vmatprep.subr.mxu0 0.0
      %7715 = vmatpush1.msra.mxu0 0.0
      %7716 = vmatprep.subr.mxu0 0.0
      %7717 = vmatpush1.msra.mxu0 0.0
      %7718 = vmatprep.subr.mxu0 0.0
      %7719 = vmatpush1.msra.mxu0 0.0
      %7720 = vmatprep.subr.mxu0 0.0
      %7721 = vmatpush1.msra.mxu0 0.0
      %7722 = vmatprep.subr.mxu0 0.0
      %7723 = vmatpush1.msra.mxu0 0.0
      %7724 = vmatprep.subr.mxu0 0.0
      %7725 = vmatpush1.msra.mxu0 0.0
      %7726 = vmatprep.subr.mxu0 0.0
      %7727 = vmatpush1.msra.mxu0 0.0
      %7728 = vmatprep.subr.mxu0 0.0
      %7729 = vmatpush1.msra.mxu0 0.0
      %7730 = vmatprep.subr.mxu0 0.0
      %7731 = vmatpush1.msra.mxu0 0.0
      %7732 = vmatprep.subr.mxu0 0.0
      %7733 = vmatpush1.msra.mxu0 0.0
      %7734 = vmatprep.subr.mxu0 0.0
      %7735 = vmatpush1.msra.mxu0 0.0
      %7736 = vmatprep.subr.mxu0 %v7629
      %7737 = vmatpush1.msra.mxu0 %v7628
      %7738 = vmatprep.subr.mxu0 0.0
      %7739 = vmatpush2.msra.mxu0 0.0
      %7740 = vmatprep.subr.mxu0 0.0
      %7741 = vmatpush2.msra.mxu0 0.0
      %7742 = vmatprep.subr.mxu0 0.0
      %7743 = vmatpush2.msra.mxu0 0.0
      %7744 = vmatprep.subr.mxu0 0.0
      %7745 = vmatpush2.msra.mxu0 0.0
      %7746 = vmatprep.subr.mxu0 0.0
      %7747 = vmatpush2.msra.mxu0 0.0
      %7748 = vmatprep.subr.mxu0 0.0
      %7749 = vmatpush2.msra.mxu0 0.0
      %7750 = vmatprep.subr.mxu0 0.0
      %7751 = vmatpush2.msra.mxu0 0.0
      %7752 = vmatprep.subr.mxu0 0.0
      %7753 = vmatpush2.msra.mxu0 0.0
      %7754 = vmatprep.subr.mxu0 0.0
      %7755 = vmatpush2.msra.mxu0 0.0
      %7756 = vmatprep.subr.mxu0 0.0
      %7757 = vmatpush2.msra.mxu0 0.0
      %7758 = vmatprep.subr.mxu0 0.0
      %7759 = vmatpush2.msra.mxu0 0.0
      %7760 = vmatprep.subr.mxu0 0.0
      %7761 = vmatpush2.msra.mxu0 0.0
      %7762 = vmatprep.subr.mxu0 0.0
      %7763 = vmatpush2.msra.mxu0 0.0
      %7764 = vmatprep.subr.mxu0 0.0
      %7765 = vmatpush2.msra.mxu0 0.0
      %7766 = vmatprep.subr.mxu0 0.0
      %7767 = vmatpush2.msra.mxu0 0.0
      %7768 = vmatprep.subr.mxu0 0.0
      %7769 = vmatpush2.msra.mxu0 0.0
      %7770 = vmatprep.mubr.f32.mxu0 0.0
      %7771 = vmatmul.mubr.f32.gmra.mxu0 %v7633
      %v7772 = vpop.f32.mrf.mxu0
      %v7773 = vadd.f32 0.0, %v7772
      %v7774 = vpop.f32.mrf.mxu0
      %v7775 = vadd.f32 0.0, %v7774
      %7776 = vdwg.mxu0
      %v7777 = vadd.f32 %v7610, %v7702
      %v7778 = vadd.f32 %v7611, %v7704
      %v7779 = vadd.f32 %v7612, %v7773
      %v7780 = vadd.f32 %v7613, %v7775
      %7781 = vrot.lane.b32.xlu0 %v2798, 112
      %v7782 = vpop.permute.xlu0 %7781
      %7783 = vrot.lane.b32.xlu0 %v2799, 112
      %v7784 = vpop.permute.xlu0 %7783
      %7785 = vrot.lane.b32.xlu0 %v2800, 112
      %v7786 = vpop.permute.xlu0 %7785
      %7787 = vrot.lane.b32.xlu0 %v2801, 112
      %v7788 = vpop.permute.xlu0 %7787
      %v7789 = vsel %vm2414, %v7786, %v7788
      %v7790 = vsel %vm2414, %v7784, %v7786
      %v7791 = vsel %vm2414, %v7782, %v7784
      %v7792 = vsel %vm2414, %v7788, %v7782
      %v7793 = vmul.f32 %v7791, %v2425
      %v7794 = vmul.f32 %v7790, %v2429
      %v7795 = vmul.f32 %v7789, %v2433
      %v7796 = vmul.f32 %v7792, %v2437
      %s7797 = scalar_lea.vmem %s895, 56
      %v7798 = vld [vmem:[%s7797] sm:$0xff]
      %v7800 = vsel %vm1200, %v7798, 0
      %7802 = vmatprep.subr.mxu0 0.0
      %7803 = vmatpush1.msra.mxu0 0.0
      %7804 = vmatprep.subr.mxu0 0.0
      %7805 = vmatpush1.msra.mxu0 0.0
      %7806 = vmatprep.subr.mxu0 0.0
      %7807 = vmatpush1.msra.mxu0 0.0
      %7808 = vmatprep.subr.mxu0 0.0
      %7809 = vmatpush1.msra.mxu0 0.0
      %7810 = vmatprep.subr.mxu0 0.0
      %7811 = vmatpush1.msra.mxu0 0.0
      %7812 = vmatprep.subr.mxu0 0.0
      %7813 = vmatpush1.msra.mxu0 0.0
      %7814 = vmatprep.subr.mxu0 0.0
      %7815 = vmatpush1.msra.mxu0 0.0
      %7816 = vmatprep.subr.mxu0 0.0
      %7817 = vmatpush1.msra.mxu0 0.0
      %7818 = vmatprep.subr.mxu0 0.0
      %7819 = vmatpush1.msra.mxu0 0.0
      %7820 = vmatprep.subr.mxu0 0.0
      %7821 = vmatpush1.msra.mxu0 0.0
      %7822 = vmatprep.subr.mxu0 0.0
      %7823 = vmatpush1.msra.mxu0 0.0
      %7824 = vmatprep.subr.mxu0 0.0
      %7825 = vmatpush1.msra.mxu0 0.0
      %7826 = vmatprep.subr.mxu0 0.0
      %7827 = vmatpush1.msra.mxu0 0.0
      %7828 = vmatprep.subr.mxu0 0.0
      %7829 = vmatpush1.msra.mxu0 0.0
      %7830 = vmatprep.subr.mxu0 0.0
      %7831 = vmatpush1.msra.mxu0 0.0
      %7832 = vmatprep.subr.mxu0 %v7794
      %7833 = vmatpush1.msra.mxu0 %v7793
      %7834 = vmatprep.subr.mxu0 0.0
      %7835 = vmatpush2.msra.mxu0 0.0
      %7836 = vmatprep.subr.mxu0 0.0
      %7837 = vmatpush2.msra.mxu0 0.0
      %7838 = vmatprep.subr.mxu0 0.0
      %7839 = vmatpush2.msra.mxu0 0.0
      %7840 = vmatprep.subr.mxu0 0.0
      %7841 = vmatpush2.msra.mxu0 0.0
      %7842 = vmatprep.subr.mxu0 0.0
      %7843 = vmatpush2.msra.mxu0 0.0
      %7844 = vmatprep.subr.mxu0 0.0
      %7845 = vmatpush2.msra.mxu0 0.0
      %7846 = vmatprep.subr.mxu0 0.0
      %7847 = vmatpush2.msra.mxu0 0.0
      %7848 = vmatprep.subr.mxu0 0.0
      %7849 = vmatpush2.msra.mxu0 0.0
      %7850 = vmatprep.subr.mxu0 0.0
      %7851 = vmatpush2.msra.mxu0 0.0
      %7852 = vmatprep.subr.mxu0 0.0
      %7853 = vmatpush2.msra.mxu0 0.0
      %7854 = vmatprep.subr.mxu0 0.0
      %7855 = vmatpush2.msra.mxu0 0.0
      %7856 = vmatprep.subr.mxu0 0.0
      %7857 = vmatpush2.msra.mxu0 0.0
      %7858 = vmatprep.subr.mxu0 0.0
      %7859 = vmatpush2.msra.mxu0 0.0
      %7860 = vmatprep.subr.mxu0 0.0
      %7861 = vmatpush2.msra.mxu0 0.0
      %7862 = vmatprep.subr.mxu0 0.0
      %7863 = vmatpush2.msra.mxu0 0.0
      %7864 = vmatprep.subr.mxu0 0.0
      %7865 = vmatpush2.msra.mxu0 0.0
      %7866 = vmatprep.mubr.f32.mxu0 0.0
      %7867 = vmatmul.mubr.f32.gmra.mxu0 %v7800
      %v7868 = vpop.f32.mrf.mxu0
      %v7869 = vadd.f32 0.0, %v7868
      %v7870 = vpop.f32.mrf.mxu0
      %v7871 = vadd.f32 0.0, %v7870
      %7872 = vdwg.mxu0
      %7873 = vmatprep.subr.mxu0 0.0
      %7874 = vmatpush1.msra.mxu0 0.0
      %7875 = vmatprep.subr.mxu0 0.0
      %7876 = vmatpush1.msra.mxu0 0.0
      %7877 = vmatprep.subr.mxu0 0.0
      %7878 = vmatpush1.msra.mxu0 0.0
      %7879 = vmatprep.subr.mxu0 0.0
      %7880 = vmatpush1.msra.mxu0 0.0
      %7881 = vmatprep.subr.mxu0 0.0
      %7882 = vmatpush1.msra.mxu0 0.0
      %7883 = vmatprep.subr.mxu0 0.0
      %7884 = vmatpush1.msra.mxu0 0.0
      %7885 = vmatprep.subr.mxu0 0.0
      %7886 = vmatpush1.msra.mxu0 0.0
      %7887 = vmatprep.subr.mxu0 0.0
      %7888 = vmatpush1.msra.mxu0 0.0
      %7889 = vmatprep.subr.mxu0 0.0
      %7890 = vmatpush1.msra.mxu0 0.0
      %7891 = vmatprep.subr.mxu0 0.0
      %7892 = vmatpush1.msra.mxu0 0.0
      %7893 = vmatprep.subr.mxu0 0.0
      %7894 = vmatpush1.msra.mxu0 0.0
      %7895 = vmatprep.subr.mxu0 0.0
      %7896 = vmatpush1.msra.mxu0 0.0
      %7897 = vmatprep.subr.mxu0 0.0
      %7898 = vmatpush1.msra.mxu0 0.0
      %7899 = vmatprep.subr.mxu0 0.0
      %7900 = vmatpush1.msra.mxu0 0.0
      %7901 = vmatprep.subr.mxu0 0.0
      %7902 = vmatpush1.msra.mxu0 0.0
      %7903 = vmatprep.subr.mxu0 %v7796
      %7904 = vmatpush1.msra.mxu0 %v7795
      %7905 = vmatprep.subr.mxu0 0.0
      %7906 = vmatpush2.msra.mxu0 0.0
      %7907 = vmatprep.subr.mxu0 0.0
      %7908 = vmatpush2.msra.mxu0 0.0
      %7909 = vmatprep.subr.mxu0 0.0
      %7910 = vmatpush2.msra.mxu0 0.0
      %7911 = vmatprep.subr.mxu0 0.0
      %7912 = vmatpush2.msra.mxu0 0.0
      %7913 = vmatprep.subr.mxu0 0.0
      %7914 = vmatpush2.msra.mxu0 0.0
      %7915 = vmatprep.subr.mxu0 0.0
      %7916 = vmatpush2.msra.mxu0 0.0
      %7917 = vmatprep.subr.mxu0 0.0
      %7918 = vmatpush2.msra.mxu0 0.0
      %7919 = vmatprep.subr.mxu0 0.0
      %7920 = vmatpush2.msra.mxu0 0.0
      %7921 = vmatprep.subr.mxu0 0.0
      %7922 = vmatpush2.msra.mxu0 0.0
      %7923 = vmatprep.subr.mxu0 0.0
      %7924 = vmatpush2.msra.mxu0 0.0
      %7925 = vmatprep.subr.mxu0 0.0
      %7926 = vmatpush2.msra.mxu0 0.0
      %7927 = vmatprep.subr.mxu0 0.0
      %7928 = vmatpush2.msra.mxu0 0.0
      %7929 = vmatprep.subr.mxu0 0.0
      %7930 = vmatpush2.msra.mxu0 0.0
      %7931 = vmatprep.subr.mxu0 0.0
      %7932 = vmatpush2.msra.mxu0 0.0
      %7933 = vmatprep.subr.mxu0 0.0
      %7934 = vmatpush2.msra.mxu0 0.0
      %7935 = vmatprep.subr.mxu0 0.0
      %7936 = vmatpush2.msra.mxu0 0.0
      %7937 = vmatprep.mubr.f32.mxu0 0.0
      %7938 = vmatmul.mubr.f32.gmra.mxu0 %v7800
      %v7939 = vpop.f32.mrf.mxu0
      %v7940 = vadd.f32 0.0, %v7939
      %v7941 = vpop.f32.mrf.mxu0
      %v7942 = vadd.f32 0.0, %v7941
      %7943 = vdwg.mxu0
      %v7944 = vadd.f32 %v7777, %v7869
      %v7945 = vadd.f32 %v7778, %v7871
      %v7946 = vadd.f32 %v7779, %v7940
      %v7947 = vadd.f32 %v7780, %v7942
      %7948 = vrot.lane.b32.xlu0 %v2798, 111
      %v7949 = vpop.permute.xlu0 %7948
      %7950 = vrot.lane.b32.xlu0 %v2799, 111
      %v7951 = vpop.permute.xlu0 %7950
      %7952 = vrot.lane.b32.xlu0 %v2800, 111
      %v7953 = vpop.permute.xlu0 %7952
      %7954 = vrot.lane.b32.xlu0 %v2801, 111
      %v7955 = vpop.permute.xlu0 %7954
      %v7956 = vsel %vm2605, %v7953, %v7955
      %v7957 = vsel %vm2605, %v7951, %v7953
      %v7958 = vsel %vm2605, %v7949, %v7951
      %v7959 = vsel %vm2605, %v7955, %v7949
      %v7960 = vmul.f32 %v7958, %v2616
      %v7961 = vmul.f32 %v7957, %v2620
      %v7962 = vmul.f32 %v7956, %v2624
      %v7963 = vmul.f32 %v7959, %v2628
      %s7964 = scalar_lea.vmem %s895, 64
      %v7965 = vld [vmem:[%s7964] sm:$0xff]
      %v7967 = vsel %vm1200, %v7965, 0
      %7969 = vmatprep.subr.mxu0 0.0
      %7970 = vmatpush1.msra.mxu0 0.0
      %7971 = vmatprep.subr.mxu0 0.0
      %7972 = vmatpush1.msra.mxu0 0.0
      %7973 = vmatprep.subr.mxu0 0.0
      %7974 = vmatpush1.msra.mxu0 0.0
      %7975 = vmatprep.subr.mxu0 0.0
      %7976 = vmatpush1.msra.mxu0 0.0
      %7977 = vmatprep.subr.mxu0 0.0
      %7978 = vmatpush1.msra.mxu0 0.0
      %7979 = vmatprep.subr.mxu0 0.0
      %7980 = vmatpush1.msra.mxu0 0.0
      %7981 = vmatprep.subr.mxu0 0.0
      %7982 = vmatpush1.msra.mxu0 0.0
      %7983 = vmatprep.subr.mxu0 0.0
      %7984 = vmatpush1.msra.mxu0 0.0
      %7985 = vmatprep.subr.mxu0 0.0
      %7986 = vmatpush1.msra.mxu0 0.0
      %7987 = vmatprep.subr.mxu0 0.0
      %7988 = vmatpush1.msra.mxu0 0.0
      %7989 = vmatprep.subr.mxu0 0.0
      %7990 = vmatpush1.msra.mxu0 0.0
      %7991 = vmatprep.subr.mxu0 0.0
      %7992 = vmatpush1.msra.mxu0 0.0
      %7993 = vmatprep.subr.mxu0 0.0
      %7994 = vmatpush1.msra.mxu0 0.0
      %7995 = vmatprep.subr.mxu0 0.0
      %7996 = vmatpush1.msra.mxu0 0.0
      %7997 = vmatprep.subr.mxu0 0.0
      %7998 = vmatpush1.msra.mxu0 0.0
      %7999 = vmatprep.subr.mxu0 %v7961
      %8000 = vmatpush1.msra.mxu0 %v7960
      %8001 = vmatprep.subr.mxu0 0.0
      %8002 = vmatpush2.msra.mxu0 0.0
      %8003 = vmatprep.subr.mxu0 0.0
      %8004 = vmatpush2.msra.mxu0 0.0
      %8005 = vmatprep.subr.mxu0 0.0
      %8006 = vmatpush2.msra.mxu0 0.0
      %8007 = vmatprep.subr.mxu0 0.0
      %8008 = vmatpush2.msra.mxu0 0.0
      %8009 = vmatprep.subr.mxu0 0.0
      %8010 = vmatpush2.msra.mxu0 0.0
      %8011 = vmatprep.subr.mxu0 0.0
      %8012 = vmatpush2.msra.mxu0 0.0
      %8013 = vmatprep.subr.mxu0 0.0
      %8014 = vmatpush2.msra.mxu0 0.0
      %8015 = vmatprep.subr.mxu0 0.0
      %8016 = vmatpush2.msra.mxu0 0.0
      %8017 = vmatprep.subr.mxu0 0.0
      %8018 = vmatpush2.msra.mxu0 0.0
      %8019 = vmatprep.subr.mxu0 0.0
      %8020 = vmatpush2.msra.mxu0 0.0
      %8021 = vmatprep.subr.mxu0 0.0
      %8022 = vmatpush2.msra.mxu0 0.0
      %8023 = vmatprep.subr.mxu0 0.0
      %8024 = vmatpush2.msra.mxu0 0.0
      %8025 = vmatprep.subr.mxu0 0.0
      %8026 = vmatpush2.msra.mxu0 0.0
      %8027 = vmatprep.subr.mxu0 0.0
      %8028 = vmatpush2.msra.mxu0 0.0
      %8029 = vmatprep.subr.mxu0 0.0
      %8030 = vmatpush2.msra.mxu0 0.0
      %8031 = vmatprep.subr.mxu0 0.0
      %8032 = vmatpush2.msra.mxu0 0.0
      %8033 = vmatprep.mubr.f32.mxu0 0.0
      %8034 = vmatmul.mubr.f32.gmra.mxu0 %v7967
      %v8035 = vpop.f32.mrf.mxu0
      %v8036 = vadd.f32 0.0, %v8035
      %v8037 = vpop.f32.mrf.mxu0
      %v8038 = vadd.f32 0.0, %v8037
      %8039 = vdwg.mxu0
      %8040 = vmatprep.subr.mxu0 0.0
      %8041 = vmatpush1.msra.mxu0 0.0
      %8042 = vmatprep.subr.mxu0 0.0
      %8043 = vmatpush1.msra.mxu0 0.0
      %8044 = vmatprep.subr.mxu0 0.0
      %8045 = vmatpush1.msra.mxu0 0.0
      %8046 = vmatprep.subr.mxu0 0.0
      %8047 = vmatpush1.msra.mxu0 0.0
      %8048 = vmatprep.subr.mxu0 0.0
      %8049 = vmatpush1.msra.mxu0 0.0
      %8050 = vmatprep.subr.mxu0 0.0
      %8051 = vmatpush1.msra.mxu0 0.0
      %8052 = vmatprep.subr.mxu0 0.0
      %8053 = vmatpush1.msra.mxu0 0.0
      %8054 = vmatprep.subr.mxu0 0.0
      %8055 = vmatpush1.msra.mxu0 0.0
      %8056 = vmatprep.subr.mxu0 0.0
      %8057 = vmatpush1.msra.mxu0 0.0
      %8058 = vmatprep.subr.mxu0 0.0
      %8059 = vmatpush1.msra.mxu0 0.0
      %8060 = vmatprep.subr.mxu0 0.0
      %8061 = vmatpush1.msra.mxu0 0.0
      %8062 = vmatprep.subr.mxu0 0.0
      %8063 = vmatpush1.msra.mxu0 0.0
      %8064 = vmatprep.subr.mxu0 0.0
      %8065 = vmatpush1.msra.mxu0 0.0
      %8066 = vmatprep.subr.mxu0 0.0
      %8067 = vmatpush1.msra.mxu0 0.0
      %8068 = vmatprep.subr.mxu0 0.0
      %8069 = vmatpush1.msra.mxu0 0.0
      %8070 = vmatprep.subr.mxu0 %v7963
      %8071 = vmatpush1.msra.mxu0 %v7962
      %8072 = vmatprep.subr.mxu0 0.0
      %8073 = vmatpush2.msra.mxu0 0.0
      %8074 = vmatprep.subr.mxu0 0.0
      %8075 = vmatpush2.msra.mxu0 0.0
      %8076 = vmatprep.subr.mxu0 0.0
      %8077 = vmatpush2.msra.mxu0 0.0
      %8078 = vmatprep.subr.mxu0 0.0
      %8079 = vmatpush2.msra.mxu0 0.0
      %8080 = vmatprep.subr.mxu0 0.0
      %8081 = vmatpush2.msra.mxu0 0.0
      %8082 = vmatprep.subr.mxu0 0.0
      %8083 = vmatpush2.msra.mxu0 0.0
      %8084 = vmatprep.subr.mxu0 0.0
      %8085 = vmatpush2.msra.mxu0 0.0
      %8086 = vmatprep.subr.mxu0 0.0
      %8087 = vmatpush2.msra.mxu0 0.0
      %8088 = vmatprep.subr.mxu0 0.0
      %8089 = vmatpush2.msra.mxu0 0.0
      %8090 = vmatprep.subr.mxu0 0.0
      %8091 = vmatpush2.msra.mxu0 0.0
      %8092 = vmatprep.subr.mxu0 0.0
      %8093 = vmatpush2.msra.mxu0 0.0
      %8094 = vmatprep.subr.mxu0 0.0
      %8095 = vmatpush2.msra.mxu0 0.0
      %8096 = vmatprep.subr.mxu0 0.0
      %8097 = vmatpush2.msra.mxu0 0.0
      %8098 = vmatprep.subr.mxu0 0.0
      %8099 = vmatpush2.msra.mxu0 0.0
      %8100 = vmatprep.subr.mxu0 0.0
      %8101 = vmatpush2.msra.mxu0 0.0
      %8102 = vmatprep.subr.mxu0 0.0
      %8103 = vmatpush2.msra.mxu0 0.0
      %8104 = vmatprep.mubr.f32.mxu0 0.0
      %8105 = vmatmul.mubr.f32.gmra.mxu0 %v7967
      %v8106 = vpop.f32.mrf.mxu0
      %v8107 = vadd.f32 0.0, %v8106
      %v8108 = vpop.f32.mrf.mxu0
      %v8109 = vadd.f32 0.0, %v8108
      %8110 = vdwg.mxu0
      %v8111 = vadd.f32 %v7944, %v8036
      %v8112 = vadd.f32 %v7945, %v8038
      %v8113 = vadd.f32 %v7946, %v8107
      %v8114 = vadd.f32 %v7947, %v8109
      %v8115 = vld [vmem:[%s899] sm:$0xff]
      %8117 = vset.pattern.permute.xlu0 0
      %8118 = vperm.xlu0 %8117, %v8115
      %v8119 = vpop.permute.xlu0 %8118
      %v8121 = vadd.f32 %v8111, %v8119
      %v8122 = vadd.f32 %v8112, %v8119
      %v8123 = vadd.f32 %v8113, %v8119
      %v8124 = vadd.f32 %v8114, %v8119
      %v8125 = vmax.f32 %v8121, 0.0
      %v8126 = vmax.f32 %v8122, 0.0
      %v8127 = vmax.f32 %v8123, 0.0
      %v8128 = vmax.f32 %v8124, 0.0
      %8129 = vrot.lane.b32.xlu0 %v8125, 17
      %v8130 = vpop.permute.xlu0 %8129
      %8131 = vrot.lane.b32.xlu0 %v8126, 17
      %v8132 = vpop.permute.xlu0 %8131
      %8133 = vrot.lane.b32.xlu0 %v8127, 17
      %v8134 = vpop.permute.xlu0 %8133
      %8135 = vrot.lane.b32.xlu0 %v8128, 17
      %v8136 = vpop.permute.xlu0 %8135
      %v8137 = vsel %vm1126, %v8134, %v8136
      %v8138 = vsel %vm1126, %v8132, %v8134
      %v8139 = vsel %vm1126, %v8130, %v8132
      %v8140 = vsel %vm1126, %v8136, %v8130
      %v8141 = vmul.f32 %v8140, %v1136
      %v8142 = vmul.f32 %v8139, %v1140
      %v8143 = vmul.f32 %v8138, %v1144
      %v8144 = vmul.f32 %v8137, %v1148
      %v8145 = vld [vmem:[%s904] sm:$0xff]
      %8146 = vrot.lane.b32.xlu0 %v8125, 16
      %v8147 = vpop.permute.xlu0 %8146
      %8148 = vrot.lane.b32.xlu0 %v8126, 16
      %v8149 = vpop.permute.xlu0 %8148
      %8150 = vrot.lane.b32.xlu0 %v8127, 16
      %v8151 = vpop.permute.xlu0 %8150
      %8152 = vrot.lane.b32.xlu0 %v8128, 16
      %v8153 = vpop.permute.xlu0 %8152
      %v8154 = vsel %vm1166, %v8151, %v8153
      %v8155 = vsel %vm1166, %v8149, %v8151
      %v8156 = vsel %vm1166, %v8147, %v8149
      %v8157 = vsel %vm1166, %v8153, %v8147
      %v8158 = vmul.f32 %v8157, %v1177
      %v8159 = vmul.f32 %v8156, %v1181
      %v8160 = vmul.f32 %v8155, %v1185
      %v8161 = vmul.f32 %v8154, %v1189
      %s8162 = scalar_lea.vmem %s904, 8
      %v8163 = vld [vmem:[%s8162] sm:$0xff]
      %v8165 = vsel %vm1200, %v8163, 0
      %8167 = vmatprep.subr.mxu0 0.0
      %8168 = vmatpush1.msra.mxu0 0.0
      %8169 = vmatprep.subr.mxu0 0.0
      %8170 = vmatpush1.msra.mxu0 0.0
      %8171 = vmatprep.subr.mxu0 0.0
      %8172 = vmatpush1.msra.mxu0 0.0
      %8173 = vmatprep.subr.mxu0 0.0
      %8174 = vmatpush1.msra.mxu0 0.0
      %8175 = vmatprep.subr.mxu0 0.0
      %8176 = vmatpush1.msra.mxu0 0.0
      %8177 = vmatprep.subr.mxu0 0.0
      %8178 = vmatpush1.msra.mxu0 0.0
      %8179 = vmatprep.subr.mxu0 0.0
      %8180 = vmatpush1.msra.mxu0 0.0
      %8181 = vmatprep.subr.mxu0 0.0
      %8182 = vmatpush1.msra.mxu0 0.0
      %8183 = vmatprep.subr.mxu0 0.0
      %8184 = vmatpush1.msra.mxu0 0.0
      %8185 = vmatprep.subr.mxu0 0.0
      %8186 = vmatpush1.msra.mxu0 0.0
      %8187 = vmatprep.subr.mxu0 0.0
      %8188 = vmatpush1.msra.mxu0 0.0
      %8189 = vmatprep.subr.mxu0 0.0
      %8190 = vmatpush1.msra.mxu0 0.0
      %8191 = vmatprep.subr.mxu0 0.0
      %8192 = vmatpush1.msra.mxu0 0.0
      %8193 = vmatprep.subr.mxu0 0.0
      %8194 = vmatpush1.msra.mxu0 0.0
      %8195 = vmatprep.subr.mxu0 0.0
      %8196 = vmatpush1.msra.mxu0 0.0
      %8197 = vmatprep.subr.mxu0 %v8159
      %8198 = vmatpush1.msra.mxu0 %v8158
      %8199 = vmatprep.subr.mxu0 0.0
      %8200 = vmatpush2.msra.mxu0 0.0
      %8201 = vmatprep.subr.mxu0 0.0
      %8202 = vmatpush2.msra.mxu0 0.0
      %8203 = vmatprep.subr.mxu0 0.0
      %8204 = vmatpush2.msra.mxu0 0.0
      %8205 = vmatprep.subr.mxu0 0.0
      %8206 = vmatpush2.msra.mxu0 0.0
      %8207 = vmatprep.subr.mxu0 0.0
      %8208 = vmatpush2.msra.mxu0 0.0
      %8209 = vmatprep.subr.mxu0 0.0
      %8210 = vmatpush2.msra.mxu0 0.0
      %8211 = vmatprep.subr.mxu0 0.0
      %8212 = vmatpush2.msra.mxu0 0.0
      %8213 = vmatprep.subr.mxu0 0.0
      %8214 = vmatpush2.msra.mxu0 0.0
      %8215 = vmatprep.subr.mxu0 0.0
      %8216 = vmatpush2.msra.mxu0 0.0
      %8217 = vmatprep.subr.mxu0 0.0
      %8218 = vmatpush2.msra.mxu0 0.0
      %8219 = vmatprep.subr.mxu0 0.0
      %8220 = vmatpush2.msra.mxu0 0.0
      %8221 = vmatprep.subr.mxu0 0.0
      %8222 = vmatpush2.msra.mxu0 0.0
      %8223 = vmatprep.subr.mxu0 0.0
      %8224 = vmatpush2.msra.mxu0 0.0
      %8225 = vmatprep.subr.mxu0 0.0
      %8226 = vmatpush2.msra.mxu0 0.0
      %8227 = vmatprep.subr.mxu0 0.0
      %8228 = vmatpush2.msra.mxu0 0.0
      %8229 = vmatprep.subr.mxu0 0.0
      %8230 = vmatpush2.msra.mxu0 0.0
      %8231 = vmatprep.mubr.f32.mxu0 0.0
      %8232 = vmatmul.mubr.f32.gmra.mxu0 %v8165
      %v8233 = vpop.f32.mrf.mxu0
      %v8234 = vadd.f32 0.0, %v8233
      %v8235 = vpop.f32.mrf.mxu0
      %v8236 = vadd.f32 0.0, %v8235
      %8237 = vdwg.mxu0
      %8238 = vmatprep.subr.mxu0 0.0
      %8239 = vmatpush1.msra.mxu0 0.0
      %8240 = vmatprep.subr.mxu0 0.0
      %8241 = vmatpush1.msra.mxu0 0.0
      %8242 = vmatprep.subr.mxu0 0.0
      %8243 = vmatpush1.msra.mxu0 0.0
      %8244 = vmatprep.subr.mxu0 0.0
      %8245 = vmatpush1.msra.mxu0 0.0
      %8246 = vmatprep.subr.mxu0 0.0
      %8247 = vmatpush1.msra.mxu0 0.0
      %8248 = vmatprep.subr.mxu0 0.0
      %8249 = vmatpush1.msra.mxu0 0.0
      %8250 = vmatprep.subr.mxu0 0.0
      %8251 = vmatpush1.msra.mxu0 0.0
      %8252 = vmatprep.subr.mxu0 0.0
      %8253 = vmatpush1.msra.mxu0 0.0
      %8254 = vmatprep.subr.mxu0 0.0
      %8255 = vmatpush1.msra.mxu0 0.0
      %8256 = vmatprep.subr.mxu0 0.0
      %8257 = vmatpush1.msra.mxu0 0.0
      %8258 = vmatprep.subr.mxu0 0.0
      %8259 = vmatpush1.msra.mxu0 0.0
      %8260 = vmatprep.subr.mxu0 0.0
      %8261 = vmatpush1.msra.mxu0 0.0
      %8262 = vmatprep.subr.mxu0 0.0
      %8263 = vmatpush1.msra.mxu0 0.0
      %8264 = vmatprep.subr.mxu0 0.0
      %8265 = vmatpush1.msra.mxu0 0.0
      %8266 = vmatprep.subr.mxu0 0.0
      %8267 = vmatpush1.msra.mxu0 0.0
      %8268 = vmatprep.subr.mxu0 %v8161
      %8269 = vmatpush1.msra.mxu0 %v8160
      %8270 = vmatprep.subr.mxu0 0.0
      %8271 = vmatpush2.msra.mxu0 0.0
      %8272 = vmatprep.subr.mxu0 0.0
      %8273 = vmatpush2.msra.mxu0 0.0
      %8274 = vmatprep.subr.mxu0 0.0
      %8275 = vmatpush2.msra.mxu0 0.0
      %8276 = vmatprep.subr.mxu0 0.0
      %8277 = vmatpush2.msra.mxu0 0.0
      %8278 = vmatprep.subr.mxu0 0.0
      %8279 = vmatpush2.msra.mxu0 0.0
      %8280 = vmatprep.subr.mxu0 0.0
      %8281 = vmatpush2.msra.mxu0 0.0
      %8282 = vmatprep.subr.mxu0 0.0
      %8283 = vmatpush2.msra.mxu0 0.0
      %8284 = vmatprep.subr.mxu0 0.0
      %8285 = vmatpush2.msra.mxu0 0.0
      %8286 = vmatprep.subr.mxu0 0.0
      %8287 = vmatpush2.msra.mxu0 0.0
      %8288 = vmatprep.subr.mxu0 0.0
      %8289 = vmatpush2.msra.mxu0 0.0
      %8290 = vmatprep.subr.mxu0 0.0
      %8291 = vmatpush2.msra.mxu0 0.0
      %8292 = vmatprep.subr.mxu0 0.0
      %8293 = vmatpush2.msra.mxu0 0.0
      %8294 = vmatprep.subr.mxu0 0.0
      %8295 = vmatpush2.msra.mxu0 0.0
      %8296 = vmatprep.subr.mxu0 0.0
      %8297 = vmatpush2.msra.mxu0 0.0
      %8298 = vmatprep.subr.mxu0 0.0
      %8299 = vmatpush2.msra.mxu0 0.0
      %8300 = vmatprep.subr.mxu0 0.0
      %8301 = vmatpush2.msra.mxu0 0.0
      %8302 = vmatprep.mubr.f32.mxu0 0.0
      %8303 = vmatmul.mubr.f32.gmra.mxu0 %v8165
      %v8304 = vpop.f32.mrf.mxu0
      %v8305 = vadd.f32 0.0, %v8304
      %v8306 = vpop.f32.mrf.mxu0
      %v8307 = vadd.f32 0.0, %v8306
      %8308 = vdwg.mxu0
      %v8310 = vsel %vm1200, %v8145, 0
      %8312 = vmatprep.subr.mxu0 0.0
      %8313 = vmatpush1.msra.mxu0 0.0
      %8314 = vmatprep.subr.mxu0 0.0
      %8315 = vmatpush1.msra.mxu0 0.0
      %8316 = vmatprep.subr.mxu0 0.0
      %8317 = vmatpush1.msra.mxu0 0.0
      %8318 = vmatprep.subr.mxu0 0.0
      %8319 = vmatpush1.msra.mxu0 0.0
      %8320 = vmatprep.subr.mxu0 0.0
      %8321 = vmatpush1.msra.mxu0 0.0
      %8322 = vmatprep.subr.mxu0 0.0
      %8323 = vmatpush1.msra.mxu0 0.0
      %8324 = vmatprep.subr.mxu0 0.0
      %8325 = vmatpush1.msra.mxu0 0.0
      %8326 = vmatprep.subr.mxu0 0.0
      %8327 = vmatpush1.msra.mxu0 0.0
      %8328 = vmatprep.subr.mxu0 0.0
      %8329 = vmatpush1.msra.mxu0 0.0
      %8330 = vmatprep.subr.mxu0 0.0
      %8331 = vmatpush1.msra.mxu0 0.0
      %8332 = vmatprep.subr.mxu0 0.0
      %8333 = vmatpush1.msra.mxu0 0.0
      %8334 = vmatprep.subr.mxu0 0.0
      %8335 = vmatpush1.msra.mxu0 0.0
      %8336 = vmatprep.subr.mxu0 0.0
      %8337 = vmatpush1.msra.mxu0 0.0
      %8338 = vmatprep.subr.mxu0 0.0
      %8339 = vmatpush1.msra.mxu0 0.0
      %8340 = vmatprep.subr.mxu0 0.0
      %8341 = vmatpush1.msra.mxu0 0.0
      %8342 = vmatprep.subr.mxu0 %v8142
      %8343 = vmatpush1.msra.mxu0 %v8141
      %8344 = vmatprep.subr.mxu0 0.0
      %8345 = vmatpush2.msra.mxu0 0.0
      %8346 = vmatprep.subr.mxu0 0.0
      %8347 = vmatpush2.msra.mxu0 0.0
      %8348 = vmatprep.subr.mxu0 0.0
      %8349 = vmatpush2.msra.mxu0 0.0
      %8350 = vmatprep.subr.mxu0 0.0
      %8351 = vmatpush2.msra.mxu0 0.0
      %8352 = vmatprep.subr.mxu0 0.0
      %8353 = vmatpush2.msra.mxu0 0.0
      %8354 = vmatprep.subr.mxu0 0.0
      %8355 = vmatpush2.msra.mxu0 0.0
      %8356 = vmatprep.subr.mxu0 0.0
      %8357 = vmatpush2.msra.mxu0 0.0
      %8358 = vmatprep.subr.mxu0 0.0
      %8359 = vmatpush2.msra.mxu0 0.0
      %8360 = vmatprep.subr.mxu0 0.0
      %8361 = vmatpush2.msra.mxu0 0.0
      %8362 = vmatprep.subr.mxu0 0.0
      %8363 = vmatpush2.msra.mxu0 0.0
      %8364 = vmatprep.subr.mxu0 0.0
      %8365 = vmatpush2.msra.mxu0 0.0
      %8366 = vmatprep.subr.mxu0 0.0
      %8367 = vmatpush2.msra.mxu0 0.0
      %8368 = vmatprep.subr.mxu0 0.0
      %8369 = vmatpush2.msra.mxu0 0.0
      %8370 = vmatprep.subr.mxu0 0.0
      %8371 = vmatpush2.msra.mxu0 0.0
      %8372 = vmatprep.subr.mxu0 0.0
      %8373 = vmatpush2.msra.mxu0 0.0
      %8374 = vmatprep.subr.mxu0 0.0
      %8375 = vmatpush2.msra.mxu0 0.0
      %8376 = vmatprep.mubr.f32.mxu0 0.0
      %8377 = vmatmul.mubr.f32.gmra.mxu0 %v8310
      %v8378 = vpop.f32.mrf.mxu0
      %v8379 = vadd.f32 %v8234, %v8378
      %v8380 = vpop.f32.mrf.mxu0
      %v8381 = vadd.f32 %v8236, %v8380
      %8382 = vdwg.mxu0
      %8383 = vmatprep.subr.mxu0 0.0
      %8384 = vmatpush1.msra.mxu0 0.0
      %8385 = vmatprep.subr.mxu0 0.0
      %8386 = vmatpush1.msra.mxu0 0.0
      %8387 = vmatprep.subr.mxu0 0.0
      %8388 = vmatpush1.msra.mxu0 0.0
      %8389 = vmatprep.subr.mxu0 0.0
      %8390 = vmatpush1.msra.mxu0 0.0
      %8391 = vmatprep.subr.mxu0 0.0
      %8392 = vmatpush1.msra.mxu0 0.0
      %8393 = vmatprep.subr.mxu0 0.0
      %8394 = vmatpush1.msra.mxu0 0.0
      %8395 = vmatprep.subr.mxu0 0.0
      %8396 = vmatpush1.msra.mxu0 0.0
      %8397 = vmatprep.subr.mxu0 0.0
      %8398 = vmatpush1.msra.mxu0 0.0
      %8399 = vmatprep.subr.mxu0 0.0
      %8400 = vmatpush1.msra.mxu0 0.0
      %8401 = vmatprep.subr.mxu0 0.0
      %8402 = vmatpush1.msra.mxu0 0.0
      %8403 = vmatprep.subr.mxu0 0.0
      %8404 = vmatpush1.msra.mxu0 0.0
      %8405 = vmatprep.subr.mxu0 0.0
      %8406 = vmatpush1.msra.mxu0 0.0
      %8407 = vmatprep.subr.mxu0 0.0
      %8408 = vmatpush1.msra.mxu0 0.0
      %8409 = vmatprep.subr.mxu0 0.0
      %8410 = vmatpush1.msra.mxu0 0.0
      %8411 = vmatprep.subr.mxu0 0.0
      %8412 = vmatpush1.msra.mxu0 0.0
      %8413 = vmatprep.subr.mxu0 %v8144
      %8414 = vmatpush1.msra.mxu0 %v8143
      %8415 = vmatprep.subr.mxu0 0.0
      %8416 = vmatpush2.msra.mxu0 0.0
      %8417 = vmatprep.subr.mxu0 0.0
      %8418 = vmatpush2.msra.mxu0 0.0
      %8419 = vmatprep.subr.mxu0 0.0
      %8420 = vmatpush2.msra.mxu0 0.0
      %8421 = vmatprep.subr.mxu0 0.0
      %8422 = vmatpush2.msra.mxu0 0.0
      %8423 = vmatprep.subr.mxu0 0.0
      %8424 = vmatpush2.msra.mxu0 0.0
      %8425 = vmatprep.subr.mxu0 0.0
      %8426 = vmatpush2.msra.mxu0 0.0
      %8427 = vmatprep.subr.mxu0 0.0
      %8428 = vmatpush2.msra.mxu0 0.0
      %8429 = vmatprep.subr.mxu0 0.0
      %8430 = vmatpush2.msra.mxu0 0.0
      %8431 = vmatprep.subr.mxu0 0.0
      %8432 = vmatpush2.msra.mxu0 0.0
      %8433 = vmatprep.subr.mxu0 0.0
      %8434 = vmatpush2.msra.mxu0 0.0
      %8435 = vmatprep.subr.mxu0 0.0
      %8436 = vmatpush2.msra.mxu0 0.0
      %8437 = vmatprep.subr.mxu0 0.0
      %8438 = vmatpush2.msra.mxu0 0.0
      %8439 = vmatprep.subr.mxu0 0.0
      %8440 = vmatpush2.msra.mxu0 0.0
      %8441 = vmatprep.subr.mxu0 0.0
      %8442 = vmatpush2.msra.mxu0 0.0
      %8443 = vmatprep.subr.mxu0 0.0
      %8444 = vmatpush2.msra.mxu0 0.0
      %8445 = vmatprep.subr.mxu0 0.0
      %8446 = vmatpush2.msra.mxu0 0.0
      %8447 = vmatprep.mubr.f32.mxu0 0.0
      %8448 = vmatmul.mubr.f32.gmra.mxu0 %v8310
      %v8449 = vpop.f32.mrf.mxu0
      %v8450 = vadd.f32 %v8305, %v8449
      %v8451 = vpop.f32.mrf.mxu0
      %v8452 = vadd.f32 %v8307, %v8451
      %8453 = vdwg.mxu0
      %8454 = vrot.lane.b32.xlu0 %v8125, 15
      %v8455 = vpop.permute.xlu0 %8454
      %8456 = vrot.lane.b32.xlu0 %v8126, 15
      %v8457 = vpop.permute.xlu0 %8456
      %8458 = vrot.lane.b32.xlu0 %v8127, 15
      %v8459 = vpop.permute.xlu0 %8458
      %8460 = vrot.lane.b32.xlu0 %v8128, 15
      %v8461 = vpop.permute.xlu0 %8460
      %v8462 = vsel %vm1499, %v8459, %v8461
      %v8463 = vsel %vm1499, %v8457, %v8459
      %v8464 = vsel %vm1499, %v8455, %v8457
      %v8465 = vsel %vm1499, %v8461, %v8455
      %v8466 = vmul.f32 %v8465, %v1510
      %v8467 = vmul.f32 %v8464, %v1514
      %v8468 = vmul.f32 %v8463, %v1518
      %v8469 = vmul.f32 %v8462, %v1522
      %s8470 = scalar_lea.vmem %s904, 16
      %v8471 = vld [vmem:[%s8470] sm:$0xff]
      %v8473 = vsel %vm1200, %v8471, 0
      %8475 = vmatprep.subr.mxu0 0.0
      %8476 = vmatpush1.msra.mxu0 0.0
      %8477 = vmatprep.subr.mxu0 0.0
      %8478 = vmatpush1.msra.mxu0 0.0
      %8479 = vmatprep.subr.mxu0 0.0
      %8480 = vmatpush1.msra.mxu0 0.0
      %8481 = vmatprep.subr.mxu0 0.0
      %8482 = vmatpush1.msra.mxu0 0.0
      %8483 = vmatprep.subr.mxu0 0.0
      %8484 = vmatpush1.msra.mxu0 0.0
      %8485 = vmatprep.subr.mxu0 0.0
      %8486 = vmatpush1.msra.mxu0 0.0
      %8487 = vmatprep.subr.mxu0 0.0
      %8488 = vmatpush1.msra.mxu0 0.0
      %8489 = vmatprep.subr.mxu0 0.0
      %8490 = vmatpush1.msra.mxu0 0.0
      %8491 = vmatprep.subr.mxu0 0.0
      %8492 = vmatpush1.msra.mxu0 0.0
      %8493 = vmatprep.subr.mxu0 0.0
      %8494 = vmatpush1.msra.mxu0 0.0
      %8495 = vmatprep.subr.mxu0 0.0
      %8496 = vmatpush1.msra.mxu0 0.0
      %8497 = vmatprep.subr.mxu0 0.0
      %8498 = vmatpush1.msra.mxu0 0.0
      %8499 = vmatprep.subr.mxu0 0.0
      %8500 = vmatpush1.msra.mxu0 0.0
      %8501 = vmatprep.subr.mxu0 0.0
      %8502 = vmatpush1.msra.mxu0 0.0
      %8503 = vmatprep.subr.mxu0 0.0
      %8504 = vmatpush1.msra.mxu0 0.0
      %8505 = vmatprep.subr.mxu0 %v8467
      %8506 = vmatpush1.msra.mxu0 %v8466
      %8507 = vmatprep.subr.mxu0 0.0
      %8508 = vmatpush2.msra.mxu0 0.0
      %8509 = vmatprep.subr.mxu0 0.0
      %8510 = vmatpush2.msra.mxu0 0.0
      %8511 = vmatprep.subr.mxu0 0.0
      %8512 = vmatpush2.msra.mxu0 0.0
      %8513 = vmatprep.subr.mxu0 0.0
      %8514 = vmatpush2.msra.mxu0 0.0
      %8515 = vmatprep.subr.mxu0 0.0
      %8516 = vmatpush2.msra.mxu0 0.0
      %8517 = vmatprep.subr.mxu0 0.0
      %8518 = vmatpush2.msra.mxu0 0.0
      %8519 = vmatprep.subr.mxu0 0.0
      %8520 = vmatpush2.msra.mxu0 0.0
      %8521 = vmatprep.subr.mxu0 0.0
      %8522 = vmatpush2.msra.mxu0 0.0
      %8523 = vmatprep.subr.mxu0 0.0
      %8524 = vmatpush2.msra.mxu0 0.0
      %8525 = vmatprep.subr.mxu0 0.0
      %8526 = vmatpush2.msra.mxu0 0.0
      %8527 = vmatprep.subr.mxu0 0.0
      %8528 = vmatpush2.msra.mxu0 0.0
      %8529 = vmatprep.subr.mxu0 0.0
      %8530 = vmatpush2.msra.mxu0 0.0
      %8531 = vmatprep.subr.mxu0 0.0
      %8532 = vmatpush2.msra.mxu0 0.0
      %8533 = vmatprep.subr.mxu0 0.0
      %8534 = vmatpush2.msra.mxu0 0.0
      %8535 = vmatprep.subr.mxu0 0.0
      %8536 = vmatpush2.msra.mxu0 0.0
      %8537 = vmatprep.subr.mxu0 0.0
      %8538 = vmatpush2.msra.mxu0 0.0
      %8539 = vmatprep.mubr.f32.mxu0 0.0
      %8540 = vmatmul.mubr.f32.gmra.mxu0 %v8473
      %v8541 = vpop.f32.mrf.mxu0
      %v8542 = vadd.f32 0.0, %v8541
      %v8543 = vpop.f32.mrf.mxu0
      %v8544 = vadd.f32 0.0, %v8543
      %8545 = vdwg.mxu0
      %8546 = vmatprep.subr.mxu0 0.0
      %8547 = vmatpush1.msra.mxu0 0.0
      %8548 = vmatprep.subr.mxu0 0.0
      %8549 = vmatpush1.msra.mxu0 0.0
      %8550 = vmatprep.subr.mxu0 0.0
      %8551 = vmatpush1.msra.mxu0 0.0
      %8552 = vmatprep.subr.mxu0 0.0
      %8553 = vmatpush1.msra.mxu0 0.0
      %8554 = vmatprep.subr.mxu0 0.0
      %8555 = vmatpush1.msra.mxu0 0.0
      %8556 = vmatprep.subr.mxu0 0.0
      %8557 = vmatpush1.msra.mxu0 0.0
      %8558 = vmatprep.subr.mxu0 0.0
      %8559 = vmatpush1.msra.mxu0 0.0
      %8560 = vmatprep.subr.mxu0 0.0
      %8561 = vmatpush1.msra.mxu0 0.0
      %8562 = vmatprep.subr.mxu0 0.0
      %8563 = vmatpush1.msra.mxu0 0.0
      %8564 = vmatprep.subr.mxu0 0.0
      %8565 = vmatpush1.msra.mxu0 0.0
      %8566 = vmatprep.subr.mxu0 0.0
      %8567 = vmatpush1.msra.mxu0 0.0
      %8568 = vmatprep.subr.mxu0 0.0
      %8569 = vmatpush1.msra.mxu0 0.0
      %8570 = vmatprep.subr.mxu0 0.0
      %8571 = vmatpush1.msra.mxu0 0.0
      %8572 = vmatprep.subr.mxu0 0.0
      %8573 = vmatpush1.msra.mxu0 0.0
      %8574 = vmatprep.subr.mxu0 0.0
      %8575 = vmatpush1.msra.mxu0 0.0
      %8576 = vmatprep.subr.mxu0 %v8469
      %8577 = vmatpush1.msra.mxu0 %v8468
      %8578 = vmatprep.subr.mxu0 0.0
      %8579 = vmatpush2.msra.mxu0 0.0
      %8580 = vmatprep.subr.mxu0 0.0
      %8581 = vmatpush2.msra.mxu0 0.0
      %8582 = vmatprep.subr.mxu0 0.0
      %8583 = vmatpush2.msra.mxu0 0.0
      %8584 = vmatprep.subr.mxu0 0.0
      %8585 = vmatpush2.msra.mxu0 0.0
      %8586 = vmatprep.subr.mxu0 0.0
      %8587 = vmatpush2.msra.mxu0 0.0
      %8588 = vmatprep.subr.mxu0 0.0
      %8589 = vmatpush2.msra.mxu0 0.0
      %8590 = vmatprep.subr.mxu0 0.0
      %8591 = vmatpush2.msra.mxu0 0.0
      %8592 = vmatprep.subr.mxu0 0.0
      %8593 = vmatpush2.msra.mxu0 0.0
      %8594 = vmatprep.subr.mxu0 0.0
      %8595 = vmatpush2.msra.mxu0 0.0
      %8596 = vmatprep.subr.mxu0 0.0
      %8597 = vmatpush2.msra.mxu0 0.0
      %8598 = vmatprep.subr.mxu0 0.0
      %8599 = vmatpush2.msra.mxu0 0.0
      %8600 = vmatprep.subr.mxu0 0.0
      %8601 = vmatpush2.msra.mxu0 0.0
      %8602 = vmatprep.subr.mxu0 0.0
      %8603 = vmatpush2.msra.mxu0 0.0
      %8604 = vmatprep.subr.mxu0 0.0
      %8605 = vmatpush2.msra.mxu0 0.0
      %8606 = vmatprep.subr.mxu0 0.0
      %8607 = vmatpush2.msra.mxu0 0.0
      %8608 = vmatprep.subr.mxu0 0.0
      %8609 = vmatpush2.msra.mxu0 0.0
      %8610 = vmatprep.mubr.f32.mxu0 0.0
      %8611 = vmatmul.mubr.f32.gmra.mxu0 %v8473
      %v8612 = vpop.f32.mrf.mxu0
      %v8613 = vadd.f32 0.0, %v8612
      %v8614 = vpop.f32.mrf.mxu0
      %v8615 = vadd.f32 0.0, %v8614
      %8616 = vdwg.mxu0
      %v8617 = vadd.f32 %v8379, %v8542
      %v8618 = vadd.f32 %v8381, %v8544
      %v8619 = vadd.f32 %v8450, %v8613
      %v8620 = vadd.f32 %v8452, %v8615
      %8621 = vrot.lane.b32.xlu0 %v8125, 1
      %v8622 = vpop.permute.xlu0 %8621
      %8623 = vrot.lane.b32.xlu0 %v8126, 1
      %v8624 = vpop.permute.xlu0 %8623
      %8625 = vrot.lane.b32.xlu0 %v8127, 1
      %v8626 = vpop.permute.xlu0 %8625
      %8627 = vrot.lane.b32.xlu0 %v8128, 1
      %v8628 = vpop.permute.xlu0 %8627
      %v8629 = vsel %vm1690, %v8626, %v8628
      %v8630 = vsel %vm1690, %v8624, %v8626
      %v8631 = vsel %vm1690, %v8622, %v8624
      %v8632 = vsel %vm1690, %v8628, %v8622
      %v8633 = vmul.f32 %v8632, %v1701
      %v8634 = vmul.f32 %v8631, %v1705
      %v8635 = vmul.f32 %v8630, %v1709
      %v8636 = vmul.f32 %v8629, %v1713
      %s8637 = scalar_lea.vmem %s904, 24
      %v8638 = vld [vmem:[%s8637] sm:$0xff]
      %v8640 = vsel %vm1200, %v8638, 0
      %8642 = vmatprep.subr.mxu0 0.0
      %8643 = vmatpush1.msra.mxu0 0.0
      %8644 = vmatprep.subr.mxu0 0.0
      %8645 = vmatpush1.msra.mxu0 0.0
      %8646 = vmatprep.subr.mxu0 0.0
      %8647 = vmatpush1.msra.mxu0 0.0
      %8648 = vmatprep.subr.mxu0 0.0
      %8649 = vmatpush1.msra.mxu0 0.0
      %8650 = vmatprep.subr.mxu0 0.0
      %8651 = vmatpush1.msra.mxu0 0.0
      %8652 = vmatprep.subr.mxu0 0.0
      %8653 = vmatpush1.msra.mxu0 0.0
      %8654 = vmatprep.subr.mxu0 0.0
      %8655 = vmatpush1.msra.mxu0 0.0
      %8656 = vmatprep.subr.mxu0 0.0
      %8657 = vmatpush1.msra.mxu0 0.0
      %8658 = vmatprep.subr.mxu0 0.0
      %8659 = vmatpush1.msra.mxu0 0.0
      %8660 = vmatprep.subr.mxu0 0.0
      %8661 = vmatpush1.msra.mxu0 0.0
      %8662 = vmatprep.subr.mxu0 0.0
      %8663 = vmatpush1.msra.mxu0 0.0
      %8664 = vmatprep.subr.mxu0 0.0
      %8665 = vmatpush1.msra.mxu0 0.0
      %8666 = vmatprep.subr.mxu0 0.0
      %8667 = vmatpush1.msra.mxu0 0.0
      %8668 = vmatprep.subr.mxu0 0.0
      %8669 = vmatpush1.msra.mxu0 0.0
      %8670 = vmatprep.subr.mxu0 0.0
      %8671 = vmatpush1.msra.mxu0 0.0
      %8672 = vmatprep.subr.mxu0 %v8634
      %8673 = vmatpush1.msra.mxu0 %v8633
      %8674 = vmatprep.subr.mxu0 0.0
      %8675 = vmatpush2.msra.mxu0 0.0
      %8676 = vmatprep.subr.mxu0 0.0
      %8677 = vmatpush2.msra.mxu0 0.0
      %8678 = vmatprep.subr.mxu0 0.0
      %8679 = vmatpush2.msra.mxu0 0.0
      %8680 = vmatprep.subr.mxu0 0.0
      %8681 = vmatpush2.msra.mxu0 0.0
      %8682 = vmatprep.subr.mxu0 0.0
      %8683 = vmatpush2.msra.mxu0 0.0
      %8684 = vmatprep.subr.mxu0 0.0
      %8685 = vmatpush2.msra.mxu0 0.0
      %8686 = vmatprep.subr.mxu0 0.0
      %8687 = vmatpush2.msra.mxu0 0.0
      %8688 = vmatprep.subr.mxu0 0.0
      %8689 = vmatpush2.msra.mxu0 0.0
      %8690 = vmatprep.subr.mxu0 0.0
      %8691 = vmatpush2.msra.mxu0 0.0
      %8692 = vmatprep.subr.mxu0 0.0
      %8693 = vmatpush2.msra.mxu0 0.0
      %8694 = vmatprep.subr.mxu0 0.0
      %8695 = vmatpush2.msra.mxu0 0.0
      %8696 = vmatprep.subr.mxu0 0.0
      %8697 = vmatpush2.msra.mxu0 0.0
      %8698 = vmatprep.subr.mxu0 0.0
      %8699 = vmatpush2.msra.mxu0 0.0
      %8700 = vmatprep.subr.mxu0 0.0
      %8701 = vmatpush2.msra.mxu0 0.0
      %8702 = vmatprep.subr.mxu0 0.0
      %8703 = vmatpush2.msra.mxu0 0.0
      %8704 = vmatprep.subr.mxu0 0.0
      %8705 = vmatpush2.msra.mxu0 0.0
      %8706 = vmatprep.mubr.f32.mxu0 0.0
      %8707 = vmatmul.mubr.f32.gmra.mxu0 %v8640
      %v8708 = vpop.f32.mrf.mxu0
      %v8709 = vadd.f32 0.0, %v8708
      %v8710 = vpop.f32.mrf.mxu0
      %v8711 = vadd.f32 0.0, %v8710
      %8712 = vdwg.mxu0
      %8713 = vmatprep.subr.mxu0 0.0
      %8714 = vmatpush1.msra.mxu0 0.0
      %8715 = vmatprep.subr.mxu0 0.0
      %8716 = vmatpush1.msra.mxu0 0.0
      %8717 = vmatprep.subr.mxu0 0.0
      %8718 = vmatpush1.msra.mxu0 0.0
      %8719 = vmatprep.subr.mxu0 0.0
      %8720 = vmatpush1.msra.mxu0 0.0
      %8721 = vmatprep.subr.mxu0 0.0
      %8722 = vmatpush1.msra.mxu0 0.0
      %8723 = vmatprep.subr.mxu0 0.0
      %8724 = vmatpush1.msra.mxu0 0.0
      %8725 = vmatprep.subr.mxu0 0.0
      %8726 = vmatpush1.msra.mxu0 0.0
      %8727 = vmatprep.subr.mxu0 0.0
      %8728 = vmatpush1.msra.mxu0 0.0
      %8729 = vmatprep.subr.mxu0 0.0
      %8730 = vmatpush1.msra.mxu0 0.0
      %8731 = vmatprep.subr.mxu0 0.0
      %8732 = vmatpush1.msra.mxu0 0.0
      %8733 = vmatprep.subr.mxu0 0.0
      %8734 = vmatpush1.msra.mxu0 0.0
      %8735 = vmatprep.subr.mxu0 0.0
      %8736 = vmatpush1.msra.mxu0 0.0
      %8737 = vmatprep.subr.mxu0 0.0
      %8738 = vmatpush1.msra.mxu0 0.0
      %8739 = vmatprep.subr.mxu0 0.0
      %8740 = vmatpush1.msra.mxu0 0.0
      %8741 = vmatprep.subr.mxu0 0.0
      %8742 = vmatpush1.msra.mxu0 0.0
      %8743 = vmatprep.subr.mxu0 %v8636
      %8744 = vmatpush1.msra.mxu0 %v8635
      %8745 = vmatprep.subr.mxu0 0.0
      %8746 = vmatpush2.msra.mxu0 0.0
      %8747 = vmatprep.subr.mxu0 0.0
      %8748 = vmatpush2.msra.mxu0 0.0
      %8749 = vmatprep.subr.mxu0 0.0
      %8750 = vmatpush2.msra.mxu0 0.0
      %8751 = vmatprep.subr.mxu0 0.0
      %8752 = vmatpush2.msra.mxu0 0.0
      %8753 = vmatprep.subr.mxu0 0.0
      %8754 = vmatpush2.msra.mxu0 0.0
      %8755 = vmatprep.subr.mxu0 0.0
      %8756 = vmatpush2.msra.mxu0 0.0
      %8757 = vmatprep.subr.mxu0 0.0
      %8758 = vmatpush2.msra.mxu0 0.0
      %8759 = vmatprep.subr.mxu0 0.0
      %8760 = vmatpush2.msra.mxu0 0.0
      %8761 = vmatprep.subr.mxu0 0.0
      %8762 = vmatpush2.msra.mxu0 0.0
      %8763 = vmatprep.subr.mxu0 0.0
      %8764 = vmatpush2.msra.mxu0 0.0
      %8765 = vmatprep.subr.mxu0 0.0
      %8766 = vmatpush2.msra.mxu0 0.0
      %8767 = vmatprep.subr.mxu0 0.0
      %8768 = vmatpush2.msra.mxu0 0.0
      %8769 = vmatprep.subr.mxu0 0.0
      %8770 = vmatpush2.msra.mxu0 0.0
      %8771 = vmatprep.subr.mxu0 0.0
      %8772 = vmatpush2.msra.mxu0 0.0
      %8773 = vmatprep.subr.mxu0 0.0
      %8774 = vmatpush2.msra.mxu0 0.0
      %8775 = vmatprep.subr.mxu0 0.0
      %8776 = vmatpush2.msra.mxu0 0.0
      %8777 = vmatprep.mubr.f32.mxu0 0.0
      %8778 = vmatmul.mubr.f32.gmra.mxu0 %v8640
      %v8779 = vpop.f32.mrf.mxu0
      %v8780 = vadd.f32 0.0, %v8779
      %v8781 = vpop.f32.mrf.mxu0
      %v8782 = vadd.f32 0.0, %v8781
      %8783 = vdwg.mxu0
      %v8784 = vadd.f32 %v8617, %v8709
      %v8785 = vadd.f32 %v8618, %v8711
      %v8786 = vadd.f32 %v8619, %v8780
      %v8787 = vadd.f32 %v8620, %v8782
      %s8788 = scalar_lea.vmem %s904, 32
      %v8789 = vld [vmem:[%s8788] sm:$0xff]
      %v8791 = vsel %vm1200, %v8789, 0
      %8793 = vmatprep.subr.mxu0 0.0
      %8794 = vmatpush1.msra.mxu0 0.0
      %8795 = vmatprep.subr.mxu0 0.0
      %8796 = vmatpush1.msra.mxu0 0.0
      %8797 = vmatprep.subr.mxu0 0.0
      %8798 = vmatpush1.msra.mxu0 0.0
      %8799 = vmatprep.subr.mxu0 0.0
      %8800 = vmatpush1.msra.mxu0 0.0
      %8801 = vmatprep.subr.mxu0 0.0
      %8802 = vmatpush1.msra.mxu0 0.0
      %8803 = vmatprep.subr.mxu0 0.0
      %8804 = vmatpush1.msra.mxu0 0.0
      %8805 = vmatprep.subr.mxu0 0.0
      %8806 = vmatpush1.msra.mxu0 0.0
      %8807 = vmatprep.subr.mxu0 0.0
      %8808 = vmatpush1.msra.mxu0 0.0
      %8809 = vmatprep.subr.mxu0 0.0
      %8810 = vmatpush1.msra.mxu0 0.0
      %8811 = vmatprep.subr.mxu0 0.0
      %8812 = vmatpush1.msra.mxu0 0.0
      %8813 = vmatprep.subr.mxu0 0.0
      %8814 = vmatpush1.msra.mxu0 0.0
      %8815 = vmatprep.subr.mxu0 0.0
      %8816 = vmatpush1.msra.mxu0 0.0
      %8817 = vmatprep.subr.mxu0 0.0
      %8818 = vmatpush1.msra.mxu0 0.0
      %8819 = vmatprep.subr.mxu0 0.0
      %8820 = vmatpush1.msra.mxu0 0.0
      %8821 = vmatprep.subr.mxu0 0.0
      %8822 = vmatpush1.msra.mxu0 0.0
      %8823 = vmatprep.subr.mxu0 %v8126
      %8824 = vmatpush1.msra.mxu0 %v8125
      %8825 = vmatprep.subr.mxu0 0.0
      %8826 = vmatpush2.msra.mxu0 0.0
      %8827 = vmatprep.subr.mxu0 0.0
      %8828 = vmatpush2.msra.mxu0 0.0
      %8829 = vmatprep.subr.mxu0 0.0
      %8830 = vmatpush2.msra.mxu0 0.0
      %8831 = vmatprep.subr.mxu0 0.0
      %8832 = vmatpush2.msra.mxu0 0.0
      %8833 = vmatprep.subr.mxu0 0.0
      %8834 = vmatpush2.msra.mxu0 0.0
      %8835 = vmatprep.subr.mxu0 0.0
      %8836 = vmatpush2.msra.mxu0 0.0
      %8837 = vmatprep.subr.mxu0 0.0
      %8838 = vmatpush2.msra.mxu0 0.0
      %8839 = vmatprep.subr.mxu0 0.0
      %8840 = vmatpush2.msra.mxu0 0.0
      %8841 = vmatprep.subr.mxu0 0.0
      %8842 = vmatpush2.msra.mxu0 0.0
      %8843 = vmatprep.subr.mxu0 0.0
      %8844 = vmatpush2.msra.mxu0 0.0
      %8845 = vmatprep.subr.mxu0 0.0
      %8846 = vmatpush2.msra.mxu0 0.0
      %8847 = vmatprep.subr.mxu0 0.0
      %8848 = vmatpush2.msra.mxu0 0.0
      %8849 = vmatprep.subr.mxu0 0.0
      %8850 = vmatpush2.msra.mxu0 0.0
      %8851 = vmatprep.subr.mxu0 0.0
      %8852 = vmatpush2.msra.mxu0 0.0
      %8853 = vmatprep.subr.mxu0 0.0
      %8854 = vmatpush2.msra.mxu0 0.0
      %8855 = vmatprep.subr.mxu0 0.0
      %8856 = vmatpush2.msra.mxu0 0.0
      %8857 = vmatprep.mubr.f32.mxu0 0.0
      %8858 = vmatmul.mubr.f32.gmra.mxu0 %v8791
      %v8859 = vpop.f32.mrf.mxu0
      %v8860 = vadd.f32 0.0, %v8859
      %v8861 = vpop.f32.mrf.mxu0
      %v8862 = vadd.f32 0.0, %v8861
      %8863 = vdwg.mxu0
      %8864 = vmatprep.subr.mxu0 0.0
      %8865 = vmatpush1.msra.mxu0 0.0
      %8866 = vmatprep.subr.mxu0 0.0
      %8867 = vmatpush1.msra.mxu0 0.0
      %8868 = vmatprep.subr.mxu0 0.0
      %8869 = vmatpush1.msra.mxu0 0.0
      %8870 = vmatprep.subr.mxu0 0.0
      %8871 = vmatpush1.msra.mxu0 0.0
      %8872 = vmatprep.subr.mxu0 0.0
      %8873 = vmatpush1.msra.mxu0 0.0
      %8874 = vmatprep.subr.mxu0 0.0
      %8875 = vmatpush1.msra.mxu0 0.0
      %8876 = vmatprep.subr.mxu0 0.0
      %8877 = vmatpush1.msra.mxu0 0.0
      %8878 = vmatprep.subr.mxu0 0.0
      %8879 = vmatpush1.msra.mxu0 0.0
      %8880 = vmatprep.subr.mxu0 0.0
      %8881 = vmatpush1.msra.mxu0 0.0
      %8882 = vmatprep.subr.mxu0 0.0
      %8883 = vmatpush1.msra.mxu0 0.0
      %8884 = vmatprep.subr.mxu0 0.0
      %8885 = vmatpush1.msra.mxu0 0.0
      %8886 = vmatprep.subr.mxu0 0.0
      %8887 = vmatpush1.msra.mxu0 0.0
      %8888 = vmatprep.subr.mxu0 0.0
      %8889 = vmatpush1.msra.mxu0 0.0
      %8890 = vmatprep.subr.mxu0 0.0
      %8891 = vmatpush1.msra.mxu0 0.0
      %8892 = vmatprep.subr.mxu0 0.0
      %8893 = vmatpush1.msra.mxu0 0.0
      %8894 = vmatprep.subr.mxu0 %v8128
      %8895 = vmatpush1.msra.mxu0 %v8127
      %8896 = vmatprep.subr.mxu0 0.0
      %8897 = vmatpush2.msra.mxu0 0.0
      %8898 = vmatprep.subr.mxu0 0.0
      %8899 = vmatpush2.msra.mxu0 0.0
      %8900 = vmatprep.subr.mxu0 0.0
      %8901 = vmatpush2.msra.mxu0 0.0
      %8902 = vmatprep.subr.mxu0 0.0
      %8903 = vmatpush2.msra.mxu0 0.0
      %8904 = vmatprep.subr.mxu0 0.0
      %8905 = vmatpush2.msra.mxu0 0.0
      %8906 = vmatprep.subr.mxu0 0.0
      %8907 = vmatpush2.msra.mxu0 0.0
      %8908 = vmatprep.subr.mxu0 0.0
      %8909 = vmatpush2.msra.mxu0 0.0
      %8910 = vmatprep.subr.mxu0 0.0
      %8911 = vmatpush2.msra.mxu0 0.0
      %8912 = vmatprep.subr.mxu0 0.0
      %8913 = vmatpush2.msra.mxu0 0.0
      %8914 = vmatprep.subr.mxu0 0.0
      %8915 = vmatpush2.msra.mxu0 0.0
      %8916 = vmatprep.subr.mxu0 0.0
      %8917 = vmatpush2.msra.mxu0 0.0
      %8918 = vmatprep.subr.mxu0 0.0
      %8919 = vmatpush2.msra.mxu0 0.0
      %8920 = vmatprep.subr.mxu0 0.0
      %8921 = vmatpush2.msra.mxu0 0.0
      %8922 = vmatprep.subr.mxu0 0.0
      %8923 = vmatpush2.msra.mxu0 0.0
      %8924 = vmatprep.subr.mxu0 0.0
      %8925 = vmatpush2.msra.mxu0 0.0
      %8926 = vmatprep.subr.mxu0 0.0
      %8927 = vmatpush2.msra.mxu0 0.0
      %8928 = vmatprep.mubr.f32.mxu0 0.0
      %8929 = vmatmul.mubr.f32.gmra.mxu0 %v8791
      %v8930 = vpop.f32.mrf.mxu0
      %v8931 = vadd.f32 0.0, %v8930
      %v8932 = vpop.f32.mrf.mxu0
      %v8933 = vadd.f32 0.0, %v8932
      %8934 = vdwg.mxu0
      %v8935 = vadd.f32 %v8784, %v8860
      %v8936 = vadd.f32 %v8785, %v8862
      %v8937 = vadd.f32 %v8786, %v8931
      %v8938 = vadd.f32 %v8787, %v8933
      %8939 = vrot.lane.b32.xlu0 %v8125, 127
      %v8940 = vpop.permute.xlu0 %8939
      %8941 = vrot.lane.b32.xlu0 %v8126, 127
      %v8942 = vpop.permute.xlu0 %8941
      %8943 = vrot.lane.b32.xlu0 %v8127, 127
      %v8944 = vpop.permute.xlu0 %8943
      %8945 = vrot.lane.b32.xlu0 %v8128, 127
      %v8946 = vpop.permute.xlu0 %8945
      %v8947 = vsel %vm2032, %v8944, %v8946
      %v8948 = vsel %vm2032, %v8942, %v8944
      %v8949 = vsel %vm2032, %v8940, %v8942
      %v8950 = vsel %vm2032, %v8946, %v8940
      %v8951 = vmul.f32 %v8949, %v2043
      %v8952 = vmul.f32 %v8948, %v2047
      %v8953 = vmul.f32 %v8947, %v2051
      %v8954 = vmul.f32 %v8950, %v2055
      %s8955 = scalar_lea.vmem %s904, 40
      %v8956 = vld [vmem:[%s8955] sm:$0xff]
      %v8958 = vsel %vm1200, %v8956, 0
      %8960 = vmatprep.subr.mxu0 0.0
      %8961 = vmatpush1.msra.mxu0 0.0
      %8962 = vmatprep.subr.mxu0 0.0
      %8963 = vmatpush1.msra.mxu0 0.0
      %8964 = vmatprep.subr.mxu0 0.0
      %8965 = vmatpush1.msra.mxu0 0.0
      %8966 = vmatprep.subr.mxu0 0.0
      %8967 = vmatpush1.msra.mxu0 0.0
      %8968 = vmatprep.subr.mxu0 0.0
      %8969 = vmatpush1.msra.mxu0 0.0
      %8970 = vmatprep.subr.mxu0 0.0
      %8971 = vmatpush1.msra.mxu0 0.0
      %8972 = vmatprep.subr.mxu0 0.0
      %8973 = vmatpush1.msra.mxu0 0.0
      %8974 = vmatprep.subr.mxu0 0.0
      %8975 = vmatpush1.msra.mxu0 0.0
      %8976 = vmatprep.subr.mxu0 0.0
      %8977 = vmatpush1.msra.mxu0 0.0
      %8978 = vmatprep.subr.mxu0 0.0
      %8979 = vmatpush1.msra.mxu0 0.0
      %8980 = vmatprep.subr.mxu0 0.0
      %8981 = vmatpush1.msra.mxu0 0.0
      %8982 = vmatprep.subr.mxu0 0.0
      %8983 = vmatpush1.msra.mxu0 0.0
      %8984 = vmatprep.subr.mxu0 0.0
      %8985 = vmatpush1.msra.mxu0 0.0
      %8986 = vmatprep.subr.mxu0 0.0
      %8987 = vmatpush1.msra.mxu0 0.0
      %8988 = vmatprep.subr.mxu0 0.0
      %8989 = vmatpush1.msra.mxu0 0.0
      %8990 = vmatprep.subr.mxu0 %v8952
      %8991 = vmatpush1.msra.mxu0 %v8951
      %8992 = vmatprep.subr.mxu0 0.0
      %8993 = vmatpush2.msra.mxu0 0.0
      %8994 = vmatprep.subr.mxu0 0.0
      %8995 = vmatpush2.msra.mxu0 0.0
      %8996 = vmatprep.subr.mxu0 0.0
      %8997 = vmatpush2.msra.mxu0 0.0
      %8998 = vmatprep.subr.mxu0 0.0
      %8999 = vmatpush2.msra.mxu0 0.0
      %9000 = vmatprep.subr.mxu0 0.0
      %9001 = vmatpush2.msra.mxu0 0.0
      %9002 = vmatprep.subr.mxu0 0.0
      %9003 = vmatpush2.msra.mxu0 0.0
      %9004 = vmatprep.subr.mxu0 0.0
      %9005 = vmatpush2.msra.mxu0 0.0
      %9006 = vmatprep.subr.mxu0 0.0
      %9007 = vmatpush2.msra.mxu0 0.0
      %9008 = vmatprep.subr.mxu0 0.0
      %9009 = vmatpush2.msra.mxu0 0.0
      %9010 = vmatprep.subr.mxu0 0.0
      %9011 = vmatpush2.msra.mxu0 0.0
      %9012 = vmatprep.subr.mxu0 0.0
      %9013 = vmatpush2.msra.mxu0 0.0
      %9014 = vmatprep.subr.mxu0 0.0
      %9015 = vmatpush2.msra.mxu0 0.0
      %9016 = vmatprep.subr.mxu0 0.0
      %9017 = vmatpush2.msra.mxu0 0.0
      %9018 = vmatprep.subr.mxu0 0.0
      %9019 = vmatpush2.msra.mxu0 0.0
      %9020 = vmatprep.subr.mxu0 0.0
      %9021 = vmatpush2.msra.mxu0 0.0
      %9022 = vmatprep.subr.mxu0 0.0
      %9023 = vmatpush2.msra.mxu0 0.0
      %9024 = vmatprep.mubr.f32.mxu0 0.0
      %9025 = vmatmul.mubr.f32.gmra.mxu0 %v8958
      %v9026 = vpop.f32.mrf.mxu0
      %v9027 = vadd.f32 0.0, %v9026
      %v9028 = vpop.f32.mrf.mxu0
      %v9029 = vadd.f32 0.0, %v9028
      %9030 = vdwg.mxu0
      %9031 = vmatprep.subr.mxu0 0.0
      %9032 = vmatpush1.msra.mxu0 0.0
      %9033 = vmatprep.subr.mxu0 0.0
      %9034 = vmatpush1.msra.mxu0 0.0
      %9035 = vmatprep.subr.mxu0 0.0
      %9036 = vmatpush1.msra.mxu0 0.0
      %9037 = vmatprep.subr.mxu0 0.0
      %9038 = vmatpush1.msra.mxu0 0.0
      %9039 = vmatprep.subr.mxu0 0.0
      %9040 = vmatpush1.msra.mxu0 0.0
      %9041 = vmatprep.subr.mxu0 0.0
      %9042 = vmatpush1.msra.mxu0 0.0
      %9043 = vmatprep.subr.mxu0 0.0
      %9044 = vmatpush1.msra.mxu0 0.0
      %9045 = vmatprep.subr.mxu0 0.0
      %9046 = vmatpush1.msra.mxu0 0.0
      %9047 = vmatprep.subr.mxu0 0.0
      %9048 = vmatpush1.msra.mxu0 0.0
      %9049 = vmatprep.subr.mxu0 0.0
      %9050 = vmatpush1.msra.mxu0 0.0
      %9051 = vmatprep.subr.mxu0 0.0
      %9052 = vmatpush1.msra.mxu0 0.0
      %9053 = vmatprep.subr.mxu0 0.0
      %9054 = vmatpush1.msra.mxu0 0.0
      %9055 = vmatprep.subr.mxu0 0.0
      %9056 = vmatpush1.msra.mxu0 0.0
      %9057 = vmatprep.subr.mxu0 0.0
      %9058 = vmatpush1.msra.mxu0 0.0
      %9059 = vmatprep.subr.mxu0 0.0
      %9060 = vmatpush1.msra.mxu0 0.0
      %9061 = vmatprep.subr.mxu0 %v8954
      %9062 = vmatpush1.msra.mxu0 %v8953
      %9063 = vmatprep.subr.mxu0 0.0
      %9064 = vmatpush2.msra.mxu0 0.0
      %9065 = vmatprep.subr.mxu0 0.0
      %9066 = vmatpush2.msra.mxu0 0.0
      %9067 = vmatprep.subr.mxu0 0.0
      %9068 = vmatpush2.msra.mxu0 0.0
      %9069 = vmatprep.subr.mxu0 0.0
      %9070 = vmatpush2.msra.mxu0 0.0
      %9071 = vmatprep.subr.mxu0 0.0
      %9072 = vmatpush2.msra.mxu0 0.0
      %9073 = vmatprep.subr.mxu0 0.0
      %9074 = vmatpush2.msra.mxu0 0.0
      %9075 = vmatprep.subr.mxu0 0.0
      %9076 = vmatpush2.msra.mxu0 0.0
      %9077 = vmatprep.subr.mxu0 0.0
      %9078 = vmatpush2.msra.mxu0 0.0
      %9079 = vmatprep.subr.mxu0 0.0
      %9080 = vmatpush2.msra.mxu0 0.0
      %9081 = vmatprep.subr.mxu0 0.0
      %9082 = vmatpush2.msra.mxu0 0.0
      %9083 = vmatprep.subr.mxu0 0.0
      %9084 = vmatpush2.msra.mxu0 0.0
      %9085 = vmatprep.subr.mxu0 0.0
      %9086 = vmatpush2.msra.mxu0 0.0
      %9087 = vmatprep.subr.mxu0 0.0
      %9088 = vmatpush2.msra.mxu0 0.0
      %9089 = vmatprep.subr.mxu0 0.0
      %9090 = vmatpush2.msra.mxu0 0.0
      %9091 = vmatprep.subr.mxu0 0.0
      %9092 = vmatpush2.msra.mxu0 0.0
      %9093 = vmatprep.subr.mxu0 0.0
      %9094 = vmatpush2.msra.mxu0 0.0
      %9095 = vmatprep.mubr.f32.mxu0 0.0
      %9096 = vmatmul.mubr.f32.gmra.mxu0 %v8958
      %v9097 = vpop.f32.mrf.mxu0
      %v9098 = vadd.f32 0.0, %v9097
      %v9099 = vpop.f32.mrf.mxu0
      %v9100 = vadd.f32 0.0, %v9099
      %9101 = vdwg.mxu0
      %v9102 = vadd.f32 %v8935, %v9027
      %v9103 = vadd.f32 %v8936, %v9029
      %v9104 = vadd.f32 %v8937, %v9098
      %v9105 = vadd.f32 %v8938, %v9100
      %9106 = vrot.lane.b32.xlu0 %v8125, 113
      %v9107 = vpop.permute.xlu0 %9106
      %9108 = vrot.lane.b32.xlu0 %v8126, 113
      %v9109 = vpop.permute.xlu0 %9108
      %9110 = vrot.lane.b32.xlu0 %v8127, 113
      %v9111 = vpop.permute.xlu0 %9110
      %9112 = vrot.lane.b32.xlu0 %v8128, 113
      %v9113 = vpop.permute.xlu0 %9112
      %v9114 = vsel %vm2223, %v9111, %v9113
      %v9115 = vsel %vm2223, %v9109, %v9111
      %v9116 = vsel %vm2223, %v9107, %v9109
      %v9117 = vsel %vm2223, %v9113, %v9107
      %v9118 = vmul.f32 %v9116, %v2234
      %v9119 = vmul.f32 %v9115, %v2238
      %v9120 = vmul.f32 %v9114, %v2242
      %v9121 = vmul.f32 %v9117, %v2246
      %s9122 = scalar_lea.vmem %s904, 48
      %v9123 = vld [vmem:[%s9122] sm:$0xff]
      %v9125 = vsel %vm1200, %v9123, 0
      %9127 = vmatprep.subr.mxu0 0.0
      %9128 = vmatpush1.msra.mxu0 0.0
      %9129 = vmatprep.subr.mxu0 0.0
      %9130 = vmatpush1.msra.mxu0 0.0
      %9131 = vmatprep.subr.mxu0 0.0
      %9132 = vmatpush1.msra.mxu0 0.0
      %9133 = vmatprep.subr.mxu0 0.0
      %9134 = vmatpush1.msra.mxu0 0.0
      %9135 = vmatprep.subr.mxu0 0.0
      %9136 = vmatpush1.msra.mxu0 0.0
      %9137 = vmatprep.subr.mxu0 0.0
      %9138 = vmatpush1.msra.mxu0 0.0
      %9139 = vmatprep.subr.mxu0 0.0
      %9140 = vmatpush1.msra.mxu0 0.0
      %9141 = vmatprep.subr.mxu0 0.0
      %9142 = vmatpush1.msra.mxu0 0.0
      %9143 = vmatprep.subr.mxu0 0.0
      %9144 = vmatpush1.msra.mxu0 0.0
      %9145 = vmatprep.subr.mxu0 0.0
      %9146 = vmatpush1.msra.mxu0 0.0
      %9147 = vmatprep.subr.mxu0 0.0
      %9148 = vmatpush1.msra.mxu0 0.0
      %9149 = vmatprep.subr.mxu0 0.0
      %9150 = vmatpush1.msra.mxu0 0.0
      %9151 = vmatprep.subr.mxu0 0.0
      %9152 = vmatpush1.msra.mxu0 0.0
      %9153 = vmatprep.subr.mxu0 0.0
      %9154 = vmatpush1.msra.mxu0 0.0
      %9155 = vmatprep.subr.mxu0 0.0
      %9156 = vmatpush1.msra.mxu0 0.0
      %9157 = vmatprep.subr.mxu0 %v9119
      %9158 = vmatpush1.msra.mxu0 %v9118
      %9159 = vmatprep.subr.mxu0 0.0
      %9160 = vmatpush2.msra.mxu0 0.0
      %9161 = vmatprep.subr.mxu0 0.0
      %9162 = vmatpush2.msra.mxu0 0.0
      %9163 = vmatprep.subr.mxu0 0.0
      %9164 = vmatpush2.msra.mxu0 0.0
      %9165 = vmatprep.subr.mxu0 0.0
      %9166 = vmatpush2.msra.mxu0 0.0
      %9167 = vmatprep.subr.mxu0 0.0
      %9168 = vmatpush2.msra.mxu0 0.0
      %9169 = vmatprep.subr.mxu0 0.0
      %9170 = vmatpush2.msra.mxu0 0.0
      %9171 = vmatprep.subr.mxu0 0.0
      %9172 = vmatpush2.msra.mxu0 0.0
      %9173 = vmatprep.subr.mxu0 0.0
      %9174 = vmatpush2.msra.mxu0 0.0
      %9175 = vmatprep.subr.mxu0 0.0
      %9176 = vmatpush2.msra.mxu0 0.0
      %9177 = vmatprep.subr.mxu0 0.0
      %9178 = vmatpush2.msra.mxu0 0.0
      %9179 = vmatprep.subr.mxu0 0.0
      %9180 = vmatpush2.msra.mxu0 0.0
      %9181 = vmatprep.subr.mxu0 0.0
      %9182 = vmatpush2.msra.mxu0 0.0
      %9183 = vmatprep.subr.mxu0 0.0
      %9184 = vmatpush2.msra.mxu0 0.0
      %9185 = vmatprep.subr.mxu0 0.0
      %9186 = vmatpush2.msra.mxu0 0.0
      %9187 = vmatprep.subr.mxu0 0.0
      %9188 = vmatpush2.msra.mxu0 0.0
      %9189 = vmatprep.subr.mxu0 0.0
      %9190 = vmatpush2.msra.mxu0 0.0
      %9191 = vmatprep.mubr.f32.mxu0 0.0
      %9192 = vmatmul.mubr.f32.gmra.mxu0 %v9125
      %v9193 = vpop.f32.mrf.mxu0
      %v9194 = vadd.f32 0.0, %v9193
      %v9195 = vpop.f32.mrf.mxu0
      %v9196 = vadd.f32 0.0, %v9195
      %9197 = vdwg.mxu0
      %9198 = vmatprep.subr.mxu0 0.0
      %9199 = vmatpush1.msra.mxu0 0.0
      %9200 = vmatprep.subr.mxu0 0.0
      %9201 = vmatpush1.msra.mxu0 0.0
      %9202 = vmatprep.subr.mxu0 0.0
      %9203 = vmatpush1.msra.mxu0 0.0
      %9204 = vmatprep.subr.mxu0 0.0
      %9205 = vmatpush1.msra.mxu0 0.0
      %9206 = vmatprep.subr.mxu0 0.0
      %9207 = vmatpush1.msra.mxu0 0.0
      %9208 = vmatprep.subr.mxu0 0.0
      %9209 = vmatpush1.msra.mxu0 0.0
      %9210 = vmatprep.subr.mxu0 0.0
      %9211 = vmatpush1.msra.mxu0 0.0
      %9212 = vmatprep.subr.mxu0 0.0
      %9213 = vmatpush1.msra.mxu0 0.0
      %9214 = vmatprep.subr.mxu0 0.0
      %9215 = vmatpush1.msra.mxu0 0.0
      %9216 = vmatprep.subr.mxu0 0.0
      %9217 = vmatpush1.msra.mxu0 0.0
      %9218 = vmatprep.subr.mxu0 0.0
      %9219 = vmatpush1.msra.mxu0 0.0
      %9220 = vmatprep.subr.mxu0 0.0
      %9221 = vmatpush1.msra.mxu0 0.0
      %9222 = vmatprep.subr.mxu0 0.0
      %9223 = vmatpush1.msra.mxu0 0.0
      %9224 = vmatprep.subr.mxu0 0.0
      %9225 = vmatpush1.msra.mxu0 0.0
      %9226 = vmatprep.subr.mxu0 0.0
      %9227 = vmatpush1.msra.mxu0 0.0
      %9228 = vmatprep.subr.mxu0 %v9121
      %9229 = vmatpush1.msra.mxu0 %v9120
      %9230 = vmatprep.subr.mxu0 0.0
      %9231 = vmatpush2.msra.mxu0 0.0
      %9232 = vmatprep.subr.mxu0 0.0
      %9233 = vmatpush2.msra.mxu0 0.0
      %9234 = vmatprep.subr.mxu0 0.0
      %9235 = vmatpush2.msra.mxu0 0.0
      %9236 = vmatprep.subr.mxu0 0.0
      %9237 = vmatpush2.msra.mxu0 0.0
      %9238 = vmatprep.subr.mxu0 0.0
      %9239 = vmatpush2.msra.mxu0 0.0
      %9240 = vmatprep.subr.mxu0 0.0
      %9241 = vmatpush2.msra.mxu0 0.0
      %9242 = vmatprep.subr.mxu0 0.0
      %9243 = vmatpush2.msra.mxu0 0.0
      %9244 = vmatprep.subr.mxu0 0.0
      %9245 = vmatpush2.msra.mxu0 0.0
      %9246 = vmatprep.subr.mxu0 0.0
      %9247 = vmatpush2.msra.mxu0 0.0
      %9248 = vmatprep.subr.mxu0 0.0
      %9249 = vmatpush2.msra.mxu0 0.0
      %9250 = vmatprep.subr.mxu0 0.0
      %9251 = vmatpush2.msra.mxu0 0.0
      %9252 = vmatprep.subr.mxu0 0.0
      %9253 = vmatpush2.msra.mxu0 0.0
      %9254 = vmatprep.subr.mxu0 0.0
      %9255 = vmatpush2.msra.mxu0 0.0
      %9256 = vmatprep.subr.mxu0 0.0
      %9257 = vmatpush2.msra.mxu0 0.0
      %9258 = vmatprep.subr.mxu0 0.0
      %9259 = vmatpush2.msra.mxu0 0.0
      %9260 = vmatprep.subr.mxu0 0.0
      %9261 = vmatpush2.msra.mxu0 0.0
      %9262 = vmatprep.mubr.f32.mxu0 0.0
      %9263 = vmatmul.mubr.f32.gmra.mxu0 %v9125
      %v9264 = vpop.f32.mrf.mxu0
      %v9265 = vadd.f32 0.0, %v9264
      %v9266 = vpop.f32.mrf.mxu0
      %v9267 = vadd.f32 0.0, %v9266
      %9268 = vdwg.mxu0
      %v9269 = vadd.f32 %v9102, %v9194
      %v9270 = vadd.f32 %v9103, %v9196
      %v9271 = vadd.f32 %v9104, %v9265
      %v9272 = vadd.f32 %v9105, %v9267
      %9273 = vrot.lane.b32.xlu0 %v8125, 112
      %v9274 = vpop.permute.xlu0 %9273
      %9275 = vrot.lane.b32.xlu0 %v8126, 112
      %v9276 = vpop.permute.xlu0 %9275
      %9277 = vrot.lane.b32.xlu0 %v8127, 112
      %v9278 = vpop.permute.xlu0 %9277
      %9279 = vrot.lane.b32.xlu0 %v8128, 112
      %v9280 = vpop.permute.xlu0 %9279
      %v9281 = vsel %vm2414, %v9278, %v9280
      %v9282 = vsel %vm2414, %v9276, %v9278
      %v9283 = vsel %vm2414, %v9274, %v9276
      %v9284 = vsel %vm2414, %v9280, %v9274
      %v9285 = vmul.f32 %v9283, %v2425
      %v9286 = vmul.f32 %v9282, %v2429
      %v9287 = vmul.f32 %v9281, %v2433
      %v9288 = vmul.f32 %v9284, %v2437
      %s9289 = scalar_lea.vmem %s904, 56
      %v9290 = vld [vmem:[%s9289] sm:$0xff]
      %v9292 = vsel %vm1200, %v9290, 0
      %9294 = vmatprep.subr.mxu0 0.0
      %9295 = vmatpush1.msra.mxu0 0.0
      %9296 = vmatprep.subr.mxu0 0.0
      %9297 = vmatpush1.msra.mxu0 0.0
      %9298 = vmatprep.subr.mxu0 0.0
      %9299 = vmatpush1.msra.mxu0 0.0
      %9300 = vmatprep.subr.mxu0 0.0
      %9301 = vmatpush1.msra.mxu0 0.0
      %9302 = vmatprep.subr.mxu0 0.0
      %9303 = vmatpush1.msra.mxu0 0.0
      %9304 = vmatprep.subr.mxu0 0.0
      %9305 = vmatpush1.msra.mxu0 0.0
      %9306 = vmatprep.subr.mxu0 0.0
      %9307 = vmatpush1.msra.mxu0 0.0
      %9308 = vmatprep.subr.mxu0 0.0
      %9309 = vmatpush1.msra.mxu0 0.0
      %9310 = vmatprep.subr.mxu0 0.0
      %9311 = vmatpush1.msra.mxu0 0.0
      %9312 = vmatprep.subr.mxu0 0.0
      %9313 = vmatpush1.msra.mxu0 0.0
      %9314 = vmatprep.subr.mxu0 0.0
      %9315 = vmatpush1.msra.mxu0 0.0
      %9316 = vmatprep.subr.mxu0 0.0
      %9317 = vmatpush1.msra.mxu0 0.0
      %9318 = vmatprep.subr.mxu0 0.0
      %9319 = vmatpush1.msra.mxu0 0.0
      %9320 = vmatprep.subr.mxu0 0.0
      %9321 = vmatpush1.msra.mxu0 0.0
      %9322 = vmatprep.subr.mxu0 0.0
      %9323 = vmatpush1.msra.mxu0 0.0
      %9324 = vmatprep.subr.mxu0 %v9286
      %9325 = vmatpush1.msra.mxu0 %v9285
      %9326 = vmatprep.subr.mxu0 0.0
      %9327 = vmatpush2.msra.mxu0 0.0
      %9328 = vmatprep.subr.mxu0 0.0
      %9329 = vmatpush2.msra.mxu0 0.0
      %9330 = vmatprep.subr.mxu0 0.0
      %9331 = vmatpush2.msra.mxu0 0.0
      %9332 = vmatprep.subr.mxu0 0.0
      %9333 = vmatpush2.msra.mxu0 0.0
      %9334 = vmatprep.subr.mxu0 0.0
      %9335 = vmatpush2.msra.mxu0 0.0
      %9336 = vmatprep.subr.mxu0 0.0
      %9337 = vmatpush2.msra.mxu0 0.0
      %9338 = vmatprep.subr.mxu0 0.0
      %9339 = vmatpush2.msra.mxu0 0.0
      %9340 = vmatprep.subr.mxu0 0.0
      %9341 = vmatpush2.msra.mxu0 0.0
      %9342 = vmatprep.subr.mxu0 0.0
      %9343 = vmatpush2.msra.mxu0 0.0
      %9344 = vmatprep.subr.mxu0 0.0
      %9345 = vmatpush2.msra.mxu0 0.0
      %9346 = vmatprep.subr.mxu0 0.0
      %9347 = vmatpush2.msra.mxu0 0.0
      %9348 = vmatprep.subr.mxu0 0.0
      %9349 = vmatpush2.msra.mxu0 0.0
      %9350 = vmatprep.subr.mxu0 0.0
      %9351 = vmatpush2.msra.mxu0 0.0
      %9352 = vmatprep.subr.mxu0 0.0
      %9353 = vmatpush2.msra.mxu0 0.0
      %9354 = vmatprep.subr.mxu0 0.0
      %9355 = vmatpush2.msra.mxu0 0.0
      %9356 = vmatprep.subr.mxu0 0.0
      %9357 = vmatpush2.msra.mxu0 0.0
      %9358 = vmatprep.mubr.f32.mxu0 0.0
      %9359 = vmatmul.mubr.f32.gmra.mxu0 %v9292
      %v9360 = vpop.f32.mrf.mxu0
      %v9361 = vadd.f32 0.0, %v9360
      %v9362 = vpop.f32.mrf.mxu0
      %v9363 = vadd.f32 0.0, %v9362
      %9364 = vdwg.mxu0
      %9365 = vmatprep.subr.mxu0 0.0
      %9366 = vmatpush1.msra.mxu0 0.0
      %9367 = vmatprep.subr.mxu0 0.0
      %9368 = vmatpush1.msra.mxu0 0.0
      %9369 = vmatprep.subr.mxu0 0.0
      %9370 = vmatpush1.msra.mxu0 0.0
      %9371 = vmatprep.subr.mxu0 0.0
      %9372 = vmatpush1.msra.mxu0 0.0
      %9373 = vmatprep.subr.mxu0 0.0
      %9374 = vmatpush1.msra.mxu0 0.0
      %9375 = vmatprep.subr.mxu0 0.0
      %9376 = vmatpush1.msra.mxu0 0.0
      %9377 = vmatprep.subr.mxu0 0.0
      %9378 = vmatpush1.msra.mxu0 0.0
      %9379 = vmatprep.subr.mxu0 0.0
      %9380 = vmatpush1.msra.mxu0 0.0
      %9381 = vmatprep.subr.mxu0 0.0
      %9382 = vmatpush1.msra.mxu0 0.0
      %9383 = vmatprep.subr.mxu0 0.0
      %9384 = vmatpush1.msra.mxu0 0.0
      %9385 = vmatprep.subr.mxu0 0.0
      %9386 = vmatpush1.msra.mxu0 0.0
      %9387 = vmatprep.subr.mxu0 0.0
      %9388 = vmatpush1.msra.mxu0 0.0
      %9389 = vmatprep.subr.mxu0 0.0
      %9390 = vmatpush1.msra.mxu0 0.0
      %9391 = vmatprep.subr.mxu0 0.0
      %9392 = vmatpush1.msra.mxu0 0.0
      %9393 = vmatprep.subr.mxu0 0.0
      %9394 = vmatpush1.msra.mxu0 0.0
      %9395 = vmatprep.subr.mxu0 %v9288
      %9396 = vmatpush1.msra.mxu0 %v9287
      %9397 = vmatprep.subr.mxu0 0.0
      %9398 = vmatpush2.msra.mxu0 0.0
      %9399 = vmatprep.subr.mxu0 0.0
      %9400 = vmatpush2.msra.mxu0 0.0
      %9401 = vmatprep.subr.mxu0 0.0
      %9402 = vmatpush2.msra.mxu0 0.0
      %9403 = vmatprep.subr.mxu0 0.0
      %9404 = vmatpush2.msra.mxu0 0.0
      %9405 = vmatprep.subr.mxu0 0.0
      %9406 = vmatpush2.msra.mxu0 0.0
      %9407 = vmatprep.subr.mxu0 0.0
      %9408 = vmatpush2.msra.mxu0 0.0
      %9409 = vmatprep.subr.mxu0 0.0
      %9410 = vmatpush2.msra.mxu0 0.0
      %9411 = vmatprep.subr.mxu0 0.0
      %9412 = vmatpush2.msra.mxu0 0.0
      %9413 = vmatprep.subr.mxu0 0.0
      %9414 = vmatpush2.msra.mxu0 0.0
      %9415 = vmatprep.subr.mxu0 0.0
      %9416 = vmatpush2.msra.mxu0 0.0
      %9417 = vmatprep.subr.mxu0 0.0
      %9418 = vmatpush2.msra.mxu0 0.0
      %9419 = vmatprep.subr.mxu0 0.0
      %9420 = vmatpush2.msra.mxu0 0.0
      %9421 = vmatprep.subr.mxu0 0.0
      %9422 = vmatpush2.msra.mxu0 0.0
      %9423 = vmatprep.subr.mxu0 0.0
      %9424 = vmatpush2.msra.mxu0 0.0
      %9425 = vmatprep.subr.mxu0 0.0
      %9426 = vmatpush2.msra.mxu0 0.0
      %9427 = vmatprep.subr.mxu0 0.0
      %9428 = vmatpush2.msra.mxu0 0.0
      %9429 = vmatprep.mubr.f32.mxu0 0.0
      %9430 = vmatmul.mubr.f32.gmra.mxu0 %v9292
      %v9431 = vpop.f32.mrf.mxu0
      %v9432 = vadd.f32 0.0, %v9431
      %v9433 = vpop.f32.mrf.mxu0
      %v9434 = vadd.f32 0.0, %v9433
      %9435 = vdwg.mxu0
      %v9436 = vadd.f32 %v9269, %v9361
      %v9437 = vadd.f32 %v9270, %v9363
      %v9438 = vadd.f32 %v9271, %v9432
      %v9439 = vadd.f32 %v9272, %v9434
      %9440 = vrot.lane.b32.xlu0 %v8125, 111
      %v9441 = vpop.permute.xlu0 %9440
      %9442 = vrot.lane.b32.xlu0 %v8126, 111
      %v9443 = vpop.permute.xlu0 %9442
      %9444 = vrot.lane.b32.xlu0 %v8127, 111
      %v9445 = vpop.permute.xlu0 %9444
      %9446 = vrot.lane.b32.xlu0 %v8128, 111
      %v9447 = vpop.permute.xlu0 %9446
      %v9448 = vsel %vm2605, %v9445, %v9447
      %v9449 = vsel %vm2605, %v9443, %v9445
      %v9450 = vsel %vm2605, %v9441, %v9443
      %v9451 = vsel %vm2605, %v9447, %v9441
      %v9452 = vmul.f32 %v9450, %v2616
      %v9453 = vmul.f32 %v9449, %v2620
      %v9454 = vmul.f32 %v9448, %v2624
      %v9455 = vmul.f32 %v9451, %v2628
      %s9456 = scalar_lea.vmem %s904, 64
      %v9457 = vld [vmem:[%s9456] sm:$0xff]
      %v9459 = vsel %vm1200, %v9457, 0
      %9461 = vmatprep.subr.mxu0 0.0
      %9462 = vmatpush1.msra.mxu0 0.0
      %9463 = vmatprep.subr.mxu0 0.0
      %9464 = vmatpush1.msra.mxu0 0.0
      %9465 = vmatprep.subr.mxu0 0.0
      %9466 = vmatpush1.msra.mxu0 0.0
      %9467 = vmatprep.subr.mxu0 0.0
      %9468 = vmatpush1.msra.mxu0 0.0
      %9469 = vmatprep.subr.mxu0 0.0
      %9470 = vmatpush1.msra.mxu0 0.0
      %9471 = vmatprep.subr.mxu0 0.0
      %9472 = vmatpush1.msra.mxu0 0.0
      %9473 = vmatprep.subr.mxu0 0.0
      %9474 = vmatpush1.msra.mxu0 0.0
      %9475 = vmatprep.subr.mxu0 0.0
      %9476 = vmatpush1.msra.mxu0 0.0
      %9477 = vmatprep.subr.mxu0 0.0
      %9478 = vmatpush1.msra.mxu0 0.0
      %9479 = vmatprep.subr.mxu0 0.0
      %9480 = vmatpush1.msra.mxu0 0.0
      %9481 = vmatprep.subr.mxu0 0.0
      %9482 = vmatpush1.msra.mxu0 0.0
      %9483 = vmatprep.subr.mxu0 0.0
      %9484 = vmatpush1.msra.mxu0 0.0
      %9485 = vmatprep.subr.mxu0 0.0
      %9486 = vmatpush1.msra.mxu0 0.0
      %9487 = vmatprep.subr.mxu0 0.0
      %9488 = vmatpush1.msra.mxu0 0.0
      %9489 = vmatprep.subr.mxu0 0.0
      %9490 = vmatpush1.msra.mxu0 0.0
      %9491 = vmatprep.subr.mxu0 %v9453
      %9492 = vmatpush1.msra.mxu0 %v9452
      %9493 = vmatprep.subr.mxu0 0.0
      %9494 = vmatpush2.msra.mxu0 0.0
      %9495 = vmatprep.subr.mxu0 0.0
      %9496 = vmatpush2.msra.mxu0 0.0
      %9497 = vmatprep.subr.mxu0 0.0
      %9498 = vmatpush2.msra.mxu0 0.0
      %9499 = vmatprep.subr.mxu0 0.0
      %9500 = vmatpush2.msra.mxu0 0.0
      %9501 = vmatprep.subr.mxu0 0.0
      %9502 = vmatpush2.msra.mxu0 0.0
      %9503 = vmatprep.subr.mxu0 0.0
      %9504 = vmatpush2.msra.mxu0 0.0
      %9505 = vmatprep.subr.mxu0 0.0
      %9506 = vmatpush2.msra.mxu0 0.0
      %9507 = vmatprep.subr.mxu0 0.0
      %9508 = vmatpush2.msra.mxu0 0.0
      %9509 = vmatprep.subr.mxu0 0.0
      %9510 = vmatpush2.msra.mxu0 0.0
      %9511 = vmatprep.subr.mxu0 0.0
      %9512 = vmatpush2.msra.mxu0 0.0
      %9513 = vmatprep.subr.mxu0 0.0
      %9514 = vmatpush2.msra.mxu0 0.0
      %9515 = vmatprep.subr.mxu0 0.0
      %9516 = vmatpush2.msra.mxu0 0.0
      %9517 = vmatprep.subr.mxu0 0.0
      %9518 = vmatpush2.msra.mxu0 0.0
      %9519 = vmatprep.subr.mxu0 0.0
      %9520 = vmatpush2.msra.mxu0 0.0
      %9521 = vmatprep.subr.mxu0 0.0
      %9522 = vmatpush2.msra.mxu0 0.0
      %9523 = vmatprep.subr.mxu0 0.0
      %9524 = vmatpush2.msra.mxu0 0.0
      %9525 = vmatprep.mubr.f32.mxu0 0.0
      %9526 = vmatmul.mubr.f32.gmra.mxu0 %v9459
      %v9527 = vpop.f32.mrf.mxu0
      %v9528 = vadd.f32 0.0, %v9527
      %v9529 = vpop.f32.mrf.mxu0
      %v9530 = vadd.f32 0.0, %v9529
      %9531 = vdwg.mxu0
      %9532 = vmatprep.subr.mxu0 0.0
      %9533 = vmatpush1.msra.mxu0 0.0
      %9534 = vmatprep.subr.mxu0 0.0
      %9535 = vmatpush1.msra.mxu0 0.0
      %9536 = vmatprep.subr.mxu0 0.0
      %9537 = vmatpush1.msra.mxu0 0.0
      %9538 = vmatprep.subr.mxu0 0.0
      %9539 = vmatpush1.msra.mxu0 0.0
      %9540 = vmatprep.subr.mxu0 0.0
      %9541 = vmatpush1.msra.mxu0 0.0
      %9542 = vmatprep.subr.mxu0 0.0
      %9543 = vmatpush1.msra.mxu0 0.0
      %9544 = vmatprep.subr.mxu0 0.0
      %9545 = vmatpush1.msra.mxu0 0.0
      %9546 = vmatprep.subr.mxu0 0.0
      %9547 = vmatpush1.msra.mxu0 0.0
      %9548 = vmatprep.subr.mxu0 0.0
      %9549 = vmatpush1.msra.mxu0 0.0
      %9550 = vmatprep.subr.mxu0 0.0
      %9551 = vmatpush1.msra.mxu0 0.0
      %9552 = vmatprep.subr.mxu0 0.0
      %9553 = vmatpush1.msra.mxu0 0.0
      %9554 = vmatprep.subr.mxu0 0.0
      %9555 = vmatpush1.msra.mxu0 0.0
      %9556 = vmatprep.subr.mxu0 0.0
      %9557 = vmatpush1.msra.mxu0 0.0
      %9558 = vmatprep.subr.mxu0 0.0
      %9559 = vmatpush1.msra.mxu0 0.0
      %9560 = vmatprep.subr.mxu0 0.0
      %9561 = vmatpush1.msra.mxu0 0.0
      %9562 = vmatprep.subr.mxu0 %v9455
      %9563 = vmatpush1.msra.mxu0 %v9454
      %9564 = vmatprep.subr.mxu0 0.0
      %9565 = vmatpush2.msra.mxu0 0.0
      %9566 = vmatprep.subr.mxu0 0.0
      %9567 = vmatpush2.msra.mxu0 0.0
      %9568 = vmatprep.subr.mxu0 0.0
      %9569 = vmatpush2.msra.mxu0 0.0
      %9570 = vmatprep.subr.mxu0 0.0
      %9571 = vmatpush2.msra.mxu0 0.0
      %9572 = vmatprep.subr.mxu0 0.0
      %9573 = vmatpush2.msra.mxu0 0.0
      %9574 = vmatprep.subr.mxu0 0.0
      %9575 = vmatpush2.msra.mxu0 0.0
      %9576 = vmatprep.subr.mxu0 0.0
      %9577 = vmatpush2.msra.mxu0 0.0
      %9578 = vmatprep.subr.mxu0 0.0
      %9579 = vmatpush2.msra.mxu0 0.0
      %9580 = vmatprep.subr.mxu0 0.0
      %9581 = vmatpush2.msra.mxu0 0.0
      %9582 = vmatprep.subr.mxu0 0.0
      %9583 = vmatpush2.msra.mxu0 0.0
      %9584 = vmatprep.subr.mxu0 0.0
      %9585 = vmatpush2.msra.mxu0 0.0
      %9586 = vmatprep.subr.mxu0 0.0
      %9587 = vmatpush2.msra.mxu0 0.0
      %9588 = vmatprep.subr.mxu0 0.0
      %9589 = vmatpush2.msra.mxu0 0.0
      %9590 = vmatprep.subr.mxu0 0.0
      %9591 = vmatpush2.msra.mxu0 0.0
      %9592 = vmatprep.subr.mxu0 0.0
      %9593 = vmatpush2.msra.mxu0 0.0
      %9594 = vmatprep.subr.mxu0 0.0
      %9595 = vmatpush2.msra.mxu0 0.0
      %9596 = vmatprep.mubr.f32.mxu0 0.0
      %9597 = vmatmul.mubr.f32.gmra.mxu0 %v9459
      %v9598 = vpop.f32.mrf.mxu0
      %v9599 = vadd.f32 0.0, %v9598
      %v9600 = vpop.f32.mrf.mxu0
      %v9601 = vadd.f32 0.0, %v9600
      %9602 = vdwg.mxu0
      %v9603 = vadd.f32 %v9436, %v9528
      %v9604 = vadd.f32 %v9437, %v9530
      %v9605 = vadd.f32 %v9438, %v9599
      %v9606 = vadd.f32 %v9439, %v9601
      %v9607 = vld [vmem:[%s908] sm:$0xff]
      %9609 = vset.pattern.permute.xlu0 0
      %9610 = vperm.xlu0 %9609, %v9607
      %v9611 = vpop.permute.xlu0 %9610
      %v9613 = vadd.f32 %v9603, %v9611
      %v9614 = vadd.f32 %v9604, %v9611
      %v9615 = vadd.f32 %v9605, %v9611
      %v9616 = vadd.f32 %v9606, %v9611
      %v9617 = vmax.f32 %v9613, 0.0
      %v9618 = vmax.f32 %v9614, 0.0
      %v9619 = vmax.f32 %v9615, 0.0
      %v9620 = vmax.f32 %v9616, 0.0
      %v9621 = vld [vmem:[%s911] sm:$0x1]
      %v9622 = vld [vmem:[%s914] sm:$0x1]
      %9624 = vset.pattern.permute.xlu0 0
      %9625 = vperm.xlu0 %9624, %v9622
      %v9626 = vpop.permute.xlu0 %9625
      %v9628 = vlaneseq
      %v9629 = vshrl.u32 %v9628, 7
      %v9630 = vsub.s32 0, %v9629
      %v9631 = vrot.slane %v9626, %v9630
      %v9633 = vsel %vm1200, %v9621, 0
      %9635 = vmatprep.subr.mxu0 0.0
      %9636 = vmatpush1.msra.mxu0 0.0
      %9637 = vmatprep.subr.mxu0 0.0
      %9638 = vmatpush1.msra.mxu0 0.0
      %9639 = vmatprep.subr.mxu0 0.0
      %9640 = vmatpush1.msra.mxu0 0.0
      %9641 = vmatprep.subr.mxu0 0.0
      %9642 = vmatpush1.msra.mxu0 0.0
      %9643 = vmatprep.subr.mxu0 0.0
      %9644 = vmatpush1.msra.mxu0 0.0
      %9645 = vmatprep.subr.mxu0 0.0
      %9646 = vmatpush1.msra.mxu0 0.0
      %9647 = vmatprep.subr.mxu0 0.0
      %9648 = vmatpush1.msra.mxu0 0.0
      %9649 = vmatprep.subr.mxu0 0.0
      %9650 = vmatpush1.msra.mxu0 0.0
      %9651 = vmatprep.subr.mxu0 0.0
      %9652 = vmatpush1.msra.mxu0 0.0
      %9653 = vmatprep.subr.mxu0 0.0
      %9654 = vmatpush1.msra.mxu0 0.0
      %9655 = vmatprep.subr.mxu0 0.0
      %9656 = vmatpush1.msra.mxu0 0.0
      %9657 = vmatprep.subr.mxu0 0.0
      %9658 = vmatpush1.msra.mxu0 0.0
      %9659 = vmatprep.subr.mxu0 0.0
      %9660 = vmatpush1.msra.mxu0 0.0
      %9661 = vmatprep.subr.mxu0 0.0
      %9662 = vmatpush1.msra.mxu0 0.0
      %9663 = vmatprep.subr.mxu0 0.0
      %9664 = vmatpush1.msra.mxu0 0.0
      %9665 = vmatprep.subr.mxu0 %v9618
      %9666 = vmatpush1.msra.mxu0 %v9617
      %9667 = vmatprep.subr.mxu0 0.0
      %9668 = vmatpush2.msra.mxu0 0.0
      %9669 = vmatprep.subr.mxu0 0.0
      %9670 = vmatpush2.msra.mxu0 0.0
      %9671 = vmatprep.subr.mxu0 0.0
      %9672 = vmatpush2.msra.mxu0 0.0
      %9673 = vmatprep.subr.mxu0 0.0
      %9674 = vmatpush2.msra.mxu0 0.0
      %9675 = vmatprep.subr.mxu0 0.0
      %9676 = vmatpush2.msra.mxu0 0.0
      %9677 = vmatprep.subr.mxu0 0.0
      %9678 = vmatpush2.msra.mxu0 0.0
      %9679 = vmatprep.subr.mxu0 0.0
      %9680 = vmatpush2.msra.mxu0 0.0
      %9681 = vmatprep.subr.mxu0 0.0
      %9682 = vmatpush2.msra.mxu0 0.0
      %9683 = vmatprep.subr.mxu0 0.0
      %9684 = vmatpush2.msra.mxu0 0.0
      %9685 = vmatprep.subr.mxu0 0.0
      %9686 = vmatpush2.msra.mxu0 0.0
      %9687 = vmatprep.subr.mxu0 0.0
      %9688 = vmatpush2.msra.mxu0 0.0
      %9689 = vmatprep.subr.mxu0 0.0
      %9690 = vmatpush2.msra.mxu0 0.0
      %9691 = vmatprep.subr.mxu0 0.0
      %9692 = vmatpush2.msra.mxu0 0.0
      %9693 = vmatprep.subr.mxu0 0.0
      %9694 = vmatpush2.msra.mxu0 0.0
      %9695 = vmatprep.subr.mxu0 0.0
      %9696 = vmatpush2.msra.mxu0 0.0
      %9697 = vmatprep.subr.mxu0 0.0
      %9698 = vmatpush2.msra.mxu0 0.0
      %9699 = vmatprep.mubr.f32.mxu0 0.0
      %9700 = vmatmul.mubr.f32.gmra.mxu0 %v9633
      %v9701 = vpop.f32.mrf.mxu0
      %v9702 = vadd.f32 %v9631, %v9701
      %v9703 = vpop.f32.mrf.mxu0
      %v9704 = vadd.f32 %v9631, %v9703
      %9705 = vdwg.mxu0
      %9706 = vmatprep.subr.mxu0 0.0
      %9707 = vmatpush1.msra.mxu0 0.0
      %9708 = vmatprep.subr.mxu0 0.0
      %9709 = vmatpush1.msra.mxu0 0.0
      %9710 = vmatprep.subr.mxu0 0.0
      %9711 = vmatpush1.msra.mxu0 0.0
      %9712 = vmatprep.subr.mxu0 0.0
      %9713 = vmatpush1.msra.mxu0 0.0
      %9714 = vmatprep.subr.mxu0 0.0
      %9715 = vmatpush1.msra.mxu0 0.0
      %9716 = vmatprep.subr.mxu0 0.0
      %9717 = vmatpush1.msra.mxu0 0.0
      %9718 = vmatprep.subr.mxu0 0.0
      %9719 = vmatpush1.msra.mxu0 0.0
      %9720 = vmatprep.subr.mxu0 0.0
      %9721 = vmatpush1.msra.mxu0 0.0
      %9722 = vmatprep.subr.mxu0 0.0
      %9723 = vmatpush1.msra.mxu0 0.0
      %9724 = vmatprep.subr.mxu0 0.0
      %9725 = vmatpush1.msra.mxu0 0.0
      %9726 = vmatprep.subr.mxu0 0.0
      %9727 = vmatpush1.msra.mxu0 0.0
      %9728 = vmatprep.subr.mxu0 0.0
      %9729 = vmatpush1.msra.mxu0 0.0
      %9730 = vmatprep.subr.mxu0 0.0
      %9731 = vmatpush1.msra.mxu0 0.0
      %9732 = vmatprep.subr.mxu0 0.0
      %9733 = vmatpush1.msra.mxu0 0.0
      %9734 = vmatprep.subr.mxu0 0.0
      %9735 = vmatpush1.msra.mxu0 0.0
      %9736 = vmatprep.subr.mxu0 %v9620
      %9737 = vmatpush1.msra.mxu0 %v9619
      %9738 = vmatprep.subr.mxu0 0.0
      %9739 = vmatpush2.msra.mxu0 0.0
      %9740 = vmatprep.subr.mxu0 0.0
      %9741 = vmatpush2.msra.mxu0 0.0
      %9742 = vmatprep.subr.mxu0 0.0
      %9743 = vmatpush2.msra.mxu0 0.0
      %9744 = vmatprep.subr.mxu0 0.0
      %9745 = vmatpush2.msra.mxu0 0.0
      %9746 = vmatprep.subr.mxu0 0.0
      %9747 = vmatpush2.msra.mxu0 0.0
      %9748 = vmatprep.subr.mxu0 0.0
      %9749 = vmatpush2.msra.mxu0 0.0
      %9750 = vmatprep.subr.mxu0 0.0
      %9751 = vmatpush2.msra.mxu0 0.0
      %9752 = vmatprep.subr.mxu0 0.0
      %9753 = vmatpush2.msra.mxu0 0.0
      %9754 = vmatprep.subr.mxu0 0.0
      %9755 = vmatpush2.msra.mxu0 0.0
      %9756 = vmatprep.subr.mxu0 0.0
      %9757 = vmatpush2.msra.mxu0 0.0
      %9758 = vmatprep.subr.mxu0 0.0
      %9759 = vmatpush2.msra.mxu0 0.0
      %9760 = vmatprep.subr.mxu0 0.0
      %9761 = vmatpush2.msra.mxu0 0.0
      %9762 = vmatprep.subr.mxu0 0.0
      %9763 = vmatpush2.msra.mxu0 0.0
      %9764 = vmatprep.subr.mxu0 0.0
      %9765 = vmatpush2.msra.mxu0 0.0
      %9766 = vmatprep.subr.mxu0 0.0
      %9767 = vmatpush2.msra.mxu0 0.0
      %9768 = vmatprep.subr.mxu0 0.0
      %9769 = vmatpush2.msra.mxu0 0.0
      %9770 = vmatprep.mubr.f32.mxu0 0.0
      %9771 = vmatmul.mubr.f32.gmra.mxu0 %v9633
      %v9772 = vpop.f32.mrf.mxu0
      %v9773 = vadd.f32 %v9631, %v9772
      %v9774 = vpop.f32.mrf.mxu0
      %v9775 = vadd.f32 %v9631, %v9774
      %9776 = vdwg.mxu0
      %v9781 = vcombine.low %v9702, %v9704
      %v9782 = vcombine.low %v9773, %v9775
      %v9784 = vunpack.c.l.s4 1966171168
      %v9785 = vunpack.c.0.s8 %v9784
      %v9786 = vlaneseq
      %v9787 = vshrl.u32 %v9786, 7
      %v9788 = vsub.s32 %v9785, %v9787
      %v9789 = vrot.slane %v9781, %v9788
      %v9791 = vunpack.c.l.s4 1966171168
      %v9792 = vunpack.c.0.s8 %v9791
      %v9793 = vlaneseq
      %v9794 = vshrl.u32 %v9793, 7
      %v9795 = vsub.s32 %v9792, %v9794
      %v9796 = vrot.slane %v9782, %v9795
      %v9797 = vcombine.low %v9789, %v9796
      %v9799 = vunpack.c.l.s4 1966171168
      %v9800 = vunpack.c.0.s8 %v9799
      %v9801 = vlaneseq
      %v9802 = vshrl.u32 %v9801, 7
      %v9803 = vsub.s32 %v9800, %v9802
      %v9804 = vrot.slane %v9797, %v9803
      %v9806 = vlaneseq
      %vm9807 = vcmp.ge.s32.totalorder %v9806, 0
      %vm9808 = vcmp.lt.s32.totalorder %v9806, 512
      %vm9809 = vmand %vm9807, %vm9808
      %9810 = vst.msk [vmem:[%s922] sm:$0xf] %vm9809, %v9804
      %p9811 = scmp.lt.s32.totalorder %s35, 1
      %s9812 = scalar_select %p9811, %s35, 1
      %p9813 = scmp.lt.s32.totalorder %s36, 0
      %s9814 = scalar_select %p9813, %s36, 0
      %s9815 = smul.addr %s9814, 4
      %s9816 = smul.addr %s9812, 4
      %s9817 = sadd.s32 %s9815, %s9816
      %s9818 = scalar_lea.vmem %s20, %s9817
      // Predicated region
      $region101: #{ensemble_forward.1} parent=99 // pred_check
        %p9819 = pneg %p563
      $region102: #{ensemble_forward.1} parent=99 // pred_check_branch
        %9821 = sbr.rel (%p9819) target = $region104
      $region103: #{ensemble_forward.1} parent=99 // pred_region
        _
      $region104: #{ensemble_forward.1} parent=99 // pred_fallthru
        _
    $region100: #{ensemble_forward.1} parent=5 // pred_fallthru
      _
    %p9822 = scmp.le.s32.totalorder 2, %s26
    // Predicated region
    $region105: #{ensemble_forward.1} parent=5 // pred_check
      %p9823 = pneg %p9822
    $region106: #{ensemble_forward.1} parent=5 // pred_check_branch
      %9825 = sbr.rel (%p9823) target = $region108
    $region107: #{ensemble_forward.1} parent=5 // pred_region
      %s9826 = ssub.s32 %s26, 2
      // Predicated region
      $region109: #{ensemble_forward.1} parent=107 // pred_check
        %p9827 = pneg %p569
      $region110: #{ensemble_forward.1} parent=107 // pred_check_branch
        %9829 = sbr.rel (%p9827) target = $region112
      $region111: #{ensemble_forward.1} parent=107 // pred_region
        %p9830 = scmp.lt.s32.totalorder %s37, 1
        %s9831 = scalar_select %p9830, %s37, 1
        %p9832 = scmp.lt.s32.totalorder %s38, 0
        %s9833 = scalar_select %p9832, %s38, 0
        %s9834 = smul.addr %s9833, 4
        %s9835 = smul.addr %s9831, 4
        %s9836 = sadd.s32 %s9834, %s9835
        %s9837 = scalar_lea.vmem %s20, %s9836
      $region112: #{ensemble_forward.1} parent=107 // pred_fallthru
        _
    $region108: #{ensemble_forward.1} parent=5 // pred_fallthru
      _
  $region6: #{ensemble_forward.1} parent=0 // loop_footer
    %s30 = sadd.s32 1, %s26
  $region7: #{ensemble_forward.1} parent=0 // loop_footer_branch
    %25 = sbr.rel target = $region3
  $region8: #{ensemble_forward.1} parent=0 // loop_exit
    _

</llo_original>
